<compile_context>
chip_gen: v6e
topology: v6e:2x2x1
jax: 0.10.0
libtpu: 0.0.40
codegen_flags: <defaults>
</compile_context>

<pallas_src>
import functools

import jax
import jax.numpy as jnp
from jax import lax
from jax.experimental import pallas as pl
from jax.experimental.pallas import tpu as pltpu

EPS = 1e-5
LANE = 128


def _round_up(x, m):
    return (x + m - 1) // m * m


def _vmem_limit_bytes():
    # Generation-aware scoped-VMEM limit: ~3/4 of physical VMEM, capped.
    try:
        cap = int(pltpu.get_tpu_info().vmem_capacity_bytes)
    except Exception:
        cap = 64 << 20
    return min((cap * 3) // 4, 100 << 20)


_VMEM_LIMIT = _vmem_limit_bytes()


# ----------------------------- Pallas kernels ------------------------------

def _upconv_kernel(x_ref, w_ref, b_ref, o_ref):
    # ConvTranspose2d(k=2, s=2): one bf16 matmul emits all 4 sub-pixel taps per
    # input pixel (f32 accumulation).  Output columns are zero-padded to the
    # 128-lane width -> unmasked, lane-dense stores.
    _, h1, w1, cin = x_ref.shape
    c4p = o_ref.shape[-1]
    x = x_ref[...].reshape(h1 * w1, cin)
    y = jnp.dot(x, w_ref[...], preferred_element_type=jnp.float32) + b_ref[...]
    o_ref[...] = y.reshape(1, h1, w1, c4p).astype(o_ref.dtype)


def _conv_bn_relu_kernel(xp_ref, w_ref, gamma_ref, beta_ref, o_ref,
                         acc_ref, ssum_ref, ssq_ref, *, inv_count, halo_out):
    # Fused 3x3 conv (padding=1 via a caller-provided 1-px halo) + train-mode
    # BatchNorm + ReLU.  grid = (pass, batch); the grid iterates pass-major
    # (last axis fastest).  Both the statistics accumulation and the output
    # index_map rely on that order -> both axes MUST stay "arbitrary".
    p = pl.program_id(0)          # 0: conv + stats, 1: normalize + store
    b = pl.program_id(1)          # batch element
    _, hp, wp, c = xp_ref.shape
    h, w = hp - 2, wp - 2
    cp = o_ref.shape[-1]
    m = h * w

    @pl.when(p == 0)
    def _():
        # Hoist the three dx (sublane-offset) shifted slices once.
        cols = [xp_ref[:, :, dx:dx + w, :].reshape(hp * w, c) for dx in range(3)]
        acc = jnp.zeros((m, cp), jnp.float32)
        if c % LANE == 0:
            # Lane-tile-aligned channels: K-stack the dx shifts along lanes and
            # run 3 matmuls of K=3*c (fatter MXU K, fewer issue/pop rounds).
            xs = jnp.concatenate(cols, axis=-1)                      # (hp*w, 3c)
            for dy in range(3):
                acc = acc + jnp.dot(xs[dy * w:dy * w + m, :], w_ref[dy],
                                    preferred_element_type=jnp.float32)
        else:
            # Small / unaligned channel count: 9 matmuls, but still only the 3
            # hoisted relayout copies (row shifts below are sublane-aligned).
            for dy in range(3):
                for dx in range(3):
                    acc = acc + jnp.dot(
                        cols[dx][dy * w:dy * w + m, :],
                        w_ref[dy, dx * c:(dx + 1) * c, :],
                        preferred_element_type=jnp.float32)

        # Cache the pre-BN activation: pass 1 reuses it instead of recomputing
        # the conv (halves MXU work and input DMA).
        acc_ref[b] = acc

        @pl.when(b == 0)
        def _():
            ssum_ref[...] = jnp.zeros_like(ssum_ref)
            ssq_ref[...] = jnp.zeros_like(ssq_ref)
        ssum_ref[...] += jnp.sum(acc, axis=0, keepdims=True)
        ssq_ref[...] += jnp.sum(acc * acc, axis=0, keepdims=True)

    @pl.when(p == 1)
    def _():
        acc = acc_ref[b]
        mean = ssum_ref[...] * inv_count
        # TODO(synk): E[x^2]-E[x]^2 in f32 can lose precision for activations
        # with large means (PyTorch uses a two-pass variance); fine here.
        var = jnp.maximum(ssq_ref[...] * inv_count - mean * mean, 0.0)
        inv = lax.rsqrt(var + EPS)
        scale = gamma_ref[...] * inv
        shift = beta_ref[...] - mean * scale
        act = jnp.maximum(acc * scale + shift, 0.0)
        if halo_out:
            # Emit directly in the halo-padded layout the next conv consumes
            # (removes the jnp.pad HBM round trip between the two convs).
            o_ref[...] = jnp.zeros_like(o_ref)
            o_ref[:, 1:1 + h, 1:1 + w, :] = act.reshape(1, h, w, cp).astype(o_ref.dtype)
        else:
            o_ref[...] = act.reshape(1, h, w, cp).astype(o_ref.dtype)


# ------------------------------ kernel drivers ------------------------------

def _run_upconv(x1, w_flat, b_row):
    n, h1, w1, cin = x1.shape
    c4p = w_flat.shape[1]
    return pl.pallas_call(
        _upconv_kernel,
        grid=(n,),                       # >= 2 independent steps -> v7x 2-TC
        in_specs=[pl.BlockSpec((1, h1, w1, cin), lambda b: (b, 0, 0, 0)),
                  pl.BlockSpec((cin, c4p), lambda b: (0, 0)),
                  pl.BlockSpec((1, c4p), lambda b: (0, 0))],
        out_specs=pl.BlockSpec((1, h1, w1, c4p), lambda b: (b, 0, 0, 0)),
        out_shape=jax.ShapeDtypeStruct((n, h1, w1, c4p), jnp.bfloat16),
        compiler_params=pltpu.CompilerParams(
            dimension_semantics=("parallel",),
            vmem_limit_bytes=_VMEM_LIMIT),
    )(x1, w_flat, b_row)


def _run_conv_bn_relu(xp, w, gamma, beta, out_dtype, halo_out):
    n, hp, wp, c = xp.shape
    h, wd = hp - 2, wp - 2
    kdim, cp = w.shape[1], w.shape[2]
    m = h * wd

    if halo_out:
        out_shape = jax.ShapeDtypeStruct((n, hp, wp, cp), out_dtype)
        # NOTE: `p * b` is valid only because the grid iterates pass-major
        # (last axis fastest) and pass 0 never writes; each output block is
        # then visited in one contiguous run (0,0,...,0,1,...,N-1).
        out_spec = pl.BlockSpec((1, hp, wp, cp), lambda p, b: (p * b, 0, 0, 0))
    else:
        out_shape = jax.ShapeDtypeStruct((n, h, wd, cp), out_dtype)
        out_spec = pl.BlockSpec((1, h, wd, cp), lambda p, b: (p * b, 0, 0, 0))

    kernel = functools.partial(_conv_bn_relu_kernel,
                               inv_count=1.0 / float(n * h * wd),
                               halo_out=halo_out)
    return pl.pallas_call(
        kernel,
        grid=(2, n),                                 # (pass, batch)
        in_specs=[
            # Pin the input block to the last-fetched index during pass 1 so
            # the (unused) input is never re-DMA'd after the pass boundary.
            pl.BlockSpec((1, hp, wp, c),
                         lambda p, b: ((1 - p) * b + p * (n - 1), 0, 0, 0)),
            pl.BlockSpec((3, kdim, cp), lambda p, b: (0, 0, 0)),
            pl.BlockSpec((1, cp), lambda p, b: (0, 0)),
            pl.BlockSpec((1, cp), lambda p, b: (0, 0)),
        ],
        out_specs=out_spec,
        out_shape=out_shape,
        scratch_shapes=[
            # Pre-BN activation cache (f32). TODO(synk): for production UNet
            # sizes on v7x (64 MiB VMEM) switch to bf16 and/or H-tile the grid.
            pltpu.VMEM((n, m, cp), jnp.float32),
            pltpu.VMEM((1, cp), jnp.float32),        # per-channel sum
            pltpu.VMEM((1, cp), jnp.float32),        # per-channel sum of squares
        ],
        compiler_params=pltpu.CompilerParams(
            # The batch axis carries the BN statistics and the pre-BN cache, so
            # the grid must stay sequential.
            # TODO(synk): on v7x, split the batch across the 2 TensorCores with
            # per-core partial sums + a small cross-core reduce.
            dimension_semantics=("arbitrary", "arbitrary"),
            vmem_limit_bytes=_VMEM_LIMIT),
    )(xp, w, gamma, beta)


# ------------------------------ parameters ----------------------------------

def init_params(key, in_channels, out_channels):
    # PyTorch-layout parameters of the Up block.
    k1, k2, k3, k4 = jax.random.split(key, 4)
    return {
        # ConvTranspose2d weight: [Cin, Cout, 2, 2]
        "w_up": jax.random.normal(k1, (in_channels, out_channels, 2, 2), jnp.float32) * 0.1,
        "b_up": jax.random.normal(k2, (out_channels,), jnp.float32) * 0.1,
        # Conv2d weights: [Cout, Cin, 3, 3] (bias=False)
        "w1": jax.random.normal(k3, (out_channels, in_channels, 3, 3), jnp.float32) * 0.1,
        "w2": jax.random.normal(k4, (out_channels, out_channels, 3, 3), jnp.float32) * 0.1,
        "gamma1": jnp.ones((out_channels,), jnp.float32),
        "beta1": jnp.zeros((out_channels,), jnp.float32),
        "gamma2": jnp.ones((out_channels,), jnp.float32),
        "beta2": jnp.zeros((out_channels,), jnp.float32),
    }


def _pack_params(params):
    cin = params["w_up"].shape[0]        # in_channels
    cout = params["w_up"].shape[1]       # out_channels
    ccat = params["w1"].shape[1]         # concat channels (= in_channels)
    cp = _round_up(cout, LANE)           # lane-padded conv OUTPUT channels

    # ConvTranspose2d [Cin, Cout, 2, 2] -> [Cin, (a, b, co)] so one matmul
    # emits all four sub-pixel taps; columns zero-padded to a lane multiple.
    c4 = 4 * cout
    c4p = _round_up(c4, LANE)
    w_up_flat = jnp.transpose(params["w_up"], (0, 2, 3, 1)).reshape(cin, c4)
    w_up_flat = jnp.pad(w_up_flat, ((0, 0), (0, c4p - c4)))
    b_row = jnp.pad(jnp.tile(params["b_up"], 4), (0, c4p - c4)).reshape(1, c4p)

    def conv_w(wt, ci_tgt):
        # torch [Co, Ci, 3, 3] -> (ky, (kx, ci), co): dy-major row groups whose
        # row order matches the in-kernel dx-stacked patch channel order.
        co, ci = wt.shape[0], wt.shape[1]
        wt = jnp.transpose(wt, (2, 3, 1, 0))                        # (ky, kx, ci, co)
        wt = jnp.pad(wt, ((0, 0), (0, 0), (0, ci_tgt - ci), (0, cp - co)))
        return wt.reshape(3, 3 * ci_tgt, cp).astype(jnp.bfloat16)

    def vec(v, fill=0.0):
        return jnp.pad(v, (0, cp - v.shape[0]), constant_values=fill).reshape(1, cp)

    return {
        "cout": cout, "cp": cp,
        "w_up_flat": w_up_flat.astype(jnp.bfloat16),
        "b_row": b_row.astype(jnp.float32),
        # conv1 consumes the concat at its REAL channel count (no K padding);
        # conv2 consumes conv1's lane-padded output, so its K rows are padded.
        "w1": conv_w(params["w1"], ccat),
        "w2": conv_w(params["w2"], cp),
        "gamma1": vec(params["gamma1"], 1.0), "beta1": vec(params["beta1"]),
        "gamma2": vec(params["gamma2"], 1.0), "beta2": vec(params["beta2"]),
    }


# ------------------------------ forward pass ---------------------------------

def up_module_forward(x1_nchw, x2_nchw, params):
    pk = _pack_params(params)
    cout, cp = pk["cout"], pk["cp"]

    # NCHW -> NHWC (channels ride the 128-wide lane dim).
    x1 = jnp.transpose(x1_nchw, (0, 2, 3, 1)).astype(jnp.bfloat16)
    x2 = jnp.transpose(x2_nchw, (0, 2, 3, 1)).astype(jnp.bfloat16)

    # --- self.up : ConvTranspose2d(k=2, s=2), lane-dense output columns -----
    n, h1, w1, cin = x1.shape
    up4 = _run_upconv(x1, pk["w_up_flat"], pk["b_row"])       # [n, h1, w1, c4p]
    up = up4[..., :4 * cout].reshape(n, h1, w1, 2, 2, cout)
    up = jnp.transpose(up, (0, 1, 3, 2, 4, 5)).reshape(n, 2 * h1, 2 * w1, cout)
    # TODO(synk): the 2x2 sub-pixel interleave stays in XLA (one small fused
    # copy); folding it into the kernel requires a lane->sublane relayout store
    # whose Mosaic lowering support at these tiny shapes is not guaranteed.

    # --- F.pad(diff) + 3x3 conv halo + torch.cat([x2, up], C), REAL channels --
    hh, ww = x2.shape[1], x2.shape[2]
    dy, dx = hh - up.shape[1], ww - up.shape[2]
    up_p = jnp.pad(up, ((0, 0),
                        (1 + dy // 2, 1 + dy - dy // 2),
                        (1 + dx // 2, 1 + dx - dx // 2),
                        (0, 0)))
    x2_p = jnp.pad(x2, ((0, 0), (1, 1), (1, 1), (0, 0)))
    xcat_p = jnp.concatenate([x2_p, up_p], axis=-1)           # [n, hh+2, ww+2, ccat]
    # TODO(synk): passing x2_p / up_p as two K-groups into conv1 would remove
    # this small concat copy entirely.

    # --- DoubleConv: (conv3x3 -> BN(batch stats) -> ReLU) x 2 ----------------
    # conv1 emits its activation already halo-padded for conv2 (no jnp.pad).
    act1_p = _run_conv_bn_relu(xcat_p, pk["w1"], pk["gamma1"], pk["beta1"],
                               out_dtype=jnp.bfloat16, halo_out=True)
    # TODO(synk): BatchNorm running_mean/running_var buffers are not updated
    # (forward output matches train-mode normalization; buffers are stateful).
    act2 = _run_conv_bn_relu(act1_p, pk["w2"], pk["gamma2"], pk["beta2"],
                             out_dtype=jnp.float32, halo_out=False)

    return jnp.transpose(act2[..., :cout], (0, 3, 1, 2))      # back to NCHW


if __name__ == "__main__":
    in_channels, out_channels = 8, 4
    key = jax.random.PRNGKey(0)
    kx1, kx2, kp = jax.random.split(key, 3)

    # UNet convention: x1 (deep features) has in_channels at half resolution,
    # x2 (skip connection) has out_channels at full resolution.
    x1 = jax.random.normal(kx1, (2, in_channels, 8, 8), jnp.float32)
    x2 = jax.random.normal(kx2, (2, out_channels, 16, 16), jnp.float32)
    params = init_params(kp, in_channels, out_channels)

    fwd = jax.jit(functools.partial(up_module_forward, params=params))
    out = fwd(x1, x2)
    jax.block_until_ready(out)
    assert out.shape == (2, out_channels, 16, 16), out.shape
    assert bool(jnp.all(jnp.isfinite(out)))
    print("KERNEL_OK")
</pallas_src>

<mosaic_0001>
module attributes {stable_mosaic.version = 11 : i64} {
  func.func @_upconv_kernel(%arg0: i32, %arg1: memref<1x8x8x8xbf16, #tpu.memory_space<vmem>>, %arg2: memref<8x128xbf16, #tpu.memory_space<vmem>>, %arg3: memref<1x128xf32, #tpu.memory_space<vmem>>, %arg4: memref<1x8x8x128xbf16, #tpu.memory_space<vmem>>) attributes {dimension_semantics = [#tpu.dimension_semantics<parallel>], iteration_bounds = array<i64: 2>, scalar_prefetch = 0 : i64, scratch_operands = 0 : i64, tpu.core_type = #tpu.core_type<tc>, window_params = [{transform_indices = @transform_0, window_bounds = array<i64: 1, 8, 8, 8>}, {pipeline_mode = #tpu.pipeline_mode<synchronous>, transform_indices = @transform_1, window_bounds = array<i64: 8, 128>}, {pipeline_mode = #tpu.pipeline_mode<synchronous>, transform_indices = @transform_2, window_bounds = array<i64: 1, 128>}, {transform_indices = @transform_3, window_bounds = array<i64: 1, 8, 8, 128>}]} {
    %c0 = arith.constant 0 : index
    %c0_0 = arith.constant 0 : index
    %c0_1 = arith.constant 0 : index
    %c0_2 = arith.constant 0 : index
    %0 = vector.load %arg1[%c0, %c0_0, %c0_1, %c0_2] : memref<1x8x8x8xbf16, #tpu.memory_space<vmem>>, vector<1x8x8x8xbf16>
    %1 = vector.shape_cast %0 : vector<1x8x8x8xbf16> to vector<64x8xbf16>
    %c0_3 = arith.constant 0 : index
    %c0_4 = arith.constant 0 : index
    %2 = vector.load %arg2[%c0_3, %c0_4] : memref<8x128xbf16, #tpu.memory_space<vmem>>, vector<8x128xbf16>
    %cst = arith.constant dense<0.000000e+00> : vector<64x128xf32>
    %3 = tpu.matmul %1, %2, %cst {dimension_numbers = #tpu.dot_dimension_numbers<[1], [0], [0], [1], [0, 0, 1, 1], [], []>} : vector<64x8xbf16>, vector<8x128xbf16>, vector<64x128xf32> -> vector<64x128xf32>
    %c0_5 = arith.constant 0 : index
    %c0_6 = arith.constant 0 : index
    %4 = vector.load %arg3[%c0_5, %c0_6] : memref<1x128xf32, #tpu.memory_space<vmem>>, vector<1x128xf32>
    %5 = vector.broadcast %4 : vector<1x128xf32> to vector<64x128xf32>
    %6 = arith.addf %3, %5 : vector<64x128xf32>
    %7 = vector.shape_cast %6 : vector<64x128xf32> to vector<1x8x8x128xf32>
    %8 = arith.truncf %7 : vector<1x8x8x128xf32> to vector<1x8x8x128xbf16>
    %c0_7 = arith.constant 0 : index
    %c0_8 = arith.constant 0 : index
    %c0_9 = arith.constant 0 : index
    %c0_10 = arith.constant 0 : index
    %9 = vector.load %arg4[%c0_7, %c0_8, %c0_9, %c0_10] : memref<1x8x8x128xbf16, #tpu.memory_space<vmem>>, vector<1x8x8x128xbf16>
    tpu.vector_store %arg4[%c0_7, %c0_8, %c0_9, %c0_10], %8 {strides = array<i32>} : memref<1x8x8x128xbf16, #tpu.memory_space<vmem>>, vector<1x8x8x128xbf16>,
    return
  }
  func.func @transform_0(%arg0: i32) -> (i32, i32, i32, i32) {
    %c0_i32 = arith.constant 0 : i32
    %c0_i32_0 = arith.constant 0 : i32
    %c0_i32_1 = arith.constant 0 : i32
    %c0_i32_2 = arith.constant 0 : i32
    return %arg0, %c0_i32, %c0_i32_0, %c0_i32_1 : i32, i32, i32, i32
  }
  func.func @transform_1(%arg0: i32) -> (i32, i32) {
    %c0_i32 = arith.constant 0 : i32
    %c0_i32_0 = arith.constant 0 : i32
    %c0_i32_1 = arith.constant 0 : i32
    return %c0_i32, %c0_i32_0 : i32, i32
  }
  func.func @transform_2(%arg0: i32) -> (i32, i32) {
    %c0_i32 = arith.constant 0 : i32
    %c0_i32_0 = arith.constant 0 : i32
    %c0_i32_1 = arith.constant 0 : i32
    return %c0_i32, %c0_i32_0 : i32, i32
  }
  func.func @transform_3(%arg0: i32) -> (i32, i32, i32, i32) {
    %c0_i32 = arith.constant 0 : i32
    %c0_i32_0 = arith.constant 0 : i32
    %c0_i32_1 = arith.constant 0 : i32
    %c0_i32_2 = arith.constant 0 : i32
    return %arg0, %c0_i32, %c0_i32_0, %c0_i32_1 : i32, i32, i32, i32
  }
}

module attributes {stable_mosaic.version = 11 : i64} {
  func.func @_conv_bn_relu_kernel(%arg0: i32, %arg1: i32, %arg2: memref<1x18x18x8xbf16, #tpu.memory_space<vmem>>, %arg3: memref<3x24x128xbf16, #tpu.memory_space<vmem>>, %arg4: memref<1x128xf32, #tpu.memory_space<vmem>>, %arg5: memref<1x128xf32, #tpu.memory_space<vmem>>, %arg6: memref<1x18x18x128xbf16, #tpu.memory_space<vmem>>, %arg7: memref<2x256x128xf32, #tpu.memory_space<vmem>>, %arg8: memref<1x128xf32, #tpu.memory_space<vmem>>, %arg9: memref<1x128xf32, #tpu.memory_space<vmem>>) attributes {dimension_semantics = [#tpu.dimension_semantics<arbitrary>, #tpu.dimension_semantics<arbitrary>], iteration_bounds = array<i64: 2, 2>, scalar_prefetch = 0 : i64, scratch_operands = 3 : i64, tpu.core_type = #tpu.core_type<tc>, window_params = [{transform_indices = @transform_0, window_bounds = array<i64: 1, 18, 18, 8>}, {pipeline_mode = #tpu.pipeline_mode<synchronous>, transform_indices = @transform_1, window_bounds = array<i64: 3, 24, 128>}, {pipeline_mode = #tpu.pipeline_mode<synchronous>, transform_indices = @transform_2, window_bounds = array<i64: 1, 128>}, {pipeline_mode = #tpu.pipeline_mode<synchronous>, transform_indices = @transform_3, window_bounds = array<i64: 1, 128>}, {transform_indices = @transform_4, window_bounds = array<i64: 1, 18, 18, 128>}]} {
    %c0_i32 = arith.constant 0 : i32
    %0 = arith.cmpi eq, %arg0, %c0_i32 : i32
    %1 = arith.extui %0 : i1 to i32
    %c0_i32_0 = arith.constant 0 : i32
    %2 = arith.cmpi ne, %1, %c0_i32_0 : i32
    scf.if %2 {
      %c0 = arith.constant 0 : index
      %c0_2 = arith.constant 0 : index
      %c0_3 = arith.constant 0 : index
      %c0_4 = arith.constant 0 : index
      %6 = vector.load %arg2[%c0, %c0_2, %c0_3, %c0_4] : memref<1x18x18x8xbf16, #tpu.memory_space<vmem>>, vector<1x18x16x8xbf16>
      %7 = vector.shape_cast %6 : vector<1x18x16x8xbf16> to vector<288x8xbf16>
      %c0_5 = arith.constant 0 : index
      %c0_6 = arith.constant 0 : index
      %c1 = arith.constant 1 : index
      %c0_7 = arith.constant 0 : index
      %8 = vector.load %arg2[%c0_5, %c0_6, %c1, %c0_7] : memref<1x18x18x8xbf16, #tpu.memory_space<vmem>>, vector<1x18x16x8xbf16>
      %9 = vector.shape_cast %8 : vector<1x18x16x8xbf16> to vector<288x8xbf16>
      %c0_8 = arith.constant 0 : index
      %c0_9 = arith.constant 0 : index
      %c2 = arith.constant 2 : index
      %c0_10 = arith.constant 0 : index
      %10 = vector.load %arg2[%c0_8, %c0_9, %c2, %c0_10] : memref<1x18x18x8xbf16, #tpu.memory_space<vmem>>, vector<1x18x16x8xbf16>
      %11 = vector.shape_cast %10 : vector<1x18x16x8xbf16> to vector<288x8xbf16>
      %cst = arith.constant 0.000000e+00 : f32
      %12 = vector.broadcast %cst : f32 to vector<256x128xf32>
      %13 = vector.extract_strided_slice %7 {offsets = [0, 0], sizes = [256, 8], strides = [1, 1]} : vector<288x8xbf16> to vector<256x8xbf16>
      %c0_11 = arith.constant 0 : index
      %c0_12 = arith.constant 0 : index
      %c0_13 = arith.constant 0 : index
      %14 = vector.load %arg3[%c0_11, %c0_12, %c0_13] : memref<3x24x128xbf16, #tpu.memory_space<vmem>>, vector<1x8x128xbf16>
      %15 = vector.shape_cast %14 : vector<1x8x128xbf16> to vector<8x128xbf16>
      %cst_14 = arith.constant dense<0.000000e+00> : vector<256x128xf32>
      %16 = tpu.matmul %13, %15, %cst_14 {dimension_numbers = #tpu.dot_dimension_numbers<[1], [0], [0], [1], [0, 0, 1, 1], [], []>} : vector<256x8xbf16>, vector<8x128xbf16>, vector<256x128xf32> -> vector<256x128xf32>
      %17 = arith.addf %12, %16 : vector<256x128xf32>
      %18 = vector.extract_strided_slice %9 {offsets = [0, 0], sizes = [256, 8], strides = [1, 1]} : vector<288x8xbf16> to vector<256x8xbf16>
      %c0_15 = arith.constant 0 : index
      %c8 = arith.constant 8 : index
      %c0_16 = arith.constant 0 : index
      %19 = vector.load %arg3[%c0_15, %c8, %c0_16] : memref<3x24x128xbf16, #tpu.memory_space<vmem>>, vector<1x8x128xbf16>
      %20 = vector.shape_cast %19 : vector<1x8x128xbf16> to vector<8x128xbf16>
      %cst_17 = arith.constant dense<0.000000e+00> : vector<256x128xf32>
      %21 = tpu.matmul %18, %20, %cst_17 {dimension_numbers = #tpu.dot_dimension_numbers<[1], [0], [0], [1], [0, 0, 1, 1], [], []>} : vector<256x8xbf16>, vector<8x128xbf16>, vector<256x128xf32> -> vector<256x128xf32>
      %22 = arith.addf %17, %21 : vector<256x128xf32>
      %23 = vector.extract_strided_slice %11 {offsets = [0, 0], sizes = [256, 8], strides = [1, 1]} : vector<288x8xbf16> to vector<256x8xbf16>
      %c0_18 = arith.constant 0 : index
      %c16 = arith.constant 16 : index
      %c0_19 = arith.constant 0 : index
      %24 = vector.load %arg3[%c0_18, %c16, %c0_19] : memref<3x24x128xbf16, #tpu.memory_space<vmem>>, vector<1x8x128xbf16>
      %25 = vector.shape_cast %24 : vector<1x8x128xbf16> to vector<8x128xbf16>
      %cst_20 = arith.constant dense<0.000000e+00> : vector<256x128xf32>
      %26 = tpu.matmul %23, %25, %cst_20 {dimension_numbers = #tpu.dot_dimension_numbers<[1], [0], [0], [1], [0, 0, 1, 1], [], []>} : vector<256x8xbf16>, vector<8x128xbf16>, vector<256x128xf32> -> vector<256x128xf32>
      %27 = arith.addf %22, %26 : vector<256x128xf32>
      %28 = vector.extract_strided_slice %7 {offsets = [16, 0], sizes = [256, 8], strides = [1, 1]} : vector<288x8xbf16> to vector<256x8xbf16>
      %c1_21 = arith.constant 1 : index
      %c0_22 = arith.constant 0 : index
      %c0_23 = arith.constant 0 : index
      %29 = vector.load %arg3[%c1_21, %c0_22, %c0_23] : memref<3x24x128xbf16, #tpu.memory_space<vmem>>, vector<1x8x128xbf16>
      %30 = vector.shape_cast %29 : vector<1x8x128xbf16> to vector<8x128xbf16>
      %cst_24 = arith.constant dense<0.000000e+00> : vector<256x128xf32>
      %31 = tpu.matmul %28, %30, %cst_24 {dimension_numbers = #tpu.dot_dimension_numbers<[1], [0], [0], [1], [0, 0, 1, 1], [], []>} : vector<256x8xbf16>, vector<8x128xbf16>, vector<256x128xf32> -> vector<256x128xf32>
      %32 = arith.addf %27, %31 : vector<256x128xf32>
      %33 = vector.extract_strided_slice %9 {offsets = [16, 0], sizes = [256, 8], strides = [1, 1]} : vector<288x8xbf16> to vector<256x8xbf16>
      %c1_25 = arith.constant 1 : index
      %c8_26 = arith.constant 8 : index
      %c0_27 = arith.constant 0 : index
      %34 = vector.load %arg3[%c1_25, %c8_26, %c0_27] : memref<3x24x128xbf16, #tpu.memory_space<vmem>>, vector<1x8x128xbf16>
      %35 = vector.shape_cast %34 : vector<1x8x128xbf16> to vector<8x128xbf16>
      %cst_28 = arith.constant dense<0.000000e+00> : vector<256x128xf32>
      %36 = tpu.matmul %33, %35, %cst_28 {dimension_numbers = #tpu.dot_dimension_numbers<[1], [0], [0], [1], [0, 0, 1, 1], [], []>} : vector<256x8xbf16>, vector<8x128xbf16>, vector<256x128xf32> -> vector<256x128xf32>
      %37 = arith.addf %32, %36 : vector<256x128xf32>
      %38 = vector.extract_strided_slice %11 {offsets = [16, 0], sizes = [256, 8], strides = [1, 1]} : vector<288x8xbf16> to vector<256x8xbf16>
      %c1_29 = arith.constant 1 : index
      %c16_30 = arith.constant 16 : index
      %c0_31 = arith.constant 0 : index
      %39 = vector.load %arg3[%c1_29, %c16_30, %c0_31] : memref<3x24x128xbf16, #tpu.memory_space<vmem>>, vector<1x8x128xbf16>
      %40 = vector.shape_cast %39 : vector<1x8x128xbf16> to vector<8x128xbf16>
      %cst_32 = arith.constant dense<0.000000e+00> : vector<256x128xf32>
      %41 = tpu.matmul %38, %40, %cst_32 {dimension_numbers = #tpu.dot_dimension_numbers<[1], [0], [0], [1], [0, 0, 1, 1], [], []>} : vector<256x8xbf16>, vector<8x128xbf16>, vector<256x128xf32> -> vector<256x128xf32>
      %42 = arith.addf %37, %41 : vector<256x128xf32>
      %43 = vector.extract_strided_slice %7 {offsets = [32, 0], sizes = [256, 8], strides = [1, 1]} : vector<288x8xbf16> to vector<256x8xbf16>
      %c2_33 = arith.constant 2 : index
      %c0_34 = arith.constant 0 : index
      %c0_35 = arith.constant 0 : index
      %44 = vector.load %arg3[%c2_33, %c0_34, %c0_35] : memref<3x24x128xbf16, #tpu.memory_space<vmem>>, vector<1x8x128xbf16>
      %45 = vector.shape_cast %44 : vector<1x8x128xbf16> to vector<8x128xbf16>
      %cst_36 = arith.constant dense<0.000000e+00> : vector<256x128xf32>
      %46 = tpu.matmul %43, %45, %cst_36 {dimension_numbers = #tpu.dot_dimension_numbers<[1], [0], [0], [1], [0, 0, 1, 1], [], []>} : vector<256x8xbf16>, vector<8x128xbf16>, vector<256x128xf32> -> vector<256x128xf32>
      %47 = arith.addf %42, %46 : vector<256x128xf32>
      %48 = vector.extract_strided_slice %9 {offsets = [32, 0], sizes = [256, 8], strides = [1, 1]} : vector<288x8xbf16> to vector<256x8xbf16>
      %c2_37 = arith.constant 2 : index
      %c8_38 = arith.constant 8 : index
      %c0_39 = arith.constant 0 : index
      %49 = vector.load %arg3[%c2_37, %c8_38, %c0_39] : memref<3x24x128xbf16, #tpu.memory_space<vmem>>, vector<1x8x128xbf16>
      %50 = vector.shape_cast %49 : vector<1x8x128xbf16> to vector<8x128xbf16>
      %cst_40 = arith.constant dense<0.000000e+00> : vector<256x128xf32>
      %51 = tpu.matmul %48, %50, %cst_40 {dimension_numbers = #tpu.dot_dimension_numbers<[1], [0], [0], [1], [0, 0, 1, 1], [], []>} : vector<256x8xbf16>, vector<8x128xbf16>, vector<256x128xf32> -> vector<256x128xf32>
      %52 = arith.addf %47, %51 : vector<256x128xf32>
      %53 = vector.extract_strided_slice %11 {offsets = [32, 0], sizes = [256, 8], strides = [1, 1]} : vector<288x8xbf16> to vector<256x8xbf16>
      %c2_41 = arith.constant 2 : index
      %c16_42 = arith.constant 16 : index
      %c0_43 = arith.constant 0 : index
      %54 = vector.load %arg3[%c2_41, %c16_42, %c0_43] : memref<3x24x128xbf16, #tpu.memory_space<vmem>>, vector<1x8x128xbf16>
      %55 = vector.shape_cast %54 : vector<1x8x128xbf16> to vector<8x128xbf16>
      %cst_44 = arith.constant dense<0.000000e+00> : vector<256x128xf32>
      %56 = tpu.matmul %53, %55, %cst_44 {dimension_numbers = #tpu.dot_dimension_numbers<[1], [0], [0], [1], [0, 0, 1, 1], [], []>} : vector<256x8xbf16>, vector<8x128xbf16>, vector<256x128xf32> -> vector<256x128xf32>
      %57 = arith.addf %52, %56 : vector<256x128xf32>
      %58 = arith.index_cast %arg1 : i32 to index
      %c0_45 = arith.constant 0 : index
      %c0_46 = arith.constant 0 : index
      %59 = vector.load %arg7[%58, %c0_45, %c0_46] : memref<2x256x128xf32, #tpu.memory_space<vmem>>, vector<1x256x128xf32>
      %60 = vector.shape_cast %59 : vector<1x256x128xf32> to vector<256x128xf32>
      %61 = vector.shape_cast %57 : vector<256x128xf32> to vector<1x256x128xf32>
      tpu.vector_store %arg7[%58, %c0_45, %c0_46], %61 {strides = array<i32>} : memref<2x256x128xf32, #tpu.memory_space<vmem>>, vector<1x256x128xf32>,
      %c0_i32_47 = arith.constant 0 : i32
      %62 = arith.cmpi eq, %arg1, %c0_i32_47 : i32
      %63 = arith.extui %62 : i1 to i32
      %c0_i32_48 = arith.constant 0 : i32
      %64 = arith.cmpi ne, %63, %c0_i32_48 : i32
      scf.if %64 {
        %cst_59 = arith.constant 0.000000e+00 : f32
        %76 = vector.broadcast %cst_59 : f32 to vector<1x128xf32>
        %c0_60 = arith.constant 0 : index
        %c0_61 = arith.constant 0 : index
        %77 = vector.load %arg8[%c0_60, %c0_61] : memref<1x128xf32, #tpu.memory_space<vmem>>, vector<1x128xf32>
        tpu.vector_store %arg8[%c0_60, %c0_61], %76 {strides = array<i32>} : memref<1x128xf32, #tpu.memory_space<vmem>>, vector<1x128xf32>,
        %cst_62 = arith.constant 0.000000e+00 : f32
        %78 = vector.broadcast %cst_62 : f32 to vector<1x128xf32>
        %c0_63 = arith.constant 0 : index
        %c0_64 = arith.constant 0 : index
        %79 = vector.load %arg9[%c0_63, %c0_64] : memref<1x128xf32, #tpu.memory_space<vmem>>, vector<1x128xf32>
        tpu.vector_store %arg9[%c0_63, %c0_64], %78 {strides = array<i32>} : memref<1x128xf32, #tpu.memory_space<vmem>>, vector<1x128xf32>,
      } else {
      }
      %c0_49 = arith.constant 0 : index
      %c0_50 = arith.constant 0 : index
      %65 = vector.load %arg8[%c0_49, %c0_50] : memref<1x128xf32, #tpu.memory_space<vmem>>, vector<1x128xf32>
      %cst_51 = arith.constant dense<0.000000e+00> : vector<128xf32>
      %66 = vector.multi_reduction <add>, %57, %cst_51 [0] : vector<256x128xf32> to vector<128xf32>
      %67 = vector.shape_cast %66 : vector<128xf32> to vector<1x128xf32>
      %68 = arith.addf %65, %67 : vector<1x128xf32>
      %c0_52 = arith.constant 0 : index
      %c0_53 = arith.constant 0 : index
      %69 = vector.load %arg8[%c0_52, %c0_53] : memref<1x128xf32, #tpu.memory_space<vmem>>, vector<1x128xf32>
      tpu.vector_store %arg8[%c0_52, %c0_53], %68 {strides = array<i32>} : memref<1x128xf32, #tpu.memory_space<vmem>>, vector<1x128xf32>,
      %c0_54 = arith.constant 0 : index
      %c0_55 = arith.constant 0 : index
      %70 = vector.load %arg9[%c0_54, %c0_55] : memref<1x128xf32, #tpu.memory_space<vmem>>, vector<1x128xf32>
      %71 = arith.mulf %57, %57 : vector<256x128xf32>
      %cst_56 = arith.constant dense<0.000000e+00> : vector<128xf32>
      %72 = vector.multi_reduction <add>, %71, %cst_56 [0] : vector<256x128xf32> to vector<128xf32>
      %73 = vector.shape_cast %72 : vector<128xf32> to vector<1x128xf32>
      %74 = arith.addf %70, %73 : vector<1x128xf32>
      %c0_57 = arith.constant 0 : index
      %c0_58 = arith.constant 0 : index
      %75 = vector.load %arg9[%c0_57, %c0_58] : memref<1x128xf32, #tpu.memory_space<vmem>>, vector<1x128xf32>
      tpu.vector_store %arg9[%c0_57, %c0_58], %74 {strides = array<i32>} : memref<1x128xf32, #tpu.memory_space<vmem>>, vector<1x128xf32>,
    } else {
    }
    %c1_i32 = arith.constant 1 : i32
    %3 = arith.cmpi eq, %arg0, %c1_i32 : i32
    %4 = arith.extui %3 : i1 to i32
    %c0_i32_1 = arith.constant 0 : i32
    %5 = arith.cmpi ne, %4, %c0_i32_1 : i32
    scf.if %5 {
      %6 = arith.index_cast %arg1 : i32 to index
      %c0 = arith.constant 0 : index
      %c0_2 = arith.constant 0 : index
      %7 = vector.load %arg7[%6, %c0, %c0_2] : memref<2x256x128xf32, #tpu.memory_space<vmem>>, vector<1x256x128xf32>
      %8 = vector.shape_cast %7 : vector<1x256x128xf32> to vector<256x128xf32>
      %c0_3 = arith.constant 0 : index
      %c0_4 = arith.constant 0 : index
      %9 = vector.load %arg8[%c0_3, %c0_4] : memref<1x128xf32, #tpu.memory_space<vmem>>, vector<1x128xf32>
      %cst = arith.constant 0.001953125 : f32
      %10 = vector.broadcast %cst : f32 to vector<1x128xf32>
      %11 = arith.mulf %9, %10 : vector<1x128xf32>
      %c0_5 = arith.constant 0 : index
      %c0_6 = arith.constant 0 : index
      %12 = vector.load %arg9[%c0_5, %c0_6] : memref<1x128xf32, #tpu.memory_space<vmem>>, vector<1x128xf32>
      %cst_7 = arith.constant 0.001953125 : f32
      %13 = vector.broadcast %cst_7 : f32 to vector<1x128xf32>
      %14 = arith.mulf %12, %13 : vector<1x128xf32>
      %15 = arith.mulf %11, %11 : vector<1x128xf32>
      %16 = arith.subf %14, %15 : vector<1x128xf32>
      %cst_8 = arith.constant 0.000000e+00 : f32
      %17 = vector.broadcast %cst_8 : f32 to vector<1x128xf32>
      %18 = arith.maximumf %16, %17 : vector<1x128xf32>
      %cst_9 = arith.constant 9.99999974E-6 : f32
      %19 = vector.broadcast %cst_9 : f32 to vector<1x128xf32>
      %20 = arith.addf %18, %19 : vector<1x128xf32>
      %21 = math.rsqrt %20 : vector<1x128xf32>
      %c0_10 = arith.constant 0 : index
      %c0_11 = arith.constant 0 : index
      %22 = vector.load %arg4[%c0_10, %c0_11] : memref<1x128xf32, #tpu.memory_space<vmem>>, vector<1x128xf32>
      %23 = arith.mulf %22, %21 : vector<1x128xf32>
      %c0_12 = arith.constant 0 : index
      %c0_13 = arith.constant 0 : index
      %24 = vector.load %arg5[%c0_12, %c0_13] : memref<1x128xf32, #tpu.memory_space<vmem>>, vector<1x128xf32>
      %25 = arith.mulf %11, %23 : vector<1x128xf32>
      %26 = arith.subf %24, %25 : vector<1x128xf32>
      %27 = vector.broadcast %23 : vector<1x128xf32> to vector<256x128xf32>
      %28 = arith.mulf %8, %27 : vector<256x128xf32>
      %29 = vector.broadcast %26 : vector<1x128xf32> to vector<256x128xf32>
      %30 = arith.addf %28, %29 : vector<256x128xf32>
      %cst_14 = arith.constant 0.000000e+00 : f32
      %31 = vector.broadcast %cst_14 : f32 to vector<256x128xf32>
      %32 = arith.maximumf %30, %31 : vector<256x128xf32>
      %cst_15 = arith.constant 0.000000e+00 : bf16
      %33 = vector.broadcast %cst_15 : bf16 to vector<1x18x18x128xbf16>
      %c0_16 = arith.constant 0 : index
      %c0_17 = arith.constant 0 : index
      %c0_18 = arith.constant 0 : index
      %c0_19 = arith.constant 0 : index
      %34 = vector.load %arg6[%c0_16, %c0_17, %c0_18, %c0_19] : memref<1x18x18x128xbf16, #tpu.memory_space<vmem>>, vector<1x18x18x128xbf16>
      tpu.vector_store %arg6[%c0_16, %c0_17, %c0_18, %c0_19], %33 {strides = array<i32>} : memref<1x18x18x128xbf16, #tpu.memory_space<vmem>>, vector<1x18x18x128xbf16>,
      %35 = vector.shape_cast %32 : vector<256x128xf32> to vector<1x16x16x128xf32>
      %36 = arith.truncf %35 : vector<1x16x16x128xf32> to vector<1x16x16x128xbf16>
      %c0_20 = arith.constant 0 : index
      %c1 = arith.constant 1 : index
      %c1_21 = arith.constant 1 : index
      %c0_22 = arith.constant 0 : index
      %37 = vector.load %arg6[%c0_20, %c1, %c1_21, %c0_22] : memref<1x18x18x128xbf16, #tpu.memory_space<vmem>>, vector<1x16x16x128xbf16>
      tpu.vector_store %arg6[%c0_20, %c1, %c1_21, %c0_22], %36 {strides = array<i32>} : memref<1x18x18x128xbf16, #tpu.memory_space<vmem>>, vector<1x16x16x128xbf16>,
    } else {
    }
    return
  }
  func.func @transform_0(%arg0: i32, %arg1: i32) -> (i32, i32, i32, i32) {
    %c1_i32 = arith.constant 1 : i32
    %0 = arith.subi %c1_i32, %arg0 : i32
    %1 = arith.muli %0, %arg1 : i32
    %c1_i32_0 = arith.constant 1 : i32
    %2 = arith.muli %arg0, %c1_i32_0 : i32
    %3 = arith.addi %1, %2 : i32
    %c0_i32 = arith.constant 0 : i32
    %c0_i32_1 = arith.constant 0 : i32
    %c0_i32_2 = arith.constant 0 : i32
    %c0_i32_3 = arith.constant 0 : i32
    return %3, %c0_i32, %c0_i32_1, %c0_i32_2 : i32, i32, i32, i32
  }
  func.func @transform_1(%arg0: i32, %arg1: i32) -> (i32, i32, i32) {
    %c0_i32 = arith.constant 0 : i32
    %c0_i32_0 = arith.constant 0 : i32
    %c0_i32_1 = arith.constant 0 : i32
    %c0_i32_2 = arith.constant 0 : i32
    return %c0_i32, %c0_i32_0, %c0_i32_1 : i32, i32, i32
  }
  func.func @transform_2(%arg0: i32, %arg1: i32) -> (i32, i32) {
    %c0_i32 = arith.constant 0 : i32
    %c0_i32_0 = arith.constant 0 : i32
    %c0_i32_1 = arith.constant 0 : i32
    return %c0_i32, %c0_i32_0 : i32, i32
  }
  func.func @transform_3(%arg0: i32, %arg1: i32) -> (i32, i32) {
    %c0_i32 = arith.constant 0 : i32
    %c0_i32_0 = arith.constant 0 : i32
    %c0_i32_1 = arith.constant 0 : i32
    return %c0_i32, %c0_i32_0 : i32, i32
  }
  func.func @transform_4(%arg0: i32, %arg1: i32) -> (i32, i32, i32, i32) {
    %0 = arith.muli %arg0, %arg1 : i32
    %c0_i32 = arith.constant 0 : i32
    %c0_i32_0 = arith.constant 0 : i32
    %c0_i32_1 = arith.constant 0 : i32
    %c0_i32_2 = arith.constant 0 : i32
    return %0, %c0_i32, %c0_i32_0, %c0_i32_1 : i32, i32, i32, i32
  }
}

module attributes {stable_mosaic.version = 11 : i64} {
  func.func @_conv_bn_relu_kernel(%arg0: i32, %arg1: i32, %arg2: memref<1x18x18x128xbf16, #tpu.memory_space<vmem>>, %arg3: memref<3x384x128xbf16, #tpu.memory_space<vmem>>, %arg4: memref<1x128xf32, #tpu.memory_space<vmem>>, %arg5: memref<1x128xf32, #tpu.memory_space<vmem>>, %arg6: memref<1x16x16x128xf32, #tpu.memory_space<vmem>>, %arg7: memref<2x256x128xf32, #tpu.memory_space<vmem>>, %arg8: memref<1x128xf32, #tpu.memory_space<vmem>>, %arg9: memref<1x128xf32, #tpu.memory_space<vmem>>) attributes {dimension_semantics = [#tpu.dimension_semantics<arbitrary>, #tpu.dimension_semantics<arbitrary>], iteration_bounds = array<i64: 2, 2>, scalar_prefetch = 0 : i64, scratch_operands = 3 : i64, tpu.core_type = #tpu.core_type<tc>, window_params = [{transform_indices = @transform_0, window_bounds = array<i64: 1, 18, 18, 128>}, {pipeline_mode = #tpu.pipeline_mode<synchronous>, transform_indices = @transform_1, window_bounds = array<i64: 3, 384, 128>}, {pipeline_mode = #tpu.pipeline_mode<synchronous>, transform_indices = @transform_2, window_bounds = array<i64: 1, 128>}, {pipeline_mode = #tpu.pipeline_mode<synchronous>, transform_indices = @transform_3, window_bounds = array<i64: 1, 128>}, {transform_indices = @transform_4, window_bounds = array<i64: 1, 16, 16, 128>}]} {
    %c0_i32 = arith.constant 0 : i32
    %0 = arith.cmpi eq, %arg0, %c0_i32 : i32
    %1 = arith.extui %0 : i1 to i32
    %c0_i32_0 = arith.constant 0 : i32
    %2 = arith.cmpi ne, %1, %c0_i32_0 : i32
    scf.if %2 {
      %c0 = arith.constant 0 : index
      %c0_2 = arith.constant 0 : index
      %c0_3 = arith.constant 0 : index
      %c0_4 = arith.constant 0 : index
      %6 = vector.load %arg2[%c0, %c0_2, %c0_3, %c0_4] : memref<1x18x18x128xbf16, #tpu.memory_space<vmem>>, vector<1x18x16x128xbf16>
      %7 = vector.shape_cast %6 : vector<1x18x16x128xbf16> to vector<288x128xbf16>
      %c0_5 = arith.constant 0 : index
      %c0_6 = arith.constant 0 : index
      %c1 = arith.constant 1 : index
      %c0_7 = arith.constant 0 : index
      %8 = vector.load %arg2[%c0_5, %c0_6, %c1, %c0_7] : memref<1x18x18x128xbf16, #tpu.memory_space<vmem>>, vector<1x18x16x128xbf16>
      %9 = vector.shape_cast %8 : vector<1x18x16x128xbf16> to vector<288x128xbf16>
      %c0_8 = arith.constant 0 : index
      %c0_9 = arith.constant 0 : index
      %c2 = arith.constant 2 : index
      %c0_10 = arith.constant 0 : index
      %10 = vector.load %arg2[%c0_8, %c0_9, %c2, %c0_10] : memref<1x18x18x128xbf16, #tpu.memory_space<vmem>>, vector<1x18x16x128xbf16>
      %11 = vector.shape_cast %10 : vector<1x18x16x128xbf16> to vector<288x128xbf16>
      %cst = arith.constant 0.000000e+00 : f32
      %12 = vector.broadcast %cst : f32 to vector<256x128xf32>
      %13 = tpu.concatenate %7, %9, %11 in 1 : vector<288x128xbf16>, vector<288x128xbf16>, vector<288x128xbf16> -> vector<288x384xbf16>
      %14 = vector.extract_strided_slice %13 {offsets = [0, 0], sizes = [256, 384], strides = [1, 1]} : vector<288x384xbf16> to vector<256x384xbf16>
      %c0_11 = arith.constant 0 : index
      %c0_12 = arith.constant 0 : index
      %c0_13 = arith.constant 0 : index
      %15 = vector.load %arg3[%c0_11, %c0_12, %c0_13] : memref<3x384x128xbf16, #tpu.memory_space<vmem>>, vector<1x384x128xbf16>
      %16 = vector.shape_cast %15 : vector<1x384x128xbf16> to vector<384x128xbf16>
      %cst_14 = arith.constant dense<0.000000e+00> : vector<256x128xf32>
      %17 = tpu.matmul %14, %16, %cst_14 {dimension_numbers = #tpu.dot_dimension_numbers<[1], [0], [0], [1], [0, 0, 1, 1], [], []>} : vector<256x384xbf16>, vector<384x128xbf16>, vector<256x128xf32> -> vector<256x128xf32>
      %18 = arith.addf %12, %17 : vector<256x128xf32>
      %19 = vector.extract_strided_slice %13 {offsets = [16, 0], sizes = [256, 384], strides = [1, 1]} : vector<288x384xbf16> to vector<256x384xbf16>
      %c1_15 = arith.constant 1 : index
      %c0_16 = arith.constant 0 : index
      %c0_17 = arith.constant 0 : index
      %20 = vector.load %arg3[%c1_15, %c0_16, %c0_17] : memref<3x384x128xbf16, #tpu.memory_space<vmem>>, vector<1x384x128xbf16>
      %21 = vector.shape_cast %20 : vector<1x384x128xbf16> to vector<384x128xbf16>
      %cst_18 = arith.constant dense<0.000000e+00> : vector<256x128xf32>
      %22 = tpu.matmul %19, %21, %cst_18 {dimension_numbers = #tpu.dot_dimension_numbers<[1], [0], [0], [1], [0, 0, 1, 1], [], []>} : vector<256x384xbf16>, vector<384x128xbf16>, vector<256x128xf32> -> vector<256x128xf32>
      %23 = arith.addf %18, %22 : vector<256x128xf32>
      %24 = vector.extract_strided_slice %13 {offsets = [32, 0], sizes = [256, 384], strides = [1, 1]} : vector<288x384xbf16> to vector<256x384xbf16>
      %c2_19 = arith.constant 2 : index
      %c0_20 = arith.constant 0 : index
      %c0_21 = arith.constant 0 : index
      %25 = vector.load %arg3[%c2_19, %c0_20, %c0_21] : memref<3x384x128xbf16, #tpu.memory_space<vmem>>, vector<1x384x128xbf16>
      %26 = vector.shape_cast %25 : vector<1x384x128xbf16> to vector<384x128xbf16>
      %cst_22 = arith.constant dense<0.000000e+00> : vector<256x128xf32>
      %27 = tpu.matmul %24, %26, %cst_22 {dimension_numbers = #tpu.dot_dimension_numbers<[1], [0], [0], [1], [0, 0, 1, 1], [], []>} : vector<256x384xbf16>, vector<384x128xbf16>, vector<256x128xf32> -> vector<256x128xf32>
      %28 = arith.addf %23, %27 : vector<256x128xf32>
      %29 = arith.index_cast %arg1 : i32 to index
      %c0_23 = arith.constant 0 : index
      %c0_24 = arith.constant 0 : index
      %30 = vector.load %arg7[%29, %c0_23, %c0_24] : memref<2x256x128xf32, #tpu.memory_space<vmem>>, vector<1x256x128xf32>
      %31 = vector.shape_cast %30 : vector<1x256x128xf32> to vector<256x128xf32>
      %32 = vector.shape_cast %28 : vector<256x128xf32> to vector<1x256x128xf32>
      tpu.vector_store %arg7[%29, %c0_23, %c0_24], %32 {strides = array<i32>} : memref<2x256x128xf32, #tpu.memory_space<vmem>>, vector<1x256x128xf32>,
      %c0_i32_25 = arith.constant 0 : i32
      %33 = arith.cmpi eq, %arg1, %c0_i32_25 : i32
      %34 = arith.extui %33 : i1 to i32
      %c0_i32_26 = arith.constant 0 : i32
      %35 = arith.cmpi ne, %34, %c0_i32_26 : i32
      scf.if %35 {
        %cst_37 = arith.constant 0.000000e+00 : f32
        %47 = vector.broadcast %cst_37 : f32 to vector<1x128xf32>
        %c0_38 = arith.constant 0 : index
        %c0_39 = arith.constant 0 : index
        %48 = vector.load %arg8[%c0_38, %c0_39] : memref<1x128xf32, #tpu.memory_space<vmem>>, vector<1x128xf32>
        tpu.vector_store %arg8[%c0_38, %c0_39], %47 {strides = array<i32>} : memref<1x128xf32, #tpu.memory_space<vmem>>, vector<1x128xf32>,
        %cst_40 = arith.constant 0.000000e+00 : f32
        %49 = vector.broadcast %cst_40 : f32 to vector<1x128xf32>
        %c0_41 = arith.constant 0 : index
        %c0_42 = arith.constant 0 : index
        %50 = vector.load %arg9[%c0_41, %c0_42] : memref<1x128xf32, #tpu.memory_space<vmem>>, vector<1x128xf32>
        tpu.vector_store %arg9[%c0_41, %c0_42], %49 {strides = array<i32>} : memref<1x128xf32, #tpu.memory_space<vmem>>, vector<1x128xf32>,
      } else {
      }
      %c0_27 = arith.constant 0 : index
      %c0_28 = arith.constant 0 : index
      %36 = vector.load %arg8[%c0_27, %c0_28] : memref<1x128xf32, #tpu.memory_space<vmem>>, vector<1x128xf32>
      %cst_29 = arith.constant dense<0.000000e+00> : vector<128xf32>
      %37 = vector.multi_reduction <add>, %28, %cst_29 [0] : vector<256x128xf32> to vector<128xf32>
      %38 = vector.shape_cast %37 : vector<128xf32> to vector<1x128xf32>
      %39 = arith.addf %36, %38 : vector<1x128xf32>
      %c0_30 = arith.constant 0 : index
      %c0_31 = arith.constant 0 : index
      %40 = vector.load %arg8[%c0_30, %c0_31] : memref<1x128xf32, #tpu.memory_space<vmem>>, vector<1x128xf32>
      tpu.vector_store %arg8[%c0_30, %c0_31], %39 {strides = array<i32>} : memref<1x128xf32, #tpu.memory_space<vmem>>, vector<1x128xf32>,
      %c0_32 = arith.constant 0 : index
      %c0_33 = arith.constant 0 : index
      %41 = vector.load %arg9[%c0_32, %c0_33] : memref<1x128xf32, #tpu.memory_space<vmem>>, vector<1x128xf32>
      %42 = arith.mulf %28, %28 : vector<256x128xf32>
      %cst_34 = arith.constant dense<0.000000e+00> : vector<128xf32>
      %43 = vector.multi_reduction <add>, %42, %cst_34 [0] : vector<256x128xf32> to vector<128xf32>
      %44 = vector.shape_cast %43 : vector<128xf32> to vector<1x128xf32>
      %45 = arith.addf %41, %44 : vector<1x128xf32>
      %c0_35 = arith.constant 0 : index
      %c0_36 = arith.constant 0 : index
      %46 = vector.load %arg9[%c0_35, %c0_36] : memref<1x128xf32, #tpu.memory_space<vmem>>, vector<1x128xf32>
      tpu.vector_store %arg9[%c0_35, %c0_36], %45 {strides = array<i32>} : memref<1x128xf32, #tpu.memory_space<vmem>>, vector<1x128xf32>,
    } else {
    }
    %c1_i32 = arith.constant 1 : i32
    %3 = arith.cmpi eq, %arg0, %c1_i32 : i32
    %4 = arith.extui %3 : i1 to i32
    %c0_i32_1 = arith.constant 0 : i32
    %5 = arith.cmpi ne, %4, %c0_i32_1 : i32
    scf.if %5 {
      %6 = arith.index_cast %arg1 : i32 to index
      %c0 = arith.constant 0 : index
      %c0_2 = arith.constant 0 : index
      %7 = vector.load %arg7[%6, %c0, %c0_2] : memref<2x256x128xf32, #tpu.memory_space<vmem>>, vector<1x256x128xf32>
      %8 = vector.shape_cast %7 : vector<1x256x128xf32> to vector<256x128xf32>
      %c0_3 = arith.constant 0 : index
      %c0_4 = arith.constant 0 : index
      %9 = vector.load %arg8[%c0_3, %c0_4] : memref<1x128xf32, #tpu.memory_space<vmem>>, vector<1x128xf32>
      %cst = arith.constant 0.001953125 : f32
      %10 = vector.broadcast %cst : f32 to vector<1x128xf32>
      %11 = arith.mulf %9, %10 : vector<1x128xf32>
      %c0_5 = arith.constant 0 : index
      %c0_6 = arith.constant 0 : index
      %12 = vector.load %arg9[%c0_5, %c0_6] : memref<1x128xf32, #tpu.memory_space<vmem>>, vector<1x128xf32>
      %cst_7 = arith.constant 0.001953125 : f32
      %13 = vector.broadcast %cst_7 : f32 to vector<1x128xf32>
      %14 = arith.mulf %12, %13 : vector<1x128xf32>
      %15 = arith.mulf %11, %11 : vector<1x128xf32>
      %16 = arith.subf %14, %15 : vector<1x128xf32>
      %cst_8 = arith.constant 0.000000e+00 : f32
      %17 = vector.broadcast %cst_8 : f32 to vector<1x128xf32>
      %18 = arith.maximumf %16, %17 : vector<1x128xf32>
      %cst_9 = arith.constant 9.99999974E-6 : f32
      %19 = vector.broadcast %cst_9 : f32 to vector<1x128xf32>
      %20 = arith.addf %18, %19 : vector<1x128xf32>
      %21 = math.rsqrt %20 : vector<1x128xf32>
      %c0_10 = arith.constant 0 : index
      %c0_11 = arith.constant 0 : index
      %22 = vector.load %arg4[%c0_10, %c0_11] : memref<1x128xf32, #tpu.memory_space<vmem>>, vector<1x128xf32>
      %23 = arith.mulf %22, %21 : vector<1x128xf32>
      %c0_12 = arith.constant 0 : index
      %c0_13 = arith.constant 0 : index
      %24 = vector.load %arg5[%c0_12, %c0_13] : memref<1x128xf32, #tpu.memory_space<vmem>>, vector<1x128xf32>
      %25 = arith.mulf %11, %23 : vector<1x128xf32>
      %26 = arith.subf %24, %25 : vector<1x128xf32>
      %27 = vector.broadcast %23 : vector<1x128xf32> to vector<256x128xf32>
      %28 = arith.mulf %8, %27 : vector<256x128xf32>
      %29 = vector.broadcast %26 : vector<1x128xf32> to vector<256x128xf32>
      %30 = arith.addf %28, %29 : vector<256x128xf32>
      %cst_14 = arith.constant 0.000000e+00 : f32
      %31 = vector.broadcast %cst_14 : f32 to vector<256x128xf32>
      %32 = arith.maximumf %30, %31 : vector<256x128xf32>
      %33 = vector.shape_cast %32 : vector<256x128xf32> to vector<1x16x16x128xf32>
      %c0_15 = arith.constant 0 : index
      %c0_16 = arith.constant 0 : index
      %c0_17 = arith.constant 0 : index
      %c0_18 = arith.constant 0 : index
      %34 = vector.load %arg6[%c0_15, %c0_16, %c0_17, %c0_18] : memref<1x16x16x128xf32, #tpu.memory_space<vmem>>, vector<1x16x16x128xf32>
      tpu.vector_store %arg6[%c0_15, %c0_16, %c0_17, %c0_18], %33 {strides = array<i32>} : memref<1x16x16x128xf32, #tpu.memory_space<vmem>>, vector<1x16x16x128xf32>,
    } else {
    }
    return
  }
  func.func @transform_0(%arg0: i32, %arg1: i32) -> (i32, i32, i32, i32) {
    %c1_i32 = arith.constant 1 : i32
    %0 = arith.subi %c1_i32, %arg0 : i32
    %1 = arith.muli %0, %arg1 : i32
    %c1_i32_0 = arith.constant 1 : i32
    %2 = arith.muli %arg0, %c1_i32_0 : i32
    %3 = arith.addi %1, %2 : i32
    %c0_i32 = arith.constant 0 : i32
    %c0_i32_1 = arith.constant 0 : i32
    %c0_i32_2 = arith.constant 0 : i32
    %c0_i32_3 = arith.constant 0 : i32
    return %3, %c0_i32, %c0_i32_1, %c0_i32_2 : i32, i32, i32, i32
  }
  func.func @transform_1(%arg0: i32, %arg1: i32) -> (i32, i32, i32) {
    %c0_i32 = arith.constant 0 : i32
    %c0_i32_0 = arith.constant 0 : i32
    %c0_i32_1 = arith.constant 0 : i32
    %c0_i32_2 = arith.constant 0 : i32
    return %c0_i32, %c0_i32_0, %c0_i32_1 : i32, i32, i32
  }
  func.func @transform_2(%arg0: i32, %arg1: i32) -> (i32, i32) {
    %c0_i32 = arith.constant 0 : i32
    %c0_i32_0 = arith.constant 0 : i32
    %c0_i32_1 = arith.constant 0 : i32
    return %c0_i32, %c0_i32_0 : i32, i32
  }
  func.func @transform_3(%arg0: i32, %arg1: i32) -> (i32, i32) {
    %c0_i32 = arith.constant 0 : i32
    %c0_i32_0 = arith.constant 0 : i32
    %c0_i32_1 = arith.constant 0 : i32
    return %c0_i32, %c0_i32_0 : i32, i32
  }
  func.func @transform_4(%arg0: i32, %arg1: i32) -> (i32, i32, i32, i32) {
    %0 = arith.muli %arg0, %arg1 : i32
    %c0_i32 = arith.constant 0 : i32
    %c0_i32_0 = arith.constant 0 : i32
    %c0_i32_1 = arith.constant 0 : i32
    %c0_i32_2 = arith.constant 0 : i32
    return %0, %c0_i32, %c0_i32_0, %c0_i32_1 : i32, i32, i32, i32
  }
}

</mosaic_0001>

<llo_original>
// kernel: tile.6
$region0: #{tile.6}
  #allocation0 [shape = 's32[1]{0}', space=sflag, size = 0x4, scoped, tag = 'scoped memory for tile.6']
  %s0 = inlined_call_operand.vmem [shape: f32[4], index: 0, kind: input, shape index: {}]
  %s1 = inlined_call_operand.vmem [shape: f32[4,4], index: 1, kind: output, shape index: {}]
  // Predicated region
  $region2: #{tile.6} parent=0 // pred_check
    _
  $region3: #{tile.6} parent=0 // pred_check_branch
    %3 = sbr.rel (0) target = $region5
  $region4: #{tile.6} parent=0 // pred_region
    _
  $region5: #{tile.6} parent=0 // pred_fallthru
    _
  %v4 = vld [vmem:[%s0] ss:$0 sm:$0xff]
  %5 = vst [vmem:[%s1] sm:$0xf] %v4

// kernel: tile.7
$region0: #{tile.7}
  %s0 = inlined_call_operand.vmem [shape: f32[4,4], index: 0, kind: input, shape index: {}]
  %s1 = inlined_call_operand.vmem [shape: f32[16], index: 1, kind: output, shape index: {}]
  $region1: #{tile.7} parent=0
    #allocation0 [shape = 'u8[4096]{0}', space=vmem, size = 0x1000, scoped, tag = 'scoped mem for output reshape']
    #allocation1 [shape = 'u8[4096]{0}', space=vmem, size = 0x1000, scoped, tag = 'scoped mem for input reshape']
    %s3 = sshll.u32 1, 4
    %s4 = ssub.s32 %s3, 1
    %v5 = vld [vmem:[%s0] sm:%s4]
    %6 = vst [vmem:[#allocation1] sm:%s4] %v5
    %v7 = vld [vmem:[#allocation1] sm:$0x1]
    %vm8 = vcmask 31744
    %9 = vst.msk [vmem:[#allocation0] sm:$0x1] %vm8, %v7
    %s10 = scalar_lea.vmem [#allocation1], 3
    %v11 = vld [vmem:[%s10] sm:$0x1]
    %12 = vrot.lane.b32.xlu0 %v11, 12
    %v13 = vpop.permute.xlu0 %12
    %vm14 = vcmask 130144
    %15 = vst.msk [vmem:[#allocation0] sm:$0x1] %vm14, %v13
    %s16 = scalar_lea.vmem [#allocation1], 2
    %v17 = vld [vmem:[%s16] sm:$0x1]
    %18 = vrot.lane.b32.xlu0 %v17, 8
    %v19 = vpop.permute.xlu0 %18
    %vm20 = vcmask 97344
    %21 = vst.msk [vmem:[#allocation0] sm:$0x1] %vm20, %v19
    %s22 = scalar_lea.vmem [#allocation1], 1
    %v23 = vld [vmem:[%s22] sm:$0x1]
    %24 = vrot.lane.b32.xlu0 %v23, 4
    %v25 = vpop.permute.xlu0 %24
    %vm26 = vcmask 64544
    %27 = vst.msk [vmem:[#allocation0] sm:$0x1] %vm26, %v25
    %s29 = sshll.u32 1, 1
    %s30 = ssub.s32 %s29, 1
    %v32 = vld [vmem:[#allocation0] sm:%s30]
    %s33 = sshll.u32 1, 1
    %s34 = ssub.s32 %s33, 1
    %35 = vst [vmem:[%s1] sm:%s34] %v32

// kernel: up_module_forward.3
$region0: #{up_module_forward.3}
  #allocation0 [shape = 'u32[]', space=smem, size = 0x4, offset = 0x4, fixed_abs, tag = 'smem constant byte address 0x4 - core index']
  #allocation1 [shape = 'u32[144,128]{1,0:T(1,128)}', space=vmem, size = 0x12000, scoped, tag = 'internal scratch']
  %s0 = inlined_call_operand.vmem [shape: bf16[2,8,8,8], index: 0, kind: input, shape index: {}]
  %s1 = inlined_call_operand.vmem [shape: bf16[8,128], index: 1, kind: input, shape index: {}]
  %s2 = inlined_call_operand.vmem [shape: f32[1,128], index: 2, kind: input, shape index: {}]
  %s3 = inlined_call_operand.vmem [shape: bf16[2,8,8,128], index: 3, kind: output, shape index: {}]
  %s4 = sld [smem:[#allocation0]]
  $region45: #{up_module_forward.3} parent=0
    _
  %s6 = ssub.s32 1, %s4
  %s7 = scalar_select 0, %s6, %s4
  loop: start=0, step=1, limit=4
  $region2: #{up_module_forward.3} parent=0 // loop_pre_header
    _
  $region3: #{up_module_forward.3} parent=0 // loop_header
    %s9 = sphi 0, %s13
    %p10 = scmp.ge.s32.totalorder %s9, 4
    %s19 = sphi 0, %s21
    %s22 = sphi 0, %s19
    %s23 = sphi 0, %s22
    %s39 = sphi 0, %s23
    %s43 = sphi 0, %s43
    %s45 = sphi 0, %s43
    %s46 = sphi 0, %s45
    %s60 = sphi 0, %s46
    %s64 = sphi 0, %s64
    %s66 = sphi 0, %s64
    %s67 = sphi 0, %s66
    %s81 = sphi 0, %s67
    %s87 = sphi 0, %s89
    %s90 = sphi 0, %s87
    %s91 = sphi 0, %s90
    %s107 = sphi 0, %s91
  $region4: #{up_module_forward.3} parent=0 // loop_header_branch
    %12 = sbr.rel (%p10) target = $region8
  $region5: #{up_module_forward.3} parent=0 // loop_body
    %s14 = ssub.s32 %s9, 1
    %s15 = ssub.s32 %s9, 2
    %s16 = sadd.s32 %s9, 1
    %s17 = ssub.s32 %s9, %s16
    %p18 = scmp.eq.s32.totalorder %s17, 0
    %s20 = sadd.s32 %s19, 1
    %s21 = scalar_select %p18, %s19, %s20
    %p24 = pneg %p18
    %p25 = scmp.eq.s32.totalorder %s9, 1
    %p26 = por %p24, %p25
    %p27 = scmp.ne.s32.totalorder %s19, %s22
    %p28 = scmp.eq.s32.totalorder %s9, 0
    %p29 = por %p27, %p28
    %p30 = scmp.ne.s32.totalorder %s19, %s22
    %p31 = scmp.eq.s32.totalorder %s14, 1
    %p32 = por %p30, %p31
    %p33 = scmp.ne.s32.totalorder %s22, %s23
    %p34 = scmp.eq.s32.totalorder %s14, 0
    %p35 = por %p33, %p34
    %p36 = scmp.ne.s32.totalorder %s22, %s23
    %p37 = scmp.eq.s32.totalorder %s15, 1
    %p38 = por %p36, %p37
    %p40 = scmp.ne.s32.totalorder %s23, %s39
    %p41 = scmp.eq.s32.totalorder %s15, 0
    %p42 = por %p40, %p41
    %s44 = sadd.s32 %s43, 1
    %p47 = scmp.eq.s32.totalorder %s9, 1
    %p48 = scmp.ne.s32.totalorder %s43, %s45
    %p49 = scmp.eq.s32.totalorder %s9, 0
    %p50 = por %p48, %p49
    %p51 = scmp.ne.s32.totalorder %s43, %s45
    %p52 = scmp.eq.s32.totalorder %s14, 1
    %p53 = por %p51, %p52
    %p54 = scmp.ne.s32.totalorder %s45, %s46
    %p55 = scmp.eq.s32.totalorder %s14, 0
    %p56 = por %p54, %p55
    %p57 = scmp.ne.s32.totalorder %s45, %s46
    %p58 = scmp.eq.s32.totalorder %s15, 1
    %p59 = por %p57, %p58
    %p61 = scmp.ne.s32.totalorder %s46, %s60
    %p62 = scmp.eq.s32.totalorder %s15, 0
    %p63 = por %p61, %p62
    %s65 = sadd.s32 %s64, 1
    %p68 = scmp.eq.s32.totalorder %s9, 1
    %p69 = scmp.ne.s32.totalorder %s64, %s66
    %p70 = scmp.eq.s32.totalorder %s9, 0
    %p71 = por %p69, %p70
    %p72 = scmp.ne.s32.totalorder %s64, %s66
    %p73 = scmp.eq.s32.totalorder %s14, 1
    %p74 = por %p72, %p73
    %p75 = scmp.ne.s32.totalorder %s66, %s67
    %p76 = scmp.eq.s32.totalorder %s14, 0
    %p77 = por %p75, %p76
    %p78 = scmp.ne.s32.totalorder %s66, %s67
    %p79 = scmp.eq.s32.totalorder %s15, 1
    %p80 = por %p78, %p79
    %p82 = scmp.ne.s32.totalorder %s67, %s81
    %p83 = scmp.eq.s32.totalorder %s15, 0
    %p84 = por %p82, %p83
    %s85 = ssub.s32 %s9, %s16
    %p86 = scmp.eq.s32.totalorder %s85, 0
    %s88 = sadd.s32 %s87, 1
    %s89 = scalar_select %p86, %s87, %s88
    %p92 = pneg %p86
    %p93 = scmp.eq.s32.totalorder %s9, 1
    %p94 = por %p92, %p93
    %p95 = scmp.ne.s32.totalorder %s87, %s90
    %p96 = scmp.eq.s32.totalorder %s9, 0
    %p97 = por %p95, %p96
    %p98 = scmp.ne.s32.totalorder %s87, %s90
    %p99 = scmp.eq.s32.totalorder %s14, 1
    %p100 = por %p98, %p99
    %p101 = scmp.ne.s32.totalorder %s90, %s91
    %p102 = scmp.eq.s32.totalorder %s14, 0
    %p103 = por %p101, %p102
    %p104 = scmp.ne.s32.totalorder %s90, %s91
    %p105 = scmp.eq.s32.totalorder %s15, 1
    %p106 = por %p104, %p105
    %p108 = scmp.ne.s32.totalorder %s91, %s107
    %p109 = scmp.eq.s32.totalorder %s15, 0
    %p110 = por %p108, %p109
    %p111 = scmp.le.s32.totalorder 1, %s9
    %p112 = scmp.lt.s32.totalorder %s9, 3
    %p113 = pnand %p111, %p112
    %p114 = pneg %p113
    // Predicated region
    $region9: #{up_module_forward.3} parent=5 // pred_check
      _
    $region10: #{up_module_forward.3} parent=5 // pred_check_branch
      %116 = sbr.rel (%p113) target = $region12
    $region11: #{up_module_forward.3} parent=5 // pred_region
      %s117 = ssub.s32 %s9, 1
      // Predicated region
      $region13: #{up_module_forward.3} parent=11 // pred_check
        %p118 = pneg %p56
      $region14: #{up_module_forward.3} parent=11 // pred_check_branch
        %120 = sbr.rel (%p118) target = $region16
      $region15: #{up_module_forward.3} parent=11 // pred_region
        _
      $region16: #{up_module_forward.3} parent=11 // pred_fallthru
        _
      // Predicated region
      $region17: #{up_module_forward.3} parent=11 // pred_check
        %p121 = pneg %p77
      $region18: #{up_module_forward.3} parent=11 // pred_check_branch
        %123 = sbr.rel (%p121) target = $region20
      $region19: #{up_module_forward.3} parent=11 // pred_region
        _
      $region20: #{up_module_forward.3} parent=11 // pred_fallthru
        _
    $region12: #{up_module_forward.3} parent=5 // pred_fallthru
      _
    %p124 = scmp.lt.s32.totalorder %s9, 2
    // Predicated region
    $region21: #{up_module_forward.3} parent=5 // pred_check
      %p125 = pneg %p124
    $region22: #{up_module_forward.3} parent=5 // pred_check_branch
      %127 = sbr.rel (%p125) target = $region24
    $region23: #{up_module_forward.3} parent=5 // pred_region
      // Predicated region
      $region25: #{up_module_forward.3} parent=23 // pred_check
        %p128 = pneg %p29
      $region26: #{up_module_forward.3} parent=23 // pred_check_branch
        %130 = sbr.rel (%p128) target = $region28
      $region27: #{up_module_forward.3} parent=23 // pred_region
        %p131 = scmp.lt.s32.totalorder %s9, 1
        %s132 = scalar_select %p131, %s9, 1
        %s133 = smul.addr %s132, 8
        %s134 = smul.addr %s133, 4
        %s135 = scalar_lea.vmem %s0, %s134
      $region28: #{up_module_forward.3} parent=23 // pred_fallthru
        _
    $region24: #{up_module_forward.3} parent=5 // pred_fallthru
      _
    %p136 = scmp.le.s32.totalorder 1, %s9
    %p137 = scmp.lt.s32.totalorder %s9, 3
    %p138 = pnand %p136, %p137
    %p139 = pneg %p138
    // Predicated region
    $region29: #{up_module_forward.3} parent=5 // pred_check
      _
    $region30: #{up_module_forward.3} parent=5 // pred_check_branch
      %141 = sbr.rel (%p138) target = $region32
    $region31: #{up_module_forward.3} parent=5 // pred_region
      %s142 = ssub.s32 %s9, 1
      %p143 = scmp.lt.s32.totalorder %s14, 1
      %s144 = scalar_select %p143, %s14, 1
      %s145 = smul.addr %s144, 8
      %s146 = smul.addr %s145, 4
      %s147 = scalar_lea.vmem %s0, %s146
      %p148 = pneg %p35
      %p149 = pneg %p32
      %p150 = pneg %p56
      %p151 = pneg %p53
      %p152 = pneg %p77
      %p153 = pneg %p74
      %p154 = pneg %p103
      %p155 = pneg %p100
      %p156 = scmp.lt.s32.totalorder %s14, 1
      %s157 = scalar_select %p156, %s14, 1
      %s158 = smul.addr %s157, 8
      %s159 = smul.addr %s158, 4
      %s160 = scalar_lea.vmem %s3, %s159
      %p161 = scmp.lt.s32.totalorder %s14, 1
      %s162 = scalar_select %p161, %s14, 1
      %s163 = smul.addr %s162, 8
      %s164 = smul.addr %s163, 4
      %s165 = scalar_lea.vmem %s0, %s164
      %p166 = scmp.lt.s32.totalorder %s14, 1
      %s167 = scalar_select %p166, %s14, 1
      %s168 = smul.addr %s167, 8
      %s169 = smul.addr %s168, 4
      %s170 = scalar_lea.vmem %s3, %s169
      %v172 = vld [vmem:[%s165] sm:$0xf]
      %v173 = vld [vmem:[%s165 + $0x4] sm:$0xf]
      %v174 = vld [vmem:[%s165 + $0x8] sm:$0xf]
      %v175 = vld [vmem:[%s165 + $0xc] sm:$0xf]
      %v176 = vld [vmem:[%s165 + $0x10] sm:$0xf]
      %v177 = vld [vmem:[%s165 + $0x14] sm:$0xf]
      %v178 = vld [vmem:[%s165 + $0x18] sm:$0xf]
      %v179 = vld [vmem:[%s165 + $0x1c] sm:$0xf]
      %v180 = vld [vmem:[%s1] sm:$0xf]
      %v181 = vld [vmem:[%s2] sm:$0x1]
      %v183 = vlaneseq
      %v184 = vshrl.u32 %v183, 7
      %v185 = vsub.s32 0, %v184
      %v186 = vrot.slane %v181, %v185
      %v196 = vunpack.c.l.b16 %v172
      %v197 = vunpack.c.l.b16 %v173
      %v198 = vunpack.c.l.b16 %v174
      %v199 = vunpack.c.l.b16 %v175
      %v200 = vunpack.c.l.b16 %v176
      %v201 = vunpack.c.l.b16 %v177
      %v202 = vunpack.c.l.b16 %v178
      %v203 = vunpack.c.l.b16 %v179
      %v204 = vpack.c.b16 %v197, %v196
      %v205 = vpack.c.b16 %v199, %v198
      %v206 = vpack.c.b16 %v201, %v200
      %v207 = vpack.c.b16 %v203, %v202
      %vm208 = vcmask 64512
      %v210 = vsel %vm208, %v204, 0
      %v213 = vsel %vm208, %v205, 0
      %v216 = vsel %vm208, %v206, 0
      %v219 = vsel %vm208, %v207, 0
      %vm221 = vcmask 1043456
      %v223 = vsel %vm221, %v180, 0
      %225 = vmatprep.subr.bf16.mxu0 0
      %226 = vmatpush1.bf16.msra.mxu0 0
      %227 = vmatprep.subr.bf16.mxu0 0
      %228 = vmatpush1.bf16.msra.mxu0 0
      %229 = vmatprep.subr.bf16.mxu0 0
      %230 = vmatpush1.bf16.msra.mxu0 0
      %231 = vmatprep.subr.bf16.mxu0 0
      %232 = vmatpush1.bf16.msra.mxu0 0
      %233 = vmatprep.subr.bf16.mxu0 0
      %234 = vmatpush1.bf16.msra.mxu0 0
      %235 = vmatprep.subr.bf16.mxu0 0
      %236 = vmatpush1.bf16.msra.mxu0 0
      %237 = vmatprep.subr.bf16.mxu0 0
      %238 = vmatpush1.bf16.msra.mxu0 0
      %239 = vmatprep.subr.bf16.mxu0 0
      %240 = vmatpush1.bf16.msra.mxu0 %v223
      %241 = vmatprep.subr.bf16.mxu0 0
      %242 = vmatpush2.bf16.msra.mxu0 0
      %243 = vmatprep.subr.bf16.mxu0 0
      %244 = vmatpush2.bf16.msra.mxu0 0
      %245 = vmatprep.subr.bf16.mxu0 0
      %246 = vmatpush2.bf16.msra.mxu0 0
      %247 = vmatprep.subr.bf16.mxu0 0
      %248 = vmatpush2.bf16.msra.mxu0 0
      %249 = vmatprep.subr.bf16.mxu0 0
      %250 = vmatpush2.bf16.msra.mxu0 0
      %251 = vmatprep.subr.bf16.mxu0 0
      %252 = vmatpush2.bf16.msra.mxu0 0
      %253 = vmatprep.subr.bf16.mxu0 0
      %254 = vmatpush2.bf16.msra.mxu0 0
      %255 = vmatprep.subr.bf16.mxu0 0
      %256 = vmatpush2.bf16.msra.mxu0 0
      %257 = vmatprep.mubr.bf16.mxu0 0
      %258 = vmatmul.mubr.bf16.gmra.mxu0 %v210
      %v259 = vpop.f32.mrf.mxu0
      %v260 = vadd.f32 %v186, %v259
      %v261 = vpop.f32.mrf.mxu0
      %v262 = vpop.f32.mrf.mxu0
      %v263 = vadd.f32 %v186, %v262
      %v264 = vpop.f32.mrf.mxu0
      %265 = vmatprep.mubr.bf16.mxu0 0
      %266 = vmatmul.mubr.bf16.gmra.mxu0 %v213
      %v267 = vpop.f32.mrf.mxu0
      %v268 = vadd.f32 %v186, %v267
      %v269 = vpop.f32.mrf.mxu0
      %v270 = vpop.f32.mrf.mxu0
      %v271 = vadd.f32 %v186, %v270
      %v272 = vpop.f32.mrf.mxu0
      %273 = vmatprep.mubr.bf16.mxu0 0
      %274 = vmatmul.mubr.bf16.gmra.mxu0 %v216
      %v275 = vpop.f32.mrf.mxu0
      %v276 = vadd.f32 %v186, %v275
      %v277 = vpop.f32.mrf.mxu0
      %v278 = vpop.f32.mrf.mxu0
      %v279 = vadd.f32 %v186, %v278
      %v280 = vpop.f32.mrf.mxu0
      %281 = vmatprep.mubr.bf16.mxu0 0
      %282 = vmatmul.mubr.bf16.gmra.mxu0 %v219
      %v283 = vpop.f32.mrf.mxu0
      %v284 = vadd.f32 %v186, %v283
      %v285 = vpop.f32.mrf.mxu0
      %v286 = vpop.f32.mrf.mxu0
      %v287 = vadd.f32 %v186, %v286
      %v288 = vpop.f32.mrf.mxu0
      %289 = vdwg.mxu0
      %v290 = vpack.c.bf16 %v260, %v260
      %v291 = vpack.c.bf16 %v263, %v263
      %v292 = vpack.c.bf16 %v268, %v268
      %v293 = vpack.c.bf16 %v271, %v271
      %v294 = vpack.c.bf16 %v276, %v276
      %v295 = vpack.c.bf16 %v279, %v279
      %v296 = vpack.c.bf16 %v284, %v284
      %v297 = vpack.c.bf16 %v287, %v287
      %298 = vst [vmem:[%s170] sm:$0xf] %v290
      %299 = vst [vmem:[%s170 + $0x4] sm:$0xf] %v291
      %300 = vst [vmem:[%s170 + $0x8] sm:$0xf] %v292
      %301 = vst [vmem:[%s170 + $0xc] sm:$0xf] %v293
      %302 = vst [vmem:[%s170 + $0x10] sm:$0xf] %v294
      %303 = vst [vmem:[%s170 + $0x14] sm:$0xf] %v295
      %304 = vst [vmem:[%s170 + $0x18] sm:$0xf] %v296
      %305 = vst [vmem:[%s170 + $0x1c] sm:$0xf] %v297
      %p306 = scmp.lt.s32.totalorder %s14, 1
      %s307 = scalar_select %p306, %s14, 1
      %s308 = smul.addr %s307, 8
      %s309 = smul.addr %s308, 4
      %s310 = scalar_lea.vmem %s3, %s309
      // Predicated region
      $region33: #{up_module_forward.3} parent=31 // pred_check
        %p311 = pneg %p100
      $region34: #{up_module_forward.3} parent=31 // pred_check_branch
        %313 = sbr.rel (%p311) target = $region36
      $region35: #{up_module_forward.3} parent=31 // pred_region
        _
      $region36: #{up_module_forward.3} parent=31 // pred_fallthru
        _
    $region32: #{up_module_forward.3} parent=5 // pred_fallthru
      _
    %p314 = scmp.le.s32.totalorder 2, %s9
    // Predicated region
    $region37: #{up_module_forward.3} parent=5 // pred_check
      %p315 = pneg %p314
    $region38: #{up_module_forward.3} parent=5 // pred_check_branch
      %317 = sbr.rel (%p315) target = $region40
    $region39: #{up_module_forward.3} parent=5 // pred_region
      %s318 = ssub.s32 %s9, 2
      // Predicated region
      $region41: #{up_module_forward.3} parent=39 // pred_check
        %p319 = pneg %p106
      $region42: #{up_module_forward.3} parent=39 // pred_check_branch
        %321 = sbr.rel (%p319) target = $region44
      $region43: #{up_module_forward.3} parent=39 // pred_region
        %p322 = scmp.lt.s32.totalorder %s15, 1
        %s323 = scalar_select %p322, %s15, 1
        %s324 = smul.addr %s323, 8
        %s325 = smul.addr %s324, 4
        %s326 = scalar_lea.vmem %s3, %s325
      $region44: #{up_module_forward.3} parent=39 // pred_fallthru
        _
    $region40: #{up_module_forward.3} parent=5 // pred_fallthru
      _
  $region6: #{up_module_forward.3} parent=0 // loop_footer
    %s13 = sadd.s32 1, %s9
  $region7: #{up_module_forward.3} parent=0 // loop_footer_branch
    %8 = sbr.rel target = $region3
  $region8: #{up_module_forward.3} parent=0 // loop_exit
    _

// kernel: up_module_forward.4
$region0: #{up_module_forward.4}
  #allocation0 [shape = 'u32[]', space=smem, size = 0x4, offset = 0x4, fixed_abs, tag = 'smem constant byte address 0x4 - core index']
  #allocation1 [shape = 'u32[144,128]{1,0:T(1,128)}', space=vmem, size = 0x12000, scoped, tag = 'internal scratch']
  #allocation2 [shape = 'f32[2,256,128]{2,1,0:T(8,128)}', space=vmem, size = 0x40000, scoped, tag = 'scratch operand']
  #allocation3 [shape = 'f32[1,128]{1,0:T(1,128)}', space=vmem, size = 0x200, scoped, tag = 'scratch operand']
  #allocation4 [shape = 'f32[1,128]{1,0:T(1,128)}', space=vmem, size = 0x200, scoped, tag = 'scratch operand']
  %s0 = inlined_call_operand.vmem [shape: bf16[2,18,18,8], index: 0, kind: input, shape index: {}]
  %s1 = inlined_call_operand.vmem [shape: bf16[3,24,128], index: 1, kind: input, shape index: {}]
  %s2 = inlined_call_operand.vmem [shape: f32[1,128], index: 2, kind: input, shape index: {}]
  %s3 = inlined_call_operand.vmem [shape: f32[1,128], index: 3, kind: input, shape index: {}]
  %s4 = inlined_call_operand.vmem [shape: bf16[2,18,18,128], index: 4, kind: output, shape index: {}]
  %s5 = sld [smem:[#allocation0]]
  $region61: #{up_module_forward.4} parent=0
    _
  %s7 = ssub.s32 1, %s5
  %s8 = scalar_select 0, %s7, %s5
  loop: start=0, step=1, limit=6
  $region2: #{up_module_forward.4} parent=0 // loop_pre_header
    _
  $region3: #{up_module_forward.4} parent=0 // loop_header
    %s10 = sphi 0, %s14
    %p11 = scmp.ge.s32.totalorder %s10, 6
    %s17 = sphi 0, %s29
    %s18 = sphi 0, %s25
    %s19 = sphi 0, %s17
    %s20 = sphi 0, %s18
    %s21 = sphi 0, %s19
    %s22 = sphi 0, %s20
    %s38 = sphi 0, %s40
    %s41 = sphi 0, %s38
    %s42 = sphi 0, %s41
    %s58 = sphi 0, %s42
    %s62 = sphi 0, %s62
    %s64 = sphi 0, %s62
    %s65 = sphi 0, %s64
    %s79 = sphi 0, %s65
    %s83 = sphi 0, %s83
    %s85 = sphi 0, %s83
    %s86 = sphi 0, %s85
    %s100 = sphi 0, %s86
    %s104 = sphi 0, %s104
    %s106 = sphi 0, %s104
    %s107 = sphi 0, %s106
    %s121 = sphi 0, %s107
    %s129 = sphi 0, %s131
    %s132 = sphi 0, %s129
    %s133 = sphi 0, %s132
    %s149 = sphi 0, %s133
  $region4: #{up_module_forward.4} parent=0 // loop_header_branch
    %13 = sbr.rel (%p11) target = $region8
  $region5: #{up_module_forward.4} parent=0 // loop_body
    %s15 = ssub.s32 %s10, 1
    %s16 = ssub.s32 %s10, 2
    %s23 = sadd.s32 1, %s18
    %p24 = scmp.ge.s32.totalorder %s23, 2
    %s25 = scalar_select %p24, 0, %s23
    %s26 = sadd.s32 1, %s17
    %s27 = scalar_select %p24, %s26, %s17
    %p28 = scmp.ge.s32.totalorder %s27, 2
    %s29 = scalar_select %p28, 0, %s27
    %s30 = ssub.s32 1, %s17
    %s31 = smul.u32 %s30, %s18
    %s32 = sadd.s32 %s31, %s17
    %s33 = ssub.s32 1, %s29
    %s34 = smul.u32 %s33, %s25
    %s35 = sadd.s32 %s34, %s29
    %s36 = ssub.s32 %s32, %s35
    %p37 = scmp.eq.s32.totalorder %s36, 0
    %s39 = sadd.s32 %s38, 1
    %s40 = scalar_select %p37, %s38, %s39
    %p43 = pneg %p37
    %p44 = scmp.eq.s32.totalorder %s10, 3
    %p45 = por %p43, %p44
    %p46 = scmp.ne.s32.totalorder %s38, %s41
    %p47 = scmp.eq.s32.totalorder %s10, 0
    %p48 = por %p46, %p47
    %p49 = scmp.ne.s32.totalorder %s38, %s41
    %p50 = scmp.eq.s32.totalorder %s15, 3
    %p51 = por %p49, %p50
    %p52 = scmp.ne.s32.totalorder %s41, %s42
    %p53 = scmp.eq.s32.totalorder %s15, 0
    %p54 = por %p52, %p53
    %p55 = scmp.ne.s32.totalorder %s41, %s42
    %p56 = scmp.eq.s32.totalorder %s16, 3
    %p57 = por %p55, %p56
    %p59 = scmp.ne.s32.totalorder %s42, %s58
    %p60 = scmp.eq.s32.totalorder %s16, 0
    %p61 = por %p59, %p60
    %s63 = sadd.s32 %s62, 1
    %p66 = scmp.eq.s32.totalorder %s10, 3
    %p67 = scmp.ne.s32.totalorder %s62, %s64
    %p68 = scmp.eq.s32.totalorder %s10, 0
    %p69 = por %p67, %p68
    %p70 = scmp.ne.s32.totalorder %s62, %s64
    %p71 = scmp.eq.s32.totalorder %s15, 3
    %p72 = por %p70, %p71
    %p73 = scmp.ne.s32.totalorder %s64, %s65
    %p74 = scmp.eq.s32.totalorder %s15, 0
    %p75 = por %p73, %p74
    %p76 = scmp.ne.s32.totalorder %s64, %s65
    %p77 = scmp.eq.s32.totalorder %s16, 3
    %p78 = por %p76, %p77
    %p80 = scmp.ne.s32.totalorder %s65, %s79
    %p81 = scmp.eq.s32.totalorder %s16, 0
    %p82 = por %p80, %p81
    %s84 = sadd.s32 %s83, 1
    %p87 = scmp.eq.s32.totalorder %s10, 3
    %p88 = scmp.ne.s32.totalorder %s83, %s85
    %p89 = scmp.eq.s32.totalorder %s10, 0
    %p90 = por %p88, %p89
    %p91 = scmp.ne.s32.totalorder %s83, %s85
    %p92 = scmp.eq.s32.totalorder %s15, 3
    %p93 = por %p91, %p92
    %p94 = scmp.ne.s32.totalorder %s85, %s86
    %p95 = scmp.eq.s32.totalorder %s15, 0
    %p96 = por %p94, %p95
    %p97 = scmp.ne.s32.totalorder %s85, %s86
    %p98 = scmp.eq.s32.totalorder %s16, 3
    %p99 = por %p97, %p98
    %p101 = scmp.ne.s32.totalorder %s86, %s100
    %p102 = scmp.eq.s32.totalorder %s16, 0
    %p103 = por %p101, %p102
    %s105 = sadd.s32 %s104, 1
    %p108 = scmp.eq.s32.totalorder %s10, 3
    %p109 = scmp.ne.s32.totalorder %s104, %s106
    %p110 = scmp.eq.s32.totalorder %s10, 0
    %p111 = por %p109, %p110
    %p112 = scmp.ne.s32.totalorder %s104, %s106
    %p113 = scmp.eq.s32.totalorder %s15, 3
    %p114 = por %p112, %p113
    %p115 = scmp.ne.s32.totalorder %s106, %s107
    %p116 = scmp.eq.s32.totalorder %s15, 0
    %p117 = por %p115, %p116
    %p118 = scmp.ne.s32.totalorder %s106, %s107
    %p119 = scmp.eq.s32.totalorder %s16, 3
    %p120 = por %p118, %p119
    %p122 = scmp.ne.s32.totalorder %s107, %s121
    %p123 = scmp.eq.s32.totalorder %s16, 0
    %p124 = por %p122, %p123
    %s125 = smul.u32 %s17, %s18
    %s126 = smul.u32 %s29, %s25
    %s127 = ssub.s32 %s125, %s126
    %p128 = scmp.eq.s32.totalorder %s127, 0
    %s130 = sadd.s32 %s129, 1
    %s131 = scalar_select %p128, %s129, %s130
    %p134 = pneg %p128
    %p135 = scmp.eq.s32.totalorder %s10, 3
    %p136 = por %p134, %p135
    %p137 = scmp.ne.s32.totalorder %s129, %s132
    %p138 = scmp.eq.s32.totalorder %s10, 0
    %p139 = por %p137, %p138
    %p140 = scmp.ne.s32.totalorder %s129, %s132
    %p141 = scmp.eq.s32.totalorder %s15, 3
    %p142 = por %p140, %p141
    %p143 = scmp.ne.s32.totalorder %s132, %s133
    %p144 = scmp.eq.s32.totalorder %s15, 0
    %p145 = por %p143, %p144
    %p146 = scmp.ne.s32.totalorder %s132, %s133
    %p147 = scmp.eq.s32.totalorder %s16, 3
    %p148 = por %p146, %p147
    %p150 = scmp.ne.s32.totalorder %s133, %s149
    %p151 = scmp.eq.s32.totalorder %s16, 0
    %p152 = por %p150, %p151
    %p153 = scmp.le.s32.totalorder 1, %s10
    %p154 = scmp.lt.s32.totalorder %s10, 5
    %p155 = pnand %p153, %p154
    %p156 = pneg %p155
    // Predicated region
    $region9: #{up_module_forward.4} parent=5 // pred_check
      _
    $region10: #{up_module_forward.4} parent=5 // pred_check_branch
      %158 = sbr.rel (%p155) target = $region12
    $region11: #{up_module_forward.4} parent=5 // pred_region
      %s159 = ssub.s32 %s10, 1
      // Predicated region
      $region13: #{up_module_forward.4} parent=11 // pred_check
        %p160 = pneg %p75
      $region14: #{up_module_forward.4} parent=11 // pred_check_branch
        %162 = sbr.rel (%p160) target = $region16
      $region15: #{up_module_forward.4} parent=11 // pred_region
        _
      $region16: #{up_module_forward.4} parent=11 // pred_fallthru
        _
      // Predicated region
      $region17: #{up_module_forward.4} parent=11 // pred_check
        %p163 = pneg %p96
      $region18: #{up_module_forward.4} parent=11 // pred_check_branch
        %165 = sbr.rel (%p163) target = $region20
      $region19: #{up_module_forward.4} parent=11 // pred_region
        _
      $region20: #{up_module_forward.4} parent=11 // pred_fallthru
        _
      // Predicated region
      $region21: #{up_module_forward.4} parent=11 // pred_check
        %p166 = pneg %p117
      $region22: #{up_module_forward.4} parent=11 // pred_check_branch
        %168 = sbr.rel (%p166) target = $region24
      $region23: #{up_module_forward.4} parent=11 // pred_region
        _
      $region24: #{up_module_forward.4} parent=11 // pred_fallthru
        _
    $region12: #{up_module_forward.4} parent=5 // pred_fallthru
      _
    %p169 = scmp.lt.s32.totalorder %s10, 4
    // Predicated region
    $region25: #{up_module_forward.4} parent=5 // pred_check
      %p170 = pneg %p169
    $region26: #{up_module_forward.4} parent=5 // pred_check_branch
      %172 = sbr.rel (%p170) target = $region28
    $region27: #{up_module_forward.4} parent=5 // pred_region
      // Predicated region
      $region29: #{up_module_forward.4} parent=27 // pred_check
        %p173 = pneg %p48
      $region30: #{up_module_forward.4} parent=27 // pred_check_branch
        %175 = sbr.rel (%p173) target = $region32
      $region31: #{up_module_forward.4} parent=27 // pred_region
        %s176 = ssub.s32 1, %s17
        %s177 = smul.u32 %s176, %s18
        %s178 = sadd.s32 %s177, %s17
        %p179 = scmp.lt.s32.totalorder %s178, 1
        %s180 = scalar_select %p179, %s178, 1
        %s181 = smul.addr %s180, 54
        %s182 = smul.addr %s181, 4
        %s183 = scalar_lea.vmem %s0, %s182
        %s184 = ssub.s32 1, %s17
        %s185 = smul.u32 %s184, %s18
        %s186 = sadd.s32 %s185, %s17
      $region32: #{up_module_forward.4} parent=27 // pred_fallthru
        _
    $region28: #{up_module_forward.4} parent=5 // pred_fallthru
      _
    %p187 = scmp.le.s32.totalorder 1, %s10
    %p188 = scmp.lt.s32.totalorder %s10, 5
    %p189 = pnand %p187, %p188
    %p190 = pneg %p189
    // Predicated region
    $region33: #{up_module_forward.4} parent=5 // pred_check
      _
    $region34: #{up_module_forward.4} parent=5 // pred_check_branch
      %192 = sbr.rel (%p189) target = $region36
    $region35: #{up_module_forward.4} parent=5 // pred_region
      %s193 = ssub.s32 %s10, 1
      %s194 = ssub.s32 1, %s19
      %s195 = smul.u32 %s194, %s20
      %s196 = sadd.s32 %s195, %s19
      %p197 = scmp.lt.s32.totalorder %s196, 1
      %s198 = scalar_select %p197, %s196, 1
      %s199 = smul.addr %s198, 54
      %s200 = smul.addr %s199, 4
      %s201 = scalar_lea.vmem %s0, %s200
      %p202 = pneg %p54
      %p203 = pneg %p51
      %p204 = pneg %p75
      %p205 = pneg %p72
      %p206 = pneg %p96
      %p207 = pneg %p93
      %p208 = pneg %p117
      %p209 = pneg %p114
      %p210 = pneg %p145
      %p211 = pneg %p142
      %s212 = smul.u32 %s19, %s20
      %p213 = scmp.lt.s32.totalorder %s212, 1
      %s214 = scalar_select %p213, %s212, 1
      %s215 = smul.addr %s214, 54
      %s216 = smul.addr %s215, 4
      %s217 = scalar_lea.vmem %s4, %s216
      %s218 = ssub.s32 1, %s19
      %s219 = smul.u32 %s218, %s20
      %s220 = sadd.s32 %s219, %s19
      %p221 = scmp.lt.s32.totalorder %s220, 1
      %s222 = scalar_select %p221, %s220, 1
      %s223 = smul.addr %s222, 54
      %s224 = smul.addr %s223, 4
      %s225 = scalar_lea.vmem %s0, %s224
      %s226 = ssub.s32 1, %s19
      %s227 = smul.u32 %s226, %s20
      %s228 = sadd.s32 %s227, %s19
      %s229 = smul.u32 %s19, %s20
      %p230 = scmp.lt.s32.totalorder %s229, 1
      %s231 = scalar_select %p230, %s229, 1
      %s232 = smul.addr %s231, 54
      %s233 = smul.addr %s232, 4
      %s234 = scalar_lea.vmem %s4, %s233
      %s235 = smul.u32 %s19, %s20
      %p237 = scmp.eq.s32.totalorder %s19, 0
      // Predicated region
      $region37: #{up_module_forward.4} parent=35 // pred_check
        %p238 = pneg %p237
      $region38: #{up_module_forward.4} parent=35 // pred_check_branch
        %240 = sbr.rel (%p238) target = $region40
      $region39: #{up_module_forward.4} parent=35 // pred_region
        %v241 = vld [vmem:[%s225] sm:$0xf]
        %v242 = vld [vmem:[%s225 + $0x4] sm:$0xf]
        %v243 = vld [vmem:[%s225 + $0xc] sm:$0xf]
        %v244 = vld [vmem:[%s225 + $0x10] sm:$0xf]
        %v245 = vld [vmem:[%s225 + $0x18] sm:$0xf]
        %v246 = vld [vmem:[%s225 + $0x1c] sm:$0xf]
        %v247 = vld [vmem:[%s225 + $0x24] sm:$0xf]
        %v248 = vld [vmem:[%s225 + $0x28] sm:$0xf]
        %v249 = vld [vmem:[%s225 + $0x30] sm:$0xf]
        %v250 = vld [vmem:[%s225 + $0x34] sm:$0xf]
        %v251 = vld [vmem:[%s225 + $0x3c] sm:$0xf]
        %v252 = vld [vmem:[%s225 + $0x40] sm:$0xf]
        %v253 = vld [vmem:[%s225 + $0x48] sm:$0xf]
        %v254 = vld [vmem:[%s225 + $0x4c] sm:$0xf]
        %v255 = vld [vmem:[%s225 + $0x54] sm:$0xf]
        %v256 = vld [vmem:[%s225 + $0x58] sm:$0xf]
        %v257 = vld [vmem:[%s225 + $0x60] sm:$0xf]
        %v258 = vld [vmem:[%s225 + $0x64] sm:$0xf]
        %v259 = vld [vmem:[%s225 + $0x6c] sm:$0xf]
        %v260 = vld [vmem:[%s225 + $0x70] sm:$0xf]
        %v261 = vld [vmem:[%s225 + $0x78] sm:$0xf]
        %v262 = vld [vmem:[%s225 + $0x7c] sm:$0xf]
        %v263 = vld [vmem:[%s225 + $0x84] sm:$0xf]
        %v264 = vld [vmem:[%s225 + $0x88] sm:$0xf]
        %v265 = vld [vmem:[%s225 + $0x90] sm:$0xf]
        %v266 = vld [vmem:[%s225 + $0x94] sm:$0xf]
        %v267 = vld [vmem:[%s225 + $0x9c] sm:$0xf]
        %v268 = vld [vmem:[%s225 + $0xa0] sm:$0xf]
        %v269 = vld [vmem:[%s225 + $0xa8] sm:$0xf]
        %v270 = vld [vmem:[%s225 + $0xac] sm:$0xf]
        %v271 = vld [vmem:[%s225 + $0xb4] sm:$0xf]
        %v272 = vld [vmem:[%s225 + $0xb8] sm:$0xf]
        %v273 = vld [vmem:[%s225 + $0xc0] sm:$0xf]
        %v274 = vld [vmem:[%s225 + $0xc4] sm:$0xf]
        %v275 = vld [vmem:[%s225 + $0xcc] sm:$0xf]
        %v276 = vld [vmem:[%s225 + $0xd0] sm:$0xf]
        %v277 = vld [vmem:[%s225 + $0x8] sm:$0x1]
        %v278 = vld [vmem:[%s225 + $0x14] sm:$0x1]
        %v279 = vld [vmem:[%s225 + $0x20] sm:$0x1]
        %v280 = vld [vmem:[%s225 + $0x2c] sm:$0x1]
        %v281 = vld [vmem:[%s225 + $0x38] sm:$0x1]
        %v282 = vld [vmem:[%s225 + $0x44] sm:$0x1]
        %v283 = vld [vmem:[%s225 + $0x50] sm:$0x1]
        %v284 = vld [vmem:[%s225 + $0x5c] sm:$0x1]
        %v285 = vld [vmem:[%s225 + $0x68] sm:$0x1]
        %v286 = vld [vmem:[%s225 + $0x74] sm:$0x1]
        %v287 = vld [vmem:[%s225 + $0x80] sm:$0x1]
        %v288 = vld [vmem:[%s225 + $0x8c] sm:$0x1]
        %v289 = vld [vmem:[%s225 + $0x98] sm:$0x1]
        %v290 = vld [vmem:[%s225 + $0xa4] sm:$0x1]
        %v291 = vld [vmem:[%s225 + $0xb0] sm:$0x1]
        %v292 = vld [vmem:[%s225 + $0xbc] sm:$0x1]
        %v293 = vld [vmem:[%s225 + $0xc8] sm:$0x1]
        %v294 = vld [vmem:[%s225 + $0xd4] sm:$0x1]
        %vm295 = vsmask.f32 3328
        %vm296 = vsmask.f32 7440
        %vm297 = vmor %vm295, %vm296
        %v299 = vshrl.u32 %v241, 16
        %v301 = vrot.slane %v299, 4
        %v302 = vshll.u32 %v241, 16
        %v304 = vrot.slane %v302, 5
        %v305 = vor.u32 %v301, %v304
        %v306 = vrot.slane %v305, 4
        %v308 = vshll.u32 %v242, 16
        %v310 = vrot.slane %v308, 5
        %v311 = vsel %vm297, %v306, %v310
        %v312 = vshrl.u32 %v242, 16
        %v314 = vrot.slane %v312, 4
        %v315 = vor.u32 %v314, %v310
        %v316 = vrot.slane %v315, 4
        %v318 = vshll.u32 %v277, 16
        %v320 = vrot.slane %v318, 5
        %v321 = vsel %vm297, %v316, %v320
        %v323 = vshrl.u32 %v243, 16
        %v325 = vrot.slane %v323, 4
        %v326 = vshll.u32 %v243, 16
        %v328 = vrot.slane %v326, 5
        %v329 = vor.u32 %v325, %v328
        %v330 = vrot.slane %v329, 4
        %v332 = vshll.u32 %v244, 16
        %v334 = vrot.slane %v332, 5
        %v335 = vsel %vm297, %v330, %v334
        %v336 = vshrl.u32 %v244, 16
        %v338 = vrot.slane %v336, 4
        %v339 = vor.u32 %v338, %v334
        %v340 = vrot.slane %v339, 4
        %v342 = vshll.u32 %v278, 16
        %v344 = vrot.slane %v342, 5
        %v345 = vsel %vm297, %v340, %v344
        %v347 = vshrl.u32 %v245, 16
        %v349 = vrot.slane %v347, 4
        %v350 = vshll.u32 %v245, 16
        %v352 = vrot.slane %v350, 5
        %v353 = vor.u32 %v349, %v352
        %v354 = vrot.slane %v353, 4
        %v356 = vshll.u32 %v246, 16
        %v358 = vrot.slane %v356, 5
        %v359 = vsel %vm297, %v354, %v358
        %v360 = vshrl.u32 %v246, 16
        %v362 = vrot.slane %v360, 4
        %v363 = vor.u32 %v362, %v358
        %v364 = vrot.slane %v363, 4
        %v366 = vshll.u32 %v279, 16
        %v368 = vrot.slane %v366, 5
        %v369 = vsel %vm297, %v364, %v368
        %v371 = vshrl.u32 %v247, 16
        %v373 = vrot.slane %v371, 4
        %v374 = vshll.u32 %v247, 16
        %v376 = vrot.slane %v374, 5
        %v377 = vor.u32 %v373, %v376
        %v378 = vrot.slane %v377, 4
        %v380 = vshll.u32 %v248, 16
        %v382 = vrot.slane %v380, 5
        %v383 = vsel %vm297, %v378, %v382
        %v384 = vshrl.u32 %v248, 16
        %v386 = vrot.slane %v384, 4
        %v387 = vor.u32 %v386, %v382
        %v388 = vrot.slane %v387, 4
        %v390 = vshll.u32 %v280, 16
        %v392 = vrot.slane %v390, 5
        %v393 = vsel %vm297, %v388, %v392
        %v395 = vshrl.u32 %v249, 16
        %v397 = vrot.slane %v395, 4
        %v398 = vshll.u32 %v249, 16
        %v400 = vrot.slane %v398, 5
        %v401 = vor.u32 %v397, %v400
        %v402 = vrot.slane %v401, 4
        %v404 = vshll.u32 %v250, 16
        %v406 = vrot.slane %v404, 5
        %v407 = vsel %vm297, %v402, %v406
        %v408 = vshrl.u32 %v250, 16
        %v410 = vrot.slane %v408, 4
        %v411 = vor.u32 %v410, %v406
        %v412 = vrot.slane %v411, 4
        %v414 = vshll.u32 %v281, 16
        %v416 = vrot.slane %v414, 5
        %v417 = vsel %vm297, %v412, %v416
        %v419 = vshrl.u32 %v251, 16
        %v421 = vrot.slane %v419, 4
        %v422 = vshll.u32 %v251, 16
        %v424 = vrot.slane %v422, 5
        %v425 = vor.u32 %v421, %v424
        %v426 = vrot.slane %v425, 4
        %v428 = vshll.u32 %v252, 16
        %v430 = vrot.slane %v428, 5
        %v431 = vsel %vm297, %v426, %v430
        %v432 = vshrl.u32 %v252, 16
        %v434 = vrot.slane %v432, 4
        %v435 = vor.u32 %v434, %v430
        %v436 = vrot.slane %v435, 4
        %v438 = vshll.u32 %v282, 16
        %v440 = vrot.slane %v438, 5
        %v441 = vsel %vm297, %v436, %v440
        %v443 = vshrl.u32 %v253, 16
        %v445 = vrot.slane %v443, 4
        %v446 = vshll.u32 %v253, 16
        %v448 = vrot.slane %v446, 5
        %v449 = vor.u32 %v445, %v448
        %v450 = vrot.slane %v449, 4
        %v452 = vshll.u32 %v254, 16
        %v454 = vrot.slane %v452, 5
        %v455 = vsel %vm297, %v450, %v454
        %v456 = vshrl.u32 %v254, 16
        %v458 = vrot.slane %v456, 4
        %v459 = vor.u32 %v458, %v454
        %v460 = vrot.slane %v459, 4
        %v462 = vshll.u32 %v283, 16
        %v464 = vrot.slane %v462, 5
        %v465 = vsel %vm297, %v460, %v464
        %v467 = vshrl.u32 %v255, 16
        %v469 = vrot.slane %v467, 4
        %v470 = vshll.u32 %v255, 16
        %v472 = vrot.slane %v470, 5
        %v473 = vor.u32 %v469, %v472
        %v474 = vrot.slane %v473, 4
        %v476 = vshll.u32 %v256, 16
        %v478 = vrot.slane %v476, 5
        %v479 = vsel %vm297, %v474, %v478
        %v480 = vshrl.u32 %v256, 16
        %v482 = vrot.slane %v480, 4
        %v483 = vor.u32 %v482, %v478
        %v484 = vrot.slane %v483, 4
        %v486 = vshll.u32 %v284, 16
        %v488 = vrot.slane %v486, 5
        %v489 = vsel %vm297, %v484, %v488
        %v491 = vshrl.u32 %v257, 16
        %v493 = vrot.slane %v491, 4
        %v494 = vshll.u32 %v257, 16
        %v496 = vrot.slane %v494, 5
        %v497 = vor.u32 %v493, %v496
        %v498 = vrot.slane %v497, 4
        %v500 = vshll.u32 %v258, 16
        %v502 = vrot.slane %v500, 5
        %v503 = vsel %vm297, %v498, %v502
        %v504 = vshrl.u32 %v258, 16
        %v506 = vrot.slane %v504, 4
        %v507 = vor.u32 %v506, %v502
        %v508 = vrot.slane %v507, 4
        %v510 = vshll.u32 %v285, 16
        %v512 = vrot.slane %v510, 5
        %v513 = vsel %vm297, %v508, %v512
        %v515 = vshrl.u32 %v259, 16
        %v517 = vrot.slane %v515, 4
        %v518 = vshll.u32 %v259, 16
        %v520 = vrot.slane %v518, 5
        %v521 = vor.u32 %v517, %v520
        %v522 = vrot.slane %v521, 4
        %v524 = vshll.u32 %v260, 16
        %v526 = vrot.slane %v524, 5
        %v527 = vsel %vm297, %v522, %v526
        %v528 = vshrl.u32 %v260, 16
        %v530 = vrot.slane %v528, 4
        %v531 = vor.u32 %v530, %v526
        %v532 = vrot.slane %v531, 4
        %v534 = vshll.u32 %v286, 16
        %v536 = vrot.slane %v534, 5
        %v537 = vsel %vm297, %v532, %v536
        %v539 = vshrl.u32 %v261, 16
        %v541 = vrot.slane %v539, 4
        %v542 = vshll.u32 %v261, 16
        %v544 = vrot.slane %v542, 5
        %v545 = vor.u32 %v541, %v544
        %v546 = vrot.slane %v545, 4
        %v548 = vshll.u32 %v262, 16
        %v550 = vrot.slane %v548, 5
        %v551 = vsel %vm297, %v546, %v550
        %v552 = vshrl.u32 %v262, 16
        %v554 = vrot.slane %v552, 4
        %v555 = vor.u32 %v554, %v550
        %v556 = vrot.slane %v555, 4
        %v558 = vshll.u32 %v287, 16
        %v560 = vrot.slane %v558, 5
        %v561 = vsel %vm297, %v556, %v560
        %v563 = vshrl.u32 %v263, 16
        %v565 = vrot.slane %v563, 4
        %v566 = vshll.u32 %v263, 16
        %v568 = vrot.slane %v566, 5
        %v569 = vor.u32 %v565, %v568
        %v570 = vrot.slane %v569, 4
        %v572 = vshll.u32 %v264, 16
        %v574 = vrot.slane %v572, 5
        %v575 = vsel %vm297, %v570, %v574
        %v576 = vshrl.u32 %v264, 16
        %v578 = vrot.slane %v576, 4
        %v579 = vor.u32 %v578, %v574
        %v580 = vrot.slane %v579, 4
        %v582 = vshll.u32 %v288, 16
        %v584 = vrot.slane %v582, 5
        %v585 = vsel %vm297, %v580, %v584
        %v587 = vshrl.u32 %v265, 16
        %v589 = vrot.slane %v587, 4
        %v590 = vshll.u32 %v265, 16
        %v592 = vrot.slane %v590, 5
        %v593 = vor.u32 %v589, %v592
        %v594 = vrot.slane %v593, 4
        %v596 = vshll.u32 %v266, 16
        %v598 = vrot.slane %v596, 5
        %v599 = vsel %vm297, %v594, %v598
        %v600 = vshrl.u32 %v266, 16
        %v602 = vrot.slane %v600, 4
        %v603 = vor.u32 %v602, %v598
        %v604 = vrot.slane %v603, 4
        %v606 = vshll.u32 %v289, 16
        %v608 = vrot.slane %v606, 5
        %v609 = vsel %vm297, %v604, %v608
        %v611 = vshrl.u32 %v267, 16
        %v613 = vrot.slane %v611, 4
        %v614 = vshll.u32 %v267, 16
        %v616 = vrot.slane %v614, 5
        %v617 = vor.u32 %v613, %v616
        %v618 = vrot.slane %v617, 4
        %v620 = vshll.u32 %v268, 16
        %v622 = vrot.slane %v620, 5
        %v623 = vsel %vm297, %v618, %v622
        %v624 = vshrl.u32 %v268, 16
        %v626 = vrot.slane %v624, 4
        %v627 = vor.u32 %v626, %v622
        %v628 = vrot.slane %v627, 4
        %v630 = vshll.u32 %v290, 16
        %v632 = vrot.slane %v630, 5
        %v633 = vsel %vm297, %v628, %v632
        %v635 = vshrl.u32 %v269, 16
        %v637 = vrot.slane %v635, 4
        %v638 = vshll.u32 %v269, 16
        %v640 = vrot.slane %v638, 5
        %v641 = vor.u32 %v637, %v640
        %v642 = vrot.slane %v641, 4
        %v644 = vshll.u32 %v270, 16
        %v646 = vrot.slane %v644, 5
        %v647 = vsel %vm297, %v642, %v646
        %v648 = vshrl.u32 %v270, 16
        %v650 = vrot.slane %v648, 4
        %v651 = vor.u32 %v650, %v646
        %v652 = vrot.slane %v651, 4
        %v654 = vshll.u32 %v291, 16
        %v656 = vrot.slane %v654, 5
        %v657 = vsel %vm297, %v652, %v656
        %v659 = vshrl.u32 %v271, 16
        %v661 = vrot.slane %v659, 4
        %v662 = vshll.u32 %v271, 16
        %v664 = vrot.slane %v662, 5
        %v665 = vor.u32 %v661, %v664
        %v666 = vrot.slane %v665, 4
        %v668 = vshll.u32 %v272, 16
        %v670 = vrot.slane %v668, 5
        %v671 = vsel %vm297, %v666, %v670
        %v672 = vshrl.u32 %v272, 16
        %v674 = vrot.slane %v672, 4
        %v675 = vor.u32 %v674, %v670
        %v676 = vrot.slane %v675, 4
        %v678 = vshll.u32 %v292, 16
        %v680 = vrot.slane %v678, 5
        %v681 = vsel %vm297, %v676, %v680
        %v683 = vshrl.u32 %v273, 16
        %v685 = vrot.slane %v683, 4
        %v686 = vshll.u32 %v273, 16
        %v688 = vrot.slane %v686, 5
        %v689 = vor.u32 %v685, %v688
        %v690 = vrot.slane %v689, 4
        %v692 = vshll.u32 %v274, 16
        %v694 = vrot.slane %v692, 5
        %v695 = vsel %vm297, %v690, %v694
        %v696 = vshrl.u32 %v274, 16
        %v698 = vrot.slane %v696, 4
        %v699 = vor.u32 %v698, %v694
        %v700 = vrot.slane %v699, 4
        %v702 = vshll.u32 %v293, 16
        %v704 = vrot.slane %v702, 5
        %v705 = vsel %vm297, %v700, %v704
        %v707 = vshrl.u32 %v275, 16
        %v709 = vrot.slane %v707, 4
        %v710 = vshll.u32 %v275, 16
        %v712 = vrot.slane %v710, 5
        %v713 = vor.u32 %v709, %v712
        %v714 = vrot.slane %v713, 4
        %v716 = vshll.u32 %v276, 16
        %v718 = vrot.slane %v716, 5
        %v719 = vsel %vm297, %v714, %v718
        %v720 = vshrl.u32 %v276, 16
        %v722 = vrot.slane %v720, 4
        %v723 = vor.u32 %v722, %v718
        %v724 = vrot.slane %v723, 4
        %v726 = vshll.u32 %v294, 16
        %v728 = vrot.slane %v726, 5
        %v729 = vsel %vm297, %v724, %v728
        %v730 = vld [vmem:[%s225] sm:$0xe]
        %v731 = vld [vmem:[%s225 + $0xc] sm:$0xe]
        %v732 = vld [vmem:[%s225 + $0x18] sm:$0xe]
        %v733 = vld [vmem:[%s225 + $0x24] sm:$0xe]
        %v734 = vld [vmem:[%s225 + $0x30] sm:$0xe]
        %v735 = vld [vmem:[%s225 + $0x3c] sm:$0xe]
        %v736 = vld [vmem:[%s225 + $0x48] sm:$0xe]
        %v737 = vld [vmem:[%s225 + $0x54] sm:$0xe]
        %v738 = vld [vmem:[%s225 + $0x60] sm:$0xe]
        %v739 = vld [vmem:[%s225 + $0x6c] sm:$0xe]
        %v740 = vld [vmem:[%s225 + $0x78] sm:$0xe]
        %v741 = vld [vmem:[%s225 + $0x84] sm:$0xe]
        %v742 = vld [vmem:[%s225 + $0x90] sm:$0xe]
        %v743 = vld [vmem:[%s225 + $0x9c] sm:$0xe]
        %v744 = vld [vmem:[%s225 + $0xa8] sm:$0xe]
        %v745 = vld [vmem:[%s225 + $0xb4] sm:$0xe]
        %v746 = vld [vmem:[%s225 + $0xc0] sm:$0xe]
        %v747 = vld [vmem:[%s225 + $0xcc] sm:$0xe]
        %vm802 = vcmask 1042432
        %vm803 = vcmask 1046532
        %vm804 = vmor %vm802, %vm803
        %v805 = vrot.slane %v730, 5
        %v806 = vrot.slane %v805, 4
        %v807 = vrot.slane %v242, 5
        %v808 = vsel %vm804, %v806, %v807
        %v809 = vrot.slane %v807, 4
        %v810 = vrot.slane %v277, 5
        %v811 = vsel %vm804, %v809, %v810
        %v812 = vrot.slane %v731, 5
        %v813 = vrot.slane %v812, 4
        %v814 = vrot.slane %v244, 5
        %v815 = vsel %vm804, %v813, %v814
        %v816 = vrot.slane %v814, 4
        %v817 = vrot.slane %v278, 5
        %v818 = vsel %vm804, %v816, %v817
        %v819 = vrot.slane %v732, 5
        %v820 = vrot.slane %v819, 4
        %v821 = vrot.slane %v246, 5
        %v822 = vsel %vm804, %v820, %v821
        %v823 = vrot.slane %v821, 4
        %v824 = vrot.slane %v279, 5
        %v825 = vsel %vm804, %v823, %v824
        %v826 = vrot.slane %v733, 5
        %v827 = vrot.slane %v826, 4
        %v828 = vrot.slane %v248, 5
        %v829 = vsel %vm804, %v827, %v828
        %v830 = vrot.slane %v828, 4
        %v831 = vrot.slane %v280, 5
        %v832 = vsel %vm804, %v830, %v831
        %v833 = vrot.slane %v734, 5
        %v834 = vrot.slane %v833, 4
        %v835 = vrot.slane %v250, 5
        %v836 = vsel %vm804, %v834, %v835
        %v837 = vrot.slane %v835, 4
        %v838 = vrot.slane %v281, 5
        %v839 = vsel %vm804, %v837, %v838
        %v840 = vrot.slane %v735, 5
        %v841 = vrot.slane %v840, 4
        %v842 = vrot.slane %v252, 5
        %v843 = vsel %vm804, %v841, %v842
        %v844 = vrot.slane %v842, 4
        %v845 = vrot.slane %v282, 5
        %v846 = vsel %vm804, %v844, %v845
        %v847 = vrot.slane %v736, 5
        %v848 = vrot.slane %v847, 4
        %v849 = vrot.slane %v254, 5
        %v850 = vsel %vm804, %v848, %v849
        %v851 = vrot.slane %v849, 4
        %v852 = vrot.slane %v283, 5
        %v853 = vsel %vm804, %v851, %v852
        %v854 = vrot.slane %v737, 5
        %v855 = vrot.slane %v854, 4
        %v856 = vrot.slane %v256, 5
        %v857 = vsel %vm804, %v855, %v856
        %v858 = vrot.slane %v856, 4
        %v859 = vrot.slane %v284, 5
        %v860 = vsel %vm804, %v858, %v859
        %v861 = vrot.slane %v738, 5
        %v862 = vrot.slane %v861, 4
        %v863 = vrot.slane %v258, 5
        %v864 = vsel %vm804, %v862, %v863
        %v865 = vrot.slane %v863, 4
        %v866 = vrot.slane %v285, 5
        %v867 = vsel %vm804, %v865, %v866
        %v868 = vrot.slane %v739, 5
        %v869 = vrot.slane %v868, 4
        %v870 = vrot.slane %v260, 5
        %v871 = vsel %vm804, %v869, %v870
        %v872 = vrot.slane %v870, 4
        %v873 = vrot.slane %v286, 5
        %v874 = vsel %vm804, %v872, %v873
        %v875 = vrot.slane %v740, 5
        %v876 = vrot.slane %v875, 4
        %v877 = vrot.slane %v262, 5
        %v878 = vsel %vm804, %v876, %v877
        %v879 = vrot.slane %v877, 4
        %v880 = vrot.slane %v287, 5
        %v881 = vsel %vm804, %v879, %v880
        %v882 = vrot.slane %v741, 5
        %v883 = vrot.slane %v882, 4
        %v884 = vrot.slane %v264, 5
        %v885 = vsel %vm804, %v883, %v884
        %v886 = vrot.slane %v884, 4
        %v887 = vrot.slane %v288, 5
        %v888 = vsel %vm804, %v886, %v887
        %v889 = vrot.slane %v742, 5
        %v890 = vrot.slane %v889, 4
        %v891 = vrot.slane %v266, 5
        %v892 = vsel %vm804, %v890, %v891
        %v893 = vrot.slane %v891, 4
        %v894 = vrot.slane %v289, 5
        %v895 = vsel %vm804, %v893, %v894
        %v896 = vrot.slane %v743, 5
        %v897 = vrot.slane %v896, 4
        %v898 = vrot.slane %v268, 5
        %v899 = vsel %vm804, %v897, %v898
        %v900 = vrot.slane %v898, 4
        %v901 = vrot.slane %v290, 5
        %v902 = vsel %vm804, %v900, %v901
        %v903 = vrot.slane %v744, 5
        %v904 = vrot.slane %v903, 4
        %v905 = vrot.slane %v270, 5
        %v906 = vsel %vm804, %v904, %v905
        %v907 = vrot.slane %v905, 4
        %v908 = vrot.slane %v291, 5
        %v909 = vsel %vm804, %v907, %v908
        %v910 = vrot.slane %v745, 5
        %v911 = vrot.slane %v910, 4
        %v912 = vrot.slane %v272, 5
        %v913 = vsel %vm804, %v911, %v912
        %v914 = vrot.slane %v912, 4
        %v915 = vrot.slane %v292, 5
        %v916 = vsel %vm804, %v914, %v915
        %v917 = vrot.slane %v746, 5
        %v918 = vrot.slane %v917, 4
        %v919 = vrot.slane %v274, 5
        %v920 = vsel %vm804, %v918, %v919
        %v921 = vrot.slane %v919, 4
        %v922 = vrot.slane %v293, 5
        %v923 = vsel %vm804, %v921, %v922
        %v924 = vrot.slane %v747, 5
        %v925 = vrot.slane %v924, 4
        %v926 = vrot.slane %v276, 5
        %v927 = vsel %vm804, %v925, %v926
        %v928 = vrot.slane %v926, 4
        %v929 = vrot.slane %v294, 5
        %v930 = vsel %vm804, %v928, %v929
        %v931 = vld [vmem:[%s1] sm:$0xf]
        %v932 = vld [vmem:[%s1 + $0x4] sm:$0xf]
        %v933 = vunpack.c.l.b16 %v311
        %v934 = vunpack.c.l.b16 %v321
        %v935 = vunpack.c.l.b16 %v335
        %v936 = vunpack.c.l.b16 %v345
        %v937 = vunpack.c.l.b16 %v359
        %v938 = vunpack.c.l.b16 %v369
        %v939 = vunpack.c.l.b16 %v383
        %v940 = vunpack.c.l.b16 %v393
        %v941 = vunpack.c.l.b16 %v407
        %v942 = vunpack.c.l.b16 %v417
        %v943 = vunpack.c.l.b16 %v431
        %v944 = vunpack.c.l.b16 %v441
        %v945 = vunpack.c.l.b16 %v455
        %v946 = vunpack.c.l.b16 %v465
        %v947 = vunpack.c.l.b16 %v479
        %v948 = vunpack.c.l.b16 %v489
        %v949 = vunpack.c.l.b16 %v503
        %v950 = vunpack.c.l.b16 %v513
        %v951 = vunpack.c.l.b16 %v527
        %v952 = vunpack.c.l.b16 %v537
        %v953 = vunpack.c.l.b16 %v551
        %v954 = vunpack.c.l.b16 %v561
        %v955 = vunpack.c.l.b16 %v575
        %v956 = vunpack.c.l.b16 %v585
        %v957 = vunpack.c.l.b16 %v599
        %v958 = vunpack.c.l.b16 %v609
        %v959 = vunpack.c.l.b16 %v623
        %v960 = vunpack.c.l.b16 %v633
        %v961 = vunpack.c.l.b16 %v647
        %v962 = vunpack.c.l.b16 %v657
        %v963 = vunpack.c.l.b16 %v671
        %v964 = vunpack.c.l.b16 %v681
        %v965 = vpack.c.b16 %v934, %v933
        %v966 = vpack.c.b16 %v936, %v935
        %v967 = vpack.c.b16 %v938, %v937
        %v968 = vpack.c.b16 %v940, %v939
        %v969 = vpack.c.b16 %v942, %v941
        %v970 = vpack.c.b16 %v944, %v943
        %v971 = vpack.c.b16 %v946, %v945
        %v972 = vpack.c.b16 %v948, %v947
        %v973 = vpack.c.b16 %v950, %v949
        %v974 = vpack.c.b16 %v952, %v951
        %v975 = vpack.c.b16 %v954, %v953
        %v976 = vpack.c.b16 %v956, %v955
        %v977 = vpack.c.b16 %v958, %v957
        %v978 = vpack.c.b16 %v960, %v959
        %v979 = vpack.c.b16 %v962, %v961
        %v980 = vpack.c.b16 %v964, %v963
        %vm981 = vcmask 64512
        %v983 = vsel %vm981, %v965, 0
        %v986 = vsel %vm981, %v966, 0
        %v989 = vsel %vm981, %v967, 0
        %v992 = vsel %vm981, %v968, 0
        %v995 = vsel %vm981, %v969, 0
        %v998 = vsel %vm981, %v970, 0
        %v1001 = vsel %vm981, %v971, 0
        %v1004 = vsel %vm981, %v972, 0
        %v1007 = vsel %vm981, %v973, 0
        %v1010 = vsel %vm981, %v974, 0
        %v1013 = vsel %vm981, %v975, 0
        %v1016 = vsel %vm981, %v976, 0
        %v1019 = vsel %vm981, %v977, 0
        %v1022 = vsel %vm981, %v978, 0
        %v1025 = vsel %vm981, %v979, 0
        %v1028 = vsel %vm981, %v980, 0
        %vm1030 = vcmask 1043456
        %v1032 = vsel %vm1030, %v932, 0
        %1034 = vmatprep.subr.bf16.mxu0 0
        %1035 = vmatpush1.bf16.msra.mxu0 0
        %1036 = vmatprep.subr.bf16.mxu0 0
        %1037 = vmatpush1.bf16.msra.mxu0 0
        %1038 = vmatprep.subr.bf16.mxu0 0
        %1039 = vmatpush1.bf16.msra.mxu0 0
        %1040 = vmatprep.subr.bf16.mxu0 0
        %1041 = vmatpush1.bf16.msra.mxu0 0
        %1042 = vmatprep.subr.bf16.mxu0 0
        %1043 = vmatpush1.bf16.msra.mxu0 0
        %1044 = vmatprep.subr.bf16.mxu0 0
        %1045 = vmatpush1.bf16.msra.mxu0 0
        %1046 = vmatprep.subr.bf16.mxu0 0
        %1047 = vmatpush1.bf16.msra.mxu0 0
        %1048 = vmatprep.subr.bf16.mxu0 0
        %1049 = vmatpush1.bf16.msra.mxu0 %v1032
        %1050 = vmatprep.subr.bf16.mxu0 0
        %1051 = vmatpush2.bf16.msra.mxu0 0
        %1052 = vmatprep.subr.bf16.mxu0 0
        %1053 = vmatpush2.bf16.msra.mxu0 0
        %1054 = vmatprep.subr.bf16.mxu0 0
        %1055 = vmatpush2.bf16.msra.mxu0 0
        %1056 = vmatprep.subr.bf16.mxu0 0
        %1057 = vmatpush2.bf16.msra.mxu0 0
        %1058 = vmatprep.subr.bf16.mxu0 0
        %1059 = vmatpush2.bf16.msra.mxu0 0
        %1060 = vmatprep.subr.bf16.mxu0 0
        %1061 = vmatpush2.bf16.msra.mxu0 0
        %1062 = vmatprep.subr.bf16.mxu0 0
        %1063 = vmatpush2.bf16.msra.mxu0 0
        %1064 = vmatprep.subr.bf16.mxu0 0
        %1065 = vmatpush2.bf16.msra.mxu0 0
        %1066 = vmatprep.mubr.bf16.mxu0 0
        %1067 = vmatmul.mubr.bf16.gmra.mxu0 %v983
        %v1068 = vpop.f32.mrf.mxu0
        %v1069 = vadd.f32 0.0, %v1068
        %v1070 = vpop.f32.mrf.mxu0
        %v1071 = vpop.f32.mrf.mxu0
        %v1072 = vadd.f32 0.0, %v1071
        %v1073 = vpop.f32.mrf.mxu0
        %1074 = vmatprep.mubr.bf16.mxu0 0
        %1075 = vmatmul.mubr.bf16.gmra.mxu0 %v986
        %v1076 = vpop.f32.mrf.mxu0
        %v1077 = vadd.f32 0.0, %v1076
        %v1078 = vpop.f32.mrf.mxu0
        %v1079 = vpop.f32.mrf.mxu0
        %v1080 = vadd.f32 0.0, %v1079
        %v1081 = vpop.f32.mrf.mxu0
        %1082 = vmatprep.mubr.bf16.mxu0 0
        %1083 = vmatmul.mubr.bf16.gmra.mxu0 %v989
        %v1084 = vpop.f32.mrf.mxu0
        %v1085 = vadd.f32 0.0, %v1084
        %v1086 = vpop.f32.mrf.mxu0
        %v1087 = vpop.f32.mrf.mxu0
        %v1088 = vadd.f32 0.0, %v1087
        %v1089 = vpop.f32.mrf.mxu0
        %1090 = vmatprep.mubr.bf16.mxu0 0
        %1091 = vmatmul.mubr.bf16.gmra.mxu0 %v992
        %v1092 = vpop.f32.mrf.mxu0
        %v1093 = vadd.f32 0.0, %v1092
        %v1094 = vpop.f32.mrf.mxu0
        %v1095 = vpop.f32.mrf.mxu0
        %v1096 = vadd.f32 0.0, %v1095
        %v1097 = vpop.f32.mrf.mxu0
        %1098 = vmatprep.mubr.bf16.mxu0 0
        %1099 = vmatmul.mubr.bf16.gmra.mxu0 %v995
        %v1100 = vpop.f32.mrf.mxu0
        %v1101 = vadd.f32 0.0, %v1100
        %v1102 = vpop.f32.mrf.mxu0
        %v1103 = vpop.f32.mrf.mxu0
        %v1104 = vadd.f32 0.0, %v1103
        %v1105 = vpop.f32.mrf.mxu0
        %1106 = vmatprep.mubr.bf16.mxu0 0
        %1107 = vmatmul.mubr.bf16.gmra.mxu0 %v998
        %v1108 = vpop.f32.mrf.mxu0
        %v1109 = vadd.f32 0.0, %v1108
        %v1110 = vpop.f32.mrf.mxu0
        %v1111 = vpop.f32.mrf.mxu0
        %v1112 = vadd.f32 0.0, %v1111
        %v1113 = vpop.f32.mrf.mxu0
        %1114 = vmatprep.mubr.bf16.mxu0 0
        %1115 = vmatmul.mubr.bf16.gmra.mxu0 %v1001
        %v1116 = vpop.f32.mrf.mxu0
        %v1117 = vadd.f32 0.0, %v1116
        %v1118 = vpop.f32.mrf.mxu0
        %v1119 = vpop.f32.mrf.mxu0
        %v1120 = vadd.f32 0.0, %v1119
        %v1121 = vpop.f32.mrf.mxu0
        %1122 = vmatprep.mubr.bf16.mxu0 0
        %1123 = vmatmul.mubr.bf16.gmra.mxu0 %v1004
        %v1124 = vpop.f32.mrf.mxu0
        %v1125 = vadd.f32 0.0, %v1124
        %v1126 = vpop.f32.mrf.mxu0
        %v1127 = vpop.f32.mrf.mxu0
        %v1128 = vadd.f32 0.0, %v1127
        %v1129 = vpop.f32.mrf.mxu0
        %1130 = vmatprep.mubr.bf16.mxu0 0
        %1131 = vmatmul.mubr.bf16.gmra.mxu0 %v1007
        %v1132 = vpop.f32.mrf.mxu0
        %v1133 = vadd.f32 0.0, %v1132
        %v1134 = vpop.f32.mrf.mxu0
        %v1135 = vpop.f32.mrf.mxu0
        %v1136 = vadd.f32 0.0, %v1135
        %v1137 = vpop.f32.mrf.mxu0
        %1138 = vmatprep.mubr.bf16.mxu0 0
        %1139 = vmatmul.mubr.bf16.gmra.mxu0 %v1010
        %v1140 = vpop.f32.mrf.mxu0
        %v1141 = vadd.f32 0.0, %v1140
        %v1142 = vpop.f32.mrf.mxu0
        %v1143 = vpop.f32.mrf.mxu0
        %v1144 = vadd.f32 0.0, %v1143
        %v1145 = vpop.f32.mrf.mxu0
        %1146 = vmatprep.mubr.bf16.mxu0 0
        %1147 = vmatmul.mubr.bf16.gmra.mxu0 %v1013
        %v1148 = vpop.f32.mrf.mxu0
        %v1149 = vadd.f32 0.0, %v1148
        %v1150 = vpop.f32.mrf.mxu0
        %v1151 = vpop.f32.mrf.mxu0
        %v1152 = vadd.f32 0.0, %v1151
        %v1153 = vpop.f32.mrf.mxu0
        %1154 = vmatprep.mubr.bf16.mxu0 0
        %1155 = vmatmul.mubr.bf16.gmra.mxu0 %v1016
        %v1156 = vpop.f32.mrf.mxu0
        %v1157 = vadd.f32 0.0, %v1156
        %v1158 = vpop.f32.mrf.mxu0
        %v1159 = vpop.f32.mrf.mxu0
        %v1160 = vadd.f32 0.0, %v1159
        %v1161 = vpop.f32.mrf.mxu0
        %1162 = vmatprep.mubr.bf16.mxu0 0
        %1163 = vmatmul.mubr.bf16.gmra.mxu0 %v1019
        %v1164 = vpop.f32.mrf.mxu0
        %v1165 = vadd.f32 0.0, %v1164
        %v1166 = vpop.f32.mrf.mxu0
        %v1167 = vpop.f32.mrf.mxu0
        %v1168 = vadd.f32 0.0, %v1167
        %v1169 = vpop.f32.mrf.mxu0
        %1170 = vmatprep.mubr.bf16.mxu0 0
        %1171 = vmatmul.mubr.bf16.gmra.mxu0 %v1022
        %v1172 = vpop.f32.mrf.mxu0
        %v1173 = vadd.f32 0.0, %v1172
        %v1174 = vpop.f32.mrf.mxu0
        %v1175 = vpop.f32.mrf.mxu0
        %v1176 = vadd.f32 0.0, %v1175
        %v1177 = vpop.f32.mrf.mxu0
        %1178 = vmatprep.mubr.bf16.mxu0 0
        %1179 = vmatmul.mubr.bf16.gmra.mxu0 %v1025
        %v1180 = vpop.f32.mrf.mxu0
        %v1181 = vadd.f32 0.0, %v1180
        %v1182 = vpop.f32.mrf.mxu0
        %v1183 = vpop.f32.mrf.mxu0
        %v1184 = vadd.f32 0.0, %v1183
        %v1185 = vpop.f32.mrf.mxu0
        %1186 = vmatprep.mubr.bf16.mxu0 0
        %1187 = vmatmul.mubr.bf16.gmra.mxu0 %v1028
        %v1188 = vpop.f32.mrf.mxu0
        %v1189 = vadd.f32 0.0, %v1188
        %v1190 = vpop.f32.mrf.mxu0
        %v1191 = vpop.f32.mrf.mxu0
        %v1192 = vadd.f32 0.0, %v1191
        %v1193 = vpop.f32.mrf.mxu0
        %1194 = vdwg.mxu0
        %v1211 = vunpack.c.l.b16 %v241
        %v1212 = vunpack.c.l.b16 %v242
        %v1213 = vunpack.c.l.b16 %v243
        %v1214 = vunpack.c.l.b16 %v244
        %v1215 = vunpack.c.l.b16 %v245
        %v1216 = vunpack.c.l.b16 %v246
        %v1217 = vunpack.c.l.b16 %v247
        %v1218 = vunpack.c.l.b16 %v248
        %v1219 = vunpack.c.l.b16 %v249
        %v1220 = vunpack.c.l.b16 %v250
        %v1221 = vunpack.c.l.b16 %v251
        %v1222 = vunpack.c.l.b16 %v252
        %v1223 = vunpack.c.l.b16 %v253
        %v1224 = vunpack.c.l.b16 %v254
        %v1225 = vunpack.c.l.b16 %v255
        %v1226 = vunpack.c.l.b16 %v256
        %v1227 = vunpack.c.l.b16 %v257
        %v1228 = vunpack.c.l.b16 %v258
        %v1229 = vunpack.c.l.b16 %v259
        %v1230 = vunpack.c.l.b16 %v260
        %v1231 = vunpack.c.l.b16 %v261
        %v1232 = vunpack.c.l.b16 %v262
        %v1233 = vunpack.c.l.b16 %v263
        %v1234 = vunpack.c.l.b16 %v264
        %v1235 = vunpack.c.l.b16 %v265
        %v1236 = vunpack.c.l.b16 %v266
        %v1237 = vunpack.c.l.b16 %v267
        %v1238 = vunpack.c.l.b16 %v268
        %v1239 = vunpack.c.l.b16 %v269
        %v1240 = vunpack.c.l.b16 %v270
        %v1241 = vunpack.c.l.b16 %v271
        %v1242 = vunpack.c.l.b16 %v272
        %v1243 = vpack.c.b16 %v1212, %v1211
        %v1244 = vpack.c.b16 %v1214, %v1213
        %v1245 = vpack.c.b16 %v1216, %v1215
        %v1246 = vpack.c.b16 %v1218, %v1217
        %v1247 = vpack.c.b16 %v1220, %v1219
        %v1248 = vpack.c.b16 %v1222, %v1221
        %v1249 = vpack.c.b16 %v1224, %v1223
        %v1250 = vpack.c.b16 %v1226, %v1225
        %v1251 = vpack.c.b16 %v1228, %v1227
        %v1252 = vpack.c.b16 %v1230, %v1229
        %v1253 = vpack.c.b16 %v1232, %v1231
        %v1254 = vpack.c.b16 %v1234, %v1233
        %v1255 = vpack.c.b16 %v1236, %v1235
        %v1256 = vpack.c.b16 %v1238, %v1237
        %v1257 = vpack.c.b16 %v1240, %v1239
        %v1258 = vpack.c.b16 %v1242, %v1241
        %v1260 = vsel %vm981, %v1243, 0
        %v1263 = vsel %vm981, %v1244, 0
        %v1266 = vsel %vm981, %v1245, 0
        %v1269 = vsel %vm981, %v1246, 0
        %v1272 = vsel %vm981, %v1247, 0
        %v1275 = vsel %vm981, %v1248, 0
        %v1278 = vsel %vm981, %v1249, 0
        %v1281 = vsel %vm981, %v1250, 0
        %v1284 = vsel %vm981, %v1251, 0
        %v1287 = vsel %vm981, %v1252, 0
        %v1290 = vsel %vm981, %v1253, 0
        %v1293 = vsel %vm981, %v1254, 0
        %v1296 = vsel %vm981, %v1255, 0
        %v1299 = vsel %vm981, %v1256, 0
        %v1302 = vsel %vm981, %v1257, 0
        %v1305 = vsel %vm981, %v1258, 0
        %v1308 = vsel %vm1030, %v931, 0
        %1310 = vmatprep.subr.bf16.mxu0 0
        %1311 = vmatpush1.bf16.msra.mxu0 0
        %1312 = vmatprep.subr.bf16.mxu0 0
        %1313 = vmatpush1.bf16.msra.mxu0 0
        %1314 = vmatprep.subr.bf16.mxu0 0
        %1315 = vmatpush1.bf16.msra.mxu0 0
        %1316 = vmatprep.subr.bf16.mxu0 0
        %1317 = vmatpush1.bf16.msra.mxu0 0
        %1318 = vmatprep.subr.bf16.mxu0 0
        %1319 = vmatpush1.bf16.msra.mxu0 0
        %1320 = vmatprep.subr.bf16.mxu0 0
        %1321 = vmatpush1.bf16.msra.mxu0 0
        %1322 = vmatprep.subr.bf16.mxu0 0
        %1323 = vmatpush1.bf16.msra.mxu0 0
        %1324 = vmatprep.subr.bf16.mxu0 0
        %1325 = vmatpush1.bf16.msra.mxu0 %v1308
        %1326 = vmatprep.subr.bf16.mxu0 0
        %1327 = vmatpush2.bf16.msra.mxu0 0
        %1328 = vmatprep.subr.bf16.mxu0 0
        %1329 = vmatpush2.bf16.msra.mxu0 0
        %1330 = vmatprep.subr.bf16.mxu0 0
        %1331 = vmatpush2.bf16.msra.mxu0 0
        %1332 = vmatprep.subr.bf16.mxu0 0
        %1333 = vmatpush2.bf16.msra.mxu0 0
        %1334 = vmatprep.subr.bf16.mxu0 0
        %1335 = vmatpush2.bf16.msra.mxu0 0
        %1336 = vmatprep.subr.bf16.mxu0 0
        %1337 = vmatpush2.bf16.msra.mxu0 0
        %1338 = vmatprep.subr.bf16.mxu0 0
        %1339 = vmatpush2.bf16.msra.mxu0 0
        %1340 = vmatprep.subr.bf16.mxu0 0
        %1341 = vmatpush2.bf16.msra.mxu0 0
        %1342 = vmatprep.mubr.bf16.mxu0 0
        %1343 = vmatmul.mubr.bf16.gmra.mxu0 %v1260
        %v1344 = vpop.f32.mrf.mxu0
        %v1345 = vadd.f32 %v1069, %v1344
        %v1346 = vpop.f32.mrf.mxu0
        %v1347 = vpop.f32.mrf.mxu0
        %v1348 = vadd.f32 %v1072, %v1347
        %v1349 = vpop.f32.mrf.mxu0
        %1350 = vmatprep.mubr.bf16.mxu0 0
        %1351 = vmatmul.mubr.bf16.gmra.mxu0 %v1263
        %v1352 = vpop.f32.mrf.mxu0
        %v1353 = vadd.f32 %v1077, %v1352
        %v1354 = vpop.f32.mrf.mxu0
        %v1355 = vpop.f32.mrf.mxu0
        %v1356 = vadd.f32 %v1080, %v1355
        %v1357 = vpop.f32.mrf.mxu0
        %1358 = vmatprep.mubr.bf16.mxu0 0
        %1359 = vmatmul.mubr.bf16.gmra.mxu0 %v1266
        %v1360 = vpop.f32.mrf.mxu0
        %v1361 = vadd.f32 %v1085, %v1360
        %v1362 = vpop.f32.mrf.mxu0
        %v1363 = vpop.f32.mrf.mxu0
        %v1364 = vadd.f32 %v1088, %v1363
        %v1365 = vpop.f32.mrf.mxu0
        %1366 = vmatprep.mubr.bf16.mxu0 0
        %1367 = vmatmul.mubr.bf16.gmra.mxu0 %v1269
        %v1368 = vpop.f32.mrf.mxu0
        %v1369 = vadd.f32 %v1093, %v1368
        %v1370 = vpop.f32.mrf.mxu0
        %v1371 = vpop.f32.mrf.mxu0
        %v1372 = vadd.f32 %v1096, %v1371
        %v1373 = vpop.f32.mrf.mxu0
        %1374 = vmatprep.mubr.bf16.mxu0 0
        %1375 = vmatmul.mubr.bf16.gmra.mxu0 %v1272
        %v1376 = vpop.f32.mrf.mxu0
        %v1377 = vadd.f32 %v1101, %v1376
        %v1378 = vpop.f32.mrf.mxu0
        %v1379 = vpop.f32.mrf.mxu0
        %v1380 = vadd.f32 %v1104, %v1379
        %v1381 = vpop.f32.mrf.mxu0
        %1382 = vmatprep.mubr.bf16.mxu0 0
        %1383 = vmatmul.mubr.bf16.gmra.mxu0 %v1275
        %v1384 = vpop.f32.mrf.mxu0
        %v1385 = vadd.f32 %v1109, %v1384
        %v1386 = vpop.f32.mrf.mxu0
        %v1387 = vpop.f32.mrf.mxu0
        %v1388 = vadd.f32 %v1112, %v1387
        %v1389 = vpop.f32.mrf.mxu0
        %1390 = vmatprep.mubr.bf16.mxu0 0
        %1391 = vmatmul.mubr.bf16.gmra.mxu0 %v1278
        %v1392 = vpop.f32.mrf.mxu0
        %v1393 = vadd.f32 %v1117, %v1392
        %v1394 = vpop.f32.mrf.mxu0
        %v1395 = vpop.f32.mrf.mxu0
        %v1396 = vadd.f32 %v1120, %v1395
        %v1397 = vpop.f32.mrf.mxu0
        %1398 = vmatprep.mubr.bf16.mxu0 0
        %1399 = vmatmul.mubr.bf16.gmra.mxu0 %v1281
        %v1400 = vpop.f32.mrf.mxu0
        %v1401 = vadd.f32 %v1125, %v1400
        %v1402 = vpop.f32.mrf.mxu0
        %v1403 = vpop.f32.mrf.mxu0
        %v1404 = vadd.f32 %v1128, %v1403
        %v1405 = vpop.f32.mrf.mxu0
        %1406 = vmatprep.mubr.bf16.mxu0 0
        %1407 = vmatmul.mubr.bf16.gmra.mxu0 %v1284
        %v1408 = vpop.f32.mrf.mxu0
        %v1409 = vadd.f32 %v1133, %v1408
        %v1410 = vpop.f32.mrf.mxu0
        %v1411 = vpop.f32.mrf.mxu0
        %v1412 = vadd.f32 %v1136, %v1411
        %v1413 = vpop.f32.mrf.mxu0
        %1414 = vmatprep.mubr.bf16.mxu0 0
        %1415 = vmatmul.mubr.bf16.gmra.mxu0 %v1287
        %v1416 = vpop.f32.mrf.mxu0
        %v1417 = vadd.f32 %v1141, %v1416
        %v1418 = vpop.f32.mrf.mxu0
        %v1419 = vpop.f32.mrf.mxu0
        %v1420 = vadd.f32 %v1144, %v1419
        %v1421 = vpop.f32.mrf.mxu0
        %1422 = vmatprep.mubr.bf16.mxu0 0
        %1423 = vmatmul.mubr.bf16.gmra.mxu0 %v1290
        %v1424 = vpop.f32.mrf.mxu0
        %v1425 = vadd.f32 %v1149, %v1424
        %v1426 = vpop.f32.mrf.mxu0
        %v1427 = vpop.f32.mrf.mxu0
        %v1428 = vadd.f32 %v1152, %v1427
        %v1429 = vpop.f32.mrf.mxu0
        %1430 = vmatprep.mubr.bf16.mxu0 0
        %1431 = vmatmul.mubr.bf16.gmra.mxu0 %v1293
        %v1432 = vpop.f32.mrf.mxu0
        %v1433 = vadd.f32 %v1157, %v1432
        %v1434 = vpop.f32.mrf.mxu0
        %v1435 = vpop.f32.mrf.mxu0
        %v1436 = vadd.f32 %v1160, %v1435
        %v1437 = vpop.f32.mrf.mxu0
        %1438 = vmatprep.mubr.bf16.mxu0 0
        %1439 = vmatmul.mubr.bf16.gmra.mxu0 %v1296
        %v1440 = vpop.f32.mrf.mxu0
        %v1441 = vadd.f32 %v1165, %v1440
        %v1442 = vpop.f32.mrf.mxu0
        %v1443 = vpop.f32.mrf.mxu0
        %v1444 = vadd.f32 %v1168, %v1443
        %v1445 = vpop.f32.mrf.mxu0
        %1446 = vmatprep.mubr.bf16.mxu0 0
        %1447 = vmatmul.mubr.bf16.gmra.mxu0 %v1299
        %v1448 = vpop.f32.mrf.mxu0
        %v1449 = vadd.f32 %v1173, %v1448
        %v1450 = vpop.f32.mrf.mxu0
        %v1451 = vpop.f32.mrf.mxu0
        %v1452 = vadd.f32 %v1176, %v1451
        %v1453 = vpop.f32.mrf.mxu0
        %1454 = vmatprep.mubr.bf16.mxu0 0
        %1455 = vmatmul.mubr.bf16.gmra.mxu0 %v1302
        %v1456 = vpop.f32.mrf.mxu0
        %v1457 = vadd.f32 %v1181, %v1456
        %v1458 = vpop.f32.mrf.mxu0
        %v1459 = vpop.f32.mrf.mxu0
        %v1460 = vadd.f32 %v1184, %v1459
        %v1461 = vpop.f32.mrf.mxu0
        %1462 = vmatprep.mubr.bf16.mxu0 0
        %1463 = vmatmul.mubr.bf16.gmra.mxu0 %v1305
        %v1464 = vpop.f32.mrf.mxu0
        %v1465 = vadd.f32 %v1189, %v1464
        %v1466 = vpop.f32.mrf.mxu0
        %v1467 = vpop.f32.mrf.mxu0
        %v1468 = vadd.f32 %v1192, %v1467
        %v1469 = vpop.f32.mrf.mxu0
        %1470 = vdwg.mxu0
        %v1471 = vld [vmem:[%s1 + $0x8] sm:$0xf]
        %v1472 = vunpack.c.l.b16 %v808
        %v1473 = vunpack.c.l.b16 %v811
        %v1474 = vunpack.c.l.b16 %v815
        %v1475 = vunpack.c.l.b16 %v818
        %v1476 = vunpack.c.l.b16 %v822
        %v1477 = vunpack.c.l.b16 %v825
        %v1478 = vunpack.c.l.b16 %v829
        %v1479 = vunpack.c.l.b16 %v832
        %v1480 = vunpack.c.l.b16 %v836
        %v1481 = vunpack.c.l.b16 %v839
        %v1482 = vunpack.c.l.b16 %v843
        %v1483 = vunpack.c.l.b16 %v846
        %v1484 = vunpack.c.l.b16 %v850
        %v1485 = vunpack.c.l.b16 %v853
        %v1486 = vunpack.c.l.b16 %v857
        %v1487 = vunpack.c.l.b16 %v860
        %v1488 = vunpack.c.l.b16 %v864
        %v1489 = vunpack.c.l.b16 %v867
        %v1490 = vunpack.c.l.b16 %v871
        %v1491 = vunpack.c.l.b16 %v874
        %v1492 = vunpack.c.l.b16 %v878
        %v1493 = vunpack.c.l.b16 %v881
        %v1494 = vunpack.c.l.b16 %v885
        %v1495 = vunpack.c.l.b16 %v888
        %v1496 = vunpack.c.l.b16 %v892
        %v1497 = vunpack.c.l.b16 %v895
        %v1498 = vunpack.c.l.b16 %v899
        %v1499 = vunpack.c.l.b16 %v902
        %v1500 = vunpack.c.l.b16 %v906
        %v1501 = vunpack.c.l.b16 %v909
        %v1502 = vunpack.c.l.b16 %v913
        %v1503 = vunpack.c.l.b16 %v916
        %v1504 = vpack.c.b16 %v1473, %v1472
        %v1505 = vpack.c.b16 %v1475, %v1474
        %v1506 = vpack.c.b16 %v1477, %v1476
        %v1507 = vpack.c.b16 %v1479, %v1478
        %v1508 = vpack.c.b16 %v1481, %v1480
        %v1509 = vpack.c.b16 %v1483, %v1482
        %v1510 = vpack.c.b16 %v1485, %v1484
        %v1511 = vpack.c.b16 %v1487, %v1486
        %v1512 = vpack.c.b16 %v1489, %v1488
        %v1513 = vpack.c.b16 %v1491, %v1490
        %v1514 = vpack.c.b16 %v1493, %v1492
        %v1515 = vpack.c.b16 %v1495, %v1494
        %v1516 = vpack.c.b16 %v1497, %v1496
        %v1517 = vpack.c.b16 %v1499, %v1498
        %v1518 = vpack.c.b16 %v1501, %v1500
        %v1519 = vpack.c.b16 %v1503, %v1502
        %v1521 = vsel %vm981, %v1504, 0
        %v1524 = vsel %vm981, %v1505, 0
        %v1527 = vsel %vm981, %v1506, 0
        %v1530 = vsel %vm981, %v1507, 0
        %v1533 = vsel %vm981, %v1508, 0
        %v1536 = vsel %vm981, %v1509, 0
        %v1539 = vsel %vm981, %v1510, 0
        %v1542 = vsel %vm981, %v1511, 0
        %v1545 = vsel %vm981, %v1512, 0
        %v1548 = vsel %vm981, %v1513, 0
        %v1551 = vsel %vm981, %v1514, 0
        %v1554 = vsel %vm981, %v1515, 0
        %v1557 = vsel %vm981, %v1516, 0
        %v1560 = vsel %vm981, %v1517, 0
        %v1563 = vsel %vm981, %v1518, 0
        %v1566 = vsel %vm981, %v1519, 0
        %v1569 = vsel %vm1030, %v1471, 0
        %1571 = vmatprep.subr.bf16.mxu0 0
        %1572 = vmatpush1.bf16.msra.mxu0 0
        %1573 = vmatprep.subr.bf16.mxu0 0
        %1574 = vmatpush1.bf16.msra.mxu0 0
        %1575 = vmatprep.subr.bf16.mxu0 0
        %1576 = vmatpush1.bf16.msra.mxu0 0
        %1577 = vmatprep.subr.bf16.mxu0 0
        %1578 = vmatpush1.bf16.msra.mxu0 0
        %1579 = vmatprep.subr.bf16.mxu0 0
        %1580 = vmatpush1.bf16.msra.mxu0 0
        %1581 = vmatprep.subr.bf16.mxu0 0
        %1582 = vmatpush1.bf16.msra.mxu0 0
        %1583 = vmatprep.subr.bf16.mxu0 0
        %1584 = vmatpush1.bf16.msra.mxu0 0
        %1585 = vmatprep.subr.bf16.mxu0 0
        %1586 = vmatpush1.bf16.msra.mxu0 %v1569
        %1587 = vmatprep.subr.bf16.mxu0 0
        %1588 = vmatpush2.bf16.msra.mxu0 0
        %1589 = vmatprep.subr.bf16.mxu0 0
        %1590 = vmatpush2.bf16.msra.mxu0 0
        %1591 = vmatprep.subr.bf16.mxu0 0
        %1592 = vmatpush2.bf16.msra.mxu0 0
        %1593 = vmatprep.subr.bf16.mxu0 0
        %1594 = vmatpush2.bf16.msra.mxu0 0
        %1595 = vmatprep.subr.bf16.mxu0 0
        %1596 = vmatpush2.bf16.msra.mxu0 0
        %1597 = vmatprep.subr.bf16.mxu0 0
        %1598 = vmatpush2.bf16.msra.mxu0 0
        %1599 = vmatprep.subr.bf16.mxu0 0
        %1600 = vmatpush2.bf16.msra.mxu0 0
        %1601 = vmatprep.subr.bf16.mxu0 0
        %1602 = vmatpush2.bf16.msra.mxu0 0
        %1603 = vmatprep.mubr.bf16.mxu0 0
        %1604 = vmatmul.mubr.bf16.gmra.mxu0 %v1521
        %v1605 = vpop.f32.mrf.mxu0
        %v1606 = vadd.f32 0.0, %v1605
        %v1607 = vpop.f32.mrf.mxu0
        %v1608 = vpop.f32.mrf.mxu0
        %v1609 = vadd.f32 0.0, %v1608
        %v1610 = vpop.f32.mrf.mxu0
        %1611 = vmatprep.mubr.bf16.mxu0 0
        %1612 = vmatmul.mubr.bf16.gmra.mxu0 %v1524
        %v1613 = vpop.f32.mrf.mxu0
        %v1614 = vadd.f32 0.0, %v1613
        %v1615 = vpop.f32.mrf.mxu0
        %v1616 = vpop.f32.mrf.mxu0
        %v1617 = vadd.f32 0.0, %v1616
        %v1618 = vpop.f32.mrf.mxu0
        %1619 = vmatprep.mubr.bf16.mxu0 0
        %1620 = vmatmul.mubr.bf16.gmra.mxu0 %v1527
        %v1621 = vpop.f32.mrf.mxu0
        %v1622 = vadd.f32 0.0, %v1621
        %v1623 = vpop.f32.mrf.mxu0
        %v1624 = vpop.f32.mrf.mxu0
        %v1625 = vadd.f32 0.0, %v1624
        %v1626 = vpop.f32.mrf.mxu0
        %1627 = vmatprep.mubr.bf16.mxu0 0
        %1628 = vmatmul.mubr.bf16.gmra.mxu0 %v1530
        %v1629 = vpop.f32.mrf.mxu0
        %v1630 = vadd.f32 0.0, %v1629
        %v1631 = vpop.f32.mrf.mxu0
        %v1632 = vpop.f32.mrf.mxu0
        %v1633 = vadd.f32 0.0, %v1632
        %v1634 = vpop.f32.mrf.mxu0
        %1635 = vmatprep.mubr.bf16.mxu0 0
        %1636 = vmatmul.mubr.bf16.gmra.mxu0 %v1533
        %v1637 = vpop.f32.mrf.mxu0
        %v1638 = vadd.f32 0.0, %v1637
        %v1639 = vpop.f32.mrf.mxu0
        %v1640 = vpop.f32.mrf.mxu0
        %v1641 = vadd.f32 0.0, %v1640
        %v1642 = vpop.f32.mrf.mxu0
        %1643 = vmatprep.mubr.bf16.mxu0 0
        %1644 = vmatmul.mubr.bf16.gmra.mxu0 %v1536
        %v1645 = vpop.f32.mrf.mxu0
        %v1646 = vadd.f32 0.0, %v1645
        %v1647 = vpop.f32.mrf.mxu0
        %v1648 = vpop.f32.mrf.mxu0
        %v1649 = vadd.f32 0.0, %v1648
        %v1650 = vpop.f32.mrf.mxu0
        %1651 = vmatprep.mubr.bf16.mxu0 0
        %1652 = vmatmul.mubr.bf16.gmra.mxu0 %v1539
        %v1653 = vpop.f32.mrf.mxu0
        %v1654 = vadd.f32 0.0, %v1653
        %v1655 = vpop.f32.mrf.mxu0
        %v1656 = vpop.f32.mrf.mxu0
        %v1657 = vadd.f32 0.0, %v1656
        %v1658 = vpop.f32.mrf.mxu0
        %1659 = vmatprep.mubr.bf16.mxu0 0
        %1660 = vmatmul.mubr.bf16.gmra.mxu0 %v1542
        %v1661 = vpop.f32.mrf.mxu0
        %v1662 = vadd.f32 0.0, %v1661
        %v1663 = vpop.f32.mrf.mxu0
        %v1664 = vpop.f32.mrf.mxu0
        %v1665 = vadd.f32 0.0, %v1664
        %v1666 = vpop.f32.mrf.mxu0
        %1667 = vmatprep.mubr.bf16.mxu0 0
        %1668 = vmatmul.mubr.bf16.gmra.mxu0 %v1545
        %v1669 = vpop.f32.mrf.mxu0
        %v1670 = vadd.f32 0.0, %v1669
        %v1671 = vpop.f32.mrf.mxu0
        %v1672 = vpop.f32.mrf.mxu0
        %v1673 = vadd.f32 0.0, %v1672
        %v1674 = vpop.f32.mrf.mxu0
        %1675 = vmatprep.mubr.bf16.mxu0 0
        %1676 = vmatmul.mubr.bf16.gmra.mxu0 %v1548
        %v1677 = vpop.f32.mrf.mxu0
        %v1678 = vadd.f32 0.0, %v1677
        %v1679 = vpop.f32.mrf.mxu0
        %v1680 = vpop.f32.mrf.mxu0
        %v1681 = vadd.f32 0.0, %v1680
        %v1682 = vpop.f32.mrf.mxu0
        %1683 = vmatprep.mubr.bf16.mxu0 0
        %1684 = vmatmul.mubr.bf16.gmra.mxu0 %v1551
        %v1685 = vpop.f32.mrf.mxu0
        %v1686 = vadd.f32 0.0, %v1685
        %v1687 = vpop.f32.mrf.mxu0
        %v1688 = vpop.f32.mrf.mxu0
        %v1689 = vadd.f32 0.0, %v1688
        %v1690 = vpop.f32.mrf.mxu0
        %1691 = vmatprep.mubr.bf16.mxu0 0
        %1692 = vmatmul.mubr.bf16.gmra.mxu0 %v1554
        %v1693 = vpop.f32.mrf.mxu0
        %v1694 = vadd.f32 0.0, %v1693
        %v1695 = vpop.f32.mrf.mxu0
        %v1696 = vpop.f32.mrf.mxu0
        %v1697 = vadd.f32 0.0, %v1696
        %v1698 = vpop.f32.mrf.mxu0
        %1699 = vmatprep.mubr.bf16.mxu0 0
        %1700 = vmatmul.mubr.bf16.gmra.mxu0 %v1557
        %v1701 = vpop.f32.mrf.mxu0
        %v1702 = vadd.f32 0.0, %v1701
        %v1703 = vpop.f32.mrf.mxu0
        %v1704 = vpop.f32.mrf.mxu0
        %v1705 = vadd.f32 0.0, %v1704
        %v1706 = vpop.f32.mrf.mxu0
        %1707 = vmatprep.mubr.bf16.mxu0 0
        %1708 = vmatmul.mubr.bf16.gmra.mxu0 %v1560
        %v1709 = vpop.f32.mrf.mxu0
        %v1710 = vadd.f32 0.0, %v1709
        %v1711 = vpop.f32.mrf.mxu0
        %v1712 = vpop.f32.mrf.mxu0
        %v1713 = vadd.f32 0.0, %v1712
        %v1714 = vpop.f32.mrf.mxu0
        %1715 = vmatprep.mubr.bf16.mxu0 0
        %1716 = vmatmul.mubr.bf16.gmra.mxu0 %v1563
        %v1717 = vpop.f32.mrf.mxu0
        %v1718 = vadd.f32 0.0, %v1717
        %v1719 = vpop.f32.mrf.mxu0
        %v1720 = vpop.f32.mrf.mxu0
        %v1721 = vadd.f32 0.0, %v1720
        %v1722 = vpop.f32.mrf.mxu0
        %1723 = vmatprep.mubr.bf16.mxu0 0
        %1724 = vmatmul.mubr.bf16.gmra.mxu0 %v1566
        %v1725 = vpop.f32.mrf.mxu0
        %v1726 = vadd.f32 0.0, %v1725
        %v1727 = vpop.f32.mrf.mxu0
        %v1728 = vpop.f32.mrf.mxu0
        %v1729 = vadd.f32 0.0, %v1728
        %v1730 = vpop.f32.mrf.mxu0
        %1731 = vdwg.mxu0
        %v1732 = vadd.f32 %v1345, %v1606
        %v1733 = vadd.f32 %v1348, %v1609
        %v1734 = vadd.f32 %v1353, %v1614
        %v1735 = vadd.f32 %v1356, %v1617
        %v1736 = vadd.f32 %v1361, %v1622
        %v1737 = vadd.f32 %v1364, %v1625
        %v1738 = vadd.f32 %v1369, %v1630
        %v1739 = vadd.f32 %v1372, %v1633
        %v1740 = vadd.f32 %v1377, %v1638
        %v1741 = vadd.f32 %v1380, %v1641
        %v1742 = vadd.f32 %v1385, %v1646
        %v1743 = vadd.f32 %v1388, %v1649
        %v1744 = vadd.f32 %v1393, %v1654
        %v1745 = vadd.f32 %v1396, %v1657
        %v1746 = vadd.f32 %v1401, %v1662
        %v1747 = vadd.f32 %v1404, %v1665
        %v1748 = vadd.f32 %v1409, %v1670
        %v1749 = vadd.f32 %v1412, %v1673
        %v1750 = vadd.f32 %v1417, %v1678
        %v1751 = vadd.f32 %v1420, %v1681
        %v1752 = vadd.f32 %v1425, %v1686
        %v1753 = vadd.f32 %v1428, %v1689
        %v1754 = vadd.f32 %v1433, %v1694
        %v1755 = vadd.f32 %v1436, %v1697
        %v1756 = vadd.f32 %v1441, %v1702
        %v1757 = vadd.f32 %v1444, %v1705
        %v1758 = vadd.f32 %v1449, %v1710
        %v1759 = vadd.f32 %v1452, %v1713
        %v1760 = vadd.f32 %v1457, %v1718
        %v1761 = vadd.f32 %v1460, %v1721
        %v1762 = vadd.f32 %v1465, %v1726
        %v1763 = vadd.f32 %v1468, %v1729
        %s1764 = scalar_lea.vmem %s1, 12
        %v1765 = vld [vmem:[%s1764] sm:$0xf]
        %v1767 = vunpack.c.l.b16 %v273
        %v1768 = vunpack.c.l.b16 %v274
        %v1769 = vpack.c.b16 %v1768, %v1767
        %v1771 = vsel %vm981, %v1769, 0
        %v1774 = vsel %vm1030, %v1765, 0
        %1776 = vmatprep.subr.bf16.mxu0 0
        %1777 = vmatpush1.bf16.msra.mxu0 0
        %1778 = vmatprep.subr.bf16.mxu0 0
        %1779 = vmatpush1.bf16.msra.mxu0 0
        %1780 = vmatprep.subr.bf16.mxu0 0
        %1781 = vmatpush1.bf16.msra.mxu0 0
        %1782 = vmatprep.subr.bf16.mxu0 0
        %1783 = vmatpush1.bf16.msra.mxu0 0
        %1784 = vmatprep.subr.bf16.mxu0 0
        %1785 = vmatpush1.bf16.msra.mxu0 0
        %1786 = vmatprep.subr.bf16.mxu0 0
        %1787 = vmatpush1.bf16.msra.mxu0 0
        %1788 = vmatprep.subr.bf16.mxu0 0
        %1789 = vmatpush1.bf16.msra.mxu0 0
        %1790 = vmatprep.subr.bf16.mxu0 0
        %1791 = vmatpush1.bf16.msra.mxu0 %v1774
        %1792 = vmatprep.subr.bf16.mxu0 0
        %1793 = vmatpush2.bf16.msra.mxu0 0
        %1794 = vmatprep.subr.bf16.mxu0 0
        %1795 = vmatpush2.bf16.msra.mxu0 0
        %1796 = vmatprep.subr.bf16.mxu0 0
        %1797 = vmatpush2.bf16.msra.mxu0 0
        %1798 = vmatprep.subr.bf16.mxu0 0
        %1799 = vmatpush2.bf16.msra.mxu0 0
        %1800 = vmatprep.subr.bf16.mxu0 0
        %1801 = vmatpush2.bf16.msra.mxu0 0
        %1802 = vmatprep.subr.bf16.mxu0 0
        %1803 = vmatpush2.bf16.msra.mxu0 0
        %1804 = vmatprep.subr.bf16.mxu0 0
        %1805 = vmatpush2.bf16.msra.mxu0 0
        %1806 = vmatprep.subr.bf16.mxu0 0
        %1807 = vmatpush2.bf16.msra.mxu0 0
        %1808 = vmatprep.mubr.bf16.mxu0 0
        %1809 = vmatmul.mubr.bf16.gmra.mxu0 %v1263
        %v1810 = vpop.f32.mrf.mxu0
        %v1811 = vadd.f32 0.0, %v1810
        %v1812 = vpop.f32.mrf.mxu0
        %v1813 = vpop.f32.mrf.mxu0
        %v1814 = vadd.f32 0.0, %v1813
        %v1815 = vpop.f32.mrf.mxu0
        %1816 = vmatprep.mubr.bf16.mxu0 0
        %1817 = vmatmul.mubr.bf16.gmra.mxu0 %v1266
        %v1818 = vpop.f32.mrf.mxu0
        %v1819 = vadd.f32 0.0, %v1818
        %v1820 = vpop.f32.mrf.mxu0
        %v1821 = vpop.f32.mrf.mxu0
        %v1822 = vadd.f32 0.0, %v1821
        %v1823 = vpop.f32.mrf.mxu0
        %1824 = vmatprep.mubr.bf16.mxu0 0
        %1825 = vmatmul.mubr.bf16.gmra.mxu0 %v1269
        %v1826 = vpop.f32.mrf.mxu0
        %v1827 = vadd.f32 0.0, %v1826
        %v1828 = vpop.f32.mrf.mxu0
        %v1829 = vpop.f32.mrf.mxu0
        %v1830 = vadd.f32 0.0, %v1829
        %v1831 = vpop.f32.mrf.mxu0
        %1832 = vmatprep.mubr.bf16.mxu0 0
        %1833 = vmatmul.mubr.bf16.gmra.mxu0 %v1272
        %v1834 = vpop.f32.mrf.mxu0
        %v1835 = vadd.f32 0.0, %v1834
        %v1836 = vpop.f32.mrf.mxu0
        %v1837 = vpop.f32.mrf.mxu0
        %v1838 = vadd.f32 0.0, %v1837
        %v1839 = vpop.f32.mrf.mxu0
        %1840 = vmatprep.mubr.bf16.mxu0 0
        %1841 = vmatmul.mubr.bf16.gmra.mxu0 %v1275
        %v1842 = vpop.f32.mrf.mxu0
        %v1843 = vadd.f32 0.0, %v1842
        %v1844 = vpop.f32.mrf.mxu0
        %v1845 = vpop.f32.mrf.mxu0
        %v1846 = vadd.f32 0.0, %v1845
        %v1847 = vpop.f32.mrf.mxu0
        %1848 = vmatprep.mubr.bf16.mxu0 0
        %1849 = vmatmul.mubr.bf16.gmra.mxu0 %v1278
        %v1850 = vpop.f32.mrf.mxu0
        %v1851 = vadd.f32 0.0, %v1850
        %v1852 = vpop.f32.mrf.mxu0
        %v1853 = vpop.f32.mrf.mxu0
        %v1854 = vadd.f32 0.0, %v1853
        %v1855 = vpop.f32.mrf.mxu0
        %1856 = vmatprep.mubr.bf16.mxu0 0
        %1857 = vmatmul.mubr.bf16.gmra.mxu0 %v1281
        %v1858 = vpop.f32.mrf.mxu0
        %v1859 = vadd.f32 0.0, %v1858
        %v1860 = vpop.f32.mrf.mxu0
        %v1861 = vpop.f32.mrf.mxu0
        %v1862 = vadd.f32 0.0, %v1861
        %v1863 = vpop.f32.mrf.mxu0
        %1864 = vmatprep.mubr.bf16.mxu0 0
        %1865 = vmatmul.mubr.bf16.gmra.mxu0 %v1284
        %v1866 = vpop.f32.mrf.mxu0
        %v1867 = vadd.f32 0.0, %v1866
        %v1868 = vpop.f32.mrf.mxu0
        %v1869 = vpop.f32.mrf.mxu0
        %v1870 = vadd.f32 0.0, %v1869
        %v1871 = vpop.f32.mrf.mxu0
        %1872 = vmatprep.mubr.bf16.mxu0 0
        %1873 = vmatmul.mubr.bf16.gmra.mxu0 %v1287
        %v1874 = vpop.f32.mrf.mxu0
        %v1875 = vadd.f32 0.0, %v1874
        %v1876 = vpop.f32.mrf.mxu0
        %v1877 = vpop.f32.mrf.mxu0
        %v1878 = vadd.f32 0.0, %v1877
        %v1879 = vpop.f32.mrf.mxu0
        %1880 = vmatprep.mubr.bf16.mxu0 0
        %1881 = vmatmul.mubr.bf16.gmra.mxu0 %v1290
        %v1882 = vpop.f32.mrf.mxu0
        %v1883 = vadd.f32 0.0, %v1882
        %v1884 = vpop.f32.mrf.mxu0
        %v1885 = vpop.f32.mrf.mxu0
        %v1886 = vadd.f32 0.0, %v1885
        %v1887 = vpop.f32.mrf.mxu0
        %1888 = vmatprep.mubr.bf16.mxu0 0
        %1889 = vmatmul.mubr.bf16.gmra.mxu0 %v1293
        %v1890 = vpop.f32.mrf.mxu0
        %v1891 = vadd.f32 0.0, %v1890
        %v1892 = vpop.f32.mrf.mxu0
        %v1893 = vpop.f32.mrf.mxu0
        %v1894 = vadd.f32 0.0, %v1893
        %v1895 = vpop.f32.mrf.mxu0
        %1896 = vmatprep.mubr.bf16.mxu0 0
        %1897 = vmatmul.mubr.bf16.gmra.mxu0 %v1296
        %v1898 = vpop.f32.mrf.mxu0
        %v1899 = vadd.f32 0.0, %v1898
        %v1900 = vpop.f32.mrf.mxu0
        %v1901 = vpop.f32.mrf.mxu0
        %v1902 = vadd.f32 0.0, %v1901
        %v1903 = vpop.f32.mrf.mxu0
        %1904 = vmatprep.mubr.bf16.mxu0 0
        %1905 = vmatmul.mubr.bf16.gmra.mxu0 %v1299
        %v1906 = vpop.f32.mrf.mxu0
        %v1907 = vadd.f32 0.0, %v1906
        %v1908 = vpop.f32.mrf.mxu0
        %v1909 = vpop.f32.mrf.mxu0
        %v1910 = vadd.f32 0.0, %v1909
        %v1911 = vpop.f32.mrf.mxu0
        %1912 = vmatprep.mubr.bf16.mxu0 0
        %1913 = vmatmul.mubr.bf16.gmra.mxu0 %v1302
        %v1914 = vpop.f32.mrf.mxu0
        %v1915 = vadd.f32 0.0, %v1914
        %v1916 = vpop.f32.mrf.mxu0
        %v1917 = vpop.f32.mrf.mxu0
        %v1918 = vadd.f32 0.0, %v1917
        %v1919 = vpop.f32.mrf.mxu0
        %1920 = vmatprep.mubr.bf16.mxu0 0
        %1921 = vmatmul.mubr.bf16.gmra.mxu0 %v1305
        %v1922 = vpop.f32.mrf.mxu0
        %v1923 = vadd.f32 0.0, %v1922
        %v1924 = vpop.f32.mrf.mxu0
        %v1925 = vpop.f32.mrf.mxu0
        %v1926 = vadd.f32 0.0, %v1925
        %v1927 = vpop.f32.mrf.mxu0
        %1928 = vmatprep.mubr.bf16.mxu0 0
        %1929 = vmatmul.mubr.bf16.gmra.mxu0 %v1771
        %v1930 = vpop.f32.mrf.mxu0
        %v1931 = vadd.f32 0.0, %v1930
        %v1932 = vpop.f32.mrf.mxu0
        %v1933 = vpop.f32.mrf.mxu0
        %v1934 = vadd.f32 0.0, %v1933
        %v1935 = vpop.f32.mrf.mxu0
        %1936 = vdwg.mxu0
        %v1937 = vadd.f32 %v1732, %v1811
        %v1938 = vadd.f32 %v1733, %v1814
        %v1939 = vadd.f32 %v1734, %v1819
        %v1940 = vadd.f32 %v1735, %v1822
        %v1941 = vadd.f32 %v1736, %v1827
        %v1942 = vadd.f32 %v1737, %v1830
        %v1943 = vadd.f32 %v1738, %v1835
        %v1944 = vadd.f32 %v1739, %v1838
        %v1945 = vadd.f32 %v1740, %v1843
        %v1946 = vadd.f32 %v1741, %v1846
        %v1947 = vadd.f32 %v1742, %v1851
        %v1948 = vadd.f32 %v1743, %v1854
        %v1949 = vadd.f32 %v1744, %v1859
        %v1950 = vadd.f32 %v1745, %v1862
        %v1951 = vadd.f32 %v1746, %v1867
        %v1952 = vadd.f32 %v1747, %v1870
        %v1953 = vadd.f32 %v1748, %v1875
        %v1954 = vadd.f32 %v1749, %v1878
        %v1955 = vadd.f32 %v1750, %v1883
        %v1956 = vadd.f32 %v1751, %v1886
        %v1957 = vadd.f32 %v1752, %v1891
        %v1958 = vadd.f32 %v1753, %v1894
        %v1959 = vadd.f32 %v1754, %v1899
        %v1960 = vadd.f32 %v1755, %v1902
        %v1961 = vadd.f32 %v1756, %v1907
        %v1962 = vadd.f32 %v1757, %v1910
        %v1963 = vadd.f32 %v1758, %v1915
        %v1964 = vadd.f32 %v1759, %v1918
        %v1965 = vadd.f32 %v1760, %v1923
        %v1966 = vadd.f32 %v1761, %v1926
        %v1967 = vadd.f32 %v1762, %v1931
        %v1968 = vadd.f32 %v1763, %v1934
        %v1969 = vld [vmem:[%s1764 + $0x4] sm:$0xf]
        %v1970 = vunpack.c.l.b16 %v695
        %v1971 = vunpack.c.l.b16 %v705
        %v1972 = vpack.c.b16 %v1971, %v1970
        %v1974 = vsel %vm981, %v1972, 0
        %v1977 = vsel %vm1030, %v1969, 0
        %1979 = vmatprep.subr.bf16.mxu0 0
        %1980 = vmatpush1.bf16.msra.mxu0 0
        %1981 = vmatprep.subr.bf16.mxu0 0
        %1982 = vmatpush1.bf16.msra.mxu0 0
        %1983 = vmatprep.subr.bf16.mxu0 0
        %1984 = vmatpush1.bf16.msra.mxu0 0
        %1985 = vmatprep.subr.bf16.mxu0 0
        %1986 = vmatpush1.bf16.msra.mxu0 0
        %1987 = vmatprep.subr.bf16.mxu0 0
        %1988 = vmatpush1.bf16.msra.mxu0 0
        %1989 = vmatprep.subr.bf16.mxu0 0
        %1990 = vmatpush1.bf16.msra.mxu0 0
        %1991 = vmatprep.subr.bf16.mxu0 0
        %1992 = vmatpush1.bf16.msra.mxu0 0
        %1993 = vmatprep.subr.bf16.mxu0 0
        %1994 = vmatpush1.bf16.msra.mxu0 %v1977
        %1995 = vmatprep.subr.bf16.mxu0 0
        %1996 = vmatpush2.bf16.msra.mxu0 0
        %1997 = vmatprep.subr.bf16.mxu0 0
        %1998 = vmatpush2.bf16.msra.mxu0 0
        %1999 = vmatprep.subr.bf16.mxu0 0
        %2000 = vmatpush2.bf16.msra.mxu0 0
        %2001 = vmatprep.subr.bf16.mxu0 0
        %2002 = vmatpush2.bf16.msra.mxu0 0
        %2003 = vmatprep.subr.bf16.mxu0 0
        %2004 = vmatpush2.bf16.msra.mxu0 0
        %2005 = vmatprep.subr.bf16.mxu0 0
        %2006 = vmatpush2.bf16.msra.mxu0 0
        %2007 = vmatprep.subr.bf16.mxu0 0
        %2008 = vmatpush2.bf16.msra.mxu0 0
        %2009 = vmatprep.subr.bf16.mxu0 0
        %2010 = vmatpush2.bf16.msra.mxu0 0
        %2011 = vmatprep.mubr.bf16.mxu0 0
        %2012 = vmatmul.mubr.bf16.gmra.mxu0 %v986
        %v2013 = vpop.f32.mrf.mxu0
        %v2014 = vadd.f32 0.0, %v2013
        %v2015 = vpop.f32.mrf.mxu0
        %v2016 = vpop.f32.mrf.mxu0
        %v2017 = vadd.f32 0.0, %v2016
        %v2018 = vpop.f32.mrf.mxu0
        %2019 = vmatprep.mubr.bf16.mxu0 0
        %2020 = vmatmul.mubr.bf16.gmra.mxu0 %v989
        %v2021 = vpop.f32.mrf.mxu0
        %v2022 = vadd.f32 0.0, %v2021
        %v2023 = vpop.f32.mrf.mxu0
        %v2024 = vpop.f32.mrf.mxu0
        %v2025 = vadd.f32 0.0, %v2024
        %v2026 = vpop.f32.mrf.mxu0
        %2027 = vmatprep.mubr.bf16.mxu0 0
        %2028 = vmatmul.mubr.bf16.gmra.mxu0 %v992
        %v2029 = vpop.f32.mrf.mxu0
        %v2030 = vadd.f32 0.0, %v2029
        %v2031 = vpop.f32.mrf.mxu0
        %v2032 = vpop.f32.mrf.mxu0
        %v2033 = vadd.f32 0.0, %v2032
        %v2034 = vpop.f32.mrf.mxu0
        %2035 = vmatprep.mubr.bf16.mxu0 0
        %2036 = vmatmul.mubr.bf16.gmra.mxu0 %v995
        %v2037 = vpop.f32.mrf.mxu0
        %v2038 = vadd.f32 0.0, %v2037
        %v2039 = vpop.f32.mrf.mxu0
        %v2040 = vpop.f32.mrf.mxu0
        %v2041 = vadd.f32 0.0, %v2040
        %v2042 = vpop.f32.mrf.mxu0
        %2043 = vmatprep.mubr.bf16.mxu0 0
        %2044 = vmatmul.mubr.bf16.gmra.mxu0 %v998
        %v2045 = vpop.f32.mrf.mxu0
        %v2046 = vadd.f32 0.0, %v2045
        %v2047 = vpop.f32.mrf.mxu0
        %v2048 = vpop.f32.mrf.mxu0
        %v2049 = vadd.f32 0.0, %v2048
        %v2050 = vpop.f32.mrf.mxu0
        %2051 = vmatprep.mubr.bf16.mxu0 0
        %2052 = vmatmul.mubr.bf16.gmra.mxu0 %v1001
        %v2053 = vpop.f32.mrf.mxu0
        %v2054 = vadd.f32 0.0, %v2053
        %v2055 = vpop.f32.mrf.mxu0
        %v2056 = vpop.f32.mrf.mxu0
        %v2057 = vadd.f32 0.0, %v2056
        %v2058 = vpop.f32.mrf.mxu0
        %2059 = vmatprep.mubr.bf16.mxu0 0
        %2060 = vmatmul.mubr.bf16.gmra.mxu0 %v1004
        %v2061 = vpop.f32.mrf.mxu0
        %v2062 = vadd.f32 0.0, %v2061
        %v2063 = vpop.f32.mrf.mxu0
        %v2064 = vpop.f32.mrf.mxu0
        %v2065 = vadd.f32 0.0, %v2064
        %v2066 = vpop.f32.mrf.mxu0
        %2067 = vmatprep.mubr.bf16.mxu0 0
        %2068 = vmatmul.mubr.bf16.gmra.mxu0 %v1007
        %v2069 = vpop.f32.mrf.mxu0
        %v2070 = vadd.f32 0.0, %v2069
        %v2071 = vpop.f32.mrf.mxu0
        %v2072 = vpop.f32.mrf.mxu0
        %v2073 = vadd.f32 0.0, %v2072
        %v2074 = vpop.f32.mrf.mxu0
        %2075 = vmatprep.mubr.bf16.mxu0 0
        %2076 = vmatmul.mubr.bf16.gmra.mxu0 %v1010
        %v2077 = vpop.f32.mrf.mxu0
        %v2078 = vadd.f32 0.0, %v2077
        %v2079 = vpop.f32.mrf.mxu0
        %v2080 = vpop.f32.mrf.mxu0
        %v2081 = vadd.f32 0.0, %v2080
        %v2082 = vpop.f32.mrf.mxu0
        %2083 = vmatprep.mubr.bf16.mxu0 0
        %2084 = vmatmul.mubr.bf16.gmra.mxu0 %v1013
        %v2085 = vpop.f32.mrf.mxu0
        %v2086 = vadd.f32 0.0, %v2085
        %v2087 = vpop.f32.mrf.mxu0
        %v2088 = vpop.f32.mrf.mxu0
        %v2089 = vadd.f32 0.0, %v2088
        %v2090 = vpop.f32.mrf.mxu0
        %2091 = vmatprep.mubr.bf16.mxu0 0
        %2092 = vmatmul.mubr.bf16.gmra.mxu0 %v1016
        %v2093 = vpop.f32.mrf.mxu0
        %v2094 = vadd.f32 0.0, %v2093
        %v2095 = vpop.f32.mrf.mxu0
        %v2096 = vpop.f32.mrf.mxu0
        %v2097 = vadd.f32 0.0, %v2096
        %v2098 = vpop.f32.mrf.mxu0
        %2099 = vmatprep.mubr.bf16.mxu0 0
        %2100 = vmatmul.mubr.bf16.gmra.mxu0 %v1019
        %v2101 = vpop.f32.mrf.mxu0
        %v2102 = vadd.f32 0.0, %v2101
        %v2103 = vpop.f32.mrf.mxu0
        %v2104 = vpop.f32.mrf.mxu0
        %v2105 = vadd.f32 0.0, %v2104
        %v2106 = vpop.f32.mrf.mxu0
        %2107 = vmatprep.mubr.bf16.mxu0 0
        %2108 = vmatmul.mubr.bf16.gmra.mxu0 %v1022
        %v2109 = vpop.f32.mrf.mxu0
        %v2110 = vadd.f32 0.0, %v2109
        %v2111 = vpop.f32.mrf.mxu0
        %v2112 = vpop.f32.mrf.mxu0
        %v2113 = vadd.f32 0.0, %v2112
        %v2114 = vpop.f32.mrf.mxu0
        %2115 = vmatprep.mubr.bf16.mxu0 0
        %2116 = vmatmul.mubr.bf16.gmra.mxu0 %v1025
        %v2117 = vpop.f32.mrf.mxu0
        %v2118 = vadd.f32 0.0, %v2117
        %v2119 = vpop.f32.mrf.mxu0
        %v2120 = vpop.f32.mrf.mxu0
        %v2121 = vadd.f32 0.0, %v2120
        %v2122 = vpop.f32.mrf.mxu0
        %2123 = vmatprep.mubr.bf16.mxu0 0
        %2124 = vmatmul.mubr.bf16.gmra.mxu0 %v1028
        %v2125 = vpop.f32.mrf.mxu0
        %v2126 = vadd.f32 0.0, %v2125
        %v2127 = vpop.f32.mrf.mxu0
        %v2128 = vpop.f32.mrf.mxu0
        %v2129 = vadd.f32 0.0, %v2128
        %v2130 = vpop.f32.mrf.mxu0
        %2131 = vmatprep.mubr.bf16.mxu0 0
        %2132 = vmatmul.mubr.bf16.gmra.mxu0 %v1974
        %v2133 = vpop.f32.mrf.mxu0
        %v2134 = vadd.f32 0.0, %v2133
        %v2135 = vpop.f32.mrf.mxu0
        %v2136 = vpop.f32.mrf.mxu0
        %v2137 = vadd.f32 0.0, %v2136
        %v2138 = vpop.f32.mrf.mxu0
        %2139 = vdwg.mxu0
        %v2140 = vadd.f32 %v1937, %v2014
        %v2141 = vadd.f32 %v1938, %v2017
        %v2142 = vadd.f32 %v1939, %v2022
        %v2143 = vadd.f32 %v1940, %v2025
        %v2144 = vadd.f32 %v1941, %v2030
        %v2145 = vadd.f32 %v1942, %v2033
        %v2146 = vadd.f32 %v1943, %v2038
        %v2147 = vadd.f32 %v1944, %v2041
        %v2148 = vadd.f32 %v1945, %v2046
        %v2149 = vadd.f32 %v1946, %v2049
        %v2150 = vadd.f32 %v1947, %v2054
        %v2151 = vadd.f32 %v1948, %v2057
        %v2152 = vadd.f32 %v1949, %v2062
        %v2153 = vadd.f32 %v1950, %v2065
        %v2154 = vadd.f32 %v1951, %v2070
        %v2155 = vadd.f32 %v1952, %v2073
        %v2156 = vadd.f32 %v1953, %v2078
        %v2157 = vadd.f32 %v1954, %v2081
        %v2158 = vadd.f32 %v1955, %v2086
        %v2159 = vadd.f32 %v1956, %v2089
        %v2160 = vadd.f32 %v1957, %v2094
        %v2161 = vadd.f32 %v1958, %v2097
        %v2162 = vadd.f32 %v1959, %v2102
        %v2163 = vadd.f32 %v1960, %v2105
        %v2164 = vadd.f32 %v1961, %v2110
        %v2165 = vadd.f32 %v1962, %v2113
        %v2166 = vadd.f32 %v1963, %v2118
        %v2167 = vadd.f32 %v1964, %v2121
        %v2168 = vadd.f32 %v1965, %v2126
        %v2169 = vadd.f32 %v1966, %v2129
        %v2170 = vadd.f32 %v1967, %v2134
        %v2171 = vadd.f32 %v1968, %v2137
        %v2172 = vld [vmem:[%s1764 + $0x8] sm:$0xf]
        %v2173 = vunpack.c.l.b16 %v920
        %v2174 = vunpack.c.l.b16 %v923
        %v2175 = vpack.c.b16 %v2174, %v2173
        %v2177 = vsel %vm981, %v2175, 0
        %v2180 = vsel %vm1030, %v2172, 0
        %2182 = vmatprep.subr.bf16.mxu0 0
        %2183 = vmatpush1.bf16.msra.mxu0 0
        %2184 = vmatprep.subr.bf16.mxu0 0
        %2185 = vmatpush1.bf16.msra.mxu0 0
        %2186 = vmatprep.subr.bf16.mxu0 0
        %2187 = vmatpush1.bf16.msra.mxu0 0
        %2188 = vmatprep.subr.bf16.mxu0 0
        %2189 = vmatpush1.bf16.msra.mxu0 0
        %2190 = vmatprep.subr.bf16.mxu0 0
        %2191 = vmatpush1.bf16.msra.mxu0 0
        %2192 = vmatprep.subr.bf16.mxu0 0
        %2193 = vmatpush1.bf16.msra.mxu0 0
        %2194 = vmatprep.subr.bf16.mxu0 0
        %2195 = vmatpush1.bf16.msra.mxu0 0
        %2196 = vmatprep.subr.bf16.mxu0 0
        %2197 = vmatpush1.bf16.msra.mxu0 %v2180
        %2198 = vmatprep.subr.bf16.mxu0 0
        %2199 = vmatpush2.bf16.msra.mxu0 0
        %2200 = vmatprep.subr.bf16.mxu0 0
        %2201 = vmatpush2.bf16.msra.mxu0 0
        %2202 = vmatprep.subr.bf16.mxu0 0
        %2203 = vmatpush2.bf16.msra.mxu0 0
        %2204 = vmatprep.subr.bf16.mxu0 0
        %2205 = vmatpush2.bf16.msra.mxu0 0
        %2206 = vmatprep.subr.bf16.mxu0 0
        %2207 = vmatpush2.bf16.msra.mxu0 0
        %2208 = vmatprep.subr.bf16.mxu0 0
        %2209 = vmatpush2.bf16.msra.mxu0 0
        %2210 = vmatprep.subr.bf16.mxu0 0
        %2211 = vmatpush2.bf16.msra.mxu0 0
        %2212 = vmatprep.subr.bf16.mxu0 0
        %2213 = vmatpush2.bf16.msra.mxu0 0
        %2214 = vmatprep.mubr.bf16.mxu0 0
        %2215 = vmatmul.mubr.bf16.gmra.mxu0 %v1524
        %v2216 = vpop.f32.mrf.mxu0
        %v2217 = vadd.f32 0.0, %v2216
        %v2218 = vpop.f32.mrf.mxu0
        %v2219 = vpop.f32.mrf.mxu0
        %v2220 = vadd.f32 0.0, %v2219
        %v2221 = vpop.f32.mrf.mxu0
        %2222 = vmatprep.mubr.bf16.mxu0 0
        %2223 = vmatmul.mubr.bf16.gmra.mxu0 %v1527
        %v2224 = vpop.f32.mrf.mxu0
        %v2225 = vadd.f32 0.0, %v2224
        %v2226 = vpop.f32.mrf.mxu0
        %v2227 = vpop.f32.mrf.mxu0
        %v2228 = vadd.f32 0.0, %v2227
        %v2229 = vpop.f32.mrf.mxu0
        %2230 = vmatprep.mubr.bf16.mxu0 0
        %2231 = vmatmul.mubr.bf16.gmra.mxu0 %v1530
        %v2232 = vpop.f32.mrf.mxu0
        %v2233 = vadd.f32 0.0, %v2232
        %v2234 = vpop.f32.mrf.mxu0
        %v2235 = vpop.f32.mrf.mxu0
        %v2236 = vadd.f32 0.0, %v2235
        %v2237 = vpop.f32.mrf.mxu0
        %2238 = vmatprep.mubr.bf16.mxu0 0
        %2239 = vmatmul.mubr.bf16.gmra.mxu0 %v1533
        %v2240 = vpop.f32.mrf.mxu0
        %v2241 = vadd.f32 0.0, %v2240
        %v2242 = vpop.f32.mrf.mxu0
        %v2243 = vpop.f32.mrf.mxu0
        %v2244 = vadd.f32 0.0, %v2243
        %v2245 = vpop.f32.mrf.mxu0
        %2246 = vmatprep.mubr.bf16.mxu0 0
        %2247 = vmatmul.mubr.bf16.gmra.mxu0 %v1536
        %v2248 = vpop.f32.mrf.mxu0
        %v2249 = vadd.f32 0.0, %v2248
        %v2250 = vpop.f32.mrf.mxu0
        %v2251 = vpop.f32.mrf.mxu0
        %v2252 = vadd.f32 0.0, %v2251
        %v2253 = vpop.f32.mrf.mxu0
        %2254 = vmatprep.mubr.bf16.mxu0 0
        %2255 = vmatmul.mubr.bf16.gmra.mxu0 %v1539
        %v2256 = vpop.f32.mrf.mxu0
        %v2257 = vadd.f32 0.0, %v2256
        %v2258 = vpop.f32.mrf.mxu0
        %v2259 = vpop.f32.mrf.mxu0
        %v2260 = vadd.f32 0.0, %v2259
        %v2261 = vpop.f32.mrf.mxu0
        %2262 = vmatprep.mubr.bf16.mxu0 0
        %2263 = vmatmul.mubr.bf16.gmra.mxu0 %v1542
        %v2264 = vpop.f32.mrf.mxu0
        %v2265 = vadd.f32 0.0, %v2264
        %v2266 = vpop.f32.mrf.mxu0
        %v2267 = vpop.f32.mrf.mxu0
        %v2268 = vadd.f32 0.0, %v2267
        %v2269 = vpop.f32.mrf.mxu0
        %2270 = vmatprep.mubr.bf16.mxu0 0
        %2271 = vmatmul.mubr.bf16.gmra.mxu0 %v1545
        %v2272 = vpop.f32.mrf.mxu0
        %v2273 = vadd.f32 0.0, %v2272
        %v2274 = vpop.f32.mrf.mxu0
        %v2275 = vpop.f32.mrf.mxu0
        %v2276 = vadd.f32 0.0, %v2275
        %v2277 = vpop.f32.mrf.mxu0
        %2278 = vmatprep.mubr.bf16.mxu0 0
        %2279 = vmatmul.mubr.bf16.gmra.mxu0 %v1548
        %v2280 = vpop.f32.mrf.mxu0
        %v2281 = vadd.f32 0.0, %v2280
        %v2282 = vpop.f32.mrf.mxu0
        %v2283 = vpop.f32.mrf.mxu0
        %v2284 = vadd.f32 0.0, %v2283
        %v2285 = vpop.f32.mrf.mxu0
        %2286 = vmatprep.mubr.bf16.mxu0 0
        %2287 = vmatmul.mubr.bf16.gmra.mxu0 %v1551
        %v2288 = vpop.f32.mrf.mxu0
        %v2289 = vadd.f32 0.0, %v2288
        %v2290 = vpop.f32.mrf.mxu0
        %v2291 = vpop.f32.mrf.mxu0
        %v2292 = vadd.f32 0.0, %v2291
        %v2293 = vpop.f32.mrf.mxu0
        %2294 = vmatprep.mubr.bf16.mxu0 0
        %2295 = vmatmul.mubr.bf16.gmra.mxu0 %v1554
        %v2296 = vpop.f32.mrf.mxu0
        %v2297 = vadd.f32 0.0, %v2296
        %v2298 = vpop.f32.mrf.mxu0
        %v2299 = vpop.f32.mrf.mxu0
        %v2300 = vadd.f32 0.0, %v2299
        %v2301 = vpop.f32.mrf.mxu0
        %2302 = vmatprep.mubr.bf16.mxu0 0
        %2303 = vmatmul.mubr.bf16.gmra.mxu0 %v1557
        %v2304 = vpop.f32.mrf.mxu0
        %v2305 = vadd.f32 0.0, %v2304
        %v2306 = vpop.f32.mrf.mxu0
        %v2307 = vpop.f32.mrf.mxu0
        %v2308 = vadd.f32 0.0, %v2307
        %v2309 = vpop.f32.mrf.mxu0
        %2310 = vmatprep.mubr.bf16.mxu0 0
        %2311 = vmatmul.mubr.bf16.gmra.mxu0 %v1560
        %v2312 = vpop.f32.mrf.mxu0
        %v2313 = vadd.f32 0.0, %v2312
        %v2314 = vpop.f32.mrf.mxu0
        %v2315 = vpop.f32.mrf.mxu0
        %v2316 = vadd.f32 0.0, %v2315
        %v2317 = vpop.f32.mrf.mxu0
        %2318 = vmatprep.mubr.bf16.mxu0 0
        %2319 = vmatmul.mubr.bf16.gmra.mxu0 %v1563
        %v2320 = vpop.f32.mrf.mxu0
        %v2321 = vadd.f32 0.0, %v2320
        %v2322 = vpop.f32.mrf.mxu0
        %v2323 = vpop.f32.mrf.mxu0
        %v2324 = vadd.f32 0.0, %v2323
        %v2325 = vpop.f32.mrf.mxu0
        %2326 = vmatprep.mubr.bf16.mxu0 0
        %2327 = vmatmul.mubr.bf16.gmra.mxu0 %v1566
        %v2328 = vpop.f32.mrf.mxu0
        %v2329 = vadd.f32 0.0, %v2328
        %v2330 = vpop.f32.mrf.mxu0
        %v2331 = vpop.f32.mrf.mxu0
        %v2332 = vadd.f32 0.0, %v2331
        %v2333 = vpop.f32.mrf.mxu0
        %2334 = vmatprep.mubr.bf16.mxu0 0
        %2335 = vmatmul.mubr.bf16.gmra.mxu0 %v2177
        %v2336 = vpop.f32.mrf.mxu0
        %v2337 = vadd.f32 0.0, %v2336
        %v2338 = vpop.f32.mrf.mxu0
        %v2339 = vpop.f32.mrf.mxu0
        %v2340 = vadd.f32 0.0, %v2339
        %v2341 = vpop.f32.mrf.mxu0
        %2342 = vdwg.mxu0
        %v2343 = vadd.f32 %v2140, %v2217
        %v2344 = vadd.f32 %v2141, %v2220
        %v2345 = vadd.f32 %v2142, %v2225
        %v2346 = vadd.f32 %v2143, %v2228
        %v2347 = vadd.f32 %v2144, %v2233
        %v2348 = vadd.f32 %v2145, %v2236
        %v2349 = vadd.f32 %v2146, %v2241
        %v2350 = vadd.f32 %v2147, %v2244
        %v2351 = vadd.f32 %v2148, %v2249
        %v2352 = vadd.f32 %v2149, %v2252
        %v2353 = vadd.f32 %v2150, %v2257
        %v2354 = vadd.f32 %v2151, %v2260
        %v2355 = vadd.f32 %v2152, %v2265
        %v2356 = vadd.f32 %v2153, %v2268
        %v2357 = vadd.f32 %v2154, %v2273
        %v2358 = vadd.f32 %v2155, %v2276
        %v2359 = vadd.f32 %v2156, %v2281
        %v2360 = vadd.f32 %v2157, %v2284
        %v2361 = vadd.f32 %v2158, %v2289
        %v2362 = vadd.f32 %v2159, %v2292
        %v2363 = vadd.f32 %v2160, %v2297
        %v2364 = vadd.f32 %v2161, %v2300
        %v2365 = vadd.f32 %v2162, %v2305
        %v2366 = vadd.f32 %v2163, %v2308
        %v2367 = vadd.f32 %v2164, %v2313
        %v2368 = vadd.f32 %v2165, %v2316
        %v2369 = vadd.f32 %v2166, %v2321
        %v2370 = vadd.f32 %v2167, %v2324
        %v2371 = vadd.f32 %v2168, %v2329
        %v2372 = vadd.f32 %v2169, %v2332
        %v2373 = vadd.f32 %v2170, %v2337
        %v2374 = vadd.f32 %v2171, %v2340
        %s2375 = scalar_lea.vmem %s1, 24
        %v2376 = vld [vmem:[%s2375] sm:$0xf]
        %v2378 = vunpack.c.l.b16 %v275
        %v2379 = vunpack.c.l.b16 %v276
        %v2380 = vpack.c.b16 %v2379, %v2378
        %v2382 = vsel %vm981, %v2380, 0
        %v2385 = vsel %vm1030, %v2376, 0
        %2387 = vmatprep.subr.bf16.mxu0 0
        %2388 = vmatpush1.bf16.msra.mxu0 0
        %2389 = vmatprep.subr.bf16.mxu0 0
        %2390 = vmatpush1.bf16.msra.mxu0 0
        %2391 = vmatprep.subr.bf16.mxu0 0
        %2392 = vmatpush1.bf16.msra.mxu0 0
        %2393 = vmatprep.subr.bf16.mxu0 0
        %2394 = vmatpush1.bf16.msra.mxu0 0
        %2395 = vmatprep.subr.bf16.mxu0 0
        %2396 = vmatpush1.bf16.msra.mxu0 0
        %2397 = vmatprep.subr.bf16.mxu0 0
        %2398 = vmatpush1.bf16.msra.mxu0 0
        %2399 = vmatprep.subr.bf16.mxu0 0
        %2400 = vmatpush1.bf16.msra.mxu0 0
        %2401 = vmatprep.subr.bf16.mxu0 0
        %2402 = vmatpush1.bf16.msra.mxu0 %v2385
        %2403 = vmatprep.subr.bf16.mxu0 0
        %2404 = vmatpush2.bf16.msra.mxu0 0
        %2405 = vmatprep.subr.bf16.mxu0 0
        %2406 = vmatpush2.bf16.msra.mxu0 0
        %2407 = vmatprep.subr.bf16.mxu0 0
        %2408 = vmatpush2.bf16.msra.mxu0 0
        %2409 = vmatprep.subr.bf16.mxu0 0
        %2410 = vmatpush2.bf16.msra.mxu0 0
        %2411 = vmatprep.subr.bf16.mxu0 0
        %2412 = vmatpush2.bf16.msra.mxu0 0
        %2413 = vmatprep.subr.bf16.mxu0 0
        %2414 = vmatpush2.bf16.msra.mxu0 0
        %2415 = vmatprep.subr.bf16.mxu0 0
        %2416 = vmatpush2.bf16.msra.mxu0 0
        %2417 = vmatprep.subr.bf16.mxu0 0
        %2418 = vmatpush2.bf16.msra.mxu0 0
        %2419 = vmatprep.mubr.bf16.mxu0 0
        %2420 = vmatmul.mubr.bf16.gmra.mxu0 %v1266
        %v2421 = vpop.f32.mrf.mxu0
        %v2422 = vadd.f32 0.0, %v2421
        %v2423 = vpop.f32.mrf.mxu0
        %v2424 = vpop.f32.mrf.mxu0
        %v2425 = vadd.f32 0.0, %v2424
        %v2426 = vpop.f32.mrf.mxu0
        %2427 = vmatprep.mubr.bf16.mxu0 0
        %2428 = vmatmul.mubr.bf16.gmra.mxu0 %v1269
        %v2429 = vpop.f32.mrf.mxu0
        %v2430 = vadd.f32 0.0, %v2429
        %v2431 = vpop.f32.mrf.mxu0
        %v2432 = vpop.f32.mrf.mxu0
        %v2433 = vadd.f32 0.0, %v2432
        %v2434 = vpop.f32.mrf.mxu0
        %2435 = vmatprep.mubr.bf16.mxu0 0
        %2436 = vmatmul.mubr.bf16.gmra.mxu0 %v1272
        %v2437 = vpop.f32.mrf.mxu0
        %v2438 = vadd.f32 0.0, %v2437
        %v2439 = vpop.f32.mrf.mxu0
        %v2440 = vpop.f32.mrf.mxu0
        %v2441 = vadd.f32 0.0, %v2440
        %v2442 = vpop.f32.mrf.mxu0
        %2443 = vmatprep.mubr.bf16.mxu0 0
        %2444 = vmatmul.mubr.bf16.gmra.mxu0 %v1275
        %v2445 = vpop.f32.mrf.mxu0
        %v2446 = vadd.f32 0.0, %v2445
        %v2447 = vpop.f32.mrf.mxu0
        %v2448 = vpop.f32.mrf.mxu0
        %v2449 = vadd.f32 0.0, %v2448
        %v2450 = vpop.f32.mrf.mxu0
        %2451 = vmatprep.mubr.bf16.mxu0 0
        %2452 = vmatmul.mubr.bf16.gmra.mxu0 %v1278
        %v2453 = vpop.f32.mrf.mxu0
        %v2454 = vadd.f32 0.0, %v2453
        %v2455 = vpop.f32.mrf.mxu0
        %v2456 = vpop.f32.mrf.mxu0
        %v2457 = vadd.f32 0.0, %v2456
        %v2458 = vpop.f32.mrf.mxu0
        %2459 = vmatprep.mubr.bf16.mxu0 0
        %2460 = vmatmul.mubr.bf16.gmra.mxu0 %v1281
        %v2461 = vpop.f32.mrf.mxu0
        %v2462 = vadd.f32 0.0, %v2461
        %v2463 = vpop.f32.mrf.mxu0
        %v2464 = vpop.f32.mrf.mxu0
        %v2465 = vadd.f32 0.0, %v2464
        %v2466 = vpop.f32.mrf.mxu0
        %2467 = vmatprep.mubr.bf16.mxu0 0
        %2468 = vmatmul.mubr.bf16.gmra.mxu0 %v1284
        %v2469 = vpop.f32.mrf.mxu0
        %v2470 = vadd.f32 0.0, %v2469
        %v2471 = vpop.f32.mrf.mxu0
        %v2472 = vpop.f32.mrf.mxu0
        %v2473 = vadd.f32 0.0, %v2472
        %v2474 = vpop.f32.mrf.mxu0
        %2475 = vmatprep.mubr.bf16.mxu0 0
        %2476 = vmatmul.mubr.bf16.gmra.mxu0 %v1287
        %v2477 = vpop.f32.mrf.mxu0
        %v2478 = vadd.f32 0.0, %v2477
        %v2479 = vpop.f32.mrf.mxu0
        %v2480 = vpop.f32.mrf.mxu0
        %v2481 = vadd.f32 0.0, %v2480
        %v2482 = vpop.f32.mrf.mxu0
        %2483 = vmatprep.mubr.bf16.mxu0 0
        %2484 = vmatmul.mubr.bf16.gmra.mxu0 %v1290
        %v2485 = vpop.f32.mrf.mxu0
        %v2486 = vadd.f32 0.0, %v2485
        %v2487 = vpop.f32.mrf.mxu0
        %v2488 = vpop.f32.mrf.mxu0
        %v2489 = vadd.f32 0.0, %v2488
        %v2490 = vpop.f32.mrf.mxu0
        %2491 = vmatprep.mubr.bf16.mxu0 0
        %2492 = vmatmul.mubr.bf16.gmra.mxu0 %v1293
        %v2493 = vpop.f32.mrf.mxu0
        %v2494 = vadd.f32 0.0, %v2493
        %v2495 = vpop.f32.mrf.mxu0
        %v2496 = vpop.f32.mrf.mxu0
        %v2497 = vadd.f32 0.0, %v2496
        %v2498 = vpop.f32.mrf.mxu0
        %2499 = vmatprep.mubr.bf16.mxu0 0
        %2500 = vmatmul.mubr.bf16.gmra.mxu0 %v1296
        %v2501 = vpop.f32.mrf.mxu0
        %v2502 = vadd.f32 0.0, %v2501
        %v2503 = vpop.f32.mrf.mxu0
        %v2504 = vpop.f32.mrf.mxu0
        %v2505 = vadd.f32 0.0, %v2504
        %v2506 = vpop.f32.mrf.mxu0
        %2507 = vmatprep.mubr.bf16.mxu0 0
        %2508 = vmatmul.mubr.bf16.gmra.mxu0 %v1299
        %v2509 = vpop.f32.mrf.mxu0
        %v2510 = vadd.f32 0.0, %v2509
        %v2511 = vpop.f32.mrf.mxu0
        %v2512 = vpop.f32.mrf.mxu0
        %v2513 = vadd.f32 0.0, %v2512
        %v2514 = vpop.f32.mrf.mxu0
        %2515 = vmatprep.mubr.bf16.mxu0 0
        %2516 = vmatmul.mubr.bf16.gmra.mxu0 %v1302
        %v2517 = vpop.f32.mrf.mxu0
        %v2518 = vadd.f32 0.0, %v2517
        %v2519 = vpop.f32.mrf.mxu0
        %v2520 = vpop.f32.mrf.mxu0
        %v2521 = vadd.f32 0.0, %v2520
        %v2522 = vpop.f32.mrf.mxu0
        %2523 = vmatprep.mubr.bf16.mxu0 0
        %2524 = vmatmul.mubr.bf16.gmra.mxu0 %v1305
        %v2525 = vpop.f32.mrf.mxu0
        %v2526 = vadd.f32 0.0, %v2525
        %v2527 = vpop.f32.mrf.mxu0
        %v2528 = vpop.f32.mrf.mxu0
        %v2529 = vadd.f32 0.0, %v2528
        %v2530 = vpop.f32.mrf.mxu0
        %2531 = vmatprep.mubr.bf16.mxu0 0
        %2532 = vmatmul.mubr.bf16.gmra.mxu0 %v1771
        %v2533 = vpop.f32.mrf.mxu0
        %v2534 = vadd.f32 0.0, %v2533
        %v2535 = vpop.f32.mrf.mxu0
        %v2536 = vpop.f32.mrf.mxu0
        %v2537 = vadd.f32 0.0, %v2536
        %v2538 = vpop.f32.mrf.mxu0
        %2539 = vmatprep.mubr.bf16.mxu0 0
        %2540 = vmatmul.mubr.bf16.gmra.mxu0 %v2382
        %v2541 = vpop.f32.mrf.mxu0
        %v2542 = vadd.f32 0.0, %v2541
        %v2543 = vpop.f32.mrf.mxu0
        %v2544 = vpop.f32.mrf.mxu0
        %v2545 = vadd.f32 0.0, %v2544
        %v2546 = vpop.f32.mrf.mxu0
        %2547 = vdwg.mxu0
        %v2548 = vadd.f32 %v2343, %v2422
        %v2549 = vadd.f32 %v2344, %v2425
        %v2550 = vadd.f32 %v2345, %v2430
        %v2551 = vadd.f32 %v2346, %v2433
        %v2552 = vadd.f32 %v2347, %v2438
        %v2553 = vadd.f32 %v2348, %v2441
        %v2554 = vadd.f32 %v2349, %v2446
        %v2555 = vadd.f32 %v2350, %v2449
        %v2556 = vadd.f32 %v2351, %v2454
        %v2557 = vadd.f32 %v2352, %v2457
        %v2558 = vadd.f32 %v2353, %v2462
        %v2559 = vadd.f32 %v2354, %v2465
        %v2560 = vadd.f32 %v2355, %v2470
        %v2561 = vadd.f32 %v2356, %v2473
        %v2562 = vadd.f32 %v2357, %v2478
        %v2563 = vadd.f32 %v2358, %v2481
        %v2564 = vadd.f32 %v2359, %v2486
        %v2565 = vadd.f32 %v2360, %v2489
        %v2566 = vadd.f32 %v2361, %v2494
        %v2567 = vadd.f32 %v2362, %v2497
        %v2568 = vadd.f32 %v2363, %v2502
        %v2569 = vadd.f32 %v2364, %v2505
        %v2570 = vadd.f32 %v2365, %v2510
        %v2571 = vadd.f32 %v2366, %v2513
        %v2572 = vadd.f32 %v2367, %v2518
        %v2573 = vadd.f32 %v2368, %v2521
        %v2574 = vadd.f32 %v2369, %v2526
        %v2575 = vadd.f32 %v2370, %v2529
        %v2576 = vadd.f32 %v2371, %v2534
        %v2577 = vadd.f32 %v2372, %v2537
        %v2578 = vadd.f32 %v2373, %v2542
        %v2579 = vadd.f32 %v2374, %v2545
        %v2580 = vld [vmem:[%s2375 + $0x4] sm:$0xf]
        %v2581 = vunpack.c.l.b16 %v719
        %v2582 = vunpack.c.l.b16 %v729
        %v2583 = vpack.c.b16 %v2582, %v2581
        %v2585 = vsel %vm981, %v2583, 0
        %v2588 = vsel %vm1030, %v2580, 0
        %2590 = vmatprep.subr.bf16.mxu0 0
        %2591 = vmatpush1.bf16.msra.mxu0 0
        %2592 = vmatprep.subr.bf16.mxu0 0
        %2593 = vmatpush1.bf16.msra.mxu0 0
        %2594 = vmatprep.subr.bf16.mxu0 0
        %2595 = vmatpush1.bf16.msra.mxu0 0
        %2596 = vmatprep.subr.bf16.mxu0 0
        %2597 = vmatpush1.bf16.msra.mxu0 0
        %2598 = vmatprep.subr.bf16.mxu0 0
        %2599 = vmatpush1.bf16.msra.mxu0 0
        %2600 = vmatprep.subr.bf16.mxu0 0
        %2601 = vmatpush1.bf16.msra.mxu0 0
        %2602 = vmatprep.subr.bf16.mxu0 0
        %2603 = vmatpush1.bf16.msra.mxu0 0
        %2604 = vmatprep.subr.bf16.mxu0 0
        %2605 = vmatpush1.bf16.msra.mxu0 %v2588
        %2606 = vmatprep.subr.bf16.mxu0 0
        %2607 = vmatpush2.bf16.msra.mxu0 0
        %2608 = vmatprep.subr.bf16.mxu0 0
        %2609 = vmatpush2.bf16.msra.mxu0 0
        %2610 = vmatprep.subr.bf16.mxu0 0
        %2611 = vmatpush2.bf16.msra.mxu0 0
        %2612 = vmatprep.subr.bf16.mxu0 0
        %2613 = vmatpush2.bf16.msra.mxu0 0
        %2614 = vmatprep.subr.bf16.mxu0 0
        %2615 = vmatpush2.bf16.msra.mxu0 0
        %2616 = vmatprep.subr.bf16.mxu0 0
        %2617 = vmatpush2.bf16.msra.mxu0 0
        %2618 = vmatprep.subr.bf16.mxu0 0
        %2619 = vmatpush2.bf16.msra.mxu0 0
        %2620 = vmatprep.subr.bf16.mxu0 0
        %2621 = vmatpush2.bf16.msra.mxu0 0
        %2622 = vmatprep.mubr.bf16.mxu0 0
        %2623 = vmatmul.mubr.bf16.gmra.mxu0 %v989
        %v2624 = vpop.f32.mrf.mxu0
        %v2625 = vadd.f32 0.0, %v2624
        %v2626 = vpop.f32.mrf.mxu0
        %v2627 = vpop.f32.mrf.mxu0
        %v2628 = vadd.f32 0.0, %v2627
        %v2629 = vpop.f32.mrf.mxu0
        %2630 = vmatprep.mubr.bf16.mxu0 0
        %2631 = vmatmul.mubr.bf16.gmra.mxu0 %v992
        %v2632 = vpop.f32.mrf.mxu0
        %v2633 = vadd.f32 0.0, %v2632
        %v2634 = vpop.f32.mrf.mxu0
        %v2635 = vpop.f32.mrf.mxu0
        %v2636 = vadd.f32 0.0, %v2635
        %v2637 = vpop.f32.mrf.mxu0
        %2638 = vmatprep.mubr.bf16.mxu0 0
        %2639 = vmatmul.mubr.bf16.gmra.mxu0 %v995
        %v2640 = vpop.f32.mrf.mxu0
        %v2641 = vadd.f32 0.0, %v2640
        %v2642 = vpop.f32.mrf.mxu0
        %v2643 = vpop.f32.mrf.mxu0
        %v2644 = vadd.f32 0.0, %v2643
        %v2645 = vpop.f32.mrf.mxu0
        %2646 = vmatprep.mubr.bf16.mxu0 0
        %2647 = vmatmul.mubr.bf16.gmra.mxu0 %v998
        %v2648 = vpop.f32.mrf.mxu0
        %v2649 = vadd.f32 0.0, %v2648
        %v2650 = vpop.f32.mrf.mxu0
        %v2651 = vpop.f32.mrf.mxu0
        %v2652 = vadd.f32 0.0, %v2651
        %v2653 = vpop.f32.mrf.mxu0
        %2654 = vmatprep.mubr.bf16.mxu0 0
        %2655 = vmatmul.mubr.bf16.gmra.mxu0 %v1001
        %v2656 = vpop.f32.mrf.mxu0
        %v2657 = vadd.f32 0.0, %v2656
        %v2658 = vpop.f32.mrf.mxu0
        %v2659 = vpop.f32.mrf.mxu0
        %v2660 = vadd.f32 0.0, %v2659
        %v2661 = vpop.f32.mrf.mxu0
        %2662 = vmatprep.mubr.bf16.mxu0 0
        %2663 = vmatmul.mubr.bf16.gmra.mxu0 %v1004
        %v2664 = vpop.f32.mrf.mxu0
        %v2665 = vadd.f32 0.0, %v2664
        %v2666 = vpop.f32.mrf.mxu0
        %v2667 = vpop.f32.mrf.mxu0
        %v2668 = vadd.f32 0.0, %v2667
        %v2669 = vpop.f32.mrf.mxu0
        %2670 = vmatprep.mubr.bf16.mxu0 0
        %2671 = vmatmul.mubr.bf16.gmra.mxu0 %v1007
        %v2672 = vpop.f32.mrf.mxu0
        %v2673 = vadd.f32 0.0, %v2672
        %v2674 = vpop.f32.mrf.mxu0
        %v2675 = vpop.f32.mrf.mxu0
        %v2676 = vadd.f32 0.0, %v2675
        %v2677 = vpop.f32.mrf.mxu0
        %2678 = vmatprep.mubr.bf16.mxu0 0
        %2679 = vmatmul.mubr.bf16.gmra.mxu0 %v1010
        %v2680 = vpop.f32.mrf.mxu0
        %v2681 = vadd.f32 0.0, %v2680
        %v2682 = vpop.f32.mrf.mxu0
        %v2683 = vpop.f32.mrf.mxu0
        %v2684 = vadd.f32 0.0, %v2683
        %v2685 = vpop.f32.mrf.mxu0
        %2686 = vmatprep.mubr.bf16.mxu0 0
        %2687 = vmatmul.mubr.bf16.gmra.mxu0 %v1013
        %v2688 = vpop.f32.mrf.mxu0
        %v2689 = vadd.f32 0.0, %v2688
        %v2690 = vpop.f32.mrf.mxu0
        %v2691 = vpop.f32.mrf.mxu0
        %v2692 = vadd.f32 0.0, %v2691
        %v2693 = vpop.f32.mrf.mxu0
        %2694 = vmatprep.mubr.bf16.mxu0 0
        %2695 = vmatmul.mubr.bf16.gmra.mxu0 %v1016
        %v2696 = vpop.f32.mrf.mxu0
        %v2697 = vadd.f32 0.0, %v2696
        %v2698 = vpop.f32.mrf.mxu0
        %v2699 = vpop.f32.mrf.mxu0
        %v2700 = vadd.f32 0.0, %v2699
        %v2701 = vpop.f32.mrf.mxu0
        %2702 = vmatprep.mubr.bf16.mxu0 0
        %2703 = vmatmul.mubr.bf16.gmra.mxu0 %v1019
        %v2704 = vpop.f32.mrf.mxu0
        %v2705 = vadd.f32 0.0, %v2704
        %v2706 = vpop.f32.mrf.mxu0
        %v2707 = vpop.f32.mrf.mxu0
        %v2708 = vadd.f32 0.0, %v2707
        %v2709 = vpop.f32.mrf.mxu0
        %2710 = vmatprep.mubr.bf16.mxu0 0
        %2711 = vmatmul.mubr.bf16.gmra.mxu0 %v1022
        %v2712 = vpop.f32.mrf.mxu0
        %v2713 = vadd.f32 0.0, %v2712
        %v2714 = vpop.f32.mrf.mxu0
        %v2715 = vpop.f32.mrf.mxu0
        %v2716 = vadd.f32 0.0, %v2715
        %v2717 = vpop.f32.mrf.mxu0
        %2718 = vmatprep.mubr.bf16.mxu0 0
        %2719 = vmatmul.mubr.bf16.gmra.mxu0 %v1025
        %v2720 = vpop.f32.mrf.mxu0
        %v2721 = vadd.f32 0.0, %v2720
        %v2722 = vpop.f32.mrf.mxu0
        %v2723 = vpop.f32.mrf.mxu0
        %v2724 = vadd.f32 0.0, %v2723
        %v2725 = vpop.f32.mrf.mxu0
        %2726 = vmatprep.mubr.bf16.mxu0 0
        %2727 = vmatmul.mubr.bf16.gmra.mxu0 %v1028
        %v2728 = vpop.f32.mrf.mxu0
        %v2729 = vadd.f32 0.0, %v2728
        %v2730 = vpop.f32.mrf.mxu0
        %v2731 = vpop.f32.mrf.mxu0
        %v2732 = vadd.f32 0.0, %v2731
        %v2733 = vpop.f32.mrf.mxu0
        %2734 = vmatprep.mubr.bf16.mxu0 0
        %2735 = vmatmul.mubr.bf16.gmra.mxu0 %v1974
        %v2736 = vpop.f32.mrf.mxu0
        %v2737 = vadd.f32 0.0, %v2736
        %v2738 = vpop.f32.mrf.mxu0
        %v2739 = vpop.f32.mrf.mxu0
        %v2740 = vadd.f32 0.0, %v2739
        %v2741 = vpop.f32.mrf.mxu0
        %2742 = vmatprep.mubr.bf16.mxu0 0
        %2743 = vmatmul.mubr.bf16.gmra.mxu0 %v2585
        %v2744 = vpop.f32.mrf.mxu0
        %v2745 = vadd.f32 0.0, %v2744
        %v2746 = vpop.f32.mrf.mxu0
        %v2747 = vpop.f32.mrf.mxu0
        %v2748 = vadd.f32 0.0, %v2747
        %v2749 = vpop.f32.mrf.mxu0
        %2750 = vdwg.mxu0
        %v2751 = vadd.f32 %v2548, %v2625
        %v2752 = vadd.f32 %v2549, %v2628
        %v2753 = vadd.f32 %v2550, %v2633
        %v2754 = vadd.f32 %v2551, %v2636
        %v2755 = vadd.f32 %v2552, %v2641
        %v2756 = vadd.f32 %v2553, %v2644
        %v2757 = vadd.f32 %v2554, %v2649
        %v2758 = vadd.f32 %v2555, %v2652
        %v2759 = vadd.f32 %v2556, %v2657
        %v2760 = vadd.f32 %v2557, %v2660
        %v2761 = vadd.f32 %v2558, %v2665
        %v2762 = vadd.f32 %v2559, %v2668
        %v2763 = vadd.f32 %v2560, %v2673
        %v2764 = vadd.f32 %v2561, %v2676
        %v2765 = vadd.f32 %v2562, %v2681
        %v2766 = vadd.f32 %v2563, %v2684
        %v2767 = vadd.f32 %v2564, %v2689
        %v2768 = vadd.f32 %v2565, %v2692
        %v2769 = vadd.f32 %v2566, %v2697
        %v2770 = vadd.f32 %v2567, %v2700
        %v2771 = vadd.f32 %v2568, %v2705
        %v2772 = vadd.f32 %v2569, %v2708
        %v2773 = vadd.f32 %v2570, %v2713
        %v2774 = vadd.f32 %v2571, %v2716
        %v2775 = vadd.f32 %v2572, %v2721
        %v2776 = vadd.f32 %v2573, %v2724
        %v2777 = vadd.f32 %v2574, %v2729
        %v2778 = vadd.f32 %v2575, %v2732
        %v2779 = vadd.f32 %v2576, %v2737
        %v2780 = vadd.f32 %v2577, %v2740
        %v2781 = vadd.f32 %v2578, %v2745
        %v2782 = vadd.f32 %v2579, %v2748
        %v2783 = vld [vmem:[%s2375 + $0x8] sm:$0xf]
        %v2784 = vunpack.c.l.b16 %v927
        %v2785 = vunpack.c.l.b16 %v930
        %v2786 = vpack.c.b16 %v2785, %v2784
        %v2788 = vsel %vm981, %v2786, 0
        %v2791 = vsel %vm1030, %v2783, 0
        %2793 = vmatprep.subr.bf16.mxu0 0
        %2794 = vmatpush1.bf16.msra.mxu0 0
        %2795 = vmatprep.subr.bf16.mxu0 0
        %2796 = vmatpush1.bf16.msra.mxu0 0
        %2797 = vmatprep.subr.bf16.mxu0 0
        %2798 = vmatpush1.bf16.msra.mxu0 0
        %2799 = vmatprep.subr.bf16.mxu0 0
        %2800 = vmatpush1.bf16.msra.mxu0 0
        %2801 = vmatprep.subr.bf16.mxu0 0
        %2802 = vmatpush1.bf16.msra.mxu0 0
        %2803 = vmatprep.subr.bf16.mxu0 0
        %2804 = vmatpush1.bf16.msra.mxu0 0
        %2805 = vmatprep.subr.bf16.mxu0 0
        %2806 = vmatpush1.bf16.msra.mxu0 0
        %2807 = vmatprep.subr.bf16.mxu0 0
        %2808 = vmatpush1.bf16.msra.mxu0 %v2791
        %2809 = vmatprep.subr.bf16.mxu0 0
        %2810 = vmatpush2.bf16.msra.mxu0 0
        %2811 = vmatprep.subr.bf16.mxu0 0
        %2812 = vmatpush2.bf16.msra.mxu0 0
        %2813 = vmatprep.subr.bf16.mxu0 0
        %2814 = vmatpush2.bf16.msra.mxu0 0
        %2815 = vmatprep.subr.bf16.mxu0 0
        %2816 = vmatpush2.bf16.msra.mxu0 0
        %2817 = vmatprep.subr.bf16.mxu0 0
        %2818 = vmatpush2.bf16.msra.mxu0 0
        %2819 = vmatprep.subr.bf16.mxu0 0
        %2820 = vmatpush2.bf16.msra.mxu0 0
        %2821 = vmatprep.subr.bf16.mxu0 0
        %2822 = vmatpush2.bf16.msra.mxu0 0
        %2823 = vmatprep.subr.bf16.mxu0 0
        %2824 = vmatpush2.bf16.msra.mxu0 0
        %2825 = vmatprep.mubr.bf16.mxu0 0
        %2826 = vmatmul.mubr.bf16.gmra.mxu0 %v1527
        %v2827 = vpop.f32.mrf.mxu0
        %v2828 = vadd.f32 0.0, %v2827
        %v2829 = vpop.f32.mrf.mxu0
        %v2830 = vpop.f32.mrf.mxu0
        %v2831 = vadd.f32 0.0, %v2830
        %v2832 = vpop.f32.mrf.mxu0
        %2833 = vmatprep.mubr.bf16.mxu0 0
        %2834 = vmatmul.mubr.bf16.gmra.mxu0 %v1530
        %v2835 = vpop.f32.mrf.mxu0
        %v2836 = vadd.f32 0.0, %v2835
        %v2837 = vpop.f32.mrf.mxu0
        %v2838 = vpop.f32.mrf.mxu0
        %v2839 = vadd.f32 0.0, %v2838
        %v2840 = vpop.f32.mrf.mxu0
        %2841 = vmatprep.mubr.bf16.mxu0 0
        %2842 = vmatmul.mubr.bf16.gmra.mxu0 %v1533
        %v2843 = vpop.f32.mrf.mxu0
        %v2844 = vadd.f32 0.0, %v2843
        %v2845 = vpop.f32.mrf.mxu0
        %v2846 = vpop.f32.mrf.mxu0
        %v2847 = vadd.f32 0.0, %v2846
        %v2848 = vpop.f32.mrf.mxu0
        %2849 = vmatprep.mubr.bf16.mxu0 0
        %2850 = vmatmul.mubr.bf16.gmra.mxu0 %v1536
        %v2851 = vpop.f32.mrf.mxu0
        %v2852 = vadd.f32 0.0, %v2851
        %v2853 = vpop.f32.mrf.mxu0
        %v2854 = vpop.f32.mrf.mxu0
        %v2855 = vadd.f32 0.0, %v2854
        %v2856 = vpop.f32.mrf.mxu0
        %2857 = vmatprep.mubr.bf16.mxu0 0
        %2858 = vmatmul.mubr.bf16.gmra.mxu0 %v1539
        %v2859 = vpop.f32.mrf.mxu0
        %v2860 = vadd.f32 0.0, %v2859
        %v2861 = vpop.f32.mrf.mxu0
        %v2862 = vpop.f32.mrf.mxu0
        %v2863 = vadd.f32 0.0, %v2862
        %v2864 = vpop.f32.mrf.mxu0
        %2865 = vmatprep.mubr.bf16.mxu0 0
        %2866 = vmatmul.mubr.bf16.gmra.mxu0 %v1542
        %v2867 = vpop.f32.mrf.mxu0
        %v2868 = vadd.f32 0.0, %v2867
        %v2869 = vpop.f32.mrf.mxu0
        %v2870 = vpop.f32.mrf.mxu0
        %v2871 = vadd.f32 0.0, %v2870
        %v2872 = vpop.f32.mrf.mxu0
        %2873 = vmatprep.mubr.bf16.mxu0 0
        %2874 = vmatmul.mubr.bf16.gmra.mxu0 %v1545
        %v2875 = vpop.f32.mrf.mxu0
        %v2876 = vadd.f32 0.0, %v2875
        %v2877 = vpop.f32.mrf.mxu0
        %v2878 = vpop.f32.mrf.mxu0
        %v2879 = vadd.f32 0.0, %v2878
        %v2880 = vpop.f32.mrf.mxu0
        %2881 = vmatprep.mubr.bf16.mxu0 0
        %2882 = vmatmul.mubr.bf16.gmra.mxu0 %v1548
        %v2883 = vpop.f32.mrf.mxu0
        %v2884 = vadd.f32 0.0, %v2883
        %v2885 = vpop.f32.mrf.mxu0
        %v2886 = vpop.f32.mrf.mxu0
        %v2887 = vadd.f32 0.0, %v2886
        %v2888 = vpop.f32.mrf.mxu0
        %2889 = vmatprep.mubr.bf16.mxu0 0
        %2890 = vmatmul.mubr.bf16.gmra.mxu0 %v1551
        %v2891 = vpop.f32.mrf.mxu0
        %v2892 = vadd.f32 0.0, %v2891
        %v2893 = vpop.f32.mrf.mxu0
        %v2894 = vpop.f32.mrf.mxu0
        %v2895 = vadd.f32 0.0, %v2894
        %v2896 = vpop.f32.mrf.mxu0
        %2897 = vmatprep.mubr.bf16.mxu0 0
        %2898 = vmatmul.mubr.bf16.gmra.mxu0 %v1554
        %v2899 = vpop.f32.mrf.mxu0
        %v2900 = vadd.f32 0.0, %v2899
        %v2901 = vpop.f32.mrf.mxu0
        %v2902 = vpop.f32.mrf.mxu0
        %v2903 = vadd.f32 0.0, %v2902
        %v2904 = vpop.f32.mrf.mxu0
        %2905 = vmatprep.mubr.bf16.mxu0 0
        %2906 = vmatmul.mubr.bf16.gmra.mxu0 %v1557
        %v2907 = vpop.f32.mrf.mxu0
        %v2908 = vadd.f32 0.0, %v2907
        %v2909 = vpop.f32.mrf.mxu0
        %v2910 = vpop.f32.mrf.mxu0
        %v2911 = vadd.f32 0.0, %v2910
        %v2912 = vpop.f32.mrf.mxu0
        %2913 = vmatprep.mubr.bf16.mxu0 0
        %2914 = vmatmul.mubr.bf16.gmra.mxu0 %v1560
        %v2915 = vpop.f32.mrf.mxu0
        %v2916 = vadd.f32 0.0, %v2915
        %v2917 = vpop.f32.mrf.mxu0
        %v2918 = vpop.f32.mrf.mxu0
        %v2919 = vadd.f32 0.0, %v2918
        %v2920 = vpop.f32.mrf.mxu0
        %2921 = vmatprep.mubr.bf16.mxu0 0
        %2922 = vmatmul.mubr.bf16.gmra.mxu0 %v1563
        %v2923 = vpop.f32.mrf.mxu0
        %v2924 = vadd.f32 0.0, %v2923
        %v2925 = vpop.f32.mrf.mxu0
        %v2926 = vpop.f32.mrf.mxu0
        %v2927 = vadd.f32 0.0, %v2926
        %v2928 = vpop.f32.mrf.mxu0
        %2929 = vmatprep.mubr.bf16.mxu0 0
        %2930 = vmatmul.mubr.bf16.gmra.mxu0 %v1566
        %v2931 = vpop.f32.mrf.mxu0
        %v2932 = vadd.f32 0.0, %v2931
        %v2933 = vpop.f32.mrf.mxu0
        %v2934 = vpop.f32.mrf.mxu0
        %v2935 = vadd.f32 0.0, %v2934
        %v2936 = vpop.f32.mrf.mxu0
        %2937 = vmatprep.mubr.bf16.mxu0 0
        %2938 = vmatmul.mubr.bf16.gmra.mxu0 %v2177
        %v2939 = vpop.f32.mrf.mxu0
        %v2940 = vadd.f32 0.0, %v2939
        %v2941 = vpop.f32.mrf.mxu0
        %v2942 = vpop.f32.mrf.mxu0
        %v2943 = vadd.f32 0.0, %v2942
        %v2944 = vpop.f32.mrf.mxu0
        %2945 = vmatprep.mubr.bf16.mxu0 0
        %2946 = vmatmul.mubr.bf16.gmra.mxu0 %v2788
        %v2947 = vpop.f32.mrf.mxu0
        %v2948 = vadd.f32 0.0, %v2947
        %v2949 = vpop.f32.mrf.mxu0
        %v2950 = vpop.f32.mrf.mxu0
        %v2951 = vadd.f32 0.0, %v2950
        %v2952 = vpop.f32.mrf.mxu0
        %2953 = vdwg.mxu0
        %v2954 = vadd.f32 %v2751, %v2828
        %v2955 = vadd.f32 %v2752, %v2831
        %v2956 = vadd.f32 %v2753, %v2836
        %v2957 = vadd.f32 %v2754, %v2839
        %v2958 = vadd.f32 %v2755, %v2844
        %v2959 = vadd.f32 %v2756, %v2847
        %v2960 = vadd.f32 %v2757, %v2852
        %v2961 = vadd.f32 %v2758, %v2855
        %v2962 = vadd.f32 %v2759, %v2860
        %v2963 = vadd.f32 %v2760, %v2863
        %v2964 = vadd.f32 %v2761, %v2868
        %v2965 = vadd.f32 %v2762, %v2871
        %v2966 = vadd.f32 %v2763, %v2876
        %v2967 = vadd.f32 %v2764, %v2879
        %v2968 = vadd.f32 %v2765, %v2884
        %v2969 = vadd.f32 %v2766, %v2887
        %v2970 = vadd.f32 %v2767, %v2892
        %v2971 = vadd.f32 %v2768, %v2895
        %v2972 = vadd.f32 %v2769, %v2900
        %v2973 = vadd.f32 %v2770, %v2903
        %v2974 = vadd.f32 %v2771, %v2908
        %v2975 = vadd.f32 %v2772, %v2911
        %v2976 = vadd.f32 %v2773, %v2916
        %v2977 = vadd.f32 %v2774, %v2919
        %v2978 = vadd.f32 %v2775, %v2924
        %v2979 = vadd.f32 %v2776, %v2927
        %v2980 = vadd.f32 %v2777, %v2932
        %v2981 = vadd.f32 %v2778, %v2935
        %v2982 = vadd.f32 %v2779, %v2940
        %v2983 = vadd.f32 %v2780, %v2943
        %v2984 = vadd.f32 %v2781, %v2948
        %v2985 = vadd.f32 %v2782, %v2951
        %s2986 = smul.u32 %s20, 256
        %s2987 = scalar_lea.vmem [#allocation2], %s2986
        %2988 = vst [vmem:[%s2987] sm:$0xff] %v2954
        %2989 = vst [vmem:[%s2987 + $0x8] sm:$0xff] %v2955
        %2990 = vst [vmem:[%s2987 + $0x10] sm:$0xff] %v2956
        %2991 = vst [vmem:[%s2987 + $0x18] sm:$0xff] %v2957
        %2992 = vst [vmem:[%s2987 + $0x20] sm:$0xff] %v2958
        %2993 = vst [vmem:[%s2987 + $0x28] sm:$0xff] %v2959
        %2994 = vst [vmem:[%s2987 + $0x30] sm:$0xff] %v2960
        %2995 = vst [vmem:[%s2987 + $0x38] sm:$0xff] %v2961
        %2996 = vst [vmem:[%s2987 + $0x40] sm:$0xff] %v2962
        %2997 = vst [vmem:[%s2987 + $0x48] sm:$0xff] %v2963
        %2998 = vst [vmem:[%s2987 + $0x50] sm:$0xff] %v2964
        %2999 = vst [vmem:[%s2987 + $0x58] sm:$0xff] %v2965
        %3000 = vst [vmem:[%s2987 + $0x60] sm:$0xff] %v2966
        %3001 = vst [vmem:[%s2987 + $0x68] sm:$0xff] %v2967
        %3002 = vst [vmem:[%s2987 + $0x70] sm:$0xff] %v2968
        %3003 = vst [vmem:[%s2987 + $0x78] sm:$0xff] %v2969
        %3004 = vst [vmem:[%s2987 + $0x80] sm:$0xff] %v2970
        %3005 = vst [vmem:[%s2987 + $0x88] sm:$0xff] %v2971
        %3006 = vst [vmem:[%s2987 + $0x90] sm:$0xff] %v2972
        %3007 = vst [vmem:[%s2987 + $0x98] sm:$0xff] %v2973
        %3008 = vst [vmem:[%s2987 + $0xa0] sm:$0xff] %v2974
        %3009 = vst [vmem:[%s2987 + $0xa8] sm:$0xff] %v2975
        %3010 = vst [vmem:[%s2987 + $0xb0] sm:$0xff] %v2976
        %3011 = vst [vmem:[%s2987 + $0xb8] sm:$0xff] %v2977
        %3012 = vst [vmem:[%s2987 + $0xc0] sm:$0xff] %v2978
        %3013 = vst [vmem:[%s2987 + $0xc8] sm:$0xff] %v2979
        %3014 = vst [vmem:[%s2987 + $0xd0] sm:$0xff] %v2980
        %3015 = vst [vmem:[%s2987 + $0xd8] sm:$0xff] %v2981
        %3016 = vst [vmem:[%s2987 + $0xe0] sm:$0xff] %v2982
        %3017 = vst [vmem:[%s2987 + $0xe8] sm:$0xff] %v2983
        %3018 = vst [vmem:[%s2987 + $0xf0] sm:$0xff] %v2984
        %3019 = vst [vmem:[%s2987 + $0xf8] sm:$0xff] %v2985
        %p3020 = scmp.eq.s32.totalorder %s20, 0
        // Predicated region
        $region41: #{up_module_forward.4} parent=39 // pred_check
          %p3021 = pneg %p3020
        $region42: #{up_module_forward.4} parent=39 // pred_check_branch
          %3023 = sbr.rel (%p3021) target = $region44
        $region43: #{up_module_forward.4} parent=39 // pred_region
          %3024 = vst [vmem:[#allocation3] sm:$0x1] 0.0
          %3025 = vst [vmem:[#allocation4] sm:$0x1] 0.0
        $region44: #{up_module_forward.4} parent=39 // pred_fallthru
          _
        %v3026 = vld [vmem:[#allocation3] sm:$0x1]
        %v3027 = vadd.f32 %v2954, %v2955
        %v3028 = vadd.f32 %v3027, %v2956
        %v3029 = vadd.f32 %v3028, %v2957
        %v3030 = vadd.f32 %v3029, %v2958
        %v3031 = vadd.f32 %v3030, %v2959
        %v3032 = vadd.f32 %v3031, %v2960
        %v3033 = vadd.f32 %v3032, %v2961
        %v3034 = vadd.f32 %v3033, %v2962
        %v3035 = vadd.f32 %v3034, %v2963
        %v3036 = vadd.f32 %v3035, %v2964
        %v3037 = vadd.f32 %v3036, %v2965
        %v3038 = vadd.f32 %v3037, %v2966
        %v3039 = vadd.f32 %v3038, %v2967
        %v3040 = vadd.f32 %v3039, %v2968
        %v3041 = vadd.f32 %v3040, %v2969
        %v3042 = vadd.f32 %v3041, %v2970
        %v3043 = vadd.f32 %v3042, %v2971
        %v3044 = vadd.f32 %v3043, %v2972
        %v3045 = vadd.f32 %v3044, %v2973
        %v3046 = vadd.f32 %v3045, %v2974
        %v3047 = vadd.f32 %v3046, %v2975
        %v3048 = vadd.f32 %v3047, %v2976
        %v3049 = vadd.f32 %v3048, %v2977
        %v3050 = vadd.f32 %v3049, %v2978
        %v3051 = vadd.f32 %v3050, %v2979
        %v3052 = vadd.f32 %v3051, %v2980
        %v3053 = vadd.f32 %v3052, %v2981
        %v3054 = vadd.f32 %v3053, %v2982
        %v3055 = vadd.f32 %v3054, %v2983
        %v3056 = vadd.f32 %v3055, %v2984
        %v3057 = vadd.f32 %v3056, %v2985
        %v3058 = vrot.slane %v3057, 4
        %v3059 = vadd.f32 %v3057, %v3058
        %v3060 = vrot.slane %v3059, 2
        %v3061 = vadd.f32 %v3059, %v3060
        %v3062 = vrot.slane %v3061, 1
        %v3063 = vadd.f32 %v3061, %v3062
        %v3064 = vadd.f32 %v3026, %v3063
        %3065 = vst [vmem:[#allocation3] sm:$0x1] %v3064
        %v3066 = vld [vmem:[#allocation4] sm:$0x1]
        %v3067 = vmul.f32 %v2954, %v2954
        %v3068 = vmul.f32 %v2955, %v2955
        %v3069 = vmul.f32 %v2956, %v2956
        %v3070 = vmul.f32 %v2957, %v2957
        %v3071 = vmul.f32 %v2958, %v2958
        %v3072 = vmul.f32 %v2959, %v2959
        %v3073 = vmul.f32 %v2960, %v2960
        %v3074 = vmul.f32 %v2961, %v2961
        %v3075 = vmul.f32 %v2962, %v2962
        %v3076 = vmul.f32 %v2963, %v2963
        %v3077 = vmul.f32 %v2964, %v2964
        %v3078 = vmul.f32 %v2965, %v2965
        %v3079 = vmul.f32 %v2966, %v2966
        %v3080 = vmul.f32 %v2967, %v2967
        %v3081 = vmul.f32 %v2968, %v2968
        %v3082 = vmul.f32 %v2969, %v2969
        %v3083 = vmul.f32 %v2970, %v2970
        %v3084 = vmul.f32 %v2971, %v2971
        %v3085 = vmul.f32 %v2972, %v2972
        %v3086 = vmul.f32 %v2973, %v2973
        %v3087 = vmul.f32 %v2974, %v2974
        %v3088 = vmul.f32 %v2975, %v2975
        %v3089 = vmul.f32 %v2976, %v2976
        %v3090 = vmul.f32 %v2977, %v2977
        %v3091 = vmul.f32 %v2978, %v2978
        %v3092 = vmul.f32 %v2979, %v2979
        %v3093 = vmul.f32 %v2980, %v2980
        %v3094 = vmul.f32 %v2981, %v2981
        %v3095 = vmul.f32 %v2982, %v2982
        %v3096 = vmul.f32 %v2983, %v2983
        %v3097 = vmul.f32 %v2984, %v2984
        %v3098 = vmul.f32 %v2985, %v2985
        %v3099 = vadd.f32 %v3067, %v3068
        %v3100 = vadd.f32 %v3099, %v3069
        %v3101 = vadd.f32 %v3100, %v3070
        %v3102 = vadd.f32 %v3101, %v3071
        %v3103 = vadd.f32 %v3102, %v3072
        %v3104 = vadd.f32 %v3103, %v3073
        %v3105 = vadd.f32 %v3104, %v3074
        %v3106 = vadd.f32 %v3105, %v3075
        %v3107 = vadd.f32 %v3106, %v3076
        %v3108 = vadd.f32 %v3107, %v3077
        %v3109 = vadd.f32 %v3108, %v3078
        %v3110 = vadd.f32 %v3109, %v3079
        %v3111 = vadd.f32 %v3110, %v3080
        %v3112 = vadd.f32 %v3111, %v3081
        %v3113 = vadd.f32 %v3112, %v3082
        %v3114 = vadd.f32 %v3113, %v3083
        %v3115 = vadd.f32 %v3114, %v3084
        %v3116 = vadd.f32 %v3115, %v3085
        %v3117 = vadd.f32 %v3116, %v3086
        %v3118 = vadd.f32 %v3117, %v3087
        %v3119 = vadd.f32 %v3118, %v3088
        %v3120 = vadd.f32 %v3119, %v3089
        %v3121 = vadd.f32 %v3120, %v3090
        %v3122 = vadd.f32 %v3121, %v3091
        %v3123 = vadd.f32 %v3122, %v3092
        %v3124 = vadd.f32 %v3123, %v3093
        %v3125 = vadd.f32 %v3124, %v3094
        %v3126 = vadd.f32 %v3125, %v3095
        %v3127 = vadd.f32 %v3126, %v3096
        %v3128 = vadd.f32 %v3127, %v3097
        %v3129 = vadd.f32 %v3128, %v3098
        %v3130 = vrot.slane %v3129, 4
        %v3131 = vadd.f32 %v3129, %v3130
        %v3132 = vrot.slane %v3131, 2
        %v3133 = vadd.f32 %v3131, %v3132
        %v3134 = vrot.slane %v3133, 1
        %v3135 = vadd.f32 %v3133, %v3134
        %v3136 = vadd.f32 %v3066, %v3135
        %3137 = vst [vmem:[#allocation4] sm:$0x1] %v3136
      $region40: #{up_module_forward.4} parent=35 // pred_fallthru
        _
      %p3138 = scmp.eq.s32.totalorder %s19, 1
      // Predicated region
      $region45: #{up_module_forward.4} parent=35 // pred_check
        %p3139 = pneg %p3138
      $region46: #{up_module_forward.4} parent=35 // pred_check_branch
        %3141 = sbr.rel (%p3139) target = $region48
      $region47: #{up_module_forward.4} parent=35 // pred_region
        %s3142 = smul.u32 %s20, 256
        %s3143 = scalar_lea.vmem [#allocation2], %s3142
        %v3144 = vld [vmem:[%s3143] sm:$0xff]
        %v3145 = vld [vmem:[%s3143 + $0x8] sm:$0xff]
        %v3146 = vld [vmem:[%s3143 + $0x10] sm:$0xff]
        %v3147 = vld [vmem:[%s3143 + $0x18] sm:$0xff]
        %v3148 = vld [vmem:[%s3143 + $0x20] sm:$0xff]
        %v3149 = vld [vmem:[%s3143 + $0x28] sm:$0xff]
        %v3150 = vld [vmem:[%s3143 + $0x30] sm:$0xff]
        %v3151 = vld [vmem:[%s3143 + $0x38] sm:$0xff]
        %v3152 = vld [vmem:[%s3143 + $0x40] sm:$0xff]
        %v3153 = vld [vmem:[%s3143 + $0x48] sm:$0xff]
        %v3154 = vld [vmem:[%s3143 + $0x50] sm:$0xff]
        %v3155 = vld [vmem:[%s3143 + $0x58] sm:$0xff]
        %v3156 = vld [vmem:[%s3143 + $0x60] sm:$0xff]
        %v3157 = vld [vmem:[%s3143 + $0x68] sm:$0xff]
        %v3158 = vld [vmem:[%s3143 + $0x70] sm:$0xff]
        %v3159 = vld [vmem:[%s3143 + $0x78] sm:$0xff]
        %v3160 = vld [vmem:[%s3143 + $0x80] sm:$0xff]
        %v3161 = vld [vmem:[%s3143 + $0x88] sm:$0xff]
        %v3162 = vld [vmem:[%s3143 + $0x90] sm:$0xff]
        %v3163 = vld [vmem:[%s3143 + $0x98] sm:$0xff]
        %v3164 = vld [vmem:[%s3143 + $0xa0] sm:$0xff]
        %v3165 = vld [vmem:[%s3143 + $0xa8] sm:$0xff]
        %v3166 = vld [vmem:[%s3143 + $0xb0] sm:$0xff]
        %v3167 = vld [vmem:[%s3143 + $0xb8] sm:$0xff]
        %v3168 = vld [vmem:[%s3143 + $0xc0] sm:$0xff]
        %v3169 = vld [vmem:[%s3143 + $0xc8] sm:$0xff]
        %v3170 = vld [vmem:[%s3143 + $0xd0] sm:$0xff]
        %v3171 = vld [vmem:[%s3143 + $0xd8] sm:$0xff]
        %v3172 = vld [vmem:[%s3143 + $0xe0] sm:$0xff]
        %v3173 = vld [vmem:[%s3143 + $0xe8] sm:$0xff]
        %v3174 = vld [vmem:[%s3143 + $0xf0] sm:$0xff]
        %v3175 = vld [vmem:[%s3143 + $0xf8] sm:$0xff]
        %v3176 = vld [vmem:[#allocation3] sm:$0x1]
        %v3177 = vmul.f32 %v3176, 0.001953125
        %v3178 = vld [vmem:[#allocation4] sm:$0x1]
        %v3179 = vmul.f32 %v3178, 0.001953125
        %v3180 = vmul.f32 %v3177, %v3177
        %v3181 = vsub.f32 %v3179, %v3180
        %v3182 = vmax.f32 %v3181, 0.0
        %v3183 = vadd.f32 %v3182, 1e-05
        %v3184 = vrsqrt.pop %v3183
        %v3185 = vld [vmem:[%s2] sm:$0x1]
        %v3186 = vmul.f32 %v3185, %v3184
        %v3187 = vld [vmem:[%s3] sm:$0x1]
        %v3188 = vmul.f32 %v3177, %v3186
        %v3189 = vsub.f32 %v3187, %v3188
        %v3191 = vlaneseq
        %v3192 = vshrl.u32 %v3191, 7
        %v3193 = vsub.s32 0, %v3192
        %v3194 = vrot.slane %v3186, %v3193
        %v3196 = vmul.f32 %v3144, %v3194
        %v3197 = vmul.f32 %v3145, %v3194
        %v3198 = vmul.f32 %v3146, %v3194
        %v3199 = vmul.f32 %v3147, %v3194
        %v3200 = vmul.f32 %v3148, %v3194
        %v3201 = vmul.f32 %v3149, %v3194
        %v3202 = vmul.f32 %v3150, %v3194
        %v3203 = vmul.f32 %v3151, %v3194
        %v3204 = vmul.f32 %v3152, %v3194
        %v3205 = vmul.f32 %v3153, %v3194
        %v3206 = vmul.f32 %v3154, %v3194
        %v3207 = vmul.f32 %v3155, %v3194
        %v3208 = vmul.f32 %v3156, %v3194
        %v3209 = vmul.f32 %v3157, %v3194
        %v3210 = vmul.f32 %v3158, %v3194
        %v3211 = vmul.f32 %v3159, %v3194
        %v3212 = vmul.f32 %v3160, %v3194
        %v3213 = vmul.f32 %v3161, %v3194
        %v3214 = vmul.f32 %v3162, %v3194
        %v3215 = vmul.f32 %v3163, %v3194
        %v3216 = vmul.f32 %v3164, %v3194
        %v3217 = vmul.f32 %v3165, %v3194
        %v3218 = vmul.f32 %v3166, %v3194
        %v3219 = vmul.f32 %v3167, %v3194
        %v3220 = vmul.f32 %v3168, %v3194
        %v3221 = vmul.f32 %v3169, %v3194
        %v3222 = vmul.f32 %v3170, %v3194
        %v3223 = vmul.f32 %v3171, %v3194
        %v3224 = vmul.f32 %v3172, %v3194
        %v3225 = vmul.f32 %v3173, %v3194
        %v3226 = vmul.f32 %v3174, %v3194
        %v3227 = vmul.f32 %v3175, %v3194
        %v3229 = vlaneseq
        %v3230 = vshrl.u32 %v3229, 7
        %v3231 = vsub.s32 0, %v3230
        %v3232 = vrot.slane %v3189, %v3231
        %v3234 = vadd.f32 %v3196, %v3232
        %v3235 = vadd.f32 %v3197, %v3232
        %v3236 = vadd.f32 %v3198, %v3232
        %v3237 = vadd.f32 %v3199, %v3232
        %v3238 = vadd.f32 %v3200, %v3232
        %v3239 = vadd.f32 %v3201, %v3232
        %v3240 = vadd.f32 %v3202, %v3232
        %v3241 = vadd.f32 %v3203, %v3232
        %v3242 = vadd.f32 %v3204, %v3232
        %v3243 = vadd.f32 %v3205, %v3232
        %v3244 = vadd.f32 %v3206, %v3232
        %v3245 = vadd.f32 %v3207, %v3232
        %v3246 = vadd.f32 %v3208, %v3232
        %v3247 = vadd.f32 %v3209, %v3232
        %v3248 = vadd.f32 %v3210, %v3232
        %v3249 = vadd.f32 %v3211, %v3232
        %v3250 = vadd.f32 %v3212, %v3232
        %v3251 = vadd.f32 %v3213, %v3232
        %v3252 = vadd.f32 %v3214, %v3232
        %v3253 = vadd.f32 %v3215, %v3232
        %v3254 = vadd.f32 %v3216, %v3232
        %v3255 = vadd.f32 %v3217, %v3232
        %v3256 = vadd.f32 %v3218, %v3232
        %v3257 = vadd.f32 %v3219, %v3232
        %v3258 = vadd.f32 %v3220, %v3232
        %v3259 = vadd.f32 %v3221, %v3232
        %v3260 = vadd.f32 %v3222, %v3232
        %v3261 = vadd.f32 %v3223, %v3232
        %v3262 = vadd.f32 %v3224, %v3232
        %v3263 = vadd.f32 %v3225, %v3232
        %v3264 = vadd.f32 %v3226, %v3232
        %v3265 = vadd.f32 %v3227, %v3232
        %v3266 = vmax.f32 %v3234, 0.0
        %v3267 = vmax.f32 %v3235, 0.0
        %v3268 = vmax.f32 %v3236, 0.0
        %v3269 = vmax.f32 %v3237, 0.0
        %v3270 = vmax.f32 %v3238, 0.0
        %v3271 = vmax.f32 %v3239, 0.0
        %v3272 = vmax.f32 %v3240, 0.0
        %v3273 = vmax.f32 %v3241, 0.0
        %v3274 = vmax.f32 %v3242, 0.0
        %v3275 = vmax.f32 %v3243, 0.0
        %v3276 = vmax.f32 %v3244, 0.0
        %v3277 = vmax.f32 %v3245, 0.0
        %v3278 = vmax.f32 %v3246, 0.0
        %v3279 = vmax.f32 %v3247, 0.0
        %v3280 = vmax.f32 %v3248, 0.0
        %v3281 = vmax.f32 %v3249, 0.0
        %v3282 = vmax.f32 %v3250, 0.0
        %v3283 = vmax.f32 %v3251, 0.0
        %v3284 = vmax.f32 %v3252, 0.0
        %v3285 = vmax.f32 %v3253, 0.0
        %v3286 = vmax.f32 %v3254, 0.0
        %v3287 = vmax.f32 %v3255, 0.0
        %v3288 = vmax.f32 %v3256, 0.0
        %v3289 = vmax.f32 %v3257, 0.0
        %v3290 = vmax.f32 %v3258, 0.0
        %v3291 = vmax.f32 %v3259, 0.0
        %v3292 = vmax.f32 %v3260, 0.0
        %v3293 = vmax.f32 %v3261, 0.0
        %v3294 = vmax.f32 %v3262, 0.0
        %v3295 = vmax.f32 %v3263, 0.0
        %v3296 = vmax.f32 %v3264, 0.0
        %v3297 = vmax.f32 %v3265, 0.0
        %3298 = vst [vmem:[%s234] sm:$0xf] 0
        %3299 = vst [vmem:[%s234 + $0x4] sm:$0xf] 0
        %3300 = vst [vmem:[%s234 + $0x8] sm:$0x1] 0
        %3301 = vst [vmem:[%s234 + $0xc] sm:$0xf] 0
        %3302 = vst [vmem:[%s234 + $0x10] sm:$0xf] 0
        %3303 = vst [vmem:[%s234 + $0x14] sm:$0x1] 0
        %3304 = vst [vmem:[%s234 + $0x18] sm:$0xf] 0
        %3305 = vst [vmem:[%s234 + $0x1c] sm:$0xf] 0
        %3306 = vst [vmem:[%s234 + $0x20] sm:$0x1] 0
        %3307 = vst [vmem:[%s234 + $0x24] sm:$0xf] 0
        %3308 = vst [vmem:[%s234 + $0x28] sm:$0xf] 0
        %3309 = vst [vmem:[%s234 + $0x2c] sm:$0x1] 0
        %3310 = vst [vmem:[%s234 + $0x30] sm:$0xf] 0
        %3311 = vst [vmem:[%s234 + $0x34] sm:$0xf] 0
        %3312 = vst [vmem:[%s234 + $0x38] sm:$0x1] 0
        %3313 = vst [vmem:[%s234 + $0x3c] sm:$0xf] 0
        %3314 = vst [vmem:[%s234 + $0x40] sm:$0xf] 0
        %3315 = vst [vmem:[%s234 + $0x44] sm:$0x1] 0
        %3316 = vst [vmem:[%s234 + $0x48] sm:$0xf] 0
        %3317 = vst [vmem:[%s234 + $0x4c] sm:$0xf] 0
        %3318 = vst [vmem:[%s234 + $0x50] sm:$0x1] 0
        %3319 = vst [vmem:[%s234 + $0x54] sm:$0xf] 0
        %3320 = vst [vmem:[%s234 + $0x58] sm:$0xf] 0
        %3321 = vst [vmem:[%s234 + $0x5c] sm:$0x1] 0
        %3322 = vst [vmem:[%s234 + $0x60] sm:$0xf] 0
        %3323 = vst [vmem:[%s234 + $0x64] sm:$0xf] 0
        %3324 = vst [vmem:[%s234 + $0x68] sm:$0x1] 0
        %3325 = vst [vmem:[%s234 + $0x6c] sm:$0xf] 0
        %3326 = vst [vmem:[%s234 + $0x70] sm:$0xf] 0
        %3327 = vst [vmem:[%s234 + $0x74] sm:$0x1] 0
        %3328 = vst [vmem:[%s234 + $0x78] sm:$0xf] 0
        %3329 = vst [vmem:[%s234 + $0x7c] sm:$0xf] 0
        %3330 = vst [vmem:[%s234 + $0x80] sm:$0x1] 0
        %3331 = vst [vmem:[%s234 + $0x84] sm:$0xf] 0
        %3332 = vst [vmem:[%s234 + $0x88] sm:$0xf] 0
        %3333 = vst [vmem:[%s234 + $0x8c] sm:$0x1] 0
        %3334 = vst [vmem:[%s234 + $0x90] sm:$0xf] 0
        %3335 = vst [vmem:[%s234 + $0x94] sm:$0xf] 0
        %3336 = vst [vmem:[%s234 + $0x98] sm:$0x1] 0
        %3337 = vst [vmem:[%s234 + $0x9c] sm:$0xf] 0
        %3338 = vst [vmem:[%s234 + $0xa0] sm:$0xf] 0
        %3339 = vst [vmem:[%s234 + $0xa4] sm:$0x1] 0
        %3340 = vst [vmem:[%s234 + $0xa8] sm:$0xf] 0
        %3341 = vst [vmem:[%s234 + $0xac] sm:$0xf] 0
        %3342 = vst [vmem:[%s234 + $0xb0] sm:$0x1] 0
        %3343 = vst [vmem:[%s234 + $0xb4] sm:$0xf] 0
        %3344 = vst [vmem:[%s234 + $0xb8] sm:$0xf] 0
        %3345 = vst [vmem:[%s234 + $0xbc] sm:$0x1] 0
        %3346 = vst [vmem:[%s234 + $0xc0] sm:$0xf] 0
        %3347 = vst [vmem:[%s234 + $0xc4] sm:$0xf] 0
        %3348 = vst [vmem:[%s234 + $0xc8] sm:$0x1] 0
        %3349 = vst [vmem:[%s234 + $0xcc] sm:$0xf] 0
        %3350 = vst [vmem:[%s234 + $0xd0] sm:$0xf] 0
        %3351 = vst [vmem:[%s234 + $0xd4] sm:$0x1] 0
        %v3352 = vpack.c.bf16 %v3267, %v3266
        %v3353 = vpack.c.bf16 %v3269, %v3268
        %v3354 = vpack.c.bf16 %v3271, %v3270
        %v3355 = vpack.c.bf16 %v3273, %v3272
        %v3356 = vpack.c.bf16 %v3275, %v3274
        %v3357 = vpack.c.bf16 %v3277, %v3276
        %v3358 = vpack.c.bf16 %v3279, %v3278
        %v3359 = vpack.c.bf16 %v3281, %v3280
        %v3360 = vpack.c.bf16 %v3283, %v3282
        %v3361 = vpack.c.bf16 %v3285, %v3284
        %v3362 = vpack.c.bf16 %v3287, %v3286
        %v3363 = vpack.c.bf16 %v3289, %v3288
        %v3364 = vpack.c.bf16 %v3291, %v3290
        %v3365 = vpack.c.bf16 %v3293, %v3292
        %v3366 = vpack.c.bf16 %v3295, %v3294
        %v3367 = vpack.c.bf16 %v3297, %v3296
        %v3384 = vunpack.c.l.b16 %v3352
        %v3385 = vunpack.c.h.b16 %v3352
        %v3386 = vunpack.c.l.b16 %v3353
        %v3387 = vunpack.c.h.b16 %v3353
        %v3388 = vunpack.c.l.b16 %v3354
        %v3389 = vunpack.c.h.b16 %v3354
        %v3390 = vunpack.c.l.b16 %v3355
        %v3391 = vunpack.c.h.b16 %v3355
        %v3392 = vunpack.c.l.b16 %v3356
        %v3393 = vunpack.c.h.b16 %v3356
        %v3394 = vunpack.c.l.b16 %v3357
        %v3395 = vunpack.c.h.b16 %v3357
        %v3396 = vunpack.c.l.b16 %v3358
        %v3397 = vunpack.c.h.b16 %v3358
        %v3398 = vunpack.c.l.b16 %v3359
        %v3399 = vunpack.c.h.b16 %v3359
        %v3400 = vunpack.c.l.b16 %v3360
        %v3401 = vunpack.c.h.b16 %v3360
        %v3402 = vunpack.c.l.b16 %v3361
        %v3403 = vunpack.c.h.b16 %v3361
        %v3404 = vunpack.c.l.b16 %v3362
        %v3405 = vunpack.c.h.b16 %v3362
        %v3406 = vunpack.c.l.b16 %v3363
        %v3407 = vunpack.c.h.b16 %v3363
        %v3408 = vunpack.c.l.b16 %v3364
        %v3409 = vunpack.c.h.b16 %v3364
        %v3410 = vunpack.c.l.b16 %v3365
        %v3411 = vunpack.c.h.b16 %v3365
        %v3412 = vunpack.c.l.b16 %v3366
        %v3413 = vunpack.c.h.b16 %v3366
        %v3414 = vunpack.c.l.b16 %v3367
        %v3415 = vunpack.c.h.b16 %v3367
        %v3416 = vpack.c.b16 %v3384, %v3384
        %v3417 = vpack.c.b16 %v3385, %v3385
        %v3418 = vpack.c.b16 %v3386, %v3386
        %v3419 = vpack.c.b16 %v3387, %v3387
        %v3420 = vpack.c.b16 %v3388, %v3388
        %v3421 = vpack.c.b16 %v3389, %v3389
        %v3422 = vpack.c.b16 %v3390, %v3390
        %v3423 = vpack.c.b16 %v3391, %v3391
        %v3424 = vpack.c.b16 %v3392, %v3392
        %v3425 = vpack.c.b16 %v3393, %v3393
        %v3426 = vpack.c.b16 %v3394, %v3394
        %v3427 = vpack.c.b16 %v3395, %v3395
        %v3428 = vpack.c.b16 %v3396, %v3396
        %v3429 = vpack.c.b16 %v3397, %v3397
        %v3430 = vpack.c.b16 %v3398, %v3398
        %v3431 = vpack.c.b16 %v3399, %v3399
        %v3432 = vpack.c.b16 %v3400, %v3400
        %v3433 = vpack.c.b16 %v3401, %v3401
        %v3434 = vpack.c.b16 %v3402, %v3402
        %v3435 = vpack.c.b16 %v3403, %v3403
        %v3436 = vpack.c.b16 %v3404, %v3404
        %v3437 = vpack.c.b16 %v3405, %v3405
        %v3438 = vpack.c.b16 %v3406, %v3406
        %v3439 = vpack.c.b16 %v3407, %v3407
        %v3440 = vpack.c.b16 %v3408, %v3408
        %v3441 = vpack.c.b16 %v3409, %v3409
        %v3442 = vpack.c.b16 %v3410, %v3410
        %v3443 = vpack.c.b16 %v3411, %v3411
        %v3444 = vpack.c.b16 %v3412, %v3412
        %v3445 = vpack.c.b16 %v3413, %v3413
        %v3446 = vpack.c.b16 %v3414, %v3414
        %v3447 = vpack.c.b16 %v3415, %v3415
        %vm3448 = vsmask.f32 256
        %vm3449 = vsmask.f32 4368
        %vm3450 = vmor %vm3448, %vm3449
        %v3452 = vshrl.u32 %v3416, 16
        %v3454 = vrot.slane %v3452, 7
        %v3455 = vshll.u32 %v3416, 16
        %v3457 = vor.u32 %v3454, %v3455
        %v3458 = vrot.slane %v3454, 4
        %v3460 = vshrl.u32 %v3417, 16
        %v3462 = vrot.slane %v3460, 7
        %v3463 = vshll.u32 %v3417, 16
        %v3465 = vor.u32 %v3462, %v3463
        %v3466 = vsel %vm3450, %v3458, %v3465
        %v3467 = vrot.slane %v3462, 4
        %v3469 = vshrl.u32 %v3418, 16
        %v3471 = vrot.slane %v3469, 7
        %v3472 = vshll.u32 %v3418, 16
        %v3474 = vor.u32 %v3471, %v3472
        %v3475 = vrot.slane %v3471, 4
        %v3477 = vshrl.u32 %v3419, 16
        %v3479 = vrot.slane %v3477, 7
        %v3480 = vshll.u32 %v3419, 16
        %v3482 = vor.u32 %v3479, %v3480
        %v3483 = vsel %vm3450, %v3475, %v3482
        %v3484 = vrot.slane %v3479, 4
        %v3486 = vshrl.u32 %v3420, 16
        %v3488 = vrot.slane %v3486, 7
        %v3489 = vshll.u32 %v3420, 16
        %v3491 = vor.u32 %v3488, %v3489
        %v3492 = vrot.slane %v3488, 4
        %v3494 = vshrl.u32 %v3421, 16
        %v3496 = vrot.slane %v3494, 7
        %v3497 = vshll.u32 %v3421, 16
        %v3499 = vor.u32 %v3496, %v3497
        %v3500 = vsel %vm3450, %v3492, %v3499
        %v3501 = vrot.slane %v3496, 4
        %v3503 = vshrl.u32 %v3422, 16
        %v3505 = vrot.slane %v3503, 7
        %v3506 = vshll.u32 %v3422, 16
        %v3508 = vor.u32 %v3505, %v3506
        %v3509 = vrot.slane %v3505, 4
        %v3511 = vshrl.u32 %v3423, 16
        %v3513 = vrot.slane %v3511, 7
        %v3514 = vshll.u32 %v3423, 16
        %v3516 = vor.u32 %v3513, %v3514
        %v3517 = vsel %vm3450, %v3509, %v3516
        %v3518 = vrot.slane %v3513, 4
        %v3520 = vshrl.u32 %v3424, 16
        %v3522 = vrot.slane %v3520, 7
        %v3523 = vshll.u32 %v3424, 16
        %v3525 = vor.u32 %v3522, %v3523
        %v3526 = vrot.slane %v3522, 4
        %v3528 = vshrl.u32 %v3425, 16
        %v3530 = vrot.slane %v3528, 7
        %v3531 = vshll.u32 %v3425, 16
        %v3533 = vor.u32 %v3530, %v3531
        %v3534 = vsel %vm3450, %v3526, %v3533
        %v3535 = vrot.slane %v3530, 4
        %v3537 = vshrl.u32 %v3426, 16
        %v3539 = vrot.slane %v3537, 7
        %v3540 = vshll.u32 %v3426, 16
        %v3542 = vor.u32 %v3539, %v3540
        %v3543 = vrot.slane %v3539, 4
        %v3545 = vshrl.u32 %v3427, 16
        %v3547 = vrot.slane %v3545, 7
        %v3548 = vshll.u32 %v3427, 16
        %v3550 = vor.u32 %v3547, %v3548
        %v3551 = vsel %vm3450, %v3543, %v3550
        %v3552 = vrot.slane %v3547, 4
        %v3554 = vshrl.u32 %v3428, 16
        %v3556 = vrot.slane %v3554, 7
        %v3557 = vshll.u32 %v3428, 16
        %v3559 = vor.u32 %v3556, %v3557
        %v3560 = vrot.slane %v3556, 4
        %v3562 = vshrl.u32 %v3429, 16
        %v3564 = vrot.slane %v3562, 7
        %v3565 = vshll.u32 %v3429, 16
        %v3567 = vor.u32 %v3564, %v3565
        %v3568 = vsel %vm3450, %v3560, %v3567
        %v3569 = vrot.slane %v3564, 4
        %v3571 = vshrl.u32 %v3430, 16
        %v3573 = vrot.slane %v3571, 7
        %v3574 = vshll.u32 %v3430, 16
        %v3576 = vor.u32 %v3573, %v3574
        %v3577 = vrot.slane %v3573, 4
        %v3579 = vshrl.u32 %v3431, 16
        %v3581 = vrot.slane %v3579, 7
        %v3582 = vshll.u32 %v3431, 16
        %v3584 = vor.u32 %v3581, %v3582
        %v3585 = vsel %vm3450, %v3577, %v3584
        %v3586 = vrot.slane %v3581, 4
        %v3588 = vshrl.u32 %v3432, 16
        %v3590 = vrot.slane %v3588, 7
        %v3591 = vshll.u32 %v3432, 16
        %v3593 = vor.u32 %v3590, %v3591
        %v3594 = vrot.slane %v3590, 4
        %v3596 = vshrl.u32 %v3433, 16
        %v3598 = vrot.slane %v3596, 7
        %v3599 = vshll.u32 %v3433, 16
        %v3601 = vor.u32 %v3598, %v3599
        %v3602 = vsel %vm3450, %v3594, %v3601
        %v3603 = vrot.slane %v3598, 4
        %v3605 = vshrl.u32 %v3434, 16
        %v3607 = vrot.slane %v3605, 7
        %v3608 = vshll.u32 %v3434, 16
        %v3610 = vor.u32 %v3607, %v3608
        %v3611 = vrot.slane %v3607, 4
        %v3613 = vshrl.u32 %v3435, 16
        %v3615 = vrot.slane %v3613, 7
        %v3616 = vshll.u32 %v3435, 16
        %v3618 = vor.u32 %v3615, %v3616
        %v3619 = vsel %vm3450, %v3611, %v3618
        %v3620 = vrot.slane %v3615, 4
        %v3622 = vshrl.u32 %v3436, 16
        %v3624 = vrot.slane %v3622, 7
        %v3625 = vshll.u32 %v3436, 16
        %v3627 = vor.u32 %v3624, %v3625
        %v3628 = vrot.slane %v3624, 4
        %v3630 = vshrl.u32 %v3437, 16
        %v3632 = vrot.slane %v3630, 7
        %v3633 = vshll.u32 %v3437, 16
        %v3635 = vor.u32 %v3632, %v3633
        %v3636 = vsel %vm3450, %v3628, %v3635
        %v3637 = vrot.slane %v3632, 4
        %v3639 = vshrl.u32 %v3438, 16
        %v3641 = vrot.slane %v3639, 7
        %v3642 = vshll.u32 %v3438, 16
        %v3644 = vor.u32 %v3641, %v3642
        %v3645 = vrot.slane %v3641, 4
        %v3647 = vshrl.u32 %v3439, 16
        %v3649 = vrot.slane %v3647, 7
        %v3650 = vshll.u32 %v3439, 16
        %v3652 = vor.u32 %v3649, %v3650
        %v3653 = vsel %vm3450, %v3645, %v3652
        %v3654 = vrot.slane %v3649, 4
        %v3656 = vshrl.u32 %v3440, 16
        %v3658 = vrot.slane %v3656, 7
        %v3659 = vshll.u32 %v3440, 16
        %v3661 = vor.u32 %v3658, %v3659
        %v3662 = vrot.slane %v3658, 4
        %v3664 = vshrl.u32 %v3441, 16
        %v3666 = vrot.slane %v3664, 7
        %v3667 = vshll.u32 %v3441, 16
        %v3669 = vor.u32 %v3666, %v3667
        %v3670 = vsel %vm3450, %v3662, %v3669
        %v3671 = vrot.slane %v3666, 4
        %v3673 = vshrl.u32 %v3442, 16
        %v3675 = vrot.slane %v3673, 7
        %v3676 = vshll.u32 %v3442, 16
        %v3678 = vor.u32 %v3675, %v3676
        %v3679 = vrot.slane %v3675, 4
        %v3681 = vshrl.u32 %v3443, 16
        %v3683 = vrot.slane %v3681, 7
        %v3684 = vshll.u32 %v3443, 16
        %v3686 = vor.u32 %v3683, %v3684
        %v3687 = vsel %vm3450, %v3679, %v3686
        %v3688 = vrot.slane %v3683, 4
        %v3690 = vshrl.u32 %v3444, 16
        %v3692 = vrot.slane %v3690, 7
        %v3693 = vshll.u32 %v3444, 16
        %v3695 = vor.u32 %v3692, %v3693
        %v3696 = vrot.slane %v3692, 4
        %v3698 = vshrl.u32 %v3445, 16
        %v3700 = vrot.slane %v3698, 7
        %v3701 = vshll.u32 %v3445, 16
        %v3703 = vor.u32 %v3700, %v3701
        %v3704 = vsel %vm3450, %v3696, %v3703
        %v3705 = vrot.slane %v3700, 4
        %v3707 = vshrl.u32 %v3446, 16
        %v3709 = vrot.slane %v3707, 7
        %v3710 = vshll.u32 %v3446, 16
        %v3712 = vor.u32 %v3709, %v3710
        %v3713 = vrot.slane %v3709, 4
        %v3715 = vshrl.u32 %v3447, 16
        %v3717 = vrot.slane %v3715, 7
        %v3718 = vshll.u32 %v3447, 16
        %v3720 = vor.u32 %v3717, %v3718
        %v3721 = vsel %vm3450, %v3713, %v3720
        %v3722 = vrot.slane %v3717, 4
        %s3771 = scalar_lea.vmem %s234, 12
        %vm3772 = vcmask 1043456
        %vm3773 = vsmask.f32 7938
        %vm3774 = vmand %vm3772, %vm3773
        %v3775 = vld [vmem:[%s3771] sm:$0xf]
        %v3776 = vsel %vm3774, %v3457, %v3775
        %3777 = vst [vmem:[%s3771] sm:$0xf] %v3776
        %3778 = vst [vmem:[%s3771 + $0x4] sm:$0xf] %v3466
        %vm3779 = vcmask 1040384
        %vm3780 = vmand %vm3779, %vm3448
        %v3781 = vld [vmem:[%s3771 + $0x8] sm:$0x1]
        %v3782 = vsel %vm3780, %v3467, %v3781
        %3783 = vst [vmem:[%s3771 + $0x8] sm:$0x1] %v3782
        %v3784 = vld [vmem:[%s3771 + $0xc] sm:$0xf]
        %v3785 = vsel %vm3774, %v3474, %v3784
        %3786 = vst [vmem:[%s3771 + $0xc] sm:$0xf] %v3785
        %3787 = vst [vmem:[%s3771 + $0x10] sm:$0xf] %v3483
        %v3788 = vld [vmem:[%s3771 + $0x14] sm:$0x1]
        %v3789 = vsel %vm3780, %v3484, %v3788
        %3790 = vst [vmem:[%s3771 + $0x14] sm:$0x1] %v3789
        %v3791 = vld [vmem:[%s3771 + $0x18] sm:$0xf]
        %v3792 = vsel %vm3774, %v3491, %v3791
        %3793 = vst [vmem:[%s3771 + $0x18] sm:$0xf] %v3792
        %3794 = vst [vmem:[%s3771 + $0x1c] sm:$0xf] %v3500
        %v3795 = vld [vmem:[%s3771 + $0x20] sm:$0x1]
        %v3796 = vsel %vm3780, %v3501, %v3795
        %3797 = vst [vmem:[%s3771 + $0x20] sm:$0x1] %v3796
        %v3798 = vld [vmem:[%s3771 + $0x24] sm:$0xf]
        %v3799 = vsel %vm3774, %v3508, %v3798
        %3800 = vst [vmem:[%s3771 + $0x24] sm:$0xf] %v3799
        %3801 = vst [vmem:[%s3771 + $0x28] sm:$0xf] %v3517
        %v3802 = vld [vmem:[%s3771 + $0x2c] sm:$0x1]
        %v3803 = vsel %vm3780, %v3518, %v3802
        %3804 = vst [vmem:[%s3771 + $0x2c] sm:$0x1] %v3803
        %v3805 = vld [vmem:[%s3771 + $0x30] sm:$0xf]
        %v3806 = vsel %vm3774, %v3525, %v3805
        %3807 = vst [vmem:[%s3771 + $0x30] sm:$0xf] %v3806
        %3808 = vst [vmem:[%s3771 + $0x34] sm:$0xf] %v3534
        %v3809 = vld [vmem:[%s3771 + $0x38] sm:$0x1]
        %v3810 = vsel %vm3780, %v3535, %v3809
        %3811 = vst [vmem:[%s3771 + $0x38] sm:$0x1] %v3810
        %v3812 = vld [vmem:[%s3771 + $0x3c] sm:$0xf]
        %v3813 = vsel %vm3774, %v3542, %v3812
        %3814 = vst [vmem:[%s3771 + $0x3c] sm:$0xf] %v3813
        %3815 = vst [vmem:[%s3771 + $0x40] sm:$0xf] %v3551
        %v3816 = vld [vmem:[%s3771 + $0x44] sm:$0x1]
        %v3817 = vsel %vm3780, %v3552, %v3816
        %3818 = vst [vmem:[%s3771 + $0x44] sm:$0x1] %v3817
        %v3819 = vld [vmem:[%s3771 + $0x48] sm:$0xf]
        %v3820 = vsel %vm3774, %v3559, %v3819
        %3821 = vst [vmem:[%s3771 + $0x48] sm:$0xf] %v3820
        %3822 = vst [vmem:[%s3771 + $0x4c] sm:$0xf] %v3568
        %v3823 = vld [vmem:[%s3771 + $0x50] sm:$0x1]
        %v3824 = vsel %vm3780, %v3569, %v3823
        %3825 = vst [vmem:[%s3771 + $0x50] sm:$0x1] %v3824
        %v3826 = vld [vmem:[%s3771 + $0x54] sm:$0xf]
        %v3827 = vsel %vm3774, %v3576, %v3826
        %3828 = vst [vmem:[%s3771 + $0x54] sm:$0xf] %v3827
        %3829 = vst [vmem:[%s3771 + $0x58] sm:$0xf] %v3585
        %v3830 = vld [vmem:[%s3771 + $0x5c] sm:$0x1]
        %v3831 = vsel %vm3780, %v3586, %v3830
        %3832 = vst [vmem:[%s3771 + $0x5c] sm:$0x1] %v3831
        %v3833 = vld [vmem:[%s3771 + $0x60] sm:$0xf]
        %v3834 = vsel %vm3774, %v3593, %v3833
        %3835 = vst [vmem:[%s3771 + $0x60] sm:$0xf] %v3834
        %3836 = vst [vmem:[%s3771 + $0x64] sm:$0xf] %v3602
        %v3837 = vld [vmem:[%s3771 + $0x68] sm:$0x1]
        %v3838 = vsel %vm3780, %v3603, %v3837
        %3839 = vst [vmem:[%s3771 + $0x68] sm:$0x1] %v3838
        %v3840 = vld [vmem:[%s3771 + $0x6c] sm:$0xf]
        %v3841 = vsel %vm3774, %v3610, %v3840
        %3842 = vst [vmem:[%s3771 + $0x6c] sm:$0xf] %v3841
        %3843 = vst [vmem:[%s3771 + $0x70] sm:$0xf] %v3619
        %v3844 = vld [vmem:[%s3771 + $0x74] sm:$0x1]
        %v3845 = vsel %vm3780, %v3620, %v3844
        %3846 = vst [vmem:[%s3771 + $0x74] sm:$0x1] %v3845
        %v3847 = vld [vmem:[%s3771 + $0x78] sm:$0xf]
        %v3848 = vsel %vm3774, %v3627, %v3847
        %3849 = vst [vmem:[%s3771 + $0x78] sm:$0xf] %v3848
        %3850 = vst [vmem:[%s3771 + $0x7c] sm:$0xf] %v3636
        %v3851 = vld [vmem:[%s3771 + $0x80] sm:$0x1]
        %v3852 = vsel %vm3780, %v3637, %v3851
        %3853 = vst [vmem:[%s3771 + $0x80] sm:$0x1] %v3852
        %v3854 = vld [vmem:[%s3771 + $0x84] sm:$0xf]
        %v3855 = vsel %vm3774, %v3644, %v3854
        %3856 = vst [vmem:[%s3771 + $0x84] sm:$0xf] %v3855
        %3857 = vst [vmem:[%s3771 + $0x88] sm:$0xf] %v3653
        %v3858 = vld [vmem:[%s3771 + $0x8c] sm:$0x1]
        %v3859 = vsel %vm3780, %v3654, %v3858
        %3860 = vst [vmem:[%s3771 + $0x8c] sm:$0x1] %v3859
        %v3861 = vld [vmem:[%s3771 + $0x90] sm:$0xf]
        %v3862 = vsel %vm3774, %v3661, %v3861
        %3863 = vst [vmem:[%s3771 + $0x90] sm:$0xf] %v3862
        %3864 = vst [vmem:[%s3771 + $0x94] sm:$0xf] %v3670
        %v3865 = vld [vmem:[%s3771 + $0x98] sm:$0x1]
        %v3866 = vsel %vm3780, %v3671, %v3865
        %3867 = vst [vmem:[%s3771 + $0x98] sm:$0x1] %v3866
        %v3868 = vld [vmem:[%s3771 + $0x9c] sm:$0xf]
        %v3869 = vsel %vm3774, %v3678, %v3868
        %3870 = vst [vmem:[%s3771 + $0x9c] sm:$0xf] %v3869
        %3871 = vst [vmem:[%s3771 + $0xa0] sm:$0xf] %v3687
        %v3872 = vld [vmem:[%s3771 + $0xa4] sm:$0x1]
        %v3873 = vsel %vm3780, %v3688, %v3872
        %3874 = vst [vmem:[%s3771 + $0xa4] sm:$0x1] %v3873
        %v3875 = vld [vmem:[%s3771 + $0xa8] sm:$0xf]
        %v3876 = vsel %vm3774, %v3695, %v3875
        %3877 = vst [vmem:[%s3771 + $0xa8] sm:$0xf] %v3876
        %3878 = vst [vmem:[%s3771 + $0xac] sm:$0xf] %v3704
        %v3879 = vld [vmem:[%s3771 + $0xb0] sm:$0x1]
        %v3880 = vsel %vm3780, %v3705, %v3879
        %3881 = vst [vmem:[%s3771 + $0xb0] sm:$0x1] %v3880
        %v3882 = vld [vmem:[%s3771 + $0xb4] sm:$0xf]
        %v3883 = vsel %vm3774, %v3712, %v3882
        %3884 = vst [vmem:[%s3771 + $0xb4] sm:$0xf] %v3883
        %3885 = vst [vmem:[%s3771 + $0xb8] sm:$0xf] %v3721
        %v3886 = vld [vmem:[%s3771 + $0xbc] sm:$0x1]
        %v3887 = vsel %vm3780, %v3722, %v3886
        %3888 = vst [vmem:[%s3771 + $0xbc] sm:$0x1] %v3887
      $region48: #{up_module_forward.4} parent=35 // pred_fallthru
        _
      %s3889 = smul.u32 %s19, %s20
      %p3890 = scmp.lt.s32.totalorder %s3889, 1
      %s3891 = scalar_select %p3890, %s3889, 1
      %s3892 = smul.addr %s3891, 54
      %s3893 = smul.addr %s3892, 4
      %s3894 = scalar_lea.vmem %s4, %s3893
      // Predicated region
      $region49: #{up_module_forward.4} parent=35 // pred_check
        %p3895 = pneg %p142
      $region50: #{up_module_forward.4} parent=35 // pred_check_branch
        %3897 = sbr.rel (%p3895) target = $region52
      $region51: #{up_module_forward.4} parent=35 // pred_region
        %s3898 = smul.u32 %s19, %s20
      $region52: #{up_module_forward.4} parent=35 // pred_fallthru
        _
    $region36: #{up_module_forward.4} parent=5 // pred_fallthru
      _
    %p3899 = scmp.le.s32.totalorder 2, %s10
    // Predicated region
    $region53: #{up_module_forward.4} parent=5 // pred_check
      %p3900 = pneg %p3899
    $region54: #{up_module_forward.4} parent=5 // pred_check_branch
      %3902 = sbr.rel (%p3900) target = $region56
    $region55: #{up_module_forward.4} parent=5 // pred_region
      %s3903 = ssub.s32 %s10, 2
      // Predicated region
      $region57: #{up_module_forward.4} parent=55 // pred_check
        %p3904 = pneg %p148
      $region58: #{up_module_forward.4} parent=55 // pred_check_branch
        %3906 = sbr.rel (%p3904) target = $region60
      $region59: #{up_module_forward.4} parent=55 // pred_region
        %s3907 = smul.u32 %s21, %s22
        %p3908 = scmp.lt.s32.totalorder %s3907, 1
        %s3909 = scalar_select %p3908, %s3907, 1
        %s3910 = smul.addr %s3909, 54
        %s3911 = smul.addr %s3910, 4
        %s3912 = scalar_lea.vmem %s4, %s3911
      $region60: #{up_module_forward.4} parent=55 // pred_fallthru
        _
    $region56: #{up_module_forward.4} parent=5 // pred_fallthru
      _
  $region6: #{up_module_forward.4} parent=0 // loop_footer
    %s14 = sadd.s32 1, %s10
  $region7: #{up_module_forward.4} parent=0 // loop_footer_branch
    %9 = sbr.rel target = $region3
  $region8: #{up_module_forward.4} parent=0 // loop_exit
    _

// kernel: up_module_forward.5
$region0: #{up_module_forward.5}
  #allocation0 [shape = 'u32[]', space=smem, size = 0x4, offset = 0x4, fixed_abs, tag = 'smem constant byte address 0x4 - core index']
  #allocation1 [shape = 'u32[144,128]{1,0:T(1,128)}', space=vmem, size = 0x12000, scoped, tag = 'internal scratch']
  #allocation2 [shape = 'f32[2,256,128]{2,1,0:T(8,128)}', space=vmem, size = 0x40000, scoped, tag = 'scratch operand']
  #allocation3 [shape = 'f32[1,128]{1,0:T(1,128)}', space=vmem, size = 0x200, scoped, tag = 'scratch operand']
  #allocation4 [shape = 'f32[1,128]{1,0:T(1,128)}', space=vmem, size = 0x200, scoped, tag = 'scratch operand']
  %s0 = inlined_call_operand.vmem [shape: bf16[2,18,18,128], index: 0, kind: input, shape index: {}]
  %s1 = inlined_call_operand.vmem [shape: bf16[3,384,128], index: 1, kind: input, shape index: {}]
  %s2 = inlined_call_operand.vmem [shape: f32[1,128], index: 2, kind: input, shape index: {}]
  %s3 = inlined_call_operand.vmem [shape: f32[1,128], index: 3, kind: input, shape index: {}]
  %s4 = inlined_call_operand.vmem [shape: f32[2,16,16,128], index: 4, kind: output, shape index: {}]
  %s5 = sld [smem:[#allocation0]]
  $region61: #{up_module_forward.5} parent=0
    _
  %s7 = ssub.s32 1, %s5
  %s8 = scalar_select 0, %s7, %s5
  loop: start=0, step=1, limit=6
  $region2: #{up_module_forward.5} parent=0 // loop_pre_header
    _
  $region3: #{up_module_forward.5} parent=0 // loop_header
    %s10 = sphi 0, %s14
    %p11 = scmp.ge.s32.totalorder %s10, 6
    %s17 = sphi 0, %s29
    %s18 = sphi 0, %s25
    %s19 = sphi 0, %s17
    %s20 = sphi 0, %s18
    %s21 = sphi 0, %s19
    %s22 = sphi 0, %s20
    %s38 = sphi 0, %s40
    %s41 = sphi 0, %s38
    %s42 = sphi 0, %s41
    %s58 = sphi 0, %s42
    %s62 = sphi 0, %s62
    %s64 = sphi 0, %s62
    %s65 = sphi 0, %s64
    %s79 = sphi 0, %s65
    %s83 = sphi 0, %s83
    %s85 = sphi 0, %s83
    %s86 = sphi 0, %s85
    %s100 = sphi 0, %s86
    %s104 = sphi 0, %s104
    %s106 = sphi 0, %s104
    %s107 = sphi 0, %s106
    %s121 = sphi 0, %s107
    %s129 = sphi 0, %s131
    %s132 = sphi 0, %s129
    %s133 = sphi 0, %s132
    %s149 = sphi 0, %s133
  $region4: #{up_module_forward.5} parent=0 // loop_header_branch
    %13 = sbr.rel (%p11) target = $region8
  $region5: #{up_module_forward.5} parent=0 // loop_body
    %s15 = ssub.s32 %s10, 1
    %s16 = ssub.s32 %s10, 2
    %s23 = sadd.s32 1, %s18
    %p24 = scmp.ge.s32.totalorder %s23, 2
    %s25 = scalar_select %p24, 0, %s23
    %s26 = sadd.s32 1, %s17
    %s27 = scalar_select %p24, %s26, %s17
    %p28 = scmp.ge.s32.totalorder %s27, 2
    %s29 = scalar_select %p28, 0, %s27
    %s30 = ssub.s32 1, %s17
    %s31 = smul.u32 %s30, %s18
    %s32 = sadd.s32 %s31, %s17
    %s33 = ssub.s32 1, %s29
    %s34 = smul.u32 %s33, %s25
    %s35 = sadd.s32 %s34, %s29
    %s36 = ssub.s32 %s32, %s35
    %p37 = scmp.eq.s32.totalorder %s36, 0
    %s39 = sadd.s32 %s38, 1
    %s40 = scalar_select %p37, %s38, %s39
    %p43 = pneg %p37
    %p44 = scmp.eq.s32.totalorder %s10, 3
    %p45 = por %p43, %p44
    %p46 = scmp.ne.s32.totalorder %s38, %s41
    %p47 = scmp.eq.s32.totalorder %s10, 0
    %p48 = por %p46, %p47
    %p49 = scmp.ne.s32.totalorder %s38, %s41
    %p50 = scmp.eq.s32.totalorder %s15, 3
    %p51 = por %p49, %p50
    %p52 = scmp.ne.s32.totalorder %s41, %s42
    %p53 = scmp.eq.s32.totalorder %s15, 0
    %p54 = por %p52, %p53
    %p55 = scmp.ne.s32.totalorder %s41, %s42
    %p56 = scmp.eq.s32.totalorder %s16, 3
    %p57 = por %p55, %p56
    %p59 = scmp.ne.s32.totalorder %s42, %s58
    %p60 = scmp.eq.s32.totalorder %s16, 0
    %p61 = por %p59, %p60
    %s63 = sadd.s32 %s62, 1
    %p66 = scmp.eq.s32.totalorder %s10, 3
    %p67 = scmp.ne.s32.totalorder %s62, %s64
    %p68 = scmp.eq.s32.totalorder %s10, 0
    %p69 = por %p67, %p68
    %p70 = scmp.ne.s32.totalorder %s62, %s64
    %p71 = scmp.eq.s32.totalorder %s15, 3
    %p72 = por %p70, %p71
    %p73 = scmp.ne.s32.totalorder %s64, %s65
    %p74 = scmp.eq.s32.totalorder %s15, 0
    %p75 = por %p73, %p74
    %p76 = scmp.ne.s32.totalorder %s64, %s65
    %p77 = scmp.eq.s32.totalorder %s16, 3
    %p78 = por %p76, %p77
    %p80 = scmp.ne.s32.totalorder %s65, %s79
    %p81 = scmp.eq.s32.totalorder %s16, 0
    %p82 = por %p80, %p81
    %s84 = sadd.s32 %s83, 1
    %p87 = scmp.eq.s32.totalorder %s10, 3
    %p88 = scmp.ne.s32.totalorder %s83, %s85
    %p89 = scmp.eq.s32.totalorder %s10, 0
    %p90 = por %p88, %p89
    %p91 = scmp.ne.s32.totalorder %s83, %s85
    %p92 = scmp.eq.s32.totalorder %s15, 3
    %p93 = por %p91, %p92
    %p94 = scmp.ne.s32.totalorder %s85, %s86
    %p95 = scmp.eq.s32.totalorder %s15, 0
    %p96 = por %p94, %p95
    %p97 = scmp.ne.s32.totalorder %s85, %s86
    %p98 = scmp.eq.s32.totalorder %s16, 3
    %p99 = por %p97, %p98
    %p101 = scmp.ne.s32.totalorder %s86, %s100
    %p102 = scmp.eq.s32.totalorder %s16, 0
    %p103 = por %p101, %p102
    %s105 = sadd.s32 %s104, 1
    %p108 = scmp.eq.s32.totalorder %s10, 3
    %p109 = scmp.ne.s32.totalorder %s104, %s106
    %p110 = scmp.eq.s32.totalorder %s10, 0
    %p111 = por %p109, %p110
    %p112 = scmp.ne.s32.totalorder %s104, %s106
    %p113 = scmp.eq.s32.totalorder %s15, 3
    %p114 = por %p112, %p113
    %p115 = scmp.ne.s32.totalorder %s106, %s107
    %p116 = scmp.eq.s32.totalorder %s15, 0
    %p117 = por %p115, %p116
    %p118 = scmp.ne.s32.totalorder %s106, %s107
    %p119 = scmp.eq.s32.totalorder %s16, 3
    %p120 = por %p118, %p119
    %p122 = scmp.ne.s32.totalorder %s107, %s121
    %p123 = scmp.eq.s32.totalorder %s16, 0
    %p124 = por %p122, %p123
    %s125 = smul.u32 %s17, %s18
    %s126 = smul.u32 %s29, %s25
    %s127 = ssub.s32 %s125, %s126
    %p128 = scmp.eq.s32.totalorder %s127, 0
    %s130 = sadd.s32 %s129, 1
    %s131 = scalar_select %p128, %s129, %s130
    %p134 = pneg %p128
    %p135 = scmp.eq.s32.totalorder %s10, 3
    %p136 = por %p134, %p135
    %p137 = scmp.ne.s32.totalorder %s129, %s132
    %p138 = scmp.eq.s32.totalorder %s10, 0
    %p139 = por %p137, %p138
    %p140 = scmp.ne.s32.totalorder %s129, %s132
    %p141 = scmp.eq.s32.totalorder %s15, 3
    %p142 = por %p140, %p141
    %p143 = scmp.ne.s32.totalorder %s132, %s133
    %p144 = scmp.eq.s32.totalorder %s15, 0
    %p145 = por %p143, %p144
    %p146 = scmp.ne.s32.totalorder %s132, %s133
    %p147 = scmp.eq.s32.totalorder %s16, 3
    %p148 = por %p146, %p147
    %p150 = scmp.ne.s32.totalorder %s133, %s149
    %p151 = scmp.eq.s32.totalorder %s16, 0
    %p152 = por %p150, %p151
    %p153 = scmp.le.s32.totalorder 1, %s10
    %p154 = scmp.lt.s32.totalorder %s10, 5
    %p155 = pnand %p153, %p154
    %p156 = pneg %p155
    // Predicated region
    $region9: #{up_module_forward.5} parent=5 // pred_check
      _
    $region10: #{up_module_forward.5} parent=5 // pred_check_branch
      %158 = sbr.rel (%p155) target = $region12
    $region11: #{up_module_forward.5} parent=5 // pred_region
      %s159 = ssub.s32 %s10, 1
      // Predicated region
      $region13: #{up_module_forward.5} parent=11 // pred_check
        %p160 = pneg %p75
      $region14: #{up_module_forward.5} parent=11 // pred_check_branch
        %162 = sbr.rel (%p160) target = $region16
      $region15: #{up_module_forward.5} parent=11 // pred_region
        _
      $region16: #{up_module_forward.5} parent=11 // pred_fallthru
        _
      // Predicated region
      $region17: #{up_module_forward.5} parent=11 // pred_check
        %p163 = pneg %p96
      $region18: #{up_module_forward.5} parent=11 // pred_check_branch
        %165 = sbr.rel (%p163) target = $region20
      $region19: #{up_module_forward.5} parent=11 // pred_region
        _
      $region20: #{up_module_forward.5} parent=11 // pred_fallthru
        _
      // Predicated region
      $region21: #{up_module_forward.5} parent=11 // pred_check
        %p166 = pneg %p117
      $region22: #{up_module_forward.5} parent=11 // pred_check_branch
        %168 = sbr.rel (%p166) target = $region24
      $region23: #{up_module_forward.5} parent=11 // pred_region
        _
      $region24: #{up_module_forward.5} parent=11 // pred_fallthru
        _
    $region12: #{up_module_forward.5} parent=5 // pred_fallthru
      _
    %p169 = scmp.lt.s32.totalorder %s10, 4
    // Predicated region
    $region25: #{up_module_forward.5} parent=5 // pred_check
      %p170 = pneg %p169
    $region26: #{up_module_forward.5} parent=5 // pred_check_branch
      %172 = sbr.rel (%p170) target = $region28
    $region27: #{up_module_forward.5} parent=5 // pred_region
      // Predicated region
      $region29: #{up_module_forward.5} parent=27 // pred_check
        %p173 = pneg %p48
      $region30: #{up_module_forward.5} parent=27 // pred_check_branch
        %175 = sbr.rel (%p173) target = $region32
      $region31: #{up_module_forward.5} parent=27 // pred_region
        %s176 = ssub.s32 1, %s17
        %s177 = smul.u32 %s176, %s18
        %s178 = sadd.s32 %s177, %s17
        %p179 = scmp.lt.s32.totalorder %s178, 1
        %s180 = scalar_select %p179, %s178, 1
        %s181 = smul.addr %s180, 54
        %s182 = smul.addr %s181, 4
        %s183 = scalar_lea.vmem %s0, %s182
        %s184 = ssub.s32 1, %s17
        %s185 = smul.u32 %s184, %s18
        %s186 = sadd.s32 %s185, %s17
      $region32: #{up_module_forward.5} parent=27 // pred_fallthru
        _
    $region28: #{up_module_forward.5} parent=5 // pred_fallthru
      _
    %p187 = scmp.le.s32.totalorder 1, %s10
    %p188 = scmp.lt.s32.totalorder %s10, 5
    %p189 = pnand %p187, %p188
    %p190 = pneg %p189
    // Predicated region
    $region33: #{up_module_forward.5} parent=5 // pred_check
      _
    $region34: #{up_module_forward.5} parent=5 // pred_check_branch
      %192 = sbr.rel (%p189) target = $region36
    $region35: #{up_module_forward.5} parent=5 // pred_region
      %s193 = ssub.s32 %s10, 1
      %s194 = ssub.s32 1, %s19
      %s195 = smul.u32 %s194, %s20
      %s196 = sadd.s32 %s195, %s19
      %p197 = scmp.lt.s32.totalorder %s196, 1
      %s198 = scalar_select %p197, %s196, 1
      %s199 = smul.addr %s198, 54
      %s200 = smul.addr %s199, 4
      %s201 = scalar_lea.vmem %s0, %s200
      %p202 = pneg %p54
      %p203 = pneg %p51
      %p204 = pneg %p75
      %p205 = pneg %p72
      %p206 = pneg %p96
      %p207 = pneg %p93
      %p208 = pneg %p117
      %p209 = pneg %p114
      %p210 = pneg %p145
      %p211 = pneg %p142
      %s212 = smul.u32 %s19, %s20
      %p213 = scmp.lt.s32.totalorder %s212, 1
      %s214 = scalar_select %p213, %s212, 1
      %s215 = smul.addr %s214, 32
      %s216 = smul.addr %s215, 8
      %s217 = scalar_lea.vmem %s4, %s216
      %s218 = ssub.s32 1, %s19
      %s219 = smul.u32 %s218, %s20
      %s220 = sadd.s32 %s219, %s19
      %p221 = scmp.lt.s32.totalorder %s220, 1
      %s222 = scalar_select %p221, %s220, 1
      %s223 = smul.addr %s222, 54
      %s224 = smul.addr %s223, 4
      %s225 = scalar_lea.vmem %s0, %s224
      %s226 = ssub.s32 1, %s19
      %s227 = smul.u32 %s226, %s20
      %s228 = sadd.s32 %s227, %s19
      %s229 = smul.u32 %s19, %s20
      %p230 = scmp.lt.s32.totalorder %s229, 1
      %s231 = scalar_select %p230, %s229, 1
      %s232 = smul.addr %s231, 32
      %s233 = smul.addr %s232, 8
      %s234 = scalar_lea.vmem %s4, %s233
      %s235 = smul.u32 %s19, %s20
      %p237 = scmp.eq.s32.totalorder %s19, 0
      // Predicated region
      $region37: #{up_module_forward.5} parent=35 // pred_check
        %p238 = pneg %p237
      $region38: #{up_module_forward.5} parent=35 // pred_check_branch
        %240 = sbr.rel (%p238) target = $region40
      $region39: #{up_module_forward.5} parent=35 // pred_region
        %v241 = vld [vmem:[%s225] sm:$0xf]
        %v242 = vld [vmem:[%s225 + $0x4] sm:$0xf]
        %v243 = vld [vmem:[%s225 + $0xc] sm:$0xf]
        %v244 = vld [vmem:[%s225 + $0x10] sm:$0xf]
        %v245 = vld [vmem:[%s225 + $0x18] sm:$0xf]
        %v246 = vld [vmem:[%s225 + $0x1c] sm:$0xf]
        %v247 = vld [vmem:[%s225 + $0x24] sm:$0xf]
        %v248 = vld [vmem:[%s225 + $0x28] sm:$0xf]
        %v249 = vld [vmem:[%s225 + $0x30] sm:$0xf]
        %v250 = vld [vmem:[%s225 + $0x34] sm:$0xf]
        %v251 = vld [vmem:[%s225 + $0x3c] sm:$0xf]
        %v252 = vld [vmem:[%s225 + $0x40] sm:$0xf]
        %v253 = vld [vmem:[%s225 + $0x48] sm:$0xf]
        %v254 = vld [vmem:[%s225 + $0x4c] sm:$0xf]
        %v255 = vld [vmem:[%s225 + $0x54] sm:$0xf]
        %v256 = vld [vmem:[%s225 + $0x58] sm:$0xf]
        %v257 = vld [vmem:[%s225 + $0x60] sm:$0xf]
        %v258 = vld [vmem:[%s225 + $0x64] sm:$0xf]
        %v259 = vld [vmem:[%s225 + $0x6c] sm:$0xf]
        %v260 = vld [vmem:[%s225 + $0x70] sm:$0xf]
        %v261 = vld [vmem:[%s225 + $0x78] sm:$0xf]
        %v262 = vld [vmem:[%s225 + $0x7c] sm:$0xf]
        %v263 = vld [vmem:[%s225 + $0x84] sm:$0xf]
        %v264 = vld [vmem:[%s225 + $0x88] sm:$0xf]
        %v265 = vld [vmem:[%s225 + $0x90] sm:$0xf]
        %v266 = vld [vmem:[%s225 + $0x94] sm:$0xf]
        %v267 = vld [vmem:[%s225 + $0x9c] sm:$0xf]
        %v268 = vld [vmem:[%s225 + $0xa0] sm:$0xf]
        %v269 = vld [vmem:[%s225 + $0xa8] sm:$0xf]
        %v270 = vld [vmem:[%s225 + $0xac] sm:$0xf]
        %v271 = vld [vmem:[%s225 + $0xb4] sm:$0xf]
        %v272 = vld [vmem:[%s225 + $0xb8] sm:$0xf]
        %v273 = vld [vmem:[%s225 + $0xc0] sm:$0xf]
        %v274 = vld [vmem:[%s225 + $0xc4] sm:$0xf]
        %v275 = vld [vmem:[%s225 + $0xcc] sm:$0xf]
        %v276 = vld [vmem:[%s225 + $0xd0] sm:$0xf]
        %v277 = vld [vmem:[%s225 + $0x8] sm:$0x1]
        %v278 = vld [vmem:[%s225 + $0x14] sm:$0x1]
        %v279 = vld [vmem:[%s225 + $0x20] sm:$0x1]
        %v280 = vld [vmem:[%s225 + $0x2c] sm:$0x1]
        %v281 = vld [vmem:[%s225 + $0x38] sm:$0x1]
        %v282 = vld [vmem:[%s225 + $0x44] sm:$0x1]
        %v283 = vld [vmem:[%s225 + $0x50] sm:$0x1]
        %v284 = vld [vmem:[%s225 + $0x5c] sm:$0x1]
        %v285 = vld [vmem:[%s225 + $0x68] sm:$0x1]
        %v286 = vld [vmem:[%s225 + $0x74] sm:$0x1]
        %v287 = vld [vmem:[%s225 + $0x80] sm:$0x1]
        %v288 = vld [vmem:[%s225 + $0x8c] sm:$0x1]
        %v289 = vld [vmem:[%s225 + $0x98] sm:$0x1]
        %v290 = vld [vmem:[%s225 + $0xa4] sm:$0x1]
        %v291 = vld [vmem:[%s225 + $0xb0] sm:$0x1]
        %v292 = vld [vmem:[%s225 + $0xbc] sm:$0x1]
        %v293 = vld [vmem:[%s225 + $0xc8] sm:$0x1]
        %v294 = vld [vmem:[%s225 + $0xd4] sm:$0x1]
        %vm295 = vsmask.f32 3328
        %vm296 = vsmask.f32 7440
        %vm297 = vmor %vm295, %vm296
        %v299 = vshrl.u32 %v241, 16
        %v301 = vrot.slane %v299, 4
        %v302 = vshll.u32 %v241, 16
        %v304 = vrot.slane %v302, 5
        %v305 = vor.u32 %v301, %v304
        %v306 = vrot.slane %v305, 4
        %v308 = vshll.u32 %v242, 16
        %v310 = vrot.slane %v308, 5
        %v311 = vsel %vm297, %v306, %v310
        %v312 = vshrl.u32 %v242, 16
        %v314 = vrot.slane %v312, 4
        %v315 = vor.u32 %v314, %v310
        %v316 = vrot.slane %v315, 4
        %v318 = vshll.u32 %v277, 16
        %v320 = vrot.slane %v318, 5
        %v321 = vsel %vm297, %v316, %v320
        %v323 = vshrl.u32 %v243, 16
        %v325 = vrot.slane %v323, 4
        %v326 = vshll.u32 %v243, 16
        %v328 = vrot.slane %v326, 5
        %v329 = vor.u32 %v325, %v328
        %v330 = vrot.slane %v329, 4
        %v332 = vshll.u32 %v244, 16
        %v334 = vrot.slane %v332, 5
        %v335 = vsel %vm297, %v330, %v334
        %v336 = vshrl.u32 %v244, 16
        %v338 = vrot.slane %v336, 4
        %v339 = vor.u32 %v338, %v334
        %v340 = vrot.slane %v339, 4
        %v342 = vshll.u32 %v278, 16
        %v344 = vrot.slane %v342, 5
        %v345 = vsel %vm297, %v340, %v344
        %v347 = vshrl.u32 %v245, 16
        %v349 = vrot.slane %v347, 4
        %v350 = vshll.u32 %v245, 16
        %v352 = vrot.slane %v350, 5
        %v353 = vor.u32 %v349, %v352
        %v354 = vrot.slane %v353, 4
        %v356 = vshll.u32 %v246, 16
        %v358 = vrot.slane %v356, 5
        %v359 = vsel %vm297, %v354, %v358
        %v360 = vshrl.u32 %v246, 16
        %v362 = vrot.slane %v360, 4
        %v363 = vor.u32 %v362, %v358
        %v364 = vrot.slane %v363, 4
        %v366 = vshll.u32 %v279, 16
        %v368 = vrot.slane %v366, 5
        %v369 = vsel %vm297, %v364, %v368
        %v371 = vshrl.u32 %v247, 16
        %v373 = vrot.slane %v371, 4
        %v374 = vshll.u32 %v247, 16
        %v376 = vrot.slane %v374, 5
        %v377 = vor.u32 %v373, %v376
        %v378 = vrot.slane %v377, 4
        %v380 = vshll.u32 %v248, 16
        %v382 = vrot.slane %v380, 5
        %v383 = vsel %vm297, %v378, %v382
        %v384 = vshrl.u32 %v248, 16
        %v386 = vrot.slane %v384, 4
        %v387 = vor.u32 %v386, %v382
        %v388 = vrot.slane %v387, 4
        %v390 = vshll.u32 %v280, 16
        %v392 = vrot.slane %v390, 5
        %v393 = vsel %vm297, %v388, %v392
        %v395 = vshrl.u32 %v249, 16
        %v397 = vrot.slane %v395, 4
        %v398 = vshll.u32 %v249, 16
        %v400 = vrot.slane %v398, 5
        %v401 = vor.u32 %v397, %v400
        %v402 = vrot.slane %v401, 4
        %v404 = vshll.u32 %v250, 16
        %v406 = vrot.slane %v404, 5
        %v407 = vsel %vm297, %v402, %v406
        %v408 = vshrl.u32 %v250, 16
        %v410 = vrot.slane %v408, 4
        %v411 = vor.u32 %v410, %v406
        %v412 = vrot.slane %v411, 4
        %v414 = vshll.u32 %v281, 16
        %v416 = vrot.slane %v414, 5
        %v417 = vsel %vm297, %v412, %v416
        %v419 = vshrl.u32 %v251, 16
        %v421 = vrot.slane %v419, 4
        %v422 = vshll.u32 %v251, 16
        %v424 = vrot.slane %v422, 5
        %v425 = vor.u32 %v421, %v424
        %v426 = vrot.slane %v425, 4
        %v428 = vshll.u32 %v252, 16
        %v430 = vrot.slane %v428, 5
        %v431 = vsel %vm297, %v426, %v430
        %v432 = vshrl.u32 %v252, 16
        %v434 = vrot.slane %v432, 4
        %v435 = vor.u32 %v434, %v430
        %v436 = vrot.slane %v435, 4
        %v438 = vshll.u32 %v282, 16
        %v440 = vrot.slane %v438, 5
        %v441 = vsel %vm297, %v436, %v440
        %v443 = vshrl.u32 %v253, 16
        %v445 = vrot.slane %v443, 4
        %v446 = vshll.u32 %v253, 16
        %v448 = vrot.slane %v446, 5
        %v449 = vor.u32 %v445, %v448
        %v450 = vrot.slane %v449, 4
        %v452 = vshll.u32 %v254, 16
        %v454 = vrot.slane %v452, 5
        %v455 = vsel %vm297, %v450, %v454
        %v456 = vshrl.u32 %v254, 16
        %v458 = vrot.slane %v456, 4
        %v459 = vor.u32 %v458, %v454
        %v460 = vrot.slane %v459, 4
        %v462 = vshll.u32 %v283, 16
        %v464 = vrot.slane %v462, 5
        %v465 = vsel %vm297, %v460, %v464
        %v467 = vshrl.u32 %v255, 16
        %v469 = vrot.slane %v467, 4
        %v470 = vshll.u32 %v255, 16
        %v472 = vrot.slane %v470, 5
        %v473 = vor.u32 %v469, %v472
        %v474 = vrot.slane %v473, 4
        %v476 = vshll.u32 %v256, 16
        %v478 = vrot.slane %v476, 5
        %v479 = vsel %vm297, %v474, %v478
        %v480 = vshrl.u32 %v256, 16
        %v482 = vrot.slane %v480, 4
        %v483 = vor.u32 %v482, %v478
        %v484 = vrot.slane %v483, 4
        %v486 = vshll.u32 %v284, 16
        %v488 = vrot.slane %v486, 5
        %v489 = vsel %vm297, %v484, %v488
        %v491 = vshrl.u32 %v257, 16
        %v493 = vrot.slane %v491, 4
        %v494 = vshll.u32 %v257, 16
        %v496 = vrot.slane %v494, 5
        %v497 = vor.u32 %v493, %v496
        %v498 = vrot.slane %v497, 4
        %v500 = vshll.u32 %v258, 16
        %v502 = vrot.slane %v500, 5
        %v503 = vsel %vm297, %v498, %v502
        %v504 = vshrl.u32 %v258, 16
        %v506 = vrot.slane %v504, 4
        %v507 = vor.u32 %v506, %v502
        %v508 = vrot.slane %v507, 4
        %v510 = vshll.u32 %v285, 16
        %v512 = vrot.slane %v510, 5
        %v513 = vsel %vm297, %v508, %v512
        %v515 = vshrl.u32 %v259, 16
        %v517 = vrot.slane %v515, 4
        %v518 = vshll.u32 %v259, 16
        %v520 = vrot.slane %v518, 5
        %v521 = vor.u32 %v517, %v520
        %v522 = vrot.slane %v521, 4
        %v524 = vshll.u32 %v260, 16
        %v526 = vrot.slane %v524, 5
        %v527 = vsel %vm297, %v522, %v526
        %v528 = vshrl.u32 %v260, 16
        %v530 = vrot.slane %v528, 4
        %v531 = vor.u32 %v530, %v526
        %v532 = vrot.slane %v531, 4
        %v534 = vshll.u32 %v286, 16
        %v536 = vrot.slane %v534, 5
        %v537 = vsel %vm297, %v532, %v536
        %v539 = vshrl.u32 %v261, 16
        %v541 = vrot.slane %v539, 4
        %v542 = vshll.u32 %v261, 16
        %v544 = vrot.slane %v542, 5
        %v545 = vor.u32 %v541, %v544
        %v546 = vrot.slane %v545, 4
        %v548 = vshll.u32 %v262, 16
        %v550 = vrot.slane %v548, 5
        %v551 = vsel %vm297, %v546, %v550
        %v552 = vshrl.u32 %v262, 16
        %v554 = vrot.slane %v552, 4
        %v555 = vor.u32 %v554, %v550
        %v556 = vrot.slane %v555, 4
        %v558 = vshll.u32 %v287, 16
        %v560 = vrot.slane %v558, 5
        %v561 = vsel %vm297, %v556, %v560
        %v563 = vshrl.u32 %v263, 16
        %v565 = vrot.slane %v563, 4
        %v566 = vshll.u32 %v263, 16
        %v568 = vrot.slane %v566, 5
        %v569 = vor.u32 %v565, %v568
        %v570 = vrot.slane %v569, 4
        %v572 = vshll.u32 %v264, 16
        %v574 = vrot.slane %v572, 5
        %v575 = vsel %vm297, %v570, %v574
        %v576 = vshrl.u32 %v264, 16
        %v578 = vrot.slane %v576, 4
        %v579 = vor.u32 %v578, %v574
        %v580 = vrot.slane %v579, 4
        %v582 = vshll.u32 %v288, 16
        %v584 = vrot.slane %v582, 5
        %v585 = vsel %vm297, %v580, %v584
        %v587 = vshrl.u32 %v265, 16
        %v589 = vrot.slane %v587, 4
        %v590 = vshll.u32 %v265, 16
        %v592 = vrot.slane %v590, 5
        %v593 = vor.u32 %v589, %v592
        %v594 = vrot.slane %v593, 4
        %v596 = vshll.u32 %v266, 16
        %v598 = vrot.slane %v596, 5
        %v599 = vsel %vm297, %v594, %v598
        %v600 = vshrl.u32 %v266, 16
        %v602 = vrot.slane %v600, 4
        %v603 = vor.u32 %v602, %v598
        %v604 = vrot.slane %v603, 4
        %v606 = vshll.u32 %v289, 16
        %v608 = vrot.slane %v606, 5
        %v609 = vsel %vm297, %v604, %v608
        %v611 = vshrl.u32 %v267, 16
        %v613 = vrot.slane %v611, 4
        %v614 = vshll.u32 %v267, 16
        %v616 = vrot.slane %v614, 5
        %v617 = vor.u32 %v613, %v616
        %v618 = vrot.slane %v617, 4
        %v620 = vshll.u32 %v268, 16
        %v622 = vrot.slane %v620, 5
        %v623 = vsel %vm297, %v618, %v622
        %v624 = vshrl.u32 %v268, 16
        %v626 = vrot.slane %v624, 4
        %v627 = vor.u32 %v626, %v622
        %v628 = vrot.slane %v627, 4
        %v630 = vshll.u32 %v290, 16
        %v632 = vrot.slane %v630, 5
        %v633 = vsel %vm297, %v628, %v632
        %v635 = vshrl.u32 %v269, 16
        %v637 = vrot.slane %v635, 4
        %v638 = vshll.u32 %v269, 16
        %v640 = vrot.slane %v638, 5
        %v641 = vor.u32 %v637, %v640
        %v642 = vrot.slane %v641, 4
        %v644 = vshll.u32 %v270, 16
        %v646 = vrot.slane %v644, 5
        %v647 = vsel %vm297, %v642, %v646
        %v648 = vshrl.u32 %v270, 16
        %v650 = vrot.slane %v648, 4
        %v651 = vor.u32 %v650, %v646
        %v652 = vrot.slane %v651, 4
        %v654 = vshll.u32 %v291, 16
        %v656 = vrot.slane %v654, 5
        %v657 = vsel %vm297, %v652, %v656
        %v659 = vshrl.u32 %v271, 16
        %v661 = vrot.slane %v659, 4
        %v662 = vshll.u32 %v271, 16
        %v664 = vrot.slane %v662, 5
        %v665 = vor.u32 %v661, %v664
        %v666 = vrot.slane %v665, 4
        %v668 = vshll.u32 %v272, 16
        %v670 = vrot.slane %v668, 5
        %v671 = vsel %vm297, %v666, %v670
        %v672 = vshrl.u32 %v272, 16
        %v674 = vrot.slane %v672, 4
        %v675 = vor.u32 %v674, %v670
        %v676 = vrot.slane %v675, 4
        %v678 = vshll.u32 %v292, 16
        %v680 = vrot.slane %v678, 5
        %v681 = vsel %vm297, %v676, %v680
        %v683 = vshrl.u32 %v273, 16
        %v685 = vrot.slane %v683, 4
        %v686 = vshll.u32 %v273, 16
        %v688 = vrot.slane %v686, 5
        %v689 = vor.u32 %v685, %v688
        %v690 = vrot.slane %v689, 4
        %v692 = vshll.u32 %v274, 16
        %v694 = vrot.slane %v692, 5
        %v695 = vsel %vm297, %v690, %v694
        %v696 = vshrl.u32 %v274, 16
        %v698 = vrot.slane %v696, 4
        %v699 = vor.u32 %v698, %v694
        %v700 = vrot.slane %v699, 4
        %v702 = vshll.u32 %v293, 16
        %v704 = vrot.slane %v702, 5
        %v705 = vsel %vm297, %v700, %v704
        %v707 = vshrl.u32 %v275, 16
        %v709 = vrot.slane %v707, 4
        %v710 = vshll.u32 %v275, 16
        %v712 = vrot.slane %v710, 5
        %v713 = vor.u32 %v709, %v712
        %v714 = vrot.slane %v713, 4
        %v716 = vshll.u32 %v276, 16
        %v718 = vrot.slane %v716, 5
        %v719 = vsel %vm297, %v714, %v718
        %v720 = vshrl.u32 %v276, 16
        %v722 = vrot.slane %v720, 4
        %v723 = vor.u32 %v722, %v718
        %v724 = vrot.slane %v723, 4
        %v726 = vshll.u32 %v294, 16
        %v728 = vrot.slane %v726, 5
        %v729 = vsel %vm297, %v724, %v728
        %v730 = vld [vmem:[%s225] sm:$0xe]
        %v731 = vld [vmem:[%s225 + $0xc] sm:$0xe]
        %v732 = vld [vmem:[%s225 + $0x18] sm:$0xe]
        %v733 = vld [vmem:[%s225 + $0x24] sm:$0xe]
        %v734 = vld [vmem:[%s225 + $0x30] sm:$0xe]
        %v735 = vld [vmem:[%s225 + $0x3c] sm:$0xe]
        %v736 = vld [vmem:[%s225 + $0x48] sm:$0xe]
        %v737 = vld [vmem:[%s225 + $0x54] sm:$0xe]
        %v738 = vld [vmem:[%s225 + $0x60] sm:$0xe]
        %v739 = vld [vmem:[%s225 + $0x6c] sm:$0xe]
        %v740 = vld [vmem:[%s225 + $0x78] sm:$0xe]
        %v741 = vld [vmem:[%s225 + $0x84] sm:$0xe]
        %v742 = vld [vmem:[%s225 + $0x90] sm:$0xe]
        %v743 = vld [vmem:[%s225 + $0x9c] sm:$0xe]
        %v744 = vld [vmem:[%s225 + $0xa8] sm:$0xe]
        %v745 = vld [vmem:[%s225 + $0xb4] sm:$0xe]
        %v746 = vld [vmem:[%s225 + $0xc0] sm:$0xe]
        %v747 = vld [vmem:[%s225 + $0xcc] sm:$0xe]
        %vm802 = vcmask 1042432
        %vm803 = vcmask 1046532
        %vm804 = vmor %vm802, %vm803
        %v805 = vrot.slane %v730, 5
        %v806 = vrot.slane %v805, 4
        %v807 = vrot.slane %v242, 5
        %v808 = vsel %vm804, %v806, %v807
        %v809 = vrot.slane %v807, 4
        %v810 = vrot.slane %v277, 5
        %v811 = vsel %vm804, %v809, %v810
        %v812 = vrot.slane %v731, 5
        %v813 = vrot.slane %v812, 4
        %v814 = vrot.slane %v244, 5
        %v815 = vsel %vm804, %v813, %v814
        %v816 = vrot.slane %v814, 4
        %v817 = vrot.slane %v278, 5
        %v818 = vsel %vm804, %v816, %v817
        %v819 = vrot.slane %v732, 5
        %v820 = vrot.slane %v819, 4
        %v821 = vrot.slane %v246, 5
        %v822 = vsel %vm804, %v820, %v821
        %v823 = vrot.slane %v821, 4
        %v824 = vrot.slane %v279, 5
        %v825 = vsel %vm804, %v823, %v824
        %v826 = vrot.slane %v733, 5
        %v827 = vrot.slane %v826, 4
        %v828 = vrot.slane %v248, 5
        %v829 = vsel %vm804, %v827, %v828
        %v830 = vrot.slane %v828, 4
        %v831 = vrot.slane %v280, 5
        %v832 = vsel %vm804, %v830, %v831
        %v833 = vrot.slane %v734, 5
        %v834 = vrot.slane %v833, 4
        %v835 = vrot.slane %v250, 5
        %v836 = vsel %vm804, %v834, %v835
        %v837 = vrot.slane %v835, 4
        %v838 = vrot.slane %v281, 5
        %v839 = vsel %vm804, %v837, %v838
        %v840 = vrot.slane %v735, 5
        %v841 = vrot.slane %v840, 4
        %v842 = vrot.slane %v252, 5
        %v843 = vsel %vm804, %v841, %v842
        %v844 = vrot.slane %v842, 4
        %v845 = vrot.slane %v282, 5
        %v846 = vsel %vm804, %v844, %v845
        %v847 = vrot.slane %v736, 5
        %v848 = vrot.slane %v847, 4
        %v849 = vrot.slane %v254, 5
        %v850 = vsel %vm804, %v848, %v849
        %v851 = vrot.slane %v849, 4
        %v852 = vrot.slane %v283, 5
        %v853 = vsel %vm804, %v851, %v852
        %v854 = vrot.slane %v737, 5
        %v855 = vrot.slane %v854, 4
        %v856 = vrot.slane %v256, 5
        %v857 = vsel %vm804, %v855, %v856
        %v858 = vrot.slane %v856, 4
        %v859 = vrot.slane %v284, 5
        %v860 = vsel %vm804, %v858, %v859
        %v861 = vrot.slane %v738, 5
        %v862 = vrot.slane %v861, 4
        %v863 = vrot.slane %v258, 5
        %v864 = vsel %vm804, %v862, %v863
        %v865 = vrot.slane %v863, 4
        %v866 = vrot.slane %v285, 5
        %v867 = vsel %vm804, %v865, %v866
        %v868 = vrot.slane %v739, 5
        %v869 = vrot.slane %v868, 4
        %v870 = vrot.slane %v260, 5
        %v871 = vsel %vm804, %v869, %v870
        %v872 = vrot.slane %v870, 4
        %v873 = vrot.slane %v286, 5
        %v874 = vsel %vm804, %v872, %v873
        %v875 = vrot.slane %v740, 5
        %v876 = vrot.slane %v875, 4
        %v877 = vrot.slane %v262, 5
        %v878 = vsel %vm804, %v876, %v877
        %v879 = vrot.slane %v877, 4
        %v880 = vrot.slane %v287, 5
        %v881 = vsel %vm804, %v879, %v880
        %v882 = vrot.slane %v741, 5
        %v883 = vrot.slane %v882, 4
        %v884 = vrot.slane %v264, 5
        %v885 = vsel %vm804, %v883, %v884
        %v886 = vrot.slane %v884, 4
        %v887 = vrot.slane %v288, 5
        %v888 = vsel %vm804, %v886, %v887
        %v889 = vrot.slane %v742, 5
        %v890 = vrot.slane %v889, 4
        %v891 = vrot.slane %v266, 5
        %v892 = vsel %vm804, %v890, %v891
        %v893 = vrot.slane %v891, 4
        %v894 = vrot.slane %v289, 5
        %v895 = vsel %vm804, %v893, %v894
        %v896 = vrot.slane %v743, 5
        %v897 = vrot.slane %v896, 4
        %v898 = vrot.slane %v268, 5
        %v899 = vsel %vm804, %v897, %v898
        %v900 = vrot.slane %v898, 4
        %v901 = vrot.slane %v290, 5
        %v902 = vsel %vm804, %v900, %v901
        %v903 = vrot.slane %v744, 5
        %v904 = vrot.slane %v903, 4
        %v905 = vrot.slane %v270, 5
        %v906 = vsel %vm804, %v904, %v905
        %v907 = vrot.slane %v905, 4
        %v908 = vrot.slane %v291, 5
        %v909 = vsel %vm804, %v907, %v908
        %v910 = vrot.slane %v745, 5
        %v911 = vrot.slane %v910, 4
        %v912 = vrot.slane %v272, 5
        %v913 = vsel %vm804, %v911, %v912
        %v914 = vrot.slane %v912, 4
        %v915 = vrot.slane %v292, 5
        %v916 = vsel %vm804, %v914, %v915
        %v917 = vrot.slane %v746, 5
        %v918 = vrot.slane %v917, 4
        %v919 = vrot.slane %v274, 5
        %v920 = vsel %vm804, %v918, %v919
        %v921 = vrot.slane %v919, 4
        %v922 = vrot.slane %v293, 5
        %v923 = vsel %vm804, %v921, %v922
        %v924 = vrot.slane %v747, 5
        %v925 = vrot.slane %v924, 4
        %v926 = vrot.slane %v276, 5
        %v927 = vsel %vm804, %v925, %v926
        %v928 = vrot.slane %v926, 4
        %v929 = vrot.slane %v294, 5
        %v930 = vsel %vm804, %v928, %v929
        %v949 = vunpack.c.l.b16 %v241
        %v950 = vunpack.c.l.b16 %v242
        %v951 = vunpack.c.l.b16 %v243
        %v952 = vunpack.c.l.b16 %v244
        %v953 = vunpack.c.l.b16 %v245
        %v954 = vunpack.c.l.b16 %v246
        %v955 = vunpack.c.l.b16 %v247
        %v956 = vunpack.c.l.b16 %v248
        %v957 = vunpack.c.l.b16 %v249
        %v958 = vunpack.c.l.b16 %v250
        %v959 = vunpack.c.l.b16 %v251
        %v960 = vunpack.c.l.b16 %v252
        %v961 = vunpack.c.l.b16 %v253
        %v962 = vunpack.c.l.b16 %v254
        %v963 = vunpack.c.l.b16 %v255
        %v964 = vunpack.c.l.b16 %v256
        %v965 = vunpack.c.l.b16 %v257
        %v966 = vunpack.c.l.b16 %v258
        %v967 = vunpack.c.l.b16 %v259
        %v968 = vunpack.c.l.b16 %v260
        %v969 = vunpack.c.l.b16 %v261
        %v970 = vunpack.c.l.b16 %v262
        %v971 = vunpack.c.l.b16 %v263
        %v972 = vunpack.c.l.b16 %v264
        %v973 = vunpack.c.l.b16 %v265
        %v974 = vunpack.c.l.b16 %v266
        %v975 = vunpack.c.l.b16 %v267
        %v976 = vunpack.c.l.b16 %v268
        %v977 = vunpack.c.l.b16 %v269
        %v978 = vunpack.c.l.b16 %v270
        %v979 = vunpack.c.l.b16 %v271
        %v980 = vunpack.c.l.b16 %v272
        %v981 = vunpack.c.l.b16 %v273
        %v982 = vunpack.c.l.b16 %v274
        %v983 = vunpack.c.l.b16 %v275
        %v984 = vunpack.c.l.b16 %v276
        %v985 = vpack.c.b16 %v950, %v949
        %v986 = vpack.c.b16 %v952, %v951
        %v987 = vpack.c.b16 %v954, %v953
        %v988 = vpack.c.b16 %v956, %v955
        %v989 = vpack.c.b16 %v958, %v957
        %v990 = vpack.c.b16 %v960, %v959
        %v991 = vpack.c.b16 %v962, %v961
        %v992 = vpack.c.b16 %v964, %v963
        %v993 = vpack.c.b16 %v966, %v965
        %v994 = vpack.c.b16 %v968, %v967
        %v995 = vpack.c.b16 %v970, %v969
        %v996 = vpack.c.b16 %v972, %v971
        %v997 = vpack.c.b16 %v974, %v973
        %v998 = vpack.c.b16 %v976, %v975
        %v999 = vpack.c.b16 %v978, %v977
        %v1000 = vpack.c.b16 %v980, %v979
        %v1001 = vpack.c.b16 %v982, %v981
        %v1002 = vpack.c.b16 %v984, %v983
        %v1021 = vunpack.c.l.b16 %v311
        %v1022 = vunpack.c.l.b16 %v321
        %v1023 = vunpack.c.l.b16 %v335
        %v1024 = vunpack.c.l.b16 %v345
        %v1025 = vunpack.c.l.b16 %v359
        %v1026 = vunpack.c.l.b16 %v369
        %v1027 = vunpack.c.l.b16 %v383
        %v1028 = vunpack.c.l.b16 %v393
        %v1029 = vunpack.c.l.b16 %v407
        %v1030 = vunpack.c.l.b16 %v417
        %v1031 = vunpack.c.l.b16 %v431
        %v1032 = vunpack.c.l.b16 %v441
        %v1033 = vunpack.c.l.b16 %v455
        %v1034 = vunpack.c.l.b16 %v465
        %v1035 = vunpack.c.l.b16 %v479
        %v1036 = vunpack.c.l.b16 %v489
        %v1037 = vunpack.c.l.b16 %v503
        %v1038 = vunpack.c.l.b16 %v513
        %v1039 = vunpack.c.l.b16 %v527
        %v1040 = vunpack.c.l.b16 %v537
        %v1041 = vunpack.c.l.b16 %v551
        %v1042 = vunpack.c.l.b16 %v561
        %v1043 = vunpack.c.l.b16 %v575
        %v1044 = vunpack.c.l.b16 %v585
        %v1045 = vunpack.c.l.b16 %v599
        %v1046 = vunpack.c.l.b16 %v609
        %v1047 = vunpack.c.l.b16 %v623
        %v1048 = vunpack.c.l.b16 %v633
        %v1049 = vunpack.c.l.b16 %v647
        %v1050 = vunpack.c.l.b16 %v657
        %v1051 = vunpack.c.l.b16 %v671
        %v1052 = vunpack.c.l.b16 %v681
        %v1053 = vunpack.c.l.b16 %v695
        %v1054 = vunpack.c.l.b16 %v705
        %v1055 = vunpack.c.l.b16 %v719
        %v1056 = vunpack.c.l.b16 %v729
        %v1057 = vpack.c.b16 %v1022, %v1021
        %v1058 = vpack.c.b16 %v1024, %v1023
        %v1059 = vpack.c.b16 %v1026, %v1025
        %v1060 = vpack.c.b16 %v1028, %v1027
        %v1061 = vpack.c.b16 %v1030, %v1029
        %v1062 = vpack.c.b16 %v1032, %v1031
        %v1063 = vpack.c.b16 %v1034, %v1033
        %v1064 = vpack.c.b16 %v1036, %v1035
        %v1065 = vpack.c.b16 %v1038, %v1037
        %v1066 = vpack.c.b16 %v1040, %v1039
        %v1067 = vpack.c.b16 %v1042, %v1041
        %v1068 = vpack.c.b16 %v1044, %v1043
        %v1069 = vpack.c.b16 %v1046, %v1045
        %v1070 = vpack.c.b16 %v1048, %v1047
        %v1071 = vpack.c.b16 %v1050, %v1049
        %v1072 = vpack.c.b16 %v1052, %v1051
        %v1073 = vpack.c.b16 %v1054, %v1053
        %v1074 = vpack.c.b16 %v1056, %v1055
        %v1093 = vunpack.c.l.b16 %v808
        %v1094 = vunpack.c.l.b16 %v811
        %v1095 = vunpack.c.l.b16 %v815
        %v1096 = vunpack.c.l.b16 %v818
        %v1097 = vunpack.c.l.b16 %v822
        %v1098 = vunpack.c.l.b16 %v825
        %v1099 = vunpack.c.l.b16 %v829
        %v1100 = vunpack.c.l.b16 %v832
        %v1101 = vunpack.c.l.b16 %v836
        %v1102 = vunpack.c.l.b16 %v839
        %v1103 = vunpack.c.l.b16 %v843
        %v1104 = vunpack.c.l.b16 %v846
        %v1105 = vunpack.c.l.b16 %v850
        %v1106 = vunpack.c.l.b16 %v853
        %v1107 = vunpack.c.l.b16 %v857
        %v1108 = vunpack.c.l.b16 %v860
        %v1109 = vunpack.c.l.b16 %v864
        %v1110 = vunpack.c.l.b16 %v867
        %v1111 = vunpack.c.l.b16 %v871
        %v1112 = vunpack.c.l.b16 %v874
        %v1113 = vunpack.c.l.b16 %v878
        %v1114 = vunpack.c.l.b16 %v881
        %v1115 = vunpack.c.l.b16 %v885
        %v1116 = vunpack.c.l.b16 %v888
        %v1117 = vunpack.c.l.b16 %v892
        %v1118 = vunpack.c.l.b16 %v895
        %v1119 = vunpack.c.l.b16 %v899
        %v1120 = vunpack.c.l.b16 %v902
        %v1121 = vunpack.c.l.b16 %v906
        %v1122 = vunpack.c.l.b16 %v909
        %v1123 = vunpack.c.l.b16 %v913
        %v1124 = vunpack.c.l.b16 %v916
        %v1125 = vunpack.c.l.b16 %v920
        %v1126 = vunpack.c.l.b16 %v923
        %v1127 = vunpack.c.l.b16 %v927
        %v1128 = vunpack.c.l.b16 %v930
        %v1129 = vpack.c.b16 %v1094, %v1093
        %v1130 = vpack.c.b16 %v1096, %v1095
        %v1131 = vpack.c.b16 %v1098, %v1097
        %v1132 = vpack.c.b16 %v1100, %v1099
        %v1133 = vpack.c.b16 %v1102, %v1101
        %v1134 = vpack.c.b16 %v1104, %v1103
        %v1135 = vpack.c.b16 %v1106, %v1105
        %v1136 = vpack.c.b16 %v1108, %v1107
        %v1137 = vpack.c.b16 %v1110, %v1109
        %v1138 = vpack.c.b16 %v1112, %v1111
        %v1139 = vpack.c.b16 %v1114, %v1113
        %v1140 = vpack.c.b16 %v1116, %v1115
        %v1141 = vpack.c.b16 %v1118, %v1117
        %v1142 = vpack.c.b16 %v1120, %v1119
        %v1143 = vpack.c.b16 %v1122, %v1121
        %v1144 = vpack.c.b16 %v1124, %v1123
        %v1145 = vpack.c.b16 %v1126, %v1125
        %v1146 = vpack.c.b16 %v1128, %v1127
        %v1165 = vld [vmem:[%s1] sm:$0xf]
        %v1166 = vld [vmem:[%s1 + $0x4] sm:$0xf]
        %v1167 = vld [vmem:[%s1 + $0x8] sm:$0xf]
        %v1168 = vld [vmem:[%s1 + $0xc] sm:$0xf]
        %v1169 = vld [vmem:[%s1 + $0x10] sm:$0xf]
        %v1170 = vld [vmem:[%s1 + $0x14] sm:$0xf]
        %v1171 = vld [vmem:[%s1 + $0x18] sm:$0xf]
        %v1172 = vld [vmem:[%s1 + $0x1c] sm:$0xf]
        %v1173 = vld [vmem:[%s1 + $0x20] sm:$0xf]
        %v1174 = vld [vmem:[%s1 + $0x24] sm:$0xf]
        %v1175 = vld [vmem:[%s1 + $0x28] sm:$0xf]
        %v1176 = vld [vmem:[%s1 + $0x2c] sm:$0xf]
        %v1177 = vld [vmem:[%s1 + $0x30] sm:$0xf]
        %v1178 = vld [vmem:[%s1 + $0x34] sm:$0xf]
        %v1179 = vld [vmem:[%s1 + $0x38] sm:$0xf]
        %v1180 = vld [vmem:[%s1 + $0x3c] sm:$0xf]
        %v1181 = vld [vmem:[%s1 + $0x40] sm:$0xf]
        %v1182 = vld [vmem:[%s1 + $0x44] sm:$0xf]
        %v1183 = vld [vmem:[%s1 + $0x48] sm:$0xf]
        %v1184 = vld [vmem:[%s1 + $0x4c] sm:$0xf]
        %v1185 = vld [vmem:[%s1 + $0x50] sm:$0xf]
        %v1186 = vld [vmem:[%s1 + $0x54] sm:$0xf]
        %v1187 = vld [vmem:[%s1 + $0x58] sm:$0xf]
        %v1188 = vld [vmem:[%s1 + $0x5c] sm:$0xf]
        %v1189 = vld [vmem:[%s1 + $0x60] sm:$0xf]
        %v1190 = vld [vmem:[%s1 + $0x64] sm:$0xf]
        %v1191 = vld [vmem:[%s1 + $0x68] sm:$0xf]
        %v1192 = vld [vmem:[%s1 + $0x6c] sm:$0xf]
        %v1193 = vld [vmem:[%s1 + $0x70] sm:$0xf]
        %v1194 = vld [vmem:[%s1 + $0x74] sm:$0xf]
        %v1195 = vld [vmem:[%s1 + $0x78] sm:$0xf]
        %v1196 = vld [vmem:[%s1 + $0x7c] sm:$0xf]
        %v1197 = vld [vmem:[%s1 + $0x80] sm:$0xf]
        %v1198 = vld [vmem:[%s1 + $0x84] sm:$0xf]
        %v1199 = vld [vmem:[%s1 + $0x88] sm:$0xf]
        %v1200 = vld [vmem:[%s1 + $0x8c] sm:$0xf]
        %v1201 = vld [vmem:[%s1 + $0x90] sm:$0xf]
        %v1202 = vld [vmem:[%s1 + $0x94] sm:$0xf]
        %v1203 = vld [vmem:[%s1 + $0x98] sm:$0xf]
        %v1204 = vld [vmem:[%s1 + $0x9c] sm:$0xf]
        %v1205 = vld [vmem:[%s1 + $0xa0] sm:$0xf]
        %v1206 = vld [vmem:[%s1 + $0xa4] sm:$0xf]
        %v1207 = vld [vmem:[%s1 + $0xa8] sm:$0xf]
        %v1208 = vld [vmem:[%s1 + $0xac] sm:$0xf]
        %v1209 = vld [vmem:[%s1 + $0xb0] sm:$0xf]
        %v1210 = vld [vmem:[%s1 + $0xb4] sm:$0xf]
        %v1211 = vld [vmem:[%s1 + $0xb8] sm:$0xf]
        %v1212 = vld [vmem:[%s1 + $0xbc] sm:$0xf]
        %s1213 = scalar_lea.vmem %s1, 192
        %v1214 = vld [vmem:[%s1213] sm:$0xf]
        %v1215 = vld [vmem:[%s1213 + $0x4] sm:$0xf]
        %v1216 = vld [vmem:[%s1213 + $0x8] sm:$0xf]
        %v1217 = vld [vmem:[%s1213 + $0xc] sm:$0xf]
        %v1218 = vld [vmem:[%s1213 + $0x10] sm:$0xf]
        %v1219 = vld [vmem:[%s1213 + $0x14] sm:$0xf]
        %v1220 = vld [vmem:[%s1213 + $0x18] sm:$0xf]
        %v1221 = vld [vmem:[%s1213 + $0x1c] sm:$0xf]
        %v1222 = vld [vmem:[%s1213 + $0x20] sm:$0xf]
        %v1223 = vld [vmem:[%s1213 + $0x24] sm:$0xf]
        %v1224 = vld [vmem:[%s1213 + $0x28] sm:$0xf]
        %v1225 = vld [vmem:[%s1213 + $0x2c] sm:$0xf]
        %v1226 = vld [vmem:[%s1213 + $0x30] sm:$0xf]
        %v1227 = vld [vmem:[%s1213 + $0x34] sm:$0xf]
        %v1228 = vld [vmem:[%s1213 + $0x38] sm:$0xf]
        %v1229 = vld [vmem:[%s1213 + $0x3c] sm:$0xf]
        %v1230 = vld [vmem:[%s1213 + $0x40] sm:$0xf]
        %v1231 = vld [vmem:[%s1213 + $0x44] sm:$0xf]
        %v1232 = vld [vmem:[%s1213 + $0x48] sm:$0xf]
        %v1233 = vld [vmem:[%s1213 + $0x4c] sm:$0xf]
        %v1234 = vld [vmem:[%s1213 + $0x50] sm:$0xf]
        %v1235 = vld [vmem:[%s1213 + $0x54] sm:$0xf]
        %v1236 = vld [vmem:[%s1213 + $0x58] sm:$0xf]
        %v1237 = vld [vmem:[%s1213 + $0x5c] sm:$0xf]
        %v1238 = vld [vmem:[%s1213 + $0x60] sm:$0xf]
        %v1239 = vld [vmem:[%s1213 + $0x64] sm:$0xf]
        %v1240 = vld [vmem:[%s1213 + $0x68] sm:$0xf]
        %v1241 = vld [vmem:[%s1213 + $0x6c] sm:$0xf]
        %v1242 = vld [vmem:[%s1213 + $0x70] sm:$0xf]
        %v1243 = vld [vmem:[%s1213 + $0x74] sm:$0xf]
        %v1244 = vld [vmem:[%s1213 + $0x78] sm:$0xf]
        %v1245 = vld [vmem:[%s1213 + $0x7c] sm:$0xf]
        %v1246 = vld [vmem:[%s1213 + $0x80] sm:$0xf]
        %v1247 = vld [vmem:[%s1213 + $0x84] sm:$0xf]
        %v1248 = vld [vmem:[%s1213 + $0x88] sm:$0xf]
        %v1249 = vld [vmem:[%s1213 + $0x8c] sm:$0xf]
        %v1250 = vld [vmem:[%s1213 + $0x90] sm:$0xf]
        %v1251 = vld [vmem:[%s1213 + $0x94] sm:$0xf]
        %v1252 = vld [vmem:[%s1213 + $0x98] sm:$0xf]
        %v1253 = vld [vmem:[%s1213 + $0x9c] sm:$0xf]
        %v1254 = vld [vmem:[%s1213 + $0xa0] sm:$0xf]
        %v1255 = vld [vmem:[%s1213 + $0xa4] sm:$0xf]
        %v1256 = vld [vmem:[%s1213 + $0xa8] sm:$0xf]
        %v1257 = vld [vmem:[%s1213 + $0xac] sm:$0xf]
        %v1258 = vld [vmem:[%s1213 + $0xb0] sm:$0xf]
        %v1259 = vld [vmem:[%s1213 + $0xb4] sm:$0xf]
        %v1260 = vld [vmem:[%s1213 + $0xb8] sm:$0xf]
        %v1261 = vld [vmem:[%s1213 + $0xbc] sm:$0xf]
        %v1310 = vunpack.c.l.b16 %v1214
        %v1311 = vunpack.c.l.b16 %v1215
        %v1312 = vunpack.c.l.b16 %v1216
        %v1313 = vunpack.c.l.b16 %v1217
        %v1314 = vunpack.c.l.b16 %v1218
        %v1315 = vunpack.c.l.b16 %v1219
        %v1316 = vunpack.c.l.b16 %v1220
        %v1317 = vunpack.c.l.b16 %v1221
        %v1318 = vunpack.c.l.b16 %v1222
        %v1319 = vunpack.c.l.b16 %v1223
        %v1320 = vunpack.c.l.b16 %v1224
        %v1321 = vunpack.c.l.b16 %v1225
        %v1322 = vunpack.c.l.b16 %v1226
        %v1323 = vunpack.c.l.b16 %v1227
        %v1324 = vunpack.c.l.b16 %v1228
        %v1325 = vunpack.c.l.b16 %v1229
        %v1326 = vunpack.c.l.b16 %v1230
        %v1327 = vunpack.c.l.b16 %v1231
        %v1328 = vunpack.c.l.b16 %v1232
        %v1329 = vunpack.c.l.b16 %v1233
        %v1330 = vunpack.c.l.b16 %v1234
        %v1331 = vunpack.c.l.b16 %v1235
        %v1332 = vunpack.c.l.b16 %v1236
        %v1333 = vunpack.c.l.b16 %v1237
        %v1334 = vunpack.c.l.b16 %v1238
        %v1335 = vunpack.c.l.b16 %v1239
        %v1336 = vunpack.c.l.b16 %v1240
        %v1337 = vunpack.c.l.b16 %v1241
        %v1338 = vunpack.c.l.b16 %v1242
        %v1339 = vunpack.c.l.b16 %v1243
        %v1340 = vunpack.c.l.b16 %v1244
        %v1341 = vunpack.c.l.b16 %v1245
        %v1342 = vunpack.c.l.b16 %v1246
        %v1343 = vunpack.c.l.b16 %v1247
        %v1344 = vunpack.c.l.b16 %v1248
        %v1345 = vunpack.c.l.b16 %v1249
        %v1346 = vunpack.c.l.b16 %v1250
        %v1347 = vunpack.c.l.b16 %v1251
        %v1348 = vunpack.c.l.b16 %v1252
        %v1349 = vunpack.c.l.b16 %v1253
        %v1350 = vunpack.c.l.b16 %v1254
        %v1351 = vunpack.c.l.b16 %v1255
        %v1352 = vunpack.c.l.b16 %v1256
        %v1353 = vunpack.c.l.b16 %v1257
        %v1354 = vunpack.c.l.b16 %v1258
        %v1355 = vunpack.c.l.b16 %v1259
        %v1356 = vunpack.c.l.b16 %v1260
        %v1357 = vunpack.c.l.b16 %v1261
        %v1358 = vpack.c.b16 %v1311, %v1310
        %v1359 = vpack.c.b16 %v1313, %v1312
        %v1360 = vpack.c.b16 %v1315, %v1314
        %v1361 = vpack.c.b16 %v1317, %v1316
        %v1362 = vpack.c.b16 %v1319, %v1318
        %v1363 = vpack.c.b16 %v1321, %v1320
        %v1364 = vpack.c.b16 %v1323, %v1322
        %v1365 = vpack.c.b16 %v1325, %v1324
        %v1366 = vpack.c.b16 %v1327, %v1326
        %v1367 = vpack.c.b16 %v1329, %v1328
        %v1368 = vpack.c.b16 %v1331, %v1330
        %v1369 = vpack.c.b16 %v1333, %v1332
        %v1370 = vpack.c.b16 %v1335, %v1334
        %v1371 = vpack.c.b16 %v1337, %v1336
        %v1372 = vpack.c.b16 %v1339, %v1338
        %v1373 = vpack.c.b16 %v1341, %v1340
        %v1374 = vpack.c.b16 %v1343, %v1342
        %v1375 = vpack.c.b16 %v1345, %v1344
        %v1376 = vpack.c.b16 %v1347, %v1346
        %v1377 = vpack.c.b16 %v1349, %v1348
        %v1378 = vpack.c.b16 %v1351, %v1350
        %v1379 = vpack.c.b16 %v1353, %v1352
        %v1380 = vpack.c.b16 %v1355, %v1354
        %v1381 = vpack.c.b16 %v1357, %v1356
        %1406 = vmatprep.subr.bf16.mxu0 0
        %1407 = vmatpush1.bf16.msra.mxu0 %v1365
        %1408 = vmatprep.subr.bf16.mxu0 0
        %1409 = vmatpush1.bf16.msra.mxu0 %v1364
        %1410 = vmatprep.subr.bf16.mxu0 0
        %1411 = vmatpush1.bf16.msra.mxu0 %v1363
        %1412 = vmatprep.subr.bf16.mxu0 0
        %1413 = vmatpush1.bf16.msra.mxu0 %v1362
        %1414 = vmatprep.subr.bf16.mxu0 0
        %1415 = vmatpush1.bf16.msra.mxu0 %v1361
        %1416 = vmatprep.subr.bf16.mxu0 0
        %1417 = vmatpush1.bf16.msra.mxu0 %v1360
        %1418 = vmatprep.subr.bf16.mxu0 0
        %1419 = vmatpush1.bf16.msra.mxu0 %v1359
        %1420 = vmatprep.subr.bf16.mxu0 0
        %1421 = vmatpush1.bf16.msra.mxu0 %v1358
        %1422 = vmatprep.subr.bf16.mxu0 0
        %1423 = vmatpush2.bf16.msra.mxu0 %v1373
        %1424 = vmatprep.subr.bf16.mxu0 0
        %1425 = vmatpush2.bf16.msra.mxu0 %v1372
        %1426 = vmatprep.subr.bf16.mxu0 0
        %1427 = vmatpush2.bf16.msra.mxu0 %v1371
        %1428 = vmatprep.subr.bf16.mxu0 0
        %1429 = vmatpush2.bf16.msra.mxu0 %v1370
        %1430 = vmatprep.subr.bf16.mxu0 0
        %1431 = vmatpush2.bf16.msra.mxu0 %v1369
        %1432 = vmatprep.subr.bf16.mxu0 0
        %1433 = vmatpush2.bf16.msra.mxu0 %v1368
        %1434 = vmatprep.subr.bf16.mxu0 0
        %1435 = vmatpush2.bf16.msra.mxu0 %v1367
        %1436 = vmatprep.subr.bf16.mxu0 0
        %1437 = vmatpush2.bf16.msra.mxu0 %v1366
        %1438 = vmatprep.mubr.bf16.mxu0 %v1058
        %1439 = vmatmul.mubr.bf16.gmra.mxu0 %v986
        %v1440 = vpop.f32.mrf.mxu0
        %v1441 = vadd.f32 0.0, %v1440
        %v1442 = vpop.f32.mrf.mxu0
        %v1443 = vpop.f32.mrf.mxu0
        %v1444 = vadd.f32 0.0, %v1443
        %v1445 = vpop.f32.mrf.mxu0
        %1446 = vmatprep.mubr.bf16.mxu0 %v1059
        %1447 = vmatmul.mubr.bf16.gmra.mxu0 %v987
        %v1448 = vpop.f32.mrf.mxu0
        %v1449 = vadd.f32 0.0, %v1448
        %v1450 = vpop.f32.mrf.mxu0
        %v1451 = vpop.f32.mrf.mxu0
        %v1452 = vadd.f32 0.0, %v1451
        %v1453 = vpop.f32.mrf.mxu0
        %1454 = vmatprep.mubr.bf16.mxu0 %v1060
        %1455 = vmatmul.mubr.bf16.gmra.mxu0 %v988
        %v1456 = vpop.f32.mrf.mxu0
        %v1457 = vadd.f32 0.0, %v1456
        %v1458 = vpop.f32.mrf.mxu0
        %v1459 = vpop.f32.mrf.mxu0
        %v1460 = vadd.f32 0.0, %v1459
        %v1461 = vpop.f32.mrf.mxu0
        %1462 = vmatprep.mubr.bf16.mxu0 %v1061
        %1463 = vmatmul.mubr.bf16.gmra.mxu0 %v989
        %v1464 = vpop.f32.mrf.mxu0
        %v1465 = vadd.f32 0.0, %v1464
        %v1466 = vpop.f32.mrf.mxu0
        %v1467 = vpop.f32.mrf.mxu0
        %v1468 = vadd.f32 0.0, %v1467
        %v1469 = vpop.f32.mrf.mxu0
        %1470 = vmatprep.mubr.bf16.mxu0 %v1062
        %1471 = vmatmul.mubr.bf16.gmra.mxu0 %v990
        %v1472 = vpop.f32.mrf.mxu0
        %v1473 = vadd.f32 0.0, %v1472
        %v1474 = vpop.f32.mrf.mxu0
        %v1475 = vpop.f32.mrf.mxu0
        %v1476 = vadd.f32 0.0, %v1475
        %v1477 = vpop.f32.mrf.mxu0
        %1478 = vmatprep.mubr.bf16.mxu0 %v1063
        %1479 = vmatmul.mubr.bf16.gmra.mxu0 %v991
        %v1480 = vpop.f32.mrf.mxu0
        %v1481 = vadd.f32 0.0, %v1480
        %v1482 = vpop.f32.mrf.mxu0
        %v1483 = vpop.f32.mrf.mxu0
        %v1484 = vadd.f32 0.0, %v1483
        %v1485 = vpop.f32.mrf.mxu0
        %1486 = vmatprep.mubr.bf16.mxu0 %v1064
        %1487 = vmatmul.mubr.bf16.gmra.mxu0 %v992
        %v1488 = vpop.f32.mrf.mxu0
        %v1489 = vadd.f32 0.0, %v1488
        %v1490 = vpop.f32.mrf.mxu0
        %v1491 = vpop.f32.mrf.mxu0
        %v1492 = vadd.f32 0.0, %v1491
        %v1493 = vpop.f32.mrf.mxu0
        %1494 = vmatprep.mubr.bf16.mxu0 %v1065
        %1495 = vmatmul.mubr.bf16.gmra.mxu0 %v993
        %v1496 = vpop.f32.mrf.mxu0
        %v1497 = vadd.f32 0.0, %v1496
        %v1498 = vpop.f32.mrf.mxu0
        %v1499 = vpop.f32.mrf.mxu0
        %v1500 = vadd.f32 0.0, %v1499
        %v1501 = vpop.f32.mrf.mxu0
        %1502 = vmatprep.mubr.bf16.mxu0 %v1066
        %1503 = vmatmul.mubr.bf16.gmra.mxu0 %v994
        %v1504 = vpop.f32.mrf.mxu0
        %v1505 = vadd.f32 0.0, %v1504
        %v1506 = vpop.f32.mrf.mxu0
        %v1507 = vpop.f32.mrf.mxu0
        %v1508 = vadd.f32 0.0, %v1507
        %v1509 = vpop.f32.mrf.mxu0
        %1510 = vmatprep.mubr.bf16.mxu0 %v1067
        %1511 = vmatmul.mubr.bf16.gmra.mxu0 %v995
        %v1512 = vpop.f32.mrf.mxu0
        %v1513 = vadd.f32 0.0, %v1512
        %v1514 = vpop.f32.mrf.mxu0
        %v1515 = vpop.f32.mrf.mxu0
        %v1516 = vadd.f32 0.0, %v1515
        %v1517 = vpop.f32.mrf.mxu0
        %1518 = vmatprep.mubr.bf16.mxu0 %v1068
        %1519 = vmatmul.mubr.bf16.gmra.mxu0 %v996
        %v1520 = vpop.f32.mrf.mxu0
        %v1521 = vadd.f32 0.0, %v1520
        %v1522 = vpop.f32.mrf.mxu0
        %v1523 = vpop.f32.mrf.mxu0
        %v1524 = vadd.f32 0.0, %v1523
        %v1525 = vpop.f32.mrf.mxu0
        %1526 = vmatprep.mubr.bf16.mxu0 %v1069
        %1527 = vmatmul.mubr.bf16.gmra.mxu0 %v997
        %v1528 = vpop.f32.mrf.mxu0
        %v1529 = vadd.f32 0.0, %v1528
        %v1530 = vpop.f32.mrf.mxu0
        %v1531 = vpop.f32.mrf.mxu0
        %v1532 = vadd.f32 0.0, %v1531
        %v1533 = vpop.f32.mrf.mxu0
        %1534 = vmatprep.mubr.bf16.mxu0 %v1070
        %1535 = vmatmul.mubr.bf16.gmra.mxu0 %v998
        %v1536 = vpop.f32.mrf.mxu0
        %v1537 = vadd.f32 0.0, %v1536
        %v1538 = vpop.f32.mrf.mxu0
        %v1539 = vpop.f32.mrf.mxu0
        %v1540 = vadd.f32 0.0, %v1539
        %v1541 = vpop.f32.mrf.mxu0
        %1542 = vmatprep.mubr.bf16.mxu0 %v1071
        %1543 = vmatmul.mubr.bf16.gmra.mxu0 %v999
        %v1544 = vpop.f32.mrf.mxu0
        %v1545 = vadd.f32 0.0, %v1544
        %v1546 = vpop.f32.mrf.mxu0
        %v1547 = vpop.f32.mrf.mxu0
        %v1548 = vadd.f32 0.0, %v1547
        %v1549 = vpop.f32.mrf.mxu0
        %1550 = vmatprep.mubr.bf16.mxu0 %v1072
        %1551 = vmatmul.mubr.bf16.gmra.mxu0 %v1000
        %v1552 = vpop.f32.mrf.mxu0
        %v1553 = vadd.f32 0.0, %v1552
        %v1554 = vpop.f32.mrf.mxu0
        %v1555 = vpop.f32.mrf.mxu0
        %v1556 = vadd.f32 0.0, %v1555
        %v1557 = vpop.f32.mrf.mxu0
        %1558 = vmatprep.mubr.bf16.mxu0 %v1073
        %1559 = vmatmul.mubr.bf16.gmra.mxu0 %v1001
        %v1560 = vpop.f32.mrf.mxu0
        %v1561 = vadd.f32 0.0, %v1560
        %v1562 = vpop.f32.mrf.mxu0
        %v1563 = vpop.f32.mrf.mxu0
        %v1564 = vadd.f32 0.0, %v1563
        %v1565 = vpop.f32.mrf.mxu0
        %1566 = vdwg.mxu0
        %1567 = vmatprep.subr.bf16.mxu0 0
        %1568 = vmatpush1.bf16.msra.mxu0 %v1381
        %1569 = vmatprep.subr.bf16.mxu0 0
        %1570 = vmatpush1.bf16.msra.mxu0 %v1380
        %1571 = vmatprep.subr.bf16.mxu0 0
        %1572 = vmatpush1.bf16.msra.mxu0 %v1379
        %1573 = vmatprep.subr.bf16.mxu0 0
        %1574 = vmatpush1.bf16.msra.mxu0 %v1378
        %1575 = vmatprep.subr.bf16.mxu0 0
        %1576 = vmatpush1.bf16.msra.mxu0 %v1377
        %1577 = vmatprep.subr.bf16.mxu0 0
        %1578 = vmatpush1.bf16.msra.mxu0 %v1376
        %1579 = vmatprep.subr.bf16.mxu0 0
        %1580 = vmatpush1.bf16.msra.mxu0 %v1375
        %1581 = vmatprep.subr.bf16.mxu0 0
        %1582 = vmatpush1.bf16.msra.mxu0 %v1374
        %1583 = vmatprep.subr.bf16.mxu0 0
        %1584 = vmatpush2.bf16.msra.mxu0 0
        %1585 = vmatprep.subr.bf16.mxu0 0
        %1586 = vmatpush2.bf16.msra.mxu0 0
        %1587 = vmatprep.subr.bf16.mxu0 0
        %1588 = vmatpush2.bf16.msra.mxu0 0
        %1589 = vmatprep.subr.bf16.mxu0 0
        %1590 = vmatpush2.bf16.msra.mxu0 0
        %1591 = vmatprep.subr.bf16.mxu0 0
        %1592 = vmatpush2.bf16.msra.mxu0 0
        %1593 = vmatprep.subr.bf16.mxu0 0
        %1594 = vmatpush2.bf16.msra.mxu0 0
        %1595 = vmatprep.subr.bf16.mxu0 0
        %1596 = vmatpush2.bf16.msra.mxu0 0
        %1597 = vmatprep.subr.bf16.mxu0 0
        %1598 = vmatpush2.bf16.msra.mxu0 0
        %1599 = vmatprep.mubr.bf16.mxu0 0
        %1600 = vmatmul.mubr.bf16.gmra.mxu0 %v1130
        %v1601 = vpop.f32.mrf.mxu0
        %v1602 = vadd.f32 %v1441, %v1601
        %v1603 = vpop.f32.mrf.mxu0
        %v1604 = vpop.f32.mrf.mxu0
        %v1605 = vadd.f32 %v1444, %v1604
        %v1606 = vpop.f32.mrf.mxu0
        %1607 = vmatprep.mubr.bf16.mxu0 0
        %1608 = vmatmul.mubr.bf16.gmra.mxu0 %v1131
        %v1609 = vpop.f32.mrf.mxu0
        %v1610 = vadd.f32 %v1449, %v1609
        %v1611 = vpop.f32.mrf.mxu0
        %v1612 = vpop.f32.mrf.mxu0
        %v1613 = vadd.f32 %v1452, %v1612
        %v1614 = vpop.f32.mrf.mxu0
        %1615 = vmatprep.mubr.bf16.mxu0 0
        %1616 = vmatmul.mubr.bf16.gmra.mxu0 %v1132
        %v1617 = vpop.f32.mrf.mxu0
        %v1618 = vadd.f32 %v1457, %v1617
        %v1619 = vpop.f32.mrf.mxu0
        %v1620 = vpop.f32.mrf.mxu0
        %v1621 = vadd.f32 %v1460, %v1620
        %v1622 = vpop.f32.mrf.mxu0
        %1623 = vmatprep.mubr.bf16.mxu0 0
        %1624 = vmatmul.mubr.bf16.gmra.mxu0 %v1133
        %v1625 = vpop.f32.mrf.mxu0
        %v1626 = vadd.f32 %v1465, %v1625
        %v1627 = vpop.f32.mrf.mxu0
        %v1628 = vpop.f32.mrf.mxu0
        %v1629 = vadd.f32 %v1468, %v1628
        %v1630 = vpop.f32.mrf.mxu0
        %1631 = vmatprep.mubr.bf16.mxu0 0
        %1632 = vmatmul.mubr.bf16.gmra.mxu0 %v1134
        %v1633 = vpop.f32.mrf.mxu0
        %v1634 = vadd.f32 %v1473, %v1633
        %v1635 = vpop.f32.mrf.mxu0
        %v1636 = vpop.f32.mrf.mxu0
        %v1637 = vadd.f32 %v1476, %v1636
        %v1638 = vpop.f32.mrf.mxu0
        %1639 = vmatprep.mubr.bf16.mxu0 0
        %1640 = vmatmul.mubr.bf16.gmra.mxu0 %v1135
        %v1641 = vpop.f32.mrf.mxu0
        %v1642 = vadd.f32 %v1481, %v1641
        %v1643 = vpop.f32.mrf.mxu0
        %v1644 = vpop.f32.mrf.mxu0
        %v1645 = vadd.f32 %v1484, %v1644
        %v1646 = vpop.f32.mrf.mxu0
        %1647 = vmatprep.mubr.bf16.mxu0 0
        %1648 = vmatmul.mubr.bf16.gmra.mxu0 %v1136
        %v1649 = vpop.f32.mrf.mxu0
        %v1650 = vadd.f32 %v1489, %v1649
        %v1651 = vpop.f32.mrf.mxu0
        %v1652 = vpop.f32.mrf.mxu0
        %v1653 = vadd.f32 %v1492, %v1652
        %v1654 = vpop.f32.mrf.mxu0
        %1655 = vmatprep.mubr.bf16.mxu0 0
        %1656 = vmatmul.mubr.bf16.gmra.mxu0 %v1137
        %v1657 = vpop.f32.mrf.mxu0
        %v1658 = vadd.f32 %v1497, %v1657
        %v1659 = vpop.f32.mrf.mxu0
        %v1660 = vpop.f32.mrf.mxu0
        %v1661 = vadd.f32 %v1500, %v1660
        %v1662 = vpop.f32.mrf.mxu0
        %1663 = vmatprep.mubr.bf16.mxu0 0
        %1664 = vmatmul.mubr.bf16.gmra.mxu0 %v1138
        %v1665 = vpop.f32.mrf.mxu0
        %v1666 = vadd.f32 %v1505, %v1665
        %v1667 = vpop.f32.mrf.mxu0
        %v1668 = vpop.f32.mrf.mxu0
        %v1669 = vadd.f32 %v1508, %v1668
        %v1670 = vpop.f32.mrf.mxu0
        %1671 = vmatprep.mubr.bf16.mxu0 0
        %1672 = vmatmul.mubr.bf16.gmra.mxu0 %v1139
        %v1673 = vpop.f32.mrf.mxu0
        %v1674 = vadd.f32 %v1513, %v1673
        %v1675 = vpop.f32.mrf.mxu0
        %v1676 = vpop.f32.mrf.mxu0
        %v1677 = vadd.f32 %v1516, %v1676
        %v1678 = vpop.f32.mrf.mxu0
        %1679 = vmatprep.mubr.bf16.mxu0 0
        %1680 = vmatmul.mubr.bf16.gmra.mxu0 %v1140
        %v1681 = vpop.f32.mrf.mxu0
        %v1682 = vadd.f32 %v1521, %v1681
        %v1683 = vpop.f32.mrf.mxu0
        %v1684 = vpop.f32.mrf.mxu0
        %v1685 = vadd.f32 %v1524, %v1684
        %v1686 = vpop.f32.mrf.mxu0
        %1687 = vmatprep.mubr.bf16.mxu0 0
        %1688 = vmatmul.mubr.bf16.gmra.mxu0 %v1141
        %v1689 = vpop.f32.mrf.mxu0
        %v1690 = vadd.f32 %v1529, %v1689
        %v1691 = vpop.f32.mrf.mxu0
        %v1692 = vpop.f32.mrf.mxu0
        %v1693 = vadd.f32 %v1532, %v1692
        %v1694 = vpop.f32.mrf.mxu0
        %1695 = vmatprep.mubr.bf16.mxu0 0
        %1696 = vmatmul.mubr.bf16.gmra.mxu0 %v1142
        %v1697 = vpop.f32.mrf.mxu0
        %v1698 = vadd.f32 %v1537, %v1697
        %v1699 = vpop.f32.mrf.mxu0
        %v1700 = vpop.f32.mrf.mxu0
        %v1701 = vadd.f32 %v1540, %v1700
        %v1702 = vpop.f32.mrf.mxu0
        %1703 = vmatprep.mubr.bf16.mxu0 0
        %1704 = vmatmul.mubr.bf16.gmra.mxu0 %v1143
        %v1705 = vpop.f32.mrf.mxu0
        %v1706 = vadd.f32 %v1545, %v1705
        %v1707 = vpop.f32.mrf.mxu0
        %v1708 = vpop.f32.mrf.mxu0
        %v1709 = vadd.f32 %v1548, %v1708
        %v1710 = vpop.f32.mrf.mxu0
        %1711 = vmatprep.mubr.bf16.mxu0 0
        %1712 = vmatmul.mubr.bf16.gmra.mxu0 %v1144
        %v1713 = vpop.f32.mrf.mxu0
        %v1714 = vadd.f32 %v1553, %v1713
        %v1715 = vpop.f32.mrf.mxu0
        %v1716 = vpop.f32.mrf.mxu0
        %v1717 = vadd.f32 %v1556, %v1716
        %v1718 = vpop.f32.mrf.mxu0
        %1719 = vmatprep.mubr.bf16.mxu0 0
        %1720 = vmatmul.mubr.bf16.gmra.mxu0 %v1145
        %v1721 = vpop.f32.mrf.mxu0
        %v1722 = vadd.f32 %v1561, %v1721
        %v1723 = vpop.f32.mrf.mxu0
        %v1724 = vpop.f32.mrf.mxu0
        %v1725 = vadd.f32 %v1564, %v1724
        %v1726 = vpop.f32.mrf.mxu0
        %1727 = vdwg.mxu0
        %v1776 = vunpack.c.l.b16 %v1165
        %v1777 = vunpack.c.l.b16 %v1166
        %v1778 = vunpack.c.l.b16 %v1167
        %v1779 = vunpack.c.l.b16 %v1168
        %v1780 = vunpack.c.l.b16 %v1169
        %v1781 = vunpack.c.l.b16 %v1170
        %v1782 = vunpack.c.l.b16 %v1171
        %v1783 = vunpack.c.l.b16 %v1172
        %v1784 = vunpack.c.l.b16 %v1173
        %v1785 = vunpack.c.l.b16 %v1174
        %v1786 = vunpack.c.l.b16 %v1175
        %v1787 = vunpack.c.l.b16 %v1176
        %v1788 = vunpack.c.l.b16 %v1177
        %v1789 = vunpack.c.l.b16 %v1178
        %v1790 = vunpack.c.l.b16 %v1179
        %v1791 = vunpack.c.l.b16 %v1180
        %v1792 = vunpack.c.l.b16 %v1181
        %v1793 = vunpack.c.l.b16 %v1182
        %v1794 = vunpack.c.l.b16 %v1183
        %v1795 = vunpack.c.l.b16 %v1184
        %v1796 = vunpack.c.l.b16 %v1185
        %v1797 = vunpack.c.l.b16 %v1186
        %v1798 = vunpack.c.l.b16 %v1187
        %v1799 = vunpack.c.l.b16 %v1188
        %v1800 = vunpack.c.l.b16 %v1189
        %v1801 = vunpack.c.l.b16 %v1190
        %v1802 = vunpack.c.l.b16 %v1191
        %v1803 = vunpack.c.l.b16 %v1192
        %v1804 = vunpack.c.l.b16 %v1193
        %v1805 = vunpack.c.l.b16 %v1194
        %v1806 = vunpack.c.l.b16 %v1195
        %v1807 = vunpack.c.l.b16 %v1196
        %v1808 = vunpack.c.l.b16 %v1197
        %v1809 = vunpack.c.l.b16 %v1198
        %v1810 = vunpack.c.l.b16 %v1199
        %v1811 = vunpack.c.l.b16 %v1200
        %v1812 = vunpack.c.l.b16 %v1201
        %v1813 = vunpack.c.l.b16 %v1202
        %v1814 = vunpack.c.l.b16 %v1203
        %v1815 = vunpack.c.l.b16 %v1204
        %v1816 = vunpack.c.l.b16 %v1205
        %v1817 = vunpack.c.l.b16 %v1206
        %v1818 = vunpack.c.l.b16 %v1207
        %v1819 = vunpack.c.l.b16 %v1208
        %v1820 = vunpack.c.l.b16 %v1209
        %v1821 = vunpack.c.l.b16 %v1210
        %v1822 = vunpack.c.l.b16 %v1211
        %v1823 = vunpack.c.l.b16 %v1212
        %v1824 = vpack.c.b16 %v1777, %v1776
        %v1825 = vpack.c.b16 %v1779, %v1778
        %v1826 = vpack.c.b16 %v1781, %v1780
        %v1827 = vpack.c.b16 %v1783, %v1782
        %v1828 = vpack.c.b16 %v1785, %v1784
        %v1829 = vpack.c.b16 %v1787, %v1786
        %v1830 = vpack.c.b16 %v1789, %v1788
        %v1831 = vpack.c.b16 %v1791, %v1790
        %v1832 = vpack.c.b16 %v1793, %v1792
        %v1833 = vpack.c.b16 %v1795, %v1794
        %v1834 = vpack.c.b16 %v1797, %v1796
        %v1835 = vpack.c.b16 %v1799, %v1798
        %v1836 = vpack.c.b16 %v1801, %v1800
        %v1837 = vpack.c.b16 %v1803, %v1802
        %v1838 = vpack.c.b16 %v1805, %v1804
        %v1839 = vpack.c.b16 %v1807, %v1806
        %v1840 = vpack.c.b16 %v1809, %v1808
        %v1841 = vpack.c.b16 %v1811, %v1810
        %v1842 = vpack.c.b16 %v1813, %v1812
        %v1843 = vpack.c.b16 %v1815, %v1814
        %v1844 = vpack.c.b16 %v1817, %v1816
        %v1845 = vpack.c.b16 %v1819, %v1818
        %v1846 = vpack.c.b16 %v1821, %v1820
        %v1847 = vpack.c.b16 %v1823, %v1822
        %1872 = vmatprep.subr.bf16.mxu0 0
        %1873 = vmatpush1.bf16.msra.mxu0 %v1831
        %1874 = vmatprep.subr.bf16.mxu0 0
        %1875 = vmatpush1.bf16.msra.mxu0 %v1830
        %1876 = vmatprep.subr.bf16.mxu0 0
        %1877 = vmatpush1.bf16.msra.mxu0 %v1829
        %1878 = vmatprep.subr.bf16.mxu0 0
        %1879 = vmatpush1.bf16.msra.mxu0 %v1828
        %1880 = vmatprep.subr.bf16.mxu0 0
        %1881 = vmatpush1.bf16.msra.mxu0 %v1827
        %1882 = vmatprep.subr.bf16.mxu0 0
        %1883 = vmatpush1.bf16.msra.mxu0 %v1826
        %1884 = vmatprep.subr.bf16.mxu0 0
        %1885 = vmatpush1.bf16.msra.mxu0 %v1825
        %1886 = vmatprep.subr.bf16.mxu0 0
        %1887 = vmatpush1.bf16.msra.mxu0 %v1824
        %1888 = vmatprep.subr.bf16.mxu0 0
        %1889 = vmatpush2.bf16.msra.mxu0 %v1839
        %1890 = vmatprep.subr.bf16.mxu0 0
        %1891 = vmatpush2.bf16.msra.mxu0 %v1838
        %1892 = vmatprep.subr.bf16.mxu0 0
        %1893 = vmatpush2.bf16.msra.mxu0 %v1837
        %1894 = vmatprep.subr.bf16.mxu0 0
        %1895 = vmatpush2.bf16.msra.mxu0 %v1836
        %1896 = vmatprep.subr.bf16.mxu0 0
        %1897 = vmatpush2.bf16.msra.mxu0 %v1835
        %1898 = vmatprep.subr.bf16.mxu0 0
        %1899 = vmatpush2.bf16.msra.mxu0 %v1834
        %1900 = vmatprep.subr.bf16.mxu0 0
        %1901 = vmatpush2.bf16.msra.mxu0 %v1833
        %1902 = vmatprep.subr.bf16.mxu0 0
        %1903 = vmatpush2.bf16.msra.mxu0 %v1832
        %1904 = vmatprep.mubr.bf16.mxu0 %v1057
        %1905 = vmatmul.mubr.bf16.gmra.mxu0 %v985
        %v1906 = vpop.f32.mrf.mxu0
        %v1907 = vadd.f32 %v1602, %v1906
        %v1908 = vpop.f32.mrf.mxu0
        %v1909 = vpop.f32.mrf.mxu0
        %v1910 = vadd.f32 %v1605, %v1909
        %v1911 = vpop.f32.mrf.mxu0
        %1912 = vmatprep.mubr.bf16.mxu0 %v1058
        %1913 = vmatmul.mubr.bf16.gmra.mxu0 %v986
        %v1914 = vpop.f32.mrf.mxu0
        %v1915 = vadd.f32 %v1610, %v1914
        %v1916 = vpop.f32.mrf.mxu0
        %v1917 = vpop.f32.mrf.mxu0
        %v1918 = vadd.f32 %v1613, %v1917
        %v1919 = vpop.f32.mrf.mxu0
        %1920 = vmatprep.mubr.bf16.mxu0 %v1059
        %1921 = vmatmul.mubr.bf16.gmra.mxu0 %v987
        %v1922 = vpop.f32.mrf.mxu0
        %v1923 = vadd.f32 %v1618, %v1922
        %v1924 = vpop.f32.mrf.mxu0
        %v1925 = vpop.f32.mrf.mxu0
        %v1926 = vadd.f32 %v1621, %v1925
        %v1927 = vpop.f32.mrf.mxu0
        %1928 = vmatprep.mubr.bf16.mxu0 %v1060
        %1929 = vmatmul.mubr.bf16.gmra.mxu0 %v988
        %v1930 = vpop.f32.mrf.mxu0
        %v1931 = vadd.f32 %v1626, %v1930
        %v1932 = vpop.f32.mrf.mxu0
        %v1933 = vpop.f32.mrf.mxu0
        %v1934 = vadd.f32 %v1629, %v1933
        %v1935 = vpop.f32.mrf.mxu0
        %1936 = vmatprep.mubr.bf16.mxu0 %v1061
        %1937 = vmatmul.mubr.bf16.gmra.mxu0 %v989
        %v1938 = vpop.f32.mrf.mxu0
        %v1939 = vadd.f32 %v1634, %v1938
        %v1940 = vpop.f32.mrf.mxu0
        %v1941 = vpop.f32.mrf.mxu0
        %v1942 = vadd.f32 %v1637, %v1941
        %v1943 = vpop.f32.mrf.mxu0
        %1944 = vmatprep.mubr.bf16.mxu0 %v1062
        %1945 = vmatmul.mubr.bf16.gmra.mxu0 %v990
        %v1946 = vpop.f32.mrf.mxu0
        %v1947 = vadd.f32 %v1642, %v1946
        %v1948 = vpop.f32.mrf.mxu0
        %v1949 = vpop.f32.mrf.mxu0
        %v1950 = vadd.f32 %v1645, %v1949
        %v1951 = vpop.f32.mrf.mxu0
        %1952 = vmatprep.mubr.bf16.mxu0 %v1063
        %1953 = vmatmul.mubr.bf16.gmra.mxu0 %v991
        %v1954 = vpop.f32.mrf.mxu0
        %v1955 = vadd.f32 %v1650, %v1954
        %v1956 = vpop.f32.mrf.mxu0
        %v1957 = vpop.f32.mrf.mxu0
        %v1958 = vadd.f32 %v1653, %v1957
        %v1959 = vpop.f32.mrf.mxu0
        %1960 = vmatprep.mubr.bf16.mxu0 %v1064
        %1961 = vmatmul.mubr.bf16.gmra.mxu0 %v992
        %v1962 = vpop.f32.mrf.mxu0
        %v1963 = vadd.f32 %v1658, %v1962
        %v1964 = vpop.f32.mrf.mxu0
        %v1965 = vpop.f32.mrf.mxu0
        %v1966 = vadd.f32 %v1661, %v1965
        %v1967 = vpop.f32.mrf.mxu0
        %1968 = vmatprep.mubr.bf16.mxu0 %v1065
        %1969 = vmatmul.mubr.bf16.gmra.mxu0 %v993
        %v1970 = vpop.f32.mrf.mxu0
        %v1971 = vadd.f32 %v1666, %v1970
        %v1972 = vpop.f32.mrf.mxu0
        %v1973 = vpop.f32.mrf.mxu0
        %v1974 = vadd.f32 %v1669, %v1973
        %v1975 = vpop.f32.mrf.mxu0
        %1976 = vmatprep.mubr.bf16.mxu0 %v1066
        %1977 = vmatmul.mubr.bf16.gmra.mxu0 %v994
        %v1978 = vpop.f32.mrf.mxu0
        %v1979 = vadd.f32 %v1674, %v1978
        %v1980 = vpop.f32.mrf.mxu0
        %v1981 = vpop.f32.mrf.mxu0
        %v1982 = vadd.f32 %v1677, %v1981
        %v1983 = vpop.f32.mrf.mxu0
        %1984 = vmatprep.mubr.bf16.mxu0 %v1067
        %1985 = vmatmul.mubr.bf16.gmra.mxu0 %v995
        %v1986 = vpop.f32.mrf.mxu0
        %v1987 = vadd.f32 %v1682, %v1986
        %v1988 = vpop.f32.mrf.mxu0
        %v1989 = vpop.f32.mrf.mxu0
        %v1990 = vadd.f32 %v1685, %v1989
        %v1991 = vpop.f32.mrf.mxu0
        %1992 = vmatprep.mubr.bf16.mxu0 %v1068
        %1993 = vmatmul.mubr.bf16.gmra.mxu0 %v996
        %v1994 = vpop.f32.mrf.mxu0
        %v1995 = vadd.f32 %v1690, %v1994
        %v1996 = vpop.f32.mrf.mxu0
        %v1997 = vpop.f32.mrf.mxu0
        %v1998 = vadd.f32 %v1693, %v1997
        %v1999 = vpop.f32.mrf.mxu0
        %2000 = vmatprep.mubr.bf16.mxu0 %v1069
        %2001 = vmatmul.mubr.bf16.gmra.mxu0 %v997
        %v2002 = vpop.f32.mrf.mxu0
        %v2003 = vadd.f32 %v1698, %v2002
        %v2004 = vpop.f32.mrf.mxu0
        %v2005 = vpop.f32.mrf.mxu0
        %v2006 = vadd.f32 %v1701, %v2005
        %v2007 = vpop.f32.mrf.mxu0
        %2008 = vmatprep.mubr.bf16.mxu0 %v1070
        %2009 = vmatmul.mubr.bf16.gmra.mxu0 %v998
        %v2010 = vpop.f32.mrf.mxu0
        %v2011 = vadd.f32 %v1706, %v2010
        %v2012 = vpop.f32.mrf.mxu0
        %v2013 = vpop.f32.mrf.mxu0
        %v2014 = vadd.f32 %v1709, %v2013
        %v2015 = vpop.f32.mrf.mxu0
        %2016 = vmatprep.mubr.bf16.mxu0 %v1071
        %2017 = vmatmul.mubr.bf16.gmra.mxu0 %v999
        %v2018 = vpop.f32.mrf.mxu0
        %v2019 = vadd.f32 %v1714, %v2018
        %v2020 = vpop.f32.mrf.mxu0
        %v2021 = vpop.f32.mrf.mxu0
        %v2022 = vadd.f32 %v1717, %v2021
        %v2023 = vpop.f32.mrf.mxu0
        %2024 = vmatprep.mubr.bf16.mxu0 %v1072
        %2025 = vmatmul.mubr.bf16.gmra.mxu0 %v1000
        %v2026 = vpop.f32.mrf.mxu0
        %v2027 = vadd.f32 %v1722, %v2026
        %v2028 = vpop.f32.mrf.mxu0
        %v2029 = vpop.f32.mrf.mxu0
        %v2030 = vadd.f32 %v1725, %v2029
        %v2031 = vpop.f32.mrf.mxu0
        %2032 = vdwg.mxu0
        %2033 = vmatprep.subr.bf16.mxu0 0
        %2034 = vmatpush1.bf16.msra.mxu0 %v1847
        %2035 = vmatprep.subr.bf16.mxu0 0
        %2036 = vmatpush1.bf16.msra.mxu0 %v1846
        %2037 = vmatprep.subr.bf16.mxu0 0
        %2038 = vmatpush1.bf16.msra.mxu0 %v1845
        %2039 = vmatprep.subr.bf16.mxu0 0
        %2040 = vmatpush1.bf16.msra.mxu0 %v1844
        %2041 = vmatprep.subr.bf16.mxu0 0
        %2042 = vmatpush1.bf16.msra.mxu0 %v1843
        %2043 = vmatprep.subr.bf16.mxu0 0
        %2044 = vmatpush1.bf16.msra.mxu0 %v1842
        %2045 = vmatprep.subr.bf16.mxu0 0
        %2046 = vmatpush1.bf16.msra.mxu0 %v1841
        %2047 = vmatprep.subr.bf16.mxu0 0
        %2048 = vmatpush1.bf16.msra.mxu0 %v1840
        %2049 = vmatprep.subr.bf16.mxu0 0
        %2050 = vmatpush2.bf16.msra.mxu0 0
        %2051 = vmatprep.subr.bf16.mxu0 0
        %2052 = vmatpush2.bf16.msra.mxu0 0
        %2053 = vmatprep.subr.bf16.mxu0 0
        %2054 = vmatpush2.bf16.msra.mxu0 0
        %2055 = vmatprep.subr.bf16.mxu0 0
        %2056 = vmatpush2.bf16.msra.mxu0 0
        %2057 = vmatprep.subr.bf16.mxu0 0
        %2058 = vmatpush2.bf16.msra.mxu0 0
        %2059 = vmatprep.subr.bf16.mxu0 0
        %2060 = vmatpush2.bf16.msra.mxu0 0
        %2061 = vmatprep.subr.bf16.mxu0 0
        %2062 = vmatpush2.bf16.msra.mxu0 0
        %2063 = vmatprep.subr.bf16.mxu0 0
        %2064 = vmatpush2.bf16.msra.mxu0 0
        %2065 = vmatprep.mubr.bf16.mxu0 0
        %2066 = vmatmul.mubr.bf16.gmra.mxu0 %v1129
        %v2067 = vpop.f32.mrf.mxu0
        %v2068 = vadd.f32 %v1907, %v2067
        %v2069 = vpop.f32.mrf.mxu0
        %v2070 = vpop.f32.mrf.mxu0
        %v2071 = vadd.f32 %v1910, %v2070
        %v2072 = vpop.f32.mrf.mxu0
        %2073 = vmatprep.mubr.bf16.mxu0 0
        %2074 = vmatmul.mubr.bf16.gmra.mxu0 %v1130
        %v2075 = vpop.f32.mrf.mxu0
        %v2076 = vadd.f32 %v1915, %v2075
        %v2077 = vpop.f32.mrf.mxu0
        %v2078 = vpop.f32.mrf.mxu0
        %v2079 = vadd.f32 %v1918, %v2078
        %v2080 = vpop.f32.mrf.mxu0
        %2081 = vmatprep.mubr.bf16.mxu0 0
        %2082 = vmatmul.mubr.bf16.gmra.mxu0 %v1131
        %v2083 = vpop.f32.mrf.mxu0
        %v2084 = vadd.f32 %v1923, %v2083
        %v2085 = vpop.f32.mrf.mxu0
        %v2086 = vpop.f32.mrf.mxu0
        %v2087 = vadd.f32 %v1926, %v2086
        %v2088 = vpop.f32.mrf.mxu0
        %2089 = vmatprep.mubr.bf16.mxu0 0
        %2090 = vmatmul.mubr.bf16.gmra.mxu0 %v1132
        %v2091 = vpop.f32.mrf.mxu0
        %v2092 = vadd.f32 %v1931, %v2091
        %v2093 = vpop.f32.mrf.mxu0
        %v2094 = vpop.f32.mrf.mxu0
        %v2095 = vadd.f32 %v1934, %v2094
        %v2096 = vpop.f32.mrf.mxu0
        %2097 = vmatprep.mubr.bf16.mxu0 0
        %2098 = vmatmul.mubr.bf16.gmra.mxu0 %v1133
        %v2099 = vpop.f32.mrf.mxu0
        %v2100 = vadd.f32 %v1939, %v2099
        %v2101 = vpop.f32.mrf.mxu0
        %v2102 = vpop.f32.mrf.mxu0
        %v2103 = vadd.f32 %v1942, %v2102
        %v2104 = vpop.f32.mrf.mxu0
        %2105 = vmatprep.mubr.bf16.mxu0 0
        %2106 = vmatmul.mubr.bf16.gmra.mxu0 %v1134
        %v2107 = vpop.f32.mrf.mxu0
        %v2108 = vadd.f32 %v1947, %v2107
        %v2109 = vpop.f32.mrf.mxu0
        %v2110 = vpop.f32.mrf.mxu0
        %v2111 = vadd.f32 %v1950, %v2110
        %v2112 = vpop.f32.mrf.mxu0
        %2113 = vmatprep.mubr.bf16.mxu0 0
        %2114 = vmatmul.mubr.bf16.gmra.mxu0 %v1135
        %v2115 = vpop.f32.mrf.mxu0
        %v2116 = vadd.f32 %v1955, %v2115
        %v2117 = vpop.f32.mrf.mxu0
        %v2118 = vpop.f32.mrf.mxu0
        %v2119 = vadd.f32 %v1958, %v2118
        %v2120 = vpop.f32.mrf.mxu0
        %2121 = vmatprep.mubr.bf16.mxu0 0
        %2122 = vmatmul.mubr.bf16.gmra.mxu0 %v1136
        %v2123 = vpop.f32.mrf.mxu0
        %v2124 = vadd.f32 %v1963, %v2123
        %v2125 = vpop.f32.mrf.mxu0
        %v2126 = vpop.f32.mrf.mxu0
        %v2127 = vadd.f32 %v1966, %v2126
        %v2128 = vpop.f32.mrf.mxu0
        %2129 = vmatprep.mubr.bf16.mxu0 0
        %2130 = vmatmul.mubr.bf16.gmra.mxu0 %v1137
        %v2131 = vpop.f32.mrf.mxu0
        %v2132 = vadd.f32 %v1971, %v2131
        %v2133 = vpop.f32.mrf.mxu0
        %v2134 = vpop.f32.mrf.mxu0
        %v2135 = vadd.f32 %v1974, %v2134
        %v2136 = vpop.f32.mrf.mxu0
        %2137 = vmatprep.mubr.bf16.mxu0 0
        %2138 = vmatmul.mubr.bf16.gmra.mxu0 %v1138
        %v2139 = vpop.f32.mrf.mxu0
        %v2140 = vadd.f32 %v1979, %v2139
        %v2141 = vpop.f32.mrf.mxu0
        %v2142 = vpop.f32.mrf.mxu0
        %v2143 = vadd.f32 %v1982, %v2142
        %v2144 = vpop.f32.mrf.mxu0
        %2145 = vmatprep.mubr.bf16.mxu0 0
        %2146 = vmatmul.mubr.bf16.gmra.mxu0 %v1139
        %v2147 = vpop.f32.mrf.mxu0
        %v2148 = vadd.f32 %v1987, %v2147
        %v2149 = vpop.f32.mrf.mxu0
        %v2150 = vpop.f32.mrf.mxu0
        %v2151 = vadd.f32 %v1990, %v2150
        %v2152 = vpop.f32.mrf.mxu0
        %2153 = vmatprep.mubr.bf16.mxu0 0
        %2154 = vmatmul.mubr.bf16.gmra.mxu0 %v1140
        %v2155 = vpop.f32.mrf.mxu0
        %v2156 = vadd.f32 %v1995, %v2155
        %v2157 = vpop.f32.mrf.mxu0
        %v2158 = vpop.f32.mrf.mxu0
        %v2159 = vadd.f32 %v1998, %v2158
        %v2160 = vpop.f32.mrf.mxu0
        %2161 = vmatprep.mubr.bf16.mxu0 0
        %2162 = vmatmul.mubr.bf16.gmra.mxu0 %v1141
        %v2163 = vpop.f32.mrf.mxu0
        %v2164 = vadd.f32 %v2003, %v2163
        %v2165 = vpop.f32.mrf.mxu0
        %v2166 = vpop.f32.mrf.mxu0
        %v2167 = vadd.f32 %v2006, %v2166
        %v2168 = vpop.f32.mrf.mxu0
        %2169 = vmatprep.mubr.bf16.mxu0 0
        %2170 = vmatmul.mubr.bf16.gmra.mxu0 %v1142
        %v2171 = vpop.f32.mrf.mxu0
        %v2172 = vadd.f32 %v2011, %v2171
        %v2173 = vpop.f32.mrf.mxu0
        %v2174 = vpop.f32.mrf.mxu0
        %v2175 = vadd.f32 %v2014, %v2174
        %v2176 = vpop.f32.mrf.mxu0
        %2177 = vmatprep.mubr.bf16.mxu0 0
        %2178 = vmatmul.mubr.bf16.gmra.mxu0 %v1143
        %v2179 = vpop.f32.mrf.mxu0
        %v2180 = vadd.f32 %v2019, %v2179
        %v2181 = vpop.f32.mrf.mxu0
        %v2182 = vpop.f32.mrf.mxu0
        %v2183 = vadd.f32 %v2022, %v2182
        %v2184 = vpop.f32.mrf.mxu0
        %2185 = vmatprep.mubr.bf16.mxu0 0
        %2186 = vmatmul.mubr.bf16.gmra.mxu0 %v1144
        %v2187 = vpop.f32.mrf.mxu0
        %v2188 = vadd.f32 %v2027, %v2187
        %v2189 = vpop.f32.mrf.mxu0
        %v2190 = vpop.f32.mrf.mxu0
        %v2191 = vadd.f32 %v2030, %v2190
        %v2192 = vpop.f32.mrf.mxu0
        %2193 = vdwg.mxu0
        %s2194 = scalar_lea.vmem %s1, 384
        %v2195 = vld [vmem:[%s2194] sm:$0xf]
        %v2196 = vld [vmem:[%s2194 + $0x4] sm:$0xf]
        %v2197 = vld [vmem:[%s2194 + $0x8] sm:$0xf]
        %v2198 = vld [vmem:[%s2194 + $0xc] sm:$0xf]
        %v2199 = vld [vmem:[%s2194 + $0x10] sm:$0xf]
        %v2200 = vld [vmem:[%s2194 + $0x14] sm:$0xf]
        %v2201 = vld [vmem:[%s2194 + $0x18] sm:$0xf]
        %v2202 = vld [vmem:[%s2194 + $0x1c] sm:$0xf]
        %v2203 = vld [vmem:[%s2194 + $0x20] sm:$0xf]
        %v2204 = vld [vmem:[%s2194 + $0x24] sm:$0xf]
        %v2205 = vld [vmem:[%s2194 + $0x28] sm:$0xf]
        %v2206 = vld [vmem:[%s2194 + $0x2c] sm:$0xf]
        %v2207 = vld [vmem:[%s2194 + $0x30] sm:$0xf]
        %v2208 = vld [vmem:[%s2194 + $0x34] sm:$0xf]
        %v2209 = vld [vmem:[%s2194 + $0x38] sm:$0xf]
        %v2210 = vld [vmem:[%s2194 + $0x3c] sm:$0xf]
        %v2211 = vld [vmem:[%s2194 + $0x40] sm:$0xf]
        %v2212 = vld [vmem:[%s2194 + $0x44] sm:$0xf]
        %v2213 = vld [vmem:[%s2194 + $0x48] sm:$0xf]
        %v2214 = vld [vmem:[%s2194 + $0x4c] sm:$0xf]
        %v2215 = vld [vmem:[%s2194 + $0x50] sm:$0xf]
        %v2216 = vld [vmem:[%s2194 + $0x54] sm:$0xf]
        %v2217 = vld [vmem:[%s2194 + $0x58] sm:$0xf]
        %v2218 = vld [vmem:[%s2194 + $0x5c] sm:$0xf]
        %v2219 = vld [vmem:[%s2194 + $0x60] sm:$0xf]
        %v2220 = vld [vmem:[%s2194 + $0x64] sm:$0xf]
        %v2221 = vld [vmem:[%s2194 + $0x68] sm:$0xf]
        %v2222 = vld [vmem:[%s2194 + $0x6c] sm:$0xf]
        %v2223 = vld [vmem:[%s2194 + $0x70] sm:$0xf]
        %v2224 = vld [vmem:[%s2194 + $0x74] sm:$0xf]
        %v2225 = vld [vmem:[%s2194 + $0x78] sm:$0xf]
        %v2226 = vld [vmem:[%s2194 + $0x7c] sm:$0xf]
        %v2227 = vld [vmem:[%s2194 + $0x80] sm:$0xf]
        %v2228 = vld [vmem:[%s2194 + $0x84] sm:$0xf]
        %v2229 = vld [vmem:[%s2194 + $0x88] sm:$0xf]
        %v2230 = vld [vmem:[%s2194 + $0x8c] sm:$0xf]
        %v2231 = vld [vmem:[%s2194 + $0x90] sm:$0xf]
        %v2232 = vld [vmem:[%s2194 + $0x94] sm:$0xf]
        %v2233 = vld [vmem:[%s2194 + $0x98] sm:$0xf]
        %v2234 = vld [vmem:[%s2194 + $0x9c] sm:$0xf]
        %v2235 = vld [vmem:[%s2194 + $0xa0] sm:$0xf]
        %v2236 = vld [vmem:[%s2194 + $0xa4] sm:$0xf]
        %v2237 = vld [vmem:[%s2194 + $0xa8] sm:$0xf]
        %v2238 = vld [vmem:[%s2194 + $0xac] sm:$0xf]
        %v2239 = vld [vmem:[%s2194 + $0xb0] sm:$0xf]
        %v2240 = vld [vmem:[%s2194 + $0xb4] sm:$0xf]
        %v2241 = vld [vmem:[%s2194 + $0xb8] sm:$0xf]
        %v2242 = vld [vmem:[%s2194 + $0xbc] sm:$0xf]
        %v2291 = vunpack.c.l.b16 %v2195
        %v2292 = vunpack.c.l.b16 %v2196
        %v2293 = vunpack.c.l.b16 %v2197
        %v2294 = vunpack.c.l.b16 %v2198
        %v2295 = vunpack.c.l.b16 %v2199
        %v2296 = vunpack.c.l.b16 %v2200
        %v2297 = vunpack.c.l.b16 %v2201
        %v2298 = vunpack.c.l.b16 %v2202
        %v2299 = vunpack.c.l.b16 %v2203
        %v2300 = vunpack.c.l.b16 %v2204
        %v2301 = vunpack.c.l.b16 %v2205
        %v2302 = vunpack.c.l.b16 %v2206
        %v2303 = vunpack.c.l.b16 %v2207
        %v2304 = vunpack.c.l.b16 %v2208
        %v2305 = vunpack.c.l.b16 %v2209
        %v2306 = vunpack.c.l.b16 %v2210
        %v2307 = vunpack.c.l.b16 %v2211
        %v2308 = vunpack.c.l.b16 %v2212
        %v2309 = vunpack.c.l.b16 %v2213
        %v2310 = vunpack.c.l.b16 %v2214
        %v2311 = vunpack.c.l.b16 %v2215
        %v2312 = vunpack.c.l.b16 %v2216
        %v2313 = vunpack.c.l.b16 %v2217
        %v2314 = vunpack.c.l.b16 %v2218
        %v2315 = vunpack.c.l.b16 %v2219
        %v2316 = vunpack.c.l.b16 %v2220
        %v2317 = vunpack.c.l.b16 %v2221
        %v2318 = vunpack.c.l.b16 %v2222
        %v2319 = vunpack.c.l.b16 %v2223
        %v2320 = vunpack.c.l.b16 %v2224
        %v2321 = vunpack.c.l.b16 %v2225
        %v2322 = vunpack.c.l.b16 %v2226
        %v2323 = vunpack.c.l.b16 %v2227
        %v2324 = vunpack.c.l.b16 %v2228
        %v2325 = vunpack.c.l.b16 %v2229
        %v2326 = vunpack.c.l.b16 %v2230
        %v2327 = vunpack.c.l.b16 %v2231
        %v2328 = vunpack.c.l.b16 %v2232
        %v2329 = vunpack.c.l.b16 %v2233
        %v2330 = vunpack.c.l.b16 %v2234
        %v2331 = vunpack.c.l.b16 %v2235
        %v2332 = vunpack.c.l.b16 %v2236
        %v2333 = vunpack.c.l.b16 %v2237
        %v2334 = vunpack.c.l.b16 %v2238
        %v2335 = vunpack.c.l.b16 %v2239
        %v2336 = vunpack.c.l.b16 %v2240
        %v2337 = vunpack.c.l.b16 %v2241
        %v2338 = vunpack.c.l.b16 %v2242
        %v2339 = vpack.c.b16 %v2292, %v2291
        %v2340 = vpack.c.b16 %v2294, %v2293
        %v2341 = vpack.c.b16 %v2296, %v2295
        %v2342 = vpack.c.b16 %v2298, %v2297
        %v2343 = vpack.c.b16 %v2300, %v2299
        %v2344 = vpack.c.b16 %v2302, %v2301
        %v2345 = vpack.c.b16 %v2304, %v2303
        %v2346 = vpack.c.b16 %v2306, %v2305
        %v2347 = vpack.c.b16 %v2308, %v2307
        %v2348 = vpack.c.b16 %v2310, %v2309
        %v2349 = vpack.c.b16 %v2312, %v2311
        %v2350 = vpack.c.b16 %v2314, %v2313
        %v2351 = vpack.c.b16 %v2316, %v2315
        %v2352 = vpack.c.b16 %v2318, %v2317
        %v2353 = vpack.c.b16 %v2320, %v2319
        %v2354 = vpack.c.b16 %v2322, %v2321
        %v2355 = vpack.c.b16 %v2324, %v2323
        %v2356 = vpack.c.b16 %v2326, %v2325
        %v2357 = vpack.c.b16 %v2328, %v2327
        %v2358 = vpack.c.b16 %v2330, %v2329
        %v2359 = vpack.c.b16 %v2332, %v2331
        %v2360 = vpack.c.b16 %v2334, %v2333
        %v2361 = vpack.c.b16 %v2336, %v2335
        %v2362 = vpack.c.b16 %v2338, %v2337
        %2387 = vmatprep.subr.bf16.mxu0 0
        %2388 = vmatpush1.bf16.msra.mxu0 %v2346
        %2389 = vmatprep.subr.bf16.mxu0 0
        %2390 = vmatpush1.bf16.msra.mxu0 %v2345
        %2391 = vmatprep.subr.bf16.mxu0 0
        %2392 = vmatpush1.bf16.msra.mxu0 %v2344
        %2393 = vmatprep.subr.bf16.mxu0 0
        %2394 = vmatpush1.bf16.msra.mxu0 %v2343
        %2395 = vmatprep.subr.bf16.mxu0 0
        %2396 = vmatpush1.bf16.msra.mxu0 %v2342
        %2397 = vmatprep.subr.bf16.mxu0 0
        %2398 = vmatpush1.bf16.msra.mxu0 %v2341
        %2399 = vmatprep.subr.bf16.mxu0 0
        %2400 = vmatpush1.bf16.msra.mxu0 %v2340
        %2401 = vmatprep.subr.bf16.mxu0 0
        %2402 = vmatpush1.bf16.msra.mxu0 %v2339
        %2403 = vmatprep.subr.bf16.mxu0 0
        %2404 = vmatpush2.bf16.msra.mxu0 %v2354
        %2405 = vmatprep.subr.bf16.mxu0 0
        %2406 = vmatpush2.bf16.msra.mxu0 %v2353
        %2407 = vmatprep.subr.bf16.mxu0 0
        %2408 = vmatpush2.bf16.msra.mxu0 %v2352
        %2409 = vmatprep.subr.bf16.mxu0 0
        %2410 = vmatpush2.bf16.msra.mxu0 %v2351
        %2411 = vmatprep.subr.bf16.mxu0 0
        %2412 = vmatpush2.bf16.msra.mxu0 %v2350
        %2413 = vmatprep.subr.bf16.mxu0 0
        %2414 = vmatpush2.bf16.msra.mxu0 %v2349
        %2415 = vmatprep.subr.bf16.mxu0 0
        %2416 = vmatpush2.bf16.msra.mxu0 %v2348
        %2417 = vmatprep.subr.bf16.mxu0 0
        %2418 = vmatpush2.bf16.msra.mxu0 %v2347
        %2419 = vmatprep.mubr.bf16.mxu0 %v1059
        %2420 = vmatmul.mubr.bf16.gmra.mxu0 %v987
        %v2421 = vpop.f32.mrf.mxu0
        %v2422 = vadd.f32 0.0, %v2421
        %v2423 = vpop.f32.mrf.mxu0
        %v2424 = vpop.f32.mrf.mxu0
        %v2425 = vadd.f32 0.0, %v2424
        %v2426 = vpop.f32.mrf.mxu0
        %2427 = vmatprep.mubr.bf16.mxu0 %v1060
        %2428 = vmatmul.mubr.bf16.gmra.mxu0 %v988
        %v2429 = vpop.f32.mrf.mxu0
        %v2430 = vadd.f32 0.0, %v2429
        %v2431 = vpop.f32.mrf.mxu0
        %v2432 = vpop.f32.mrf.mxu0
        %v2433 = vadd.f32 0.0, %v2432
        %v2434 = vpop.f32.mrf.mxu0
        %2435 = vmatprep.mubr.bf16.mxu0 %v1061
        %2436 = vmatmul.mubr.bf16.gmra.mxu0 %v989
        %v2437 = vpop.f32.mrf.mxu0
        %v2438 = vadd.f32 0.0, %v2437
        %v2439 = vpop.f32.mrf.mxu0
        %v2440 = vpop.f32.mrf.mxu0
        %v2441 = vadd.f32 0.0, %v2440
        %v2442 = vpop.f32.mrf.mxu0
        %2443 = vmatprep.mubr.bf16.mxu0 %v1062
        %2444 = vmatmul.mubr.bf16.gmra.mxu0 %v990
        %v2445 = vpop.f32.mrf.mxu0
        %v2446 = vadd.f32 0.0, %v2445
        %v2447 = vpop.f32.mrf.mxu0
        %v2448 = vpop.f32.mrf.mxu0
        %v2449 = vadd.f32 0.0, %v2448
        %v2450 = vpop.f32.mrf.mxu0
        %2451 = vmatprep.mubr.bf16.mxu0 %v1063
        %2452 = vmatmul.mubr.bf16.gmra.mxu0 %v991
        %v2453 = vpop.f32.mrf.mxu0
        %v2454 = vadd.f32 0.0, %v2453
        %v2455 = vpop.f32.mrf.mxu0
        %v2456 = vpop.f32.mrf.mxu0
        %v2457 = vadd.f32 0.0, %v2456
        %v2458 = vpop.f32.mrf.mxu0
        %2459 = vmatprep.mubr.bf16.mxu0 %v1064
        %2460 = vmatmul.mubr.bf16.gmra.mxu0 %v992
        %v2461 = vpop.f32.mrf.mxu0
        %v2462 = vadd.f32 0.0, %v2461
        %v2463 = vpop.f32.mrf.mxu0
        %v2464 = vpop.f32.mrf.mxu0
        %v2465 = vadd.f32 0.0, %v2464
        %v2466 = vpop.f32.mrf.mxu0
        %2467 = vmatprep.mubr.bf16.mxu0 %v1065
        %2468 = vmatmul.mubr.bf16.gmra.mxu0 %v993
        %v2469 = vpop.f32.mrf.mxu0
        %v2470 = vadd.f32 0.0, %v2469
        %v2471 = vpop.f32.mrf.mxu0
        %v2472 = vpop.f32.mrf.mxu0
        %v2473 = vadd.f32 0.0, %v2472
        %v2474 = vpop.f32.mrf.mxu0
        %2475 = vmatprep.mubr.bf16.mxu0 %v1066
        %2476 = vmatmul.mubr.bf16.gmra.mxu0 %v994
        %v2477 = vpop.f32.mrf.mxu0
        %v2478 = vadd.f32 0.0, %v2477
        %v2479 = vpop.f32.mrf.mxu0
        %v2480 = vpop.f32.mrf.mxu0
        %v2481 = vadd.f32 0.0, %v2480
        %v2482 = vpop.f32.mrf.mxu0
        %2483 = vmatprep.mubr.bf16.mxu0 %v1067
        %2484 = vmatmul.mubr.bf16.gmra.mxu0 %v995
        %v2485 = vpop.f32.mrf.mxu0
        %v2486 = vadd.f32 0.0, %v2485
        %v2487 = vpop.f32.mrf.mxu0
        %v2488 = vpop.f32.mrf.mxu0
        %v2489 = vadd.f32 0.0, %v2488
        %v2490 = vpop.f32.mrf.mxu0
        %2491 = vmatprep.mubr.bf16.mxu0 %v1068
        %2492 = vmatmul.mubr.bf16.gmra.mxu0 %v996
        %v2493 = vpop.f32.mrf.mxu0
        %v2494 = vadd.f32 0.0, %v2493
        %v2495 = vpop.f32.mrf.mxu0
        %v2496 = vpop.f32.mrf.mxu0
        %v2497 = vadd.f32 0.0, %v2496
        %v2498 = vpop.f32.mrf.mxu0
        %2499 = vmatprep.mubr.bf16.mxu0 %v1069
        %2500 = vmatmul.mubr.bf16.gmra.mxu0 %v997
        %v2501 = vpop.f32.mrf.mxu0
        %v2502 = vadd.f32 0.0, %v2501
        %v2503 = vpop.f32.mrf.mxu0
        %v2504 = vpop.f32.mrf.mxu0
        %v2505 = vadd.f32 0.0, %v2504
        %v2506 = vpop.f32.mrf.mxu0
        %2507 = vmatprep.mubr.bf16.mxu0 %v1070
        %2508 = vmatmul.mubr.bf16.gmra.mxu0 %v998
        %v2509 = vpop.f32.mrf.mxu0
        %v2510 = vadd.f32 0.0, %v2509
        %v2511 = vpop.f32.mrf.mxu0
        %v2512 = vpop.f32.mrf.mxu0
        %v2513 = vadd.f32 0.0, %v2512
        %v2514 = vpop.f32.mrf.mxu0
        %2515 = vmatprep.mubr.bf16.mxu0 %v1071
        %2516 = vmatmul.mubr.bf16.gmra.mxu0 %v999
        %v2517 = vpop.f32.mrf.mxu0
        %v2518 = vadd.f32 0.0, %v2517
        %v2519 = vpop.f32.mrf.mxu0
        %v2520 = vpop.f32.mrf.mxu0
        %v2521 = vadd.f32 0.0, %v2520
        %v2522 = vpop.f32.mrf.mxu0
        %2523 = vmatprep.mubr.bf16.mxu0 %v1072
        %2524 = vmatmul.mubr.bf16.gmra.mxu0 %v1000
        %v2525 = vpop.f32.mrf.mxu0
        %v2526 = vadd.f32 0.0, %v2525
        %v2527 = vpop.f32.mrf.mxu0
        %v2528 = vpop.f32.mrf.mxu0
        %v2529 = vadd.f32 0.0, %v2528
        %v2530 = vpop.f32.mrf.mxu0
        %2531 = vmatprep.mubr.bf16.mxu0 %v1073
        %2532 = vmatmul.mubr.bf16.gmra.mxu0 %v1001
        %v2533 = vpop.f32.mrf.mxu0
        %v2534 = vadd.f32 0.0, %v2533
        %v2535 = vpop.f32.mrf.mxu0
        %v2536 = vpop.f32.mrf.mxu0
        %v2537 = vadd.f32 0.0, %v2536
        %v2538 = vpop.f32.mrf.mxu0
        %2539 = vmatprep.mubr.bf16.mxu0 %v1074
        %2540 = vmatmul.mubr.bf16.gmra.mxu0 %v1002
        %v2541 = vpop.f32.mrf.mxu0
        %v2542 = vadd.f32 0.0, %v2541
        %v2543 = vpop.f32.mrf.mxu0
        %v2544 = vpop.f32.mrf.mxu0
        %v2545 = vadd.f32 0.0, %v2544
        %v2546 = vpop.f32.mrf.mxu0
        %2547 = vdwg.mxu0
        %2548 = vmatprep.subr.bf16.mxu0 0
        %2549 = vmatpush1.bf16.msra.mxu0 %v2362
        %2550 = vmatprep.subr.bf16.mxu0 0
        %2551 = vmatpush1.bf16.msra.mxu0 %v2361
        %2552 = vmatprep.subr.bf16.mxu0 0
        %2553 = vmatpush1.bf16.msra.mxu0 %v2360
        %2554 = vmatprep.subr.bf16.mxu0 0
        %2555 = vmatpush1.bf16.msra.mxu0 %v2359
        %2556 = vmatprep.subr.bf16.mxu0 0
        %2557 = vmatpush1.bf16.msra.mxu0 %v2358
        %2558 = vmatprep.subr.bf16.mxu0 0
        %2559 = vmatpush1.bf16.msra.mxu0 %v2357
        %2560 = vmatprep.subr.bf16.mxu0 0
        %2561 = vmatpush1.bf16.msra.mxu0 %v2356
        %2562 = vmatprep.subr.bf16.mxu0 0
        %2563 = vmatpush1.bf16.msra.mxu0 %v2355
        %2564 = vmatprep.subr.bf16.mxu0 0
        %2565 = vmatpush2.bf16.msra.mxu0 0
        %2566 = vmatprep.subr.bf16.mxu0 0
        %2567 = vmatpush2.bf16.msra.mxu0 0
        %2568 = vmatprep.subr.bf16.mxu0 0
        %2569 = vmatpush2.bf16.msra.mxu0 0
        %2570 = vmatprep.subr.bf16.mxu0 0
        %2571 = vmatpush2.bf16.msra.mxu0 0
        %2572 = vmatprep.subr.bf16.mxu0 0
        %2573 = vmatpush2.bf16.msra.mxu0 0
        %2574 = vmatprep.subr.bf16.mxu0 0
        %2575 = vmatpush2.bf16.msra.mxu0 0
        %2576 = vmatprep.subr.bf16.mxu0 0
        %2577 = vmatpush2.bf16.msra.mxu0 0
        %2578 = vmatprep.subr.bf16.mxu0 0
        %2579 = vmatpush2.bf16.msra.mxu0 0
        %2580 = vmatprep.mubr.bf16.mxu0 0
        %2581 = vmatmul.mubr.bf16.gmra.mxu0 %v1131
        %v2582 = vpop.f32.mrf.mxu0
        %v2583 = vadd.f32 %v2422, %v2582
        %v2584 = vpop.f32.mrf.mxu0
        %v2585 = vpop.f32.mrf.mxu0
        %v2586 = vadd.f32 %v2425, %v2585
        %v2587 = vpop.f32.mrf.mxu0
        %2588 = vmatprep.mubr.bf16.mxu0 0
        %2589 = vmatmul.mubr.bf16.gmra.mxu0 %v1132
        %v2590 = vpop.f32.mrf.mxu0
        %v2591 = vadd.f32 %v2430, %v2590
        %v2592 = vpop.f32.mrf.mxu0
        %v2593 = vpop.f32.mrf.mxu0
        %v2594 = vadd.f32 %v2433, %v2593
        %v2595 = vpop.f32.mrf.mxu0
        %2596 = vmatprep.mubr.bf16.mxu0 0
        %2597 = vmatmul.mubr.bf16.gmra.mxu0 %v1133
        %v2598 = vpop.f32.mrf.mxu0
        %v2599 = vadd.f32 %v2438, %v2598
        %v2600 = vpop.f32.mrf.mxu0
        %v2601 = vpop.f32.mrf.mxu0
        %v2602 = vadd.f32 %v2441, %v2601
        %v2603 = vpop.f32.mrf.mxu0
        %2604 = vmatprep.mubr.bf16.mxu0 0
        %2605 = vmatmul.mubr.bf16.gmra.mxu0 %v1134
        %v2606 = vpop.f32.mrf.mxu0
        %v2607 = vadd.f32 %v2446, %v2606
        %v2608 = vpop.f32.mrf.mxu0
        %v2609 = vpop.f32.mrf.mxu0
        %v2610 = vadd.f32 %v2449, %v2609
        %v2611 = vpop.f32.mrf.mxu0
        %2612 = vmatprep.mubr.bf16.mxu0 0
        %2613 = vmatmul.mubr.bf16.gmra.mxu0 %v1135
        %v2614 = vpop.f32.mrf.mxu0
        %v2615 = vadd.f32 %v2454, %v2614
        %v2616 = vpop.f32.mrf.mxu0
        %v2617 = vpop.f32.mrf.mxu0
        %v2618 = vadd.f32 %v2457, %v2617
        %v2619 = vpop.f32.mrf.mxu0
        %2620 = vmatprep.mubr.bf16.mxu0 0
        %2621 = vmatmul.mubr.bf16.gmra.mxu0 %v1136
        %v2622 = vpop.f32.mrf.mxu0
        %v2623 = vadd.f32 %v2462, %v2622
        %v2624 = vpop.f32.mrf.mxu0
        %v2625 = vpop.f32.mrf.mxu0
        %v2626 = vadd.f32 %v2465, %v2625
        %v2627 = vpop.f32.mrf.mxu0
        %2628 = vmatprep.mubr.bf16.mxu0 0
        %2629 = vmatmul.mubr.bf16.gmra.mxu0 %v1137
        %v2630 = vpop.f32.mrf.mxu0
        %v2631 = vadd.f32 %v2470, %v2630
        %v2632 = vpop.f32.mrf.mxu0
        %v2633 = vpop.f32.mrf.mxu0
        %v2634 = vadd.f32 %v2473, %v2633
        %v2635 = vpop.f32.mrf.mxu0
        %2636 = vmatprep.mubr.bf16.mxu0 0
        %2637 = vmatmul.mubr.bf16.gmra.mxu0 %v1138
        %v2638 = vpop.f32.mrf.mxu0
        %v2639 = vadd.f32 %v2478, %v2638
        %v2640 = vpop.f32.mrf.mxu0
        %v2641 = vpop.f32.mrf.mxu0
        %v2642 = vadd.f32 %v2481, %v2641
        %v2643 = vpop.f32.mrf.mxu0
        %2644 = vmatprep.mubr.bf16.mxu0 0
        %2645 = vmatmul.mubr.bf16.gmra.mxu0 %v1139
        %v2646 = vpop.f32.mrf.mxu0
        %v2647 = vadd.f32 %v2486, %v2646
        %v2648 = vpop.f32.mrf.mxu0
        %v2649 = vpop.f32.mrf.mxu0
        %v2650 = vadd.f32 %v2489, %v2649
        %v2651 = vpop.f32.mrf.mxu0
        %2652 = vmatprep.mubr.bf16.mxu0 0
        %2653 = vmatmul.mubr.bf16.gmra.mxu0 %v1140
        %v2654 = vpop.f32.mrf.mxu0
        %v2655 = vadd.f32 %v2494, %v2654
        %v2656 = vpop.f32.mrf.mxu0
        %v2657 = vpop.f32.mrf.mxu0
        %v2658 = vadd.f32 %v2497, %v2657
        %v2659 = vpop.f32.mrf.mxu0
        %2660 = vmatprep.mubr.bf16.mxu0 0
        %2661 = vmatmul.mubr.bf16.gmra.mxu0 %v1141
        %v2662 = vpop.f32.mrf.mxu0
        %v2663 = vadd.f32 %v2502, %v2662
        %v2664 = vpop.f32.mrf.mxu0
        %v2665 = vpop.f32.mrf.mxu0
        %v2666 = vadd.f32 %v2505, %v2665
        %v2667 = vpop.f32.mrf.mxu0
        %2668 = vmatprep.mubr.bf16.mxu0 0
        %2669 = vmatmul.mubr.bf16.gmra.mxu0 %v1142
        %v2670 = vpop.f32.mrf.mxu0
        %v2671 = vadd.f32 %v2510, %v2670
        %v2672 = vpop.f32.mrf.mxu0
        %v2673 = vpop.f32.mrf.mxu0
        %v2674 = vadd.f32 %v2513, %v2673
        %v2675 = vpop.f32.mrf.mxu0
        %2676 = vmatprep.mubr.bf16.mxu0 0
        %2677 = vmatmul.mubr.bf16.gmra.mxu0 %v1143
        %v2678 = vpop.f32.mrf.mxu0
        %v2679 = vadd.f32 %v2518, %v2678
        %v2680 = vpop.f32.mrf.mxu0
        %v2681 = vpop.f32.mrf.mxu0
        %v2682 = vadd.f32 %v2521, %v2681
        %v2683 = vpop.f32.mrf.mxu0
        %2684 = vmatprep.mubr.bf16.mxu0 0
        %2685 = vmatmul.mubr.bf16.gmra.mxu0 %v1144
        %v2686 = vpop.f32.mrf.mxu0
        %v2687 = vadd.f32 %v2526, %v2686
        %v2688 = vpop.f32.mrf.mxu0
        %v2689 = vpop.f32.mrf.mxu0
        %v2690 = vadd.f32 %v2529, %v2689
        %v2691 = vpop.f32.mrf.mxu0
        %2692 = vmatprep.mubr.bf16.mxu0 0
        %2693 = vmatmul.mubr.bf16.gmra.mxu0 %v1145
        %v2694 = vpop.f32.mrf.mxu0
        %v2695 = vadd.f32 %v2534, %v2694
        %v2696 = vpop.f32.mrf.mxu0
        %v2697 = vpop.f32.mrf.mxu0
        %v2698 = vadd.f32 %v2537, %v2697
        %v2699 = vpop.f32.mrf.mxu0
        %2700 = vmatprep.mubr.bf16.mxu0 0
        %2701 = vmatmul.mubr.bf16.gmra.mxu0 %v1146
        %v2702 = vpop.f32.mrf.mxu0
        %v2703 = vadd.f32 %v2542, %v2702
        %v2704 = vpop.f32.mrf.mxu0
        %v2705 = vpop.f32.mrf.mxu0
        %v2706 = vadd.f32 %v2545, %v2705
        %v2707 = vpop.f32.mrf.mxu0
        %2708 = vdwg.mxu0
        %v2709 = vadd.f32 %v2068, %v2583
        %v2710 = vadd.f32 %v2071, %v2586
        %v2711 = vadd.f32 %v2076, %v2591
        %v2712 = vadd.f32 %v2079, %v2594
        %v2713 = vadd.f32 %v2084, %v2599
        %v2714 = vadd.f32 %v2087, %v2602
        %v2715 = vadd.f32 %v2092, %v2607
        %v2716 = vadd.f32 %v2095, %v2610
        %v2717 = vadd.f32 %v2100, %v2615
        %v2718 = vadd.f32 %v2103, %v2618
        %v2719 = vadd.f32 %v2108, %v2623
        %v2720 = vadd.f32 %v2111, %v2626
        %v2721 = vadd.f32 %v2116, %v2631
        %v2722 = vadd.f32 %v2119, %v2634
        %v2723 = vadd.f32 %v2124, %v2639
        %v2724 = vadd.f32 %v2127, %v2642
        %v2725 = vadd.f32 %v2132, %v2647
        %v2726 = vadd.f32 %v2135, %v2650
        %v2727 = vadd.f32 %v2140, %v2655
        %v2728 = vadd.f32 %v2143, %v2658
        %v2729 = vadd.f32 %v2148, %v2663
        %v2730 = vadd.f32 %v2151, %v2666
        %v2731 = vadd.f32 %v2156, %v2671
        %v2732 = vadd.f32 %v2159, %v2674
        %v2733 = vadd.f32 %v2164, %v2679
        %v2734 = vadd.f32 %v2167, %v2682
        %v2735 = vadd.f32 %v2172, %v2687
        %v2736 = vadd.f32 %v2175, %v2690
        %v2737 = vadd.f32 %v2180, %v2695
        %v2738 = vadd.f32 %v2183, %v2698
        %v2739 = vadd.f32 %v2188, %v2703
        %v2740 = vadd.f32 %v2191, %v2706
        %s2741 = smul.u32 %s20, 256
        %s2742 = scalar_lea.vmem [#allocation2], %s2741
        %2743 = vst [vmem:[%s2742] sm:$0xff] %v2709
        %2744 = vst [vmem:[%s2742 + $0x8] sm:$0xff] %v2710
        %2745 = vst [vmem:[%s2742 + $0x10] sm:$0xff] %v2711
        %2746 = vst [vmem:[%s2742 + $0x18] sm:$0xff] %v2712
        %2747 = vst [vmem:[%s2742 + $0x20] sm:$0xff] %v2713
        %2748 = vst [vmem:[%s2742 + $0x28] sm:$0xff] %v2714
        %2749 = vst [vmem:[%s2742 + $0x30] sm:$0xff] %v2715
        %2750 = vst [vmem:[%s2742 + $0x38] sm:$0xff] %v2716
        %2751 = vst [vmem:[%s2742 + $0x40] sm:$0xff] %v2717
        %2752 = vst [vmem:[%s2742 + $0x48] sm:$0xff] %v2718
        %2753 = vst [vmem:[%s2742 + $0x50] sm:$0xff] %v2719
        %2754 = vst [vmem:[%s2742 + $0x58] sm:$0xff] %v2720
        %2755 = vst [vmem:[%s2742 + $0x60] sm:$0xff] %v2721
        %2756 = vst [vmem:[%s2742 + $0x68] sm:$0xff] %v2722
        %2757 = vst [vmem:[%s2742 + $0x70] sm:$0xff] %v2723
        %2758 = vst [vmem:[%s2742 + $0x78] sm:$0xff] %v2724
        %2759 = vst [vmem:[%s2742 + $0x80] sm:$0xff] %v2725
        %2760 = vst [vmem:[%s2742 + $0x88] sm:$0xff] %v2726
        %2761 = vst [vmem:[%s2742 + $0x90] sm:$0xff] %v2727
        %2762 = vst [vmem:[%s2742 + $0x98] sm:$0xff] %v2728
        %2763 = vst [vmem:[%s2742 + $0xa0] sm:$0xff] %v2729
        %2764 = vst [vmem:[%s2742 + $0xa8] sm:$0xff] %v2730
        %2765 = vst [vmem:[%s2742 + $0xb0] sm:$0xff] %v2731
        %2766 = vst [vmem:[%s2742 + $0xb8] sm:$0xff] %v2732
        %2767 = vst [vmem:[%s2742 + $0xc0] sm:$0xff] %v2733
        %2768 = vst [vmem:[%s2742 + $0xc8] sm:$0xff] %v2734
        %2769 = vst [vmem:[%s2742 + $0xd0] sm:$0xff] %v2735
        %2770 = vst [vmem:[%s2742 + $0xd8] sm:$0xff] %v2736
        %2771 = vst [vmem:[%s2742 + $0xe0] sm:$0xff] %v2737
        %2772 = vst [vmem:[%s2742 + $0xe8] sm:$0xff] %v2738
        %2773 = vst [vmem:[%s2742 + $0xf0] sm:$0xff] %v2739
        %2774 = vst [vmem:[%s2742 + $0xf8] sm:$0xff] %v2740
        %p2775 = scmp.eq.s32.totalorder %s20, 0
        // Predicated region
        $region41: #{up_module_forward.5} parent=39 // pred_check
          %p2776 = pneg %p2775
        $region42: #{up_module_forward.5} parent=39 // pred_check_branch
          %2778 = sbr.rel (%p2776) target = $region44
        $region43: #{up_module_forward.5} parent=39 // pred_region
          %2779 = vst [vmem:[#allocation3] sm:$0x1] 0.0
          %2780 = vst [vmem:[#allocation4] sm:$0x1] 0.0
        $region44: #{up_module_forward.5} parent=39 // pred_fallthru
          _
        %v2781 = vld [vmem:[#allocation3] sm:$0x1]
        %v2782 = vadd.f32 %v2709, %v2710
        %v2783 = vadd.f32 %v2782, %v2711
        %v2784 = vadd.f32 %v2783, %v2712
        %v2785 = vadd.f32 %v2784, %v2713
        %v2786 = vadd.f32 %v2785, %v2714
        %v2787 = vadd.f32 %v2786, %v2715
        %v2788 = vadd.f32 %v2787, %v2716
        %v2789 = vadd.f32 %v2788, %v2717
        %v2790 = vadd.f32 %v2789, %v2718
        %v2791 = vadd.f32 %v2790, %v2719
        %v2792 = vadd.f32 %v2791, %v2720
        %v2793 = vadd.f32 %v2792, %v2721
        %v2794 = vadd.f32 %v2793, %v2722
        %v2795 = vadd.f32 %v2794, %v2723
        %v2796 = vadd.f32 %v2795, %v2724
        %v2797 = vadd.f32 %v2796, %v2725
        %v2798 = vadd.f32 %v2797, %v2726
        %v2799 = vadd.f32 %v2798, %v2727
        %v2800 = vadd.f32 %v2799, %v2728
        %v2801 = vadd.f32 %v2800, %v2729
        %v2802 = vadd.f32 %v2801, %v2730
        %v2803 = vadd.f32 %v2802, %v2731
        %v2804 = vadd.f32 %v2803, %v2732
        %v2805 = vadd.f32 %v2804, %v2733
        %v2806 = vadd.f32 %v2805, %v2734
        %v2807 = vadd.f32 %v2806, %v2735
        %v2808 = vadd.f32 %v2807, %v2736
        %v2809 = vadd.f32 %v2808, %v2737
        %v2810 = vadd.f32 %v2809, %v2738
        %v2811 = vadd.f32 %v2810, %v2739
        %v2812 = vadd.f32 %v2811, %v2740
        %v2813 = vrot.slane %v2812, 4
        %v2814 = vadd.f32 %v2812, %v2813
        %v2815 = vrot.slane %v2814, 2
        %v2816 = vadd.f32 %v2814, %v2815
        %v2817 = vrot.slane %v2816, 1
        %v2818 = vadd.f32 %v2816, %v2817
        %v2819 = vadd.f32 %v2781, %v2818
        %2820 = vst [vmem:[#allocation3] sm:$0x1] %v2819
        %v2821 = vld [vmem:[#allocation4] sm:$0x1]
        %v2822 = vmul.f32 %v2709, %v2709
        %v2823 = vmul.f32 %v2710, %v2710
        %v2824 = vmul.f32 %v2711, %v2711
        %v2825 = vmul.f32 %v2712, %v2712
        %v2826 = vmul.f32 %v2713, %v2713
        %v2827 = vmul.f32 %v2714, %v2714
        %v2828 = vmul.f32 %v2715, %v2715
        %v2829 = vmul.f32 %v2716, %v2716
        %v2830 = vmul.f32 %v2717, %v2717
        %v2831 = vmul.f32 %v2718, %v2718
        %v2832 = vmul.f32 %v2719, %v2719
        %v2833 = vmul.f32 %v2720, %v2720
        %v2834 = vmul.f32 %v2721, %v2721
        %v2835 = vmul.f32 %v2722, %v2722
        %v2836 = vmul.f32 %v2723, %v2723
        %v2837 = vmul.f32 %v2724, %v2724
        %v2838 = vmul.f32 %v2725, %v2725
        %v2839 = vmul.f32 %v2726, %v2726
        %v2840 = vmul.f32 %v2727, %v2727
        %v2841 = vmul.f32 %v2728, %v2728
        %v2842 = vmul.f32 %v2729, %v2729
        %v2843 = vmul.f32 %v2730, %v2730
        %v2844 = vmul.f32 %v2731, %v2731
        %v2845 = vmul.f32 %v2732, %v2732
        %v2846 = vmul.f32 %v2733, %v2733
        %v2847 = vmul.f32 %v2734, %v2734
        %v2848 = vmul.f32 %v2735, %v2735
        %v2849 = vmul.f32 %v2736, %v2736
        %v2850 = vmul.f32 %v2737, %v2737
        %v2851 = vmul.f32 %v2738, %v2738
        %v2852 = vmul.f32 %v2739, %v2739
        %v2853 = vmul.f32 %v2740, %v2740
        %v2854 = vadd.f32 %v2822, %v2823
        %v2855 = vadd.f32 %v2854, %v2824
        %v2856 = vadd.f32 %v2855, %v2825
        %v2857 = vadd.f32 %v2856, %v2826
        %v2858 = vadd.f32 %v2857, %v2827
        %v2859 = vadd.f32 %v2858, %v2828
        %v2860 = vadd.f32 %v2859, %v2829
        %v2861 = vadd.f32 %v2860, %v2830
        %v2862 = vadd.f32 %v2861, %v2831
        %v2863 = vadd.f32 %v2862, %v2832
        %v2864 = vadd.f32 %v2863, %v2833
        %v2865 = vadd.f32 %v2864, %v2834
        %v2866 = vadd.f32 %v2865, %v2835
        %v2867 = vadd.f32 %v2866, %v2836
        %v2868 = vadd.f32 %v2867, %v2837
        %v2869 = vadd.f32 %v2868, %v2838
        %v2870 = vadd.f32 %v2869, %v2839
        %v2871 = vadd.f32 %v2870, %v2840
        %v2872 = vadd.f32 %v2871, %v2841
        %v2873 = vadd.f32 %v2872, %v2842
        %v2874 = vadd.f32 %v2873, %v2843
        %v2875 = vadd.f32 %v2874, %v2844
        %v2876 = vadd.f32 %v2875, %v2845
        %v2877 = vadd.f32 %v2876, %v2846
        %v2878 = vadd.f32 %v2877, %v2847
        %v2879 = vadd.f32 %v2878, %v2848
        %v2880 = vadd.f32 %v2879, %v2849
        %v2881 = vadd.f32 %v2880, %v2850
        %v2882 = vadd.f32 %v2881, %v2851
        %v2883 = vadd.f32 %v2882, %v2852
        %v2884 = vadd.f32 %v2883, %v2853
        %v2885 = vrot.slane %v2884, 4
        %v2886 = vadd.f32 %v2884, %v2885
        %v2887 = vrot.slane %v2886, 2
        %v2888 = vadd.f32 %v2886, %v2887
        %v2889 = vrot.slane %v2888, 1
        %v2890 = vadd.f32 %v2888, %v2889
        %v2891 = vadd.f32 %v2821, %v2890
        %2892 = vst [vmem:[#allocation4] sm:$0x1] %v2891
      $region40: #{up_module_forward.5} parent=35 // pred_fallthru
        _
      %p2893 = scmp.eq.s32.totalorder %s19, 1
      // Predicated region
      $region45: #{up_module_forward.5} parent=35 // pred_check
        %p2894 = pneg %p2893
      $region46: #{up_module_forward.5} parent=35 // pred_check_branch
        %2896 = sbr.rel (%p2894) target = $region48
      $region47: #{up_module_forward.5} parent=35 // pred_region
        %s2897 = smul.u32 %s20, 256
        %s2898 = scalar_lea.vmem [#allocation2], %s2897
        %v2899 = vld [vmem:[%s2898] sm:$0xff]
        %v2900 = vld [vmem:[%s2898 + $0x8] sm:$0xff]
        %v2901 = vld [vmem:[%s2898 + $0x10] sm:$0xff]
        %v2902 = vld [vmem:[%s2898 + $0x18] sm:$0xff]
        %v2903 = vld [vmem:[%s2898 + $0x20] sm:$0xff]
        %v2904 = vld [vmem:[%s2898 + $0x28] sm:$0xff]
        %v2905 = vld [vmem:[%s2898 + $0x30] sm:$0xff]
        %v2906 = vld [vmem:[%s2898 + $0x38] sm:$0xff]
        %v2907 = vld [vmem:[%s2898 + $0x40] sm:$0xff]
        %v2908 = vld [vmem:[%s2898 + $0x48] sm:$0xff]
        %v2909 = vld [vmem:[%s2898 + $0x50] sm:$0xff]
        %v2910 = vld [vmem:[%s2898 + $0x58] sm:$0xff]
        %v2911 = vld [vmem:[%s2898 + $0x60] sm:$0xff]
        %v2912 = vld [vmem:[%s2898 + $0x68] sm:$0xff]
        %v2913 = vld [vmem:[%s2898 + $0x70] sm:$0xff]
        %v2914 = vld [vmem:[%s2898 + $0x78] sm:$0xff]
        %v2915 = vld [vmem:[%s2898 + $0x80] sm:$0xff]
        %v2916 = vld [vmem:[%s2898 + $0x88] sm:$0xff]
        %v2917 = vld [vmem:[%s2898 + $0x90] sm:$0xff]
        %v2918 = vld [vmem:[%s2898 + $0x98] sm:$0xff]
        %v2919 = vld [vmem:[%s2898 + $0xa0] sm:$0xff]
        %v2920 = vld [vmem:[%s2898 + $0xa8] sm:$0xff]
        %v2921 = vld [vmem:[%s2898 + $0xb0] sm:$0xff]
        %v2922 = vld [vmem:[%s2898 + $0xb8] sm:$0xff]
        %v2923 = vld [vmem:[%s2898 + $0xc0] sm:$0xff]
        %v2924 = vld [vmem:[%s2898 + $0xc8] sm:$0xff]
        %v2925 = vld [vmem:[%s2898 + $0xd0] sm:$0xff]
        %v2926 = vld [vmem:[%s2898 + $0xd8] sm:$0xff]
        %v2927 = vld [vmem:[%s2898 + $0xe0] sm:$0xff]
        %v2928 = vld [vmem:[%s2898 + $0xe8] sm:$0xff]
        %v2929 = vld [vmem:[%s2898 + $0xf0] sm:$0xff]
        %v2930 = vld [vmem:[%s2898 + $0xf8] sm:$0xff]
        %v2931 = vld [vmem:[#allocation3] sm:$0x1]
        %v2932 = vmul.f32 %v2931, 0.001953125
        %v2933 = vld [vmem:[#allocation4] sm:$0x1]
        %v2934 = vmul.f32 %v2933, 0.001953125
        %v2935 = vmul.f32 %v2932, %v2932
        %v2936 = vsub.f32 %v2934, %v2935
        %v2937 = vmax.f32 %v2936, 0.0
        %v2938 = vadd.f32 %v2937, 1e-05
        %v2939 = vrsqrt.pop %v2938
        %v2940 = vld [vmem:[%s2] sm:$0x1]
        %v2941 = vmul.f32 %v2940, %v2939
        %v2942 = vld [vmem:[%s3] sm:$0x1]
        %v2943 = vmul.f32 %v2932, %v2941
        %v2944 = vsub.f32 %v2942, %v2943
        %v2946 = vlaneseq
        %v2947 = vshrl.u32 %v2946, 7
        %v2948 = vsub.s32 0, %v2947
        %v2949 = vrot.slane %v2941, %v2948
        %v2951 = vmul.f32 %v2899, %v2949
        %v2952 = vmul.f32 %v2900, %v2949
        %v2953 = vmul.f32 %v2901, %v2949
        %v2954 = vmul.f32 %v2902, %v2949
        %v2955 = vmul.f32 %v2903, %v2949
        %v2956 = vmul.f32 %v2904, %v2949
        %v2957 = vmul.f32 %v2905, %v2949
        %v2958 = vmul.f32 %v2906, %v2949
        %v2959 = vmul.f32 %v2907, %v2949
        %v2960 = vmul.f32 %v2908, %v2949
        %v2961 = vmul.f32 %v2909, %v2949
        %v2962 = vmul.f32 %v2910, %v2949
        %v2963 = vmul.f32 %v2911, %v2949
        %v2964 = vmul.f32 %v2912, %v2949
        %v2965 = vmul.f32 %v2913, %v2949
        %v2966 = vmul.f32 %v2914, %v2949
        %v2967 = vmul.f32 %v2915, %v2949
        %v2968 = vmul.f32 %v2916, %v2949
        %v2969 = vmul.f32 %v2917, %v2949
        %v2970 = vmul.f32 %v2918, %v2949
        %v2971 = vmul.f32 %v2919, %v2949
        %v2972 = vmul.f32 %v2920, %v2949
        %v2973 = vmul.f32 %v2921, %v2949
        %v2974 = vmul.f32 %v2922, %v2949
        %v2975 = vmul.f32 %v2923, %v2949
        %v2976 = vmul.f32 %v2924, %v2949
        %v2977 = vmul.f32 %v2925, %v2949
        %v2978 = vmul.f32 %v2926, %v2949
        %v2979 = vmul.f32 %v2927, %v2949
        %v2980 = vmul.f32 %v2928, %v2949
        %v2981 = vmul.f32 %v2929, %v2949
        %v2982 = vmul.f32 %v2930, %v2949
        %v2984 = vlaneseq
        %v2985 = vshrl.u32 %v2984, 7
        %v2986 = vsub.s32 0, %v2985
        %v2987 = vrot.slane %v2944, %v2986
        %v2989 = vadd.f32 %v2951, %v2987
        %v2990 = vadd.f32 %v2952, %v2987
        %v2991 = vadd.f32 %v2953, %v2987
        %v2992 = vadd.f32 %v2954, %v2987
        %v2993 = vadd.f32 %v2955, %v2987
        %v2994 = vadd.f32 %v2956, %v2987
        %v2995 = vadd.f32 %v2957, %v2987
        %v2996 = vadd.f32 %v2958, %v2987
        %v2997 = vadd.f32 %v2959, %v2987
        %v2998 = vadd.f32 %v2960, %v2987
        %v2999 = vadd.f32 %v2961, %v2987
        %v3000 = vadd.f32 %v2962, %v2987
        %v3001 = vadd.f32 %v2963, %v2987
        %v3002 = vadd.f32 %v2964, %v2987
        %v3003 = vadd.f32 %v2965, %v2987
        %v3004 = vadd.f32 %v2966, %v2987
        %v3005 = vadd.f32 %v2967, %v2987
        %v3006 = vadd.f32 %v2968, %v2987
        %v3007 = vadd.f32 %v2969, %v2987
        %v3008 = vadd.f32 %v2970, %v2987
        %v3009 = vadd.f32 %v2971, %v2987
        %v3010 = vadd.f32 %v2972, %v2987
        %v3011 = vadd.f32 %v2973, %v2987
        %v3012 = vadd.f32 %v2974, %v2987
        %v3013 = vadd.f32 %v2975, %v2987
        %v3014 = vadd.f32 %v2976, %v2987
        %v3015 = vadd.f32 %v2977, %v2987
        %v3016 = vadd.f32 %v2978, %v2987
        %v3017 = vadd.f32 %v2979, %v2987
        %v3018 = vadd.f32 %v2980, %v2987
        %v3019 = vadd.f32 %v2981, %v2987
        %v3020 = vadd.f32 %v2982, %v2987
        %v3021 = vmax.f32 %v2989, 0.0
        %v3022 = vmax.f32 %v2990, 0.0
        %v3023 = vmax.f32 %v2991, 0.0
        %v3024 = vmax.f32 %v2992, 0.0
        %v3025 = vmax.f32 %v2993, 0.0
        %v3026 = vmax.f32 %v2994, 0.0
        %v3027 = vmax.f32 %v2995, 0.0
        %v3028 = vmax.f32 %v2996, 0.0
        %v3029 = vmax.f32 %v2997, 0.0
        %v3030 = vmax.f32 %v2998, 0.0
        %v3031 = vmax.f32 %v2999, 0.0
        %v3032 = vmax.f32 %v3000, 0.0
        %v3033 = vmax.f32 %v3001, 0.0
        %v3034 = vmax.f32 %v3002, 0.0
        %v3035 = vmax.f32 %v3003, 0.0
        %v3036 = vmax.f32 %v3004, 0.0
        %v3037 = vmax.f32 %v3005, 0.0
        %v3038 = vmax.f32 %v3006, 0.0
        %v3039 = vmax.f32 %v3007, 0.0
        %v3040 = vmax.f32 %v3008, 0.0
        %v3041 = vmax.f32 %v3009, 0.0
        %v3042 = vmax.f32 %v3010, 0.0
        %v3043 = vmax.f32 %v3011, 0.0
        %v3044 = vmax.f32 %v3012, 0.0
        %v3045 = vmax.f32 %v3013, 0.0
        %v3046 = vmax.f32 %v3014, 0.0
        %v3047 = vmax.f32 %v3015, 0.0
        %v3048 = vmax.f32 %v3016, 0.0
        %v3049 = vmax.f32 %v3017, 0.0
        %v3050 = vmax.f32 %v3018, 0.0
        %v3051 = vmax.f32 %v3019, 0.0
        %v3052 = vmax.f32 %v3020, 0.0
        %3053 = vst [vmem:[%s234] sm:$0xff] %v3021
        %3054 = vst [vmem:[%s234 + $0x8] sm:$0xff] %v3022
        %3055 = vst [vmem:[%s234 + $0x10] sm:$0xff] %v3023
        %3056 = vst [vmem:[%s234 + $0x18] sm:$0xff] %v3024
        %3057 = vst [vmem:[%s234 + $0x20] sm:$0xff] %v3025
        %3058 = vst [vmem:[%s234 + $0x28] sm:$0xff] %v3026
        %3059 = vst [vmem:[%s234 + $0x30] sm:$0xff] %v3027
        %3060 = vst [vmem:[%s234 + $0x38] sm:$0xff] %v3028
        %3061 = vst [vmem:[%s234 + $0x40] sm:$0xff] %v3029
        %3062 = vst [vmem:[%s234 + $0x48] sm:$0xff] %v3030
        %3063 = vst [vmem:[%s234 + $0x50] sm:$0xff] %v3031
        %3064 = vst [vmem:[%s234 + $0x58] sm:$0xff] %v3032
        %3065 = vst [vmem:[%s234 + $0x60] sm:$0xff] %v3033
        %3066 = vst [vmem:[%s234 + $0x68] sm:$0xff] %v3034
        %3067 = vst [vmem:[%s234 + $0x70] sm:$0xff] %v3035
        %3068 = vst [vmem:[%s234 + $0x78] sm:$0xff] %v3036
        %3069 = vst [vmem:[%s234 + $0x80] sm:$0xff] %v3037
        %3070 = vst [vmem:[%s234 + $0x88] sm:$0xff] %v3038
        %3071 = vst [vmem:[%s234 + $0x90] sm:$0xff] %v3039
        %3072 = vst [vmem:[%s234 + $0x98] sm:$0xff] %v3040
        %3073 = vst [vmem:[%s234 + $0xa0] sm:$0xff] %v3041
        %3074 = vst [vmem:[%s234 + $0xa8] sm:$0xff] %v3042
        %3075 = vst [vmem:[%s234 + $0xb0] sm:$0xff] %v3043
        %3076 = vst [vmem:[%s234 + $0xb8] sm:$0xff] %v3044
        %3077 = vst [vmem:[%s234 + $0xc0] sm:$0xff] %v3045
        %3078 = vst [vmem:[%s234 + $0xc8] sm:$0xff] %v3046
        %3079 = vst [vmem:[%s234 + $0xd0] sm:$0xff] %v3047
        %3080 = vst [vmem:[%s234 + $0xd8] sm:$0xff] %v3048
        %3081 = vst [vmem:[%s234 + $0xe0] sm:$0xff] %v3049
        %3082 = vst [vmem:[%s234 + $0xe8] sm:$0xff] %v3050
        %3083 = vst [vmem:[%s234 + $0xf0] sm:$0xff] %v3051
        %3084 = vst [vmem:[%s234 + $0xf8] sm:$0xff] %v3052
      $region48: #{up_module_forward.5} parent=35 // pred_fallthru
        _
      %s3085 = smul.u32 %s19, %s20
      %p3086 = scmp.lt.s32.totalorder %s3085, 1
      %s3087 = scalar_select %p3086, %s3085, 1
      %s3088 = smul.addr %s3087, 32
      %s3089 = smul.addr %s3088, 8
      %s3090 = scalar_lea.vmem %s4, %s3089
      // Predicated region
      $region49: #{up_module_forward.5} parent=35 // pred_check
        %p3091 = pneg %p142
      $region50: #{up_module_forward.5} parent=35 // pred_check_branch
        %3093 = sbr.rel (%p3091) target = $region52
      $region51: #{up_module_forward.5} parent=35 // pred_region
        %s3094 = smul.u32 %s19, %s20
      $region52: #{up_module_forward.5} parent=35 // pred_fallthru
        _
    $region36: #{up_module_forward.5} parent=5 // pred_fallthru
      _
    %p3095 = scmp.le.s32.totalorder 2, %s10
    // Predicated region
    $region53: #{up_module_forward.5} parent=5 // pred_check
      %p3096 = pneg %p3095
    $region54: #{up_module_forward.5} parent=5 // pred_check_branch
      %3098 = sbr.rel (%p3096) target = $region56
    $region55: #{up_module_forward.5} parent=5 // pred_region
      %s3099 = ssub.s32 %s10, 2
      // Predicated region
      $region57: #{up_module_forward.5} parent=55 // pred_check
        %p3100 = pneg %p148
      $region58: #{up_module_forward.5} parent=55 // pred_check_branch
        %3102 = sbr.rel (%p3100) target = $region60
      $region59: #{up_module_forward.5} parent=55 // pred_region
        %s3103 = smul.u32 %s21, %s22
        %p3104 = scmp.lt.s32.totalorder %s3103, 1
        %s3105 = scalar_select %p3104, %s3103, 1
        %s3106 = smul.addr %s3105, 32
        %s3107 = smul.addr %s3106, 8
        %s3108 = scalar_lea.vmem %s4, %s3107
      $region60: #{up_module_forward.5} parent=55 // pred_fallthru
        _
    $region56: #{up_module_forward.5} parent=5 // pred_fallthru
      _
  $region6: #{up_module_forward.5} parent=0 // loop_footer
    %s14 = sadd.s32 1, %s10
  $region7: #{up_module_forward.5} parent=0 // loop_footer_branch
    %9 = sbr.rel target = $region3
  $region8: #{up_module_forward.5} parent=0 // loop_exit
    _

</llo_original>
